<compile_context>
chip_gen: v6e
topology: v6e:2x2x1
jax: 0.10.0
libtpu: 0.0.40
codegen_flags: <defaults>
</compile_context>

<pallas_src>
import math

import jax
import jax.numpy as jnp
from jax import lax
from jax.experimental import pallas as pl
from jax.experimental.pallas import tpu as pltpu


# -----------------------------------------------------------------------------
# Pallas kernel: conv-as-matmul, whole batch in one grid step
# -----------------------------------------------------------------------------
def _conv_matmul_kernel(col_ref, w_ref, b_ref, out_ref):
    # col_ref: (B, 9*C, H*W) f32 im2col patches, K-order = (c, ky, kx)
    # w_ref:   (OCP, 9*C)    f32 flattened conv weight (out-channels padded to 8)
    # b_ref:   (OCP, 1)      f32 bias
    # out_ref: (B, OCP, H*W) f32 output (lane-dense: H*W >= 128 -> unmasked vst)
    w = w_ref[...]
    b = b_ref[...]
    for bi in range(col_ref.shape[0]):          # B is small & static -> unrolled
        acc = jnp.dot(w, col_ref[bi],
                      precision=lax.Precision.HIGHEST,
                      preferred_element_type=jnp.float32)   # (OCP, HW) f32 accum
        out_ref[bi] = acc + b                    # bias lane-broadcast


# -----------------------------------------------------------------------------
# Wrapper
# -----------------------------------------------------------------------------
def output_proj(x, weight, bias):
    """x: (B, L, C) f32, weight: (OC, C, 3, 3) f32, bias: (OC,) f32.
    Returns (B, OC, H, W) f32 with H = W = sqrt(L)."""
    B, L, C = x.shape
    H = int(math.sqrt(L))
    W = H
    assert H * W == L, f"L={L} must be a perfect square"
    OC, IC, KH, KW = weight.shape
    assert IC == C, (IC, C)
    HW = H * W
    KK = KH * KW * C
    OCP = ((OC + 7) // 8) * 8            # pad out-channels to a sublane multiple

    # ---- layout prep (wrapper; pure data movement, no conv FLOPs) ------------
    # torch: x.transpose(1, 2).view(B, C, H, W)
    img = jnp.transpose(x, (0, 2, 1)).reshape(B, C, H, W)

    # Fused im2col (single XLA op, keeps f32 exactly):
    #   patches[b, c*KH*KW + ky*KW + kx, h, w] = img_pad[b, c, h+ky, w+kx]
    patches = lax.conv_general_dilated_patches(
        img, filter_shape=(KH, KW), window_strides=(1, 1),
        padding=((KH // 2, KH // 2), (KW // 2, KW // 2)),
        precision=lax.Precision.HIGHEST)
    cols = patches.reshape(B, KK, HW)                     # free reshape

    # weight (OC, C, KH, KW) -> (OCP, KK): same K-order (c, ky, kx) as patches.
    w2d = jnp.pad(weight.reshape(OC, KK), ((0, OCP - OC), (0, 0)))
    b2d = jnp.pad(bias, (0, OCP - OC)).reshape(OCP, 1)

    # ---- kernel launch: one grid step, everything resident in VMEM -----------
    out = pl.pallas_call(
        _conv_matmul_kernel,
        out_shape=jax.ShapeDtypeStruct((B, OCP, HW), jnp.float32),
        grid=(1,),
        in_specs=[
            pl.BlockSpec((B, KK, HW), lambda i: (0, 0, 0)),   # all patches
            pl.BlockSpec((OCP, KK), lambda i: (0, 0)),        # weights
            pl.BlockSpec((OCP, 1), lambda i: (0, 0)),         # bias
        ],
        out_specs=pl.BlockSpec((B, OCP, HW), lambda i: (0, 0, 0)),
    )(cols, w2d, b2d)

    # Drop channel padding and recover (B, OC, H, W).  Tiny copy; a consumer that
    # accepts the padded (B, OCP, H*W) layout could skip this entirely.
    return out[:, :OC, :].reshape(B, OC, H, W)


# -----------------------------------------------------------------------------
# Pure-JAX reference (mirrors the PyTorch forward) for verification
# -----------------------------------------------------------------------------
def output_proj_reference(x, weight, bias):
    B, L, C = x.shape
    H = int(math.sqrt(L))
    W = H
    img = jnp.transpose(x, (0, 2, 1)).reshape(B, C, H, W)
    out = lax.conv_general_dilated(
        img, weight, window_strides=(1, 1), padding=((1, 1), (1, 1)),
        dimension_numbers=("NCHW", "OIHW", "NCHW"),
        precision=lax.Precision.HIGHEST)
    return out + bias.reshape(1, -1, 1, 1)


# -----------------------------------------------------------------------------
# Main
# -----------------------------------------------------------------------------
if __name__ == "__main__":
    # module defaults: in_channel=64, out_channel=3, kernel 3x3, stride 1
    B, C_in, OC, H, W = 2, 64, 3, 16, 16
    L = H * W

    key = jax.random.PRNGKey(0)
    kx, kw, kb = jax.random.split(key, 3)
    x = jax.random.normal(kx, (B, L, C_in), dtype=jnp.float32)

    bound = 1.0 / math.sqrt(C_in * 3 * 3)      # PyTorch Conv2d-like uniform init
    weight = jax.random.uniform(kw, (OC, C_in, 3, 3), jnp.float32, -bound, bound)
    bias = jax.random.uniform(kb, (OC,), jnp.float32, -bound, bound)

    out = jax.block_until_ready(output_proj(x, weight, bias))

    ref = output_proj_reference(x, weight, bias)
    assert out.shape == (B, OC, H, W)
    max_err = float(jnp.max(jnp.abs(out - ref)))
    # f32 operands with f32 accumulation -> tight tolerance
    assert jnp.allclose(out, ref, atol=1e-3, rtol=1e-3), max_err

    print("KERNEL_OK")
</pallas_src>

<mosaic_0001>
module attributes {stable_mosaic.version = 11 : i64} {
  func.func @_conv_matmul_kernel(%arg0: i32, %arg1: memref<2x576x256xf32, #tpu.memory_space<vmem>>, %arg2: memref<8x576xf32, #tpu.memory_space<vmem>>, %arg3: memref<8x1xf32, #tpu.memory_space<vmem>>, %arg4: memref<2x8x256xf32, #tpu.memory_space<vmem>>) attributes {dimension_semantics = [#tpu.dimension_semantics<arbitrary>], iteration_bounds = array<i64: 1>, scalar_prefetch = 0 : i64, scratch_operands = 0 : i64, tpu.core_type = #tpu.core_type<tc>, window_params = [{pipeline_mode = #tpu.pipeline_mode<synchronous>, transform_indices = @transform_0, window_bounds = array<i64: 2, 576, 256>}, {pipeline_mode = #tpu.pipeline_mode<synchronous>, transform_indices = @transform_1, window_bounds = array<i64: 8, 576>}, {pipeline_mode = #tpu.pipeline_mode<synchronous>, transform_indices = @transform_2, window_bounds = array<i64: 8, 1>}, {pipeline_mode = #tpu.pipeline_mode<synchronous>, transform_indices = @transform_3, window_bounds = array<i64: 2, 8, 256>}]} {
    %c0 = arith.constant 0 : index
    %c0_0 = arith.constant 0 : index
    %0 = vector.load %arg2[%c0, %c0_0] : memref<8x576xf32, #tpu.memory_space<vmem>>, vector<8x576xf32>
    %c0_1 = arith.constant 0 : index
    %c0_2 = arith.constant 0 : index
    %1 = vector.load %arg3[%c0_1, %c0_2] : memref<8x1xf32, #tpu.memory_space<vmem>>, vector<8x1xf32>
    %c0_3 = arith.constant 0 : index
    %c0_4 = arith.constant 0 : index
    %c0_5 = arith.constant 0 : index
    %2 = vector.load %arg1[%c0_3, %c0_4, %c0_5] : memref<2x576x256xf32, #tpu.memory_space<vmem>>, vector<1x576x256xf32>
    %3 = vector.shape_cast %2 : vector<1x576x256xf32> to vector<576x256xf32>
    %cst = arith.constant dense<0.000000e+00> : vector<8x256xf32>
    %4 = tpu.matmul %0, %3, %cst {dimension_numbers = #tpu.dot_dimension_numbers<[1], [0], [0], [1], [0, 0, 1, 1], [], []>, precision = #tpu.contract_precision<fp32>} : vector<8x576xf32>, vector<576x256xf32>, vector<8x256xf32> -> vector<8x256xf32>
    %5 = vector.broadcast %1 : vector<8x1xf32> to vector<8x256xf32>
    %6 = arith.addf %4, %5 : vector<8x256xf32>
    %c0_6 = arith.constant 0 : index
    %c0_7 = arith.constant 0 : index
    %c0_8 = arith.constant 0 : index
    %7 = vector.load %arg4[%c0_6, %c0_7, %c0_8] : memref<2x8x256xf32, #tpu.memory_space<vmem>>, vector<1x8x256xf32>
    %8 = vector.shape_cast %7 : vector<1x8x256xf32> to vector<8x256xf32>
    %9 = vector.shape_cast %6 : vector<8x256xf32> to vector<1x8x256xf32>
    tpu.vector_store %arg4[%c0_6, %c0_7, %c0_8], %9 {strides = array<i32>} : memref<2x8x256xf32, #tpu.memory_space<vmem>>, vector<1x8x256xf32>,
    %c1 = arith.constant 1 : index
    %c0_9 = arith.constant 0 : index
    %c0_10 = arith.constant 0 : index
    %10 = vector.load %arg1[%c1, %c0_9, %c0_10] : memref<2x576x256xf32, #tpu.memory_space<vmem>>, vector<1x576x256xf32>
    %11 = vector.shape_cast %10 : vector<1x576x256xf32> to vector<576x256xf32>
    %cst_11 = arith.constant dense<0.000000e+00> : vector<8x256xf32>
    %12 = tpu.matmul %0, %11, %cst_11 {dimension_numbers = #tpu.dot_dimension_numbers<[1], [0], [0], [1], [0, 0, 1, 1], [], []>, precision = #tpu.contract_precision<fp32>} : vector<8x576xf32>, vector<576x256xf32>, vector<8x256xf32> -> vector<8x256xf32>
    %13 = vector.broadcast %1 : vector<8x1xf32> to vector<8x256xf32>
    %14 = arith.addf %12, %13 : vector<8x256xf32>
    %c1_12 = arith.constant 1 : index
    %c0_13 = arith.constant 0 : index
    %c0_14 = arith.constant 0 : index
    %15 = vector.load %arg4[%c1_12, %c0_13, %c0_14] : memref<2x8x256xf32, #tpu.memory_space<vmem>>, vector<1x8x256xf32>
    %16 = vector.shape_cast %15 : vector<1x8x256xf32> to vector<8x256xf32>
    %17 = vector.shape_cast %14 : vector<8x256xf32> to vector<1x8x256xf32>
    tpu.vector_store %arg4[%c1_12, %c0_13, %c0_14], %17 {strides = array<i32>} : memref<2x8x256xf32, #tpu.memory_space<vmem>>, vector<1x8x256xf32>,
    return
  }
  func.func @transform_0(%arg0: i32) -> (i32, i32, i32) {
    %c0_i32 = arith.constant 0 : i32
    %c0_i32_0 = arith.constant 0 : i32
    %c0_i32_1 = arith.constant 0 : i32
    %c0_i32_2 = arith.constant 0 : i32
    return %c0_i32, %c0_i32_0, %c0_i32_1 : i32, i32, i32
  }
  func.func @transform_1(%arg0: i32) -> (i32, i32) {
    %c0_i32 = arith.constant 0 : i32
    %c0_i32_0 = arith.constant 0 : i32
    %c0_i32_1 = arith.constant 0 : i32
    return %c0_i32, %c0_i32_0 : i32, i32
  }
  func.func @transform_2(%arg0: i32) -> (i32, i32) {
    %c0_i32 = arith.constant 0 : i32
    %c0_i32_0 = arith.constant 0 : i32
    %c0_i32_1 = arith.constant 0 : i32
    return %c0_i32, %c0_i32_0 : i32, i32
  }
  func.func @transform_3(%arg0: i32) -> (i32, i32, i32) {
    %c0_i32 = arith.constant 0 : i32
    %c0_i32_0 = arith.constant 0 : i32
    %c0_i32_1 = arith.constant 0 : i32
    %c0_i32_2 = arith.constant 0 : i32
    return %c0_i32, %c0_i32_0, %c0_i32_1 : i32, i32, i32
  }
}

</mosaic_0001>

<llo_original>
// kernel: tpu_custom_call.1
$region0: #{tpu_custom_call.1}
  #allocation0 [shape = 'u32[]', space=smem, size = 0x4, offset = 0x4, fixed_abs, tag = 'smem constant byte address 0x4 - core index']
  #allocation1 [shape = 'u32[144,128]{1,0:T(1,128)}', space=vmem, size = 0x12000, scoped, tag = 'internal scratch']
  %s0 = inlined_call_operand.hbm [shape: f32[2,576,256], index: 0, kind: input, shape index: {}]
  %s1 = inlined_call_operand.hbm [shape: f32[8,576], index: 1, kind: input, shape index: {}]
  %s2 = inlined_call_operand.vmem [shape: f32[8,1], index: 2, kind: input, shape index: {}]
  %s3 = inlined_call_operand.hbm [shape: f32[2,8,256], index: 3, kind: output, shape index: {}]
  %s4 = sld [smem:[#allocation0]]
  $region30: #{tpu_custom_call.1} parent=0
    _
  %s6 = ssub.s32 1, %s4
  %s7 = scalar_select 0, %s6, %s4
  $region1: #{tpu_custom_call.1} parent=0
    #allocation2 [shape = 'u8[1179648]{0}', space=vmem, size = 0x120000, scoped, tag = 'input window, operand 0, single buffered']
    #allocation3 [shape = 's32[1]{0}', space=sflag, size = 0x4, scoped, tag = 'scoped memory for tpu_custom_call.1']
    #allocation4 [shape = 's32[1]{0}', space=sflag, size = 0x4, scoped, tag = 'scoped memory for tpu_custom_call.1']
    #allocation5 [shape = 'u8[20480]{0}', space=vmem, size = 0x5000, scoped, tag = 'input window, operand 1, single buffered']
    #allocation6 [shape = 's32[1]{0}', space=sflag, size = 0x4, scoped, tag = 'scoped memory for tpu_custom_call.1']
    #allocation7 [shape = 'u8[16384]{0}', space=vmem, size = 0x4000, scoped, tag = 'output window, operand 0, single buffered']
    %8 = vsyncpa [#allocation3], 0
    %9 = vsyncpa [#allocation6], 0
    %10 = vsyncpa [#allocation4], 0
    // Predicated region
    $region2: #{tpu_custom_call.1} parent=1 // pred_check
      _
    $region3: #{tpu_custom_call.1} parent=1 // pred_check_branch
      %12 = sbr.rel (0) target = $region5
    $region4: #{tpu_custom_call.1} parent=1 // pred_region
      %s14 = ssub.s32 36864, 36864
      %15 = vsyncadd [#allocation3], %s14
      %s16 = sshll.u32 [#allocation2], 4
      %s17 = int_to_ptr.vmem [resolvable:$true] %s16
      %22 = dma.hbm_to_vmem [thread:$0]  %s0, 36864, %s17, [#allocation3], 256, 256, 16
    $region5: #{tpu_custom_call.1} parent=1 // pred_fallthru
      _
    // Predicated region
    $region6: #{tpu_custom_call.1} parent=1 // pred_check
      _
    $region7: #{tpu_custom_call.1} parent=1 // pred_check_branch
      %24 = sbr.rel (0) target = $region9
    $region8: #{tpu_custom_call.1} parent=1 // pred_region
      %s26 = ssub.s32 640, 640
      %27 = vsyncadd [#allocation6], %s26
      %s29 = sshll.u32 [#allocation5], 4
      %s30 = int_to_ptr.vmem [resolvable:$true] %s29
      %32 = dma.hbm_to_vmem [thread:$0]  %s1, 640, %s30, [#allocation6]
    $region9: #{tpu_custom_call.1} parent=1 // pred_fallthru
      _
    // Predicated region
    $region10: #{tpu_custom_call.1} parent=1 // pred_check
      _
    $region11: #{tpu_custom_call.1} parent=1 // pred_check_branch
      %34 = sbr.rel (0) target = $region13
    $region12: #{tpu_custom_call.1} parent=1 // pred_region
      _
    $region13: #{tpu_custom_call.1} parent=1 // pred_fallthru
      _
    // Predicated region
    $region14: #{tpu_custom_call.1} parent=1 // pred_check
      _
    $region15: #{tpu_custom_call.1} parent=1 // pred_check_branch
      %36 = sbr.rel (0) target = $region17
    $region16: #{tpu_custom_call.1} parent=1 // pred_region
      %37 = dma.done [#allocation3], 36864
    $region17: #{tpu_custom_call.1} parent=1 // pred_fallthru
      _
    // Predicated region
    $region18: #{tpu_custom_call.1} parent=1 // pred_check
      _
    $region19: #{tpu_custom_call.1} parent=1 // pred_check_branch
      %39 = sbr.rel (0) target = $region21
    $region20: #{tpu_custom_call.1} parent=1 // pred_region
      %40 = dma.done [#allocation6], 640
    $region21: #{tpu_custom_call.1} parent=1 // pred_fallthru
      _
    %v41 = vld [vmem:[#allocation5] sm:$0xff]
    %v42 = vld [vmem:[#allocation5 + $0x8] sm:$0xff]
    %v43 = vld [vmem:[#allocation5 + $0x10] sm:$0xff]
    %v44 = vld [vmem:[#allocation5 + $0x18] sm:$0xff]
    %v45 = vld [vmem:[#allocation5 + $0x20] sm:$0xff]
    %v46 = vld [vmem:[%s2] sm:$0xff]
    %v47 = vld [vmem:[#allocation2] sm:$0xff]
    %v48 = vld [vmem:[#allocation2 + $0x8] sm:$0xff]
    %v49 = vld [vmem:[#allocation2 + $0x10] sm:$0xff]
    %v50 = vld [vmem:[#allocation2 + $0x18] sm:$0xff]
    %v51 = vld [vmem:[#allocation2 + $0x20] sm:$0xff]
    %v52 = vld [vmem:[#allocation2 + $0x28] sm:$0xff]
    %v53 = vld [vmem:[#allocation2 + $0x30] sm:$0xff]
    %v54 = vld [vmem:[#allocation2 + $0x38] sm:$0xff]
    %v55 = vld [vmem:[#allocation2 + $0x40] sm:$0xff]
    %v56 = vld [vmem:[#allocation2 + $0x48] sm:$0xff]
    %v57 = vld [vmem:[#allocation2 + $0x50] sm:$0xff]
    %v58 = vld [vmem:[#allocation2 + $0x58] sm:$0xff]
    %v59 = vld [vmem:[#allocation2 + $0x60] sm:$0xff]
    %v60 = vld [vmem:[#allocation2 + $0x68] sm:$0xff]
    %v61 = vld [vmem:[#allocation2 + $0x70] sm:$0xff]
    %v62 = vld [vmem:[#allocation2 + $0x78] sm:$0xff]
    %v63 = vld [vmem:[#allocation2 + $0x80] sm:$0xff]
    %v64 = vld [vmem:[#allocation2 + $0x88] sm:$0xff]
    %v65 = vld [vmem:[#allocation2 + $0x90] sm:$0xff]
    %v66 = vld [vmem:[#allocation2 + $0x98] sm:$0xff]
    %v67 = vld [vmem:[#allocation2 + $0xa0] sm:$0xff]
    %v68 = vld [vmem:[#allocation2 + $0xa8] sm:$0xff]
    %v69 = vld [vmem:[#allocation2 + $0xb0] sm:$0xff]
    %v70 = vld [vmem:[#allocation2 + $0xb8] sm:$0xff]
    %v71 = vld [vmem:[#allocation2 + $0xc0] sm:$0xff]
    %v72 = vld [vmem:[#allocation2 + $0xc8] sm:$0xff]
    %v73 = vld [vmem:[#allocation2 + $0xd0] sm:$0xff]
    %v74 = vld [vmem:[#allocation2 + $0xd8] sm:$0xff]
    %v75 = vld [vmem:[#allocation2 + $0xe0] sm:$0xff]
    %v76 = vld [vmem:[#allocation2 + $0xe8] sm:$0xff]
    %v77 = vld [vmem:[#allocation2 + $0xf0] sm:$0xff]
    %v78 = vld [vmem:[#allocation2 + $0xf8] sm:$0xff]
    %v79 = vld [vmem:[#allocation2 + $0x100] sm:$0xff]
    %v80 = vld [vmem:[#allocation2 + $0x108] sm:$0xff]
    %v81 = vld [vmem:[#allocation2 + $0x110] sm:$0xff]
    %v82 = vld [vmem:[#allocation2 + $0x118] sm:$0xff]
    %v83 = vld [vmem:[#allocation2 + $0x120] sm:$0xff]
    %v84 = vld [vmem:[#allocation2 + $0x128] sm:$0xff]
    %v85 = vld [vmem:[#allocation2 + $0x130] sm:$0xff]
    %v86 = vld [vmem:[#allocation2 + $0x138] sm:$0xff]
    %v87 = vld [vmem:[#allocation2 + $0x140] sm:$0xff]
    %v88 = vld [vmem:[#allocation2 + $0x148] sm:$0xff]
    %v89 = vld [vmem:[#allocation2 + $0x150] sm:$0xff]
    %v90 = vld [vmem:[#allocation2 + $0x158] sm:$0xff]
    %v91 = vld [vmem:[#allocation2 + $0x160] sm:$0xff]
    %v92 = vld [vmem:[#allocation2 + $0x168] sm:$0xff]
    %v93 = vld [vmem:[#allocation2 + $0x170] sm:$0xff]
    %v94 = vld [vmem:[#allocation2 + $0x178] sm:$0xff]
    %v95 = vld [vmem:[#allocation2 + $0x180] sm:$0xff]
    %v96 = vld [vmem:[#allocation2 + $0x188] sm:$0xff]
    %v97 = vld [vmem:[#allocation2 + $0x190] sm:$0xff]
    %v98 = vld [vmem:[#allocation2 + $0x198] sm:$0xff]
    %v99 = vld [vmem:[#allocation2 + $0x1a0] sm:$0xff]
    %v100 = vld [vmem:[#allocation2 + $0x1a8] sm:$0xff]
    %v101 = vld [vmem:[#allocation2 + $0x1b0] sm:$0xff]
    %v102 = vld [vmem:[#allocation2 + $0x1b8] sm:$0xff]
    %v103 = vld [vmem:[#allocation2 + $0x1c0] sm:$0xff]
    %v104 = vld [vmem:[#allocation2 + $0x1c8] sm:$0xff]
    %v105 = vld [vmem:[#allocation2 + $0x1d0] sm:$0xff]
    %v106 = vld [vmem:[#allocation2 + $0x1d8] sm:$0xff]
    %v107 = vld [vmem:[#allocation2 + $0x1e0] sm:$0xff]
    %v108 = vld [vmem:[#allocation2 + $0x1e8] sm:$0xff]
    %v109 = vld [vmem:[#allocation2 + $0x1f0] sm:$0xff]
    %v110 = vld [vmem:[#allocation2 + $0x1f8] sm:$0xff]
    %v111 = vld [vmem:[#allocation2 + $0x200] sm:$0xff]
    %v112 = vld [vmem:[#allocation2 + $0x208] sm:$0xff]
    %v113 = vld [vmem:[#allocation2 + $0x210] sm:$0xff]
    %v114 = vld [vmem:[#allocation2 + $0x218] sm:$0xff]
    %v115 = vld [vmem:[#allocation2 + $0x220] sm:$0xff]
    %v116 = vld [vmem:[#allocation2 + $0x228] sm:$0xff]
    %v117 = vld [vmem:[#allocation2 + $0x230] sm:$0xff]
    %v118 = vld [vmem:[#allocation2 + $0x238] sm:$0xff]
    %v119 = vld [vmem:[#allocation2 + $0x240] sm:$0xff]
    %v120 = vld [vmem:[#allocation2 + $0x248] sm:$0xff]
    %v121 = vld [vmem:[#allocation2 + $0x250] sm:$0xff]
    %v122 = vld [vmem:[#allocation2 + $0x258] sm:$0xff]
    %v123 = vld [vmem:[#allocation2 + $0x260] sm:$0xff]
    %v124 = vld [vmem:[#allocation2 + $0x268] sm:$0xff]
    %v125 = vld [vmem:[#allocation2 + $0x270] sm:$0xff]
    %v126 = vld [vmem:[#allocation2 + $0x278] sm:$0xff]
    %v127 = vld [vmem:[#allocation2 + $0x280] sm:$0xff]
    %v128 = vld [vmem:[#allocation2 + $0x288] sm:$0xff]
    %v129 = vld [vmem:[#allocation2 + $0x290] sm:$0xff]
    %v130 = vld [vmem:[#allocation2 + $0x298] sm:$0xff]
    %v131 = vld [vmem:[#allocation2 + $0x2a0] sm:$0xff]
    %v132 = vld [vmem:[#allocation2 + $0x2a8] sm:$0xff]
    %v133 = vld [vmem:[#allocation2 + $0x2b0] sm:$0xff]
    %v134 = vld [vmem:[#allocation2 + $0x2b8] sm:$0xff]
    %v135 = vld [vmem:[#allocation2 + $0x2c0] sm:$0xff]
    %v136 = vld [vmem:[#allocation2 + $0x2c8] sm:$0xff]
    %v137 = vld [vmem:[#allocation2 + $0x2d0] sm:$0xff]
    %v138 = vld [vmem:[#allocation2 + $0x2d8] sm:$0xff]
    %v139 = vld [vmem:[#allocation2 + $0x2e0] sm:$0xff]
    %v140 = vld [vmem:[#allocation2 + $0x2e8] sm:$0xff]
    %v141 = vld [vmem:[#allocation2 + $0x2f0] sm:$0xff]
    %v142 = vld [vmem:[#allocation2 + $0x2f8] sm:$0xff]
    %v143 = vld [vmem:[#allocation2 + $0x300] sm:$0xff]
    %v144 = vld [vmem:[#allocation2 + $0x308] sm:$0xff]
    %v145 = vld [vmem:[#allocation2 + $0x310] sm:$0xff]
    %v146 = vld [vmem:[#allocation2 + $0x318] sm:$0xff]
    %v147 = vld [vmem:[#allocation2 + $0x320] sm:$0xff]
    %v148 = vld [vmem:[#allocation2 + $0x328] sm:$0xff]
    %v149 = vld [vmem:[#allocation2 + $0x330] sm:$0xff]
    %v150 = vld [vmem:[#allocation2 + $0x338] sm:$0xff]
    %v151 = vld [vmem:[#allocation2 + $0x340] sm:$0xff]
    %v152 = vld [vmem:[#allocation2 + $0x348] sm:$0xff]
    %v153 = vld [vmem:[#allocation2 + $0x350] sm:$0xff]
    %v154 = vld [vmem:[#allocation2 + $0x358] sm:$0xff]
    %v155 = vld [vmem:[#allocation2 + $0x360] sm:$0xff]
    %v156 = vld [vmem:[#allocation2 + $0x368] sm:$0xff]
    %v157 = vld [vmem:[#allocation2 + $0x370] sm:$0xff]
    %v158 = vld [vmem:[#allocation2 + $0x378] sm:$0xff]
    %v159 = vld [vmem:[#allocation2 + $0x380] sm:$0xff]
    %v160 = vld [vmem:[#allocation2 + $0x388] sm:$0xff]
    %v161 = vld [vmem:[#allocation2 + $0x390] sm:$0xff]
    %v162 = vld [vmem:[#allocation2 + $0x398] sm:$0xff]
    %v163 = vld [vmem:[#allocation2 + $0x3a0] sm:$0xff]
    %v164 = vld [vmem:[#allocation2 + $0x3a8] sm:$0xff]
    %v165 = vld [vmem:[#allocation2 + $0x3b0] sm:$0xff]
    %v166 = vld [vmem:[#allocation2 + $0x3b8] sm:$0xff]
    %v167 = vld [vmem:[#allocation2 + $0x3c0] sm:$0xff]
    %v168 = vld [vmem:[#allocation2 + $0x3c8] sm:$0xff]
    %v169 = vld [vmem:[#allocation2 + $0x3d0] sm:$0xff]
    %v170 = vld [vmem:[#allocation2 + $0x3d8] sm:$0xff]
    %v171 = vld [vmem:[#allocation2 + $0x3e0] sm:$0xff]
    %v172 = vld [vmem:[#allocation2 + $0x3e8] sm:$0xff]
    %v173 = vld [vmem:[#allocation2 + $0x3f0] sm:$0xff]
    %v174 = vld [vmem:[#allocation2 + $0x3f8] sm:$0xff]
    %v175 = vld [vmem:[#allocation2 + $0x400] sm:$0xff]
    %v176 = vld [vmem:[#allocation2 + $0x408] sm:$0xff]
    %v177 = vld [vmem:[#allocation2 + $0x410] sm:$0xff]
    %v178 = vld [vmem:[#allocation2 + $0x418] sm:$0xff]
    %v179 = vld [vmem:[#allocation2 + $0x420] sm:$0xff]
    %v180 = vld [vmem:[#allocation2 + $0x428] sm:$0xff]
    %v181 = vld [vmem:[#allocation2 + $0x430] sm:$0xff]
    %v182 = vld [vmem:[#allocation2 + $0x438] sm:$0xff]
    %v183 = vld [vmem:[#allocation2 + $0x440] sm:$0xff]
    %v184 = vld [vmem:[#allocation2 + $0x448] sm:$0xff]
    %v185 = vld [vmem:[#allocation2 + $0x450] sm:$0xff]
    %v186 = vld [vmem:[#allocation2 + $0x458] sm:$0xff]
    %v187 = vld [vmem:[#allocation2 + $0x460] sm:$0xff]
    %v188 = vld [vmem:[#allocation2 + $0x468] sm:$0xff]
    %v189 = vld [vmem:[#allocation2 + $0x470] sm:$0xff]
    %v190 = vld [vmem:[#allocation2 + $0x478] sm:$0xff]
    %192 = vset.pattern.permute.xlu0 0
    %193 = vperm.xlu0 %192, %v46
    %v194 = vpop.permute.xlu0 %193
    %vm196 = vcmask 523264
    %v198 = vsel %vm196, %v45, 0
    %v200 = vand.u32 %v78, 4294901760
    %201 = vmatprep.subr.mxu0 %v200
    %v202 = vand.u32 %v77, 4294901760
    %203 = vmatpush1.msra.mxu0 %v202
    %v204 = vand.u32 %v76, 4294901760
    %205 = vmatprep.subr.mxu0 %v204
    %v206 = vand.u32 %v75, 4294901760
    %207 = vmatpush1.msra.mxu0 %v206
    %v208 = vand.u32 %v74, 4294901760
    %209 = vmatprep.subr.mxu0 %v208
    %v210 = vand.u32 %v73, 4294901760
    %211 = vmatpush1.msra.mxu0 %v210
    %v212 = vand.u32 %v72, 4294901760
    %213 = vmatprep.subr.mxu0 %v212
    %v214 = vand.u32 %v71, 4294901760
    %215 = vmatpush1.msra.mxu0 %v214
    %v216 = vand.u32 %v70, 4294901760
    %217 = vmatprep.subr.mxu0 %v216
    %v218 = vand.u32 %v69, 4294901760
    %219 = vmatpush1.msra.mxu0 %v218
    %v220 = vand.u32 %v68, 4294901760
    %221 = vmatprep.subr.mxu0 %v220
    %v222 = vand.u32 %v67, 4294901760
    %223 = vmatpush1.msra.mxu0 %v222
    %v224 = vand.u32 %v66, 4294901760
    %225 = vmatprep.subr.mxu0 %v224
    %v226 = vand.u32 %v65, 4294901760
    %227 = vmatpush1.msra.mxu0 %v226
    %v228 = vand.u32 %v64, 4294901760
    %229 = vmatprep.subr.mxu0 %v228
    %v230 = vand.u32 %v63, 4294901760
    %231 = vmatpush1.msra.mxu0 %v230
    %v232 = vand.u32 %v62, 4294901760
    %233 = vmatprep.subr.mxu0 %v232
    %v234 = vand.u32 %v61, 4294901760
    %235 = vmatpush1.msra.mxu0 %v234
    %v236 = vand.u32 %v60, 4294901760
    %237 = vmatprep.subr.mxu0 %v236
    %v238 = vand.u32 %v59, 4294901760
    %239 = vmatpush1.msra.mxu0 %v238
    %v240 = vand.u32 %v58, 4294901760
    %241 = vmatprep.subr.mxu0 %v240
    %v242 = vand.u32 %v57, 4294901760
    %243 = vmatpush1.msra.mxu0 %v242
    %v244 = vand.u32 %v56, 4294901760
    %245 = vmatprep.subr.mxu0 %v244
    %v246 = vand.u32 %v55, 4294901760
    %247 = vmatpush1.msra.mxu0 %v246
    %v248 = vand.u32 %v54, 4294901760
    %249 = vmatprep.subr.mxu0 %v248
    %v250 = vand.u32 %v53, 4294901760
    %251 = vmatpush1.msra.mxu0 %v250
    %v252 = vand.u32 %v52, 4294901760
    %253 = vmatprep.subr.mxu0 %v252
    %v254 = vand.u32 %v51, 4294901760
    %255 = vmatpush1.msra.mxu0 %v254
    %v256 = vand.u32 %v50, 4294901760
    %257 = vmatprep.subr.mxu0 %v256
    %v258 = vand.u32 %v49, 4294901760
    %259 = vmatpush1.msra.mxu0 %v258
    %v260 = vand.u32 %v48, 4294901760
    %261 = vmatprep.subr.mxu0 %v260
    %v262 = vand.u32 %v47, 4294901760
    %263 = vmatpush1.msra.mxu0 %v262
    %v264 = vand.u32 %v110, 4294901760
    %265 = vmatprep.subr.mxu0 %v264
    %v266 = vand.u32 %v109, 4294901760
    %267 = vmatpush2.msra.mxu0 %v266
    %v268 = vand.u32 %v108, 4294901760
    %269 = vmatprep.subr.mxu0 %v268
    %v270 = vand.u32 %v107, 4294901760
    %271 = vmatpush2.msra.mxu0 %v270
    %v272 = vand.u32 %v106, 4294901760
    %273 = vmatprep.subr.mxu0 %v272
    %v274 = vand.u32 %v105, 4294901760
    %275 = vmatpush2.msra.mxu0 %v274
    %v276 = vand.u32 %v104, 4294901760
    %277 = vmatprep.subr.mxu0 %v276
    %v278 = vand.u32 %v103, 4294901760
    %279 = vmatpush2.msra.mxu0 %v278
    %v280 = vand.u32 %v102, 4294901760
    %281 = vmatprep.subr.mxu0 %v280
    %v282 = vand.u32 %v101, 4294901760
    %283 = vmatpush2.msra.mxu0 %v282
    %v284 = vand.u32 %v100, 4294901760
    %285 = vmatprep.subr.mxu0 %v284
    %v286 = vand.u32 %v99, 4294901760
    %287 = vmatpush2.msra.mxu0 %v286
    %v288 = vand.u32 %v98, 4294901760
    %289 = vmatprep.subr.mxu0 %v288
    %v290 = vand.u32 %v97, 4294901760
    %291 = vmatpush2.msra.mxu0 %v290
    %v292 = vand.u32 %v96, 4294901760
    %293 = vmatprep.subr.mxu0 %v292
    %v294 = vand.u32 %v95, 4294901760
    %295 = vmatpush2.msra.mxu0 %v294
    %v296 = vand.u32 %v94, 4294901760
    %297 = vmatprep.subr.mxu0 %v296
    %v298 = vand.u32 %v93, 4294901760
    %299 = vmatpush2.msra.mxu0 %v298
    %v300 = vand.u32 %v92, 4294901760
    %301 = vmatprep.subr.mxu0 %v300
    %v302 = vand.u32 %v91, 4294901760
    %303 = vmatpush2.msra.mxu0 %v302
    %v304 = vand.u32 %v90, 4294901760
    %305 = vmatprep.subr.mxu0 %v304
    %v306 = vand.u32 %v89, 4294901760
    %307 = vmatpush2.msra.mxu0 %v306
    %v308 = vand.u32 %v88, 4294901760
    %309 = vmatprep.subr.mxu0 %v308
    %v310 = vand.u32 %v87, 4294901760
    %311 = vmatpush2.msra.mxu0 %v310
    %v312 = vand.u32 %v86, 4294901760
    %313 = vmatprep.subr.mxu0 %v312
    %v314 = vand.u32 %v85, 4294901760
    %315 = vmatpush2.msra.mxu0 %v314
    %v316 = vand.u32 %v84, 4294901760
    %317 = vmatprep.subr.mxu0 %v316
    %v318 = vand.u32 %v83, 4294901760
    %319 = vmatpush2.msra.mxu0 %v318
    %v320 = vand.u32 %v82, 4294901760
    %321 = vmatprep.subr.mxu0 %v320
    %v322 = vand.u32 %v81, 4294901760
    %323 = vmatpush2.msra.mxu0 %v322
    %v324 = vand.u32 %v80, 4294901760
    %325 = vmatprep.subr.mxu0 %v324
    %v326 = vand.u32 %v79, 4294901760
    %327 = vmatpush2.msra.mxu0 %v326
    %v328 = vand.u32 %v42, 4294901760
    %v329 = vsub.f32 %v42, %v328
    %v330 = vand.u32 %v329, 4294901760
    %v331 = vsub.f32 %v329, %v330
    %v332 = vand.u32 %v331, 4294901760
    %333 = vmatprep.mubr.f32.mxu0 %v332
    %v334 = vand.u32 %v41, 4294901760
    %v335 = vsub.f32 %v41, %v334
    %v336 = vand.u32 %v335, 4294901760
    %v337 = vsub.f32 %v335, %v336
    %v338 = vand.u32 %v337, 4294901760
    %339 = vmatmul.mubr.f32.gmra.mxu0 %v338
    %v340 = vpop.f32.mrf.mxu0
    %v341 = vadd.f32 %v194, %v340
    %v342 = vpop.f32.mrf.mxu0
    %v343 = vadd.f32 %v194, %v342
    %344 = vdwg.mxu0
    %v345 = vand.u32 %v78, 4294901760
    %v346 = vsub.f32 %v78, %v345
    %v347 = vand.u32 %v346, 4294901760
    %v348 = vsub.f32 %v346, %v347
    %v349 = vand.u32 %v348, 4294901760
    %350 = vmatprep.subr.mxu0 %v349
    %v351 = vand.u32 %v77, 4294901760
    %v352 = vsub.f32 %v77, %v351
    %v353 = vand.u32 %v352, 4294901760
    %v354 = vsub.f32 %v352, %v353
    %v355 = vand.u32 %v354, 4294901760
    %356 = vmatpush1.msra.mxu0 %v355
    %v357 = vand.u32 %v76, 4294901760
    %v358 = vsub.f32 %v76, %v357
    %v359 = vand.u32 %v358, 4294901760
    %v360 = vsub.f32 %v358, %v359
    %v361 = vand.u32 %v360, 4294901760
    %362 = vmatprep.subr.mxu0 %v361
    %v363 = vand.u32 %v75, 4294901760
    %v364 = vsub.f32 %v75, %v363
    %v365 = vand.u32 %v364, 4294901760
    %v366 = vsub.f32 %v364, %v365
    %v367 = vand.u32 %v366, 4294901760
    %368 = vmatpush1.msra.mxu0 %v367
    %v369 = vand.u32 %v74, 4294901760
    %v370 = vsub.f32 %v74, %v369
    %v371 = vand.u32 %v370, 4294901760
    %v372 = vsub.f32 %v370, %v371
    %v373 = vand.u32 %v372, 4294901760
    %374 = vmatprep.subr.mxu0 %v373
    %v375 = vand.u32 %v73, 4294901760
    %v376 = vsub.f32 %v73, %v375
    %v377 = vand.u32 %v376, 4294901760
    %v378 = vsub.f32 %v376, %v377
    %v379 = vand.u32 %v378, 4294901760
    %380 = vmatpush1.msra.mxu0 %v379
    %v381 = vand.u32 %v72, 4294901760
    %v382 = vsub.f32 %v72, %v381
    %v383 = vand.u32 %v382, 4294901760
    %v384 = vsub.f32 %v382, %v383
    %v385 = vand.u32 %v384, 4294901760
    %386 = vmatprep.subr.mxu0 %v385
    %v387 = vand.u32 %v71, 4294901760
    %v388 = vsub.f32 %v71, %v387
    %v389 = vand.u32 %v388, 4294901760
    %v390 = vsub.f32 %v388, %v389
    %v391 = vand.u32 %v390, 4294901760
    %392 = vmatpush1.msra.mxu0 %v391
    %v393 = vand.u32 %v70, 4294901760
    %v394 = vsub.f32 %v70, %v393
    %v395 = vand.u32 %v394, 4294901760
    %v396 = vsub.f32 %v394, %v395
    %v397 = vand.u32 %v396, 4294901760
    %398 = vmatprep.subr.mxu0 %v397
    %v399 = vand.u32 %v69, 4294901760
    %v400 = vsub.f32 %v69, %v399
    %v401 = vand.u32 %v400, 4294901760
    %v402 = vsub.f32 %v400, %v401
    %v403 = vand.u32 %v402, 4294901760
    %404 = vmatpush1.msra.mxu0 %v403
    %v405 = vand.u32 %v68, 4294901760
    %v406 = vsub.f32 %v68, %v405
    %v407 = vand.u32 %v406, 4294901760
    %v408 = vsub.f32 %v406, %v407
    %v409 = vand.u32 %v408, 4294901760
    %410 = vmatprep.subr.mxu0 %v409
    %v411 = vand.u32 %v67, 4294901760
    %v412 = vsub.f32 %v67, %v411
    %v413 = vand.u32 %v412, 4294901760
    %v414 = vsub.f32 %v412, %v413
    %v415 = vand.u32 %v414, 4294901760
    %416 = vmatpush1.msra.mxu0 %v415
    %v417 = vand.u32 %v66, 4294901760
    %v418 = vsub.f32 %v66, %v417
    %v419 = vand.u32 %v418, 4294901760
    %v420 = vsub.f32 %v418, %v419
    %v421 = vand.u32 %v420, 4294901760
    %422 = vmatprep.subr.mxu0 %v421
    %v423 = vand.u32 %v65, 4294901760
    %v424 = vsub.f32 %v65, %v423
    %v425 = vand.u32 %v424, 4294901760
    %v426 = vsub.f32 %v424, %v425
    %v427 = vand.u32 %v426, 4294901760
    %428 = vmatpush1.msra.mxu0 %v427
    %v429 = vand.u32 %v64, 4294901760
    %v430 = vsub.f32 %v64, %v429
    %v431 = vand.u32 %v430, 4294901760
    %v432 = vsub.f32 %v430, %v431
    %v433 = vand.u32 %v432, 4294901760
    %434 = vmatprep.subr.mxu0 %v433
    %v435 = vand.u32 %v63, 4294901760
    %v436 = vsub.f32 %v63, %v435
    %v437 = vand.u32 %v436, 4294901760
    %v438 = vsub.f32 %v436, %v437
    %v439 = vand.u32 %v438, 4294901760
    %440 = vmatpush1.msra.mxu0 %v439
    %v441 = vand.u32 %v62, 4294901760
    %v442 = vsub.f32 %v62, %v441
    %v443 = vand.u32 %v442, 4294901760
    %v444 = vsub.f32 %v442, %v443
    %v445 = vand.u32 %v444, 4294901760
    %446 = vmatprep.subr.mxu0 %v445
    %v447 = vand.u32 %v61, 4294901760
    %v448 = vsub.f32 %v61, %v447
    %v449 = vand.u32 %v448, 4294901760
    %v450 = vsub.f32 %v448, %v449
    %v451 = vand.u32 %v450, 4294901760
    %452 = vmatpush1.msra.mxu0 %v451
    %v453 = vand.u32 %v60, 4294901760
    %v454 = vsub.f32 %v60, %v453
    %v455 = vand.u32 %v454, 4294901760
    %v456 = vsub.f32 %v454, %v455
    %v457 = vand.u32 %v456, 4294901760
    %458 = vmatprep.subr.mxu0 %v457
    %v459 = vand.u32 %v59, 4294901760
    %v460 = vsub.f32 %v59, %v459
    %v461 = vand.u32 %v460, 4294901760
    %v462 = vsub.f32 %v460, %v461
    %v463 = vand.u32 %v462, 4294901760
    %464 = vmatpush1.msra.mxu0 %v463
    %v465 = vand.u32 %v58, 4294901760
    %v466 = vsub.f32 %v58, %v465
    %v467 = vand.u32 %v466, 4294901760
    %v468 = vsub.f32 %v466, %v467
    %v469 = vand.u32 %v468, 4294901760
    %470 = vmatprep.subr.mxu0 %v469
    %v471 = vand.u32 %v57, 4294901760
    %v472 = vsub.f32 %v57, %v471
    %v473 = vand.u32 %v472, 4294901760
    %v474 = vsub.f32 %v472, %v473
    %v475 = vand.u32 %v474, 4294901760
    %476 = vmatpush1.msra.mxu0 %v475
    %v477 = vand.u32 %v56, 4294901760
    %v478 = vsub.f32 %v56, %v477
    %v479 = vand.u32 %v478, 4294901760
    %v480 = vsub.f32 %v478, %v479
    %v481 = vand.u32 %v480, 4294901760
    %482 = vmatprep.subr.mxu0 %v481
    %v483 = vand.u32 %v55, 4294901760
    %v484 = vsub.f32 %v55, %v483
    %v485 = vand.u32 %v484, 4294901760
    %v486 = vsub.f32 %v484, %v485
    %v487 = vand.u32 %v486, 4294901760
    %488 = vmatpush1.msra.mxu0 %v487
    %v489 = vand.u32 %v54, 4294901760
    %v490 = vsub.f32 %v54, %v489
    %v491 = vand.u32 %v490, 4294901760
    %v492 = vsub.f32 %v490, %v491
    %v493 = vand.u32 %v492, 4294901760
    %494 = vmatprep.subr.mxu0 %v493
    %v495 = vand.u32 %v53, 4294901760
    %v496 = vsub.f32 %v53, %v495
    %v497 = vand.u32 %v496, 4294901760
    %v498 = vsub.f32 %v496, %v497
    %v499 = vand.u32 %v498, 4294901760
    %500 = vmatpush1.msra.mxu0 %v499
    %v501 = vand.u32 %v52, 4294901760
    %v502 = vsub.f32 %v52, %v501
    %v503 = vand.u32 %v502, 4294901760
    %v504 = vsub.f32 %v502, %v503
    %v505 = vand.u32 %v504, 4294901760
    %506 = vmatprep.subr.mxu0 %v505
    %v507 = vand.u32 %v51, 4294901760
    %v508 = vsub.f32 %v51, %v507
    %v509 = vand.u32 %v508, 4294901760
    %v510 = vsub.f32 %v508, %v509
    %v511 = vand.u32 %v510, 4294901760
    %512 = vmatpush1.msra.mxu0 %v511
    %v513 = vand.u32 %v50, 4294901760
    %v514 = vsub.f32 %v50, %v513
    %v515 = vand.u32 %v514, 4294901760
    %v516 = vsub.f32 %v514, %v515
    %v517 = vand.u32 %v516, 4294901760
    %518 = vmatprep.subr.mxu0 %v517
    %v519 = vand.u32 %v49, 4294901760
    %v520 = vsub.f32 %v49, %v519
    %v521 = vand.u32 %v520, 4294901760
    %v522 = vsub.f32 %v520, %v521
    %v523 = vand.u32 %v522, 4294901760
    %524 = vmatpush1.msra.mxu0 %v523
    %v525 = vand.u32 %v48, 4294901760
    %v526 = vsub.f32 %v48, %v525
    %v527 = vand.u32 %v526, 4294901760
    %v528 = vsub.f32 %v526, %v527
    %v529 = vand.u32 %v528, 4294901760
    %530 = vmatprep.subr.mxu0 %v529
    %v531 = vand.u32 %v47, 4294901760
    %v532 = vsub.f32 %v47, %v531
    %v533 = vand.u32 %v532, 4294901760
    %v534 = vsub.f32 %v532, %v533
    %v535 = vand.u32 %v534, 4294901760
    %536 = vmatpush1.msra.mxu0 %v535
    %v537 = vand.u32 %v110, 4294901760
    %v538 = vsub.f32 %v110, %v537
    %v539 = vand.u32 %v538, 4294901760
    %v540 = vsub.f32 %v538, %v539
    %v541 = vand.u32 %v540, 4294901760
    %542 = vmatprep.subr.mxu0 %v541
    %v543 = vand.u32 %v109, 4294901760
    %v544 = vsub.f32 %v109, %v543
    %v545 = vand.u32 %v544, 4294901760
    %v546 = vsub.f32 %v544, %v545
    %v547 = vand.u32 %v546, 4294901760
    %548 = vmatpush2.msra.mxu0 %v547
    %v549 = vand.u32 %v108, 4294901760
    %v550 = vsub.f32 %v108, %v549
    %v551 = vand.u32 %v550, 4294901760
    %v552 = vsub.f32 %v550, %v551
    %v553 = vand.u32 %v552, 4294901760
    %554 = vmatprep.subr.mxu0 %v553
    %v555 = vand.u32 %v107, 4294901760
    %v556 = vsub.f32 %v107, %v555
    %v557 = vand.u32 %v556, 4294901760
    %v558 = vsub.f32 %v556, %v557
    %v559 = vand.u32 %v558, 4294901760
    %560 = vmatpush2.msra.mxu0 %v559
    %v561 = vand.u32 %v106, 4294901760
    %v562 = vsub.f32 %v106, %v561
    %v563 = vand.u32 %v562, 4294901760
    %v564 = vsub.f32 %v562, %v563
    %v565 = vand.u32 %v564, 4294901760
    %566 = vmatprep.subr.mxu0 %v565
    %v567 = vand.u32 %v105, 4294901760
    %v568 = vsub.f32 %v105, %v567
    %v569 = vand.u32 %v568, 4294901760
    %v570 = vsub.f32 %v568, %v569
    %v571 = vand.u32 %v570, 4294901760
    %572 = vmatpush2.msra.mxu0 %v571
    %v573 = vand.u32 %v104, 4294901760
    %v574 = vsub.f32 %v104, %v573
    %v575 = vand.u32 %v574, 4294901760
    %v576 = vsub.f32 %v574, %v575
    %v577 = vand.u32 %v576, 4294901760
    %578 = vmatprep.subr.mxu0 %v577
    %v579 = vand.u32 %v103, 4294901760
    %v580 = vsub.f32 %v103, %v579
    %v581 = vand.u32 %v580, 4294901760
    %v582 = vsub.f32 %v580, %v581
    %v583 = vand.u32 %v582, 4294901760
    %584 = vmatpush2.msra.mxu0 %v583
    %v585 = vand.u32 %v102, 4294901760
    %v586 = vsub.f32 %v102, %v585
    %v587 = vand.u32 %v586, 4294901760
    %v588 = vsub.f32 %v586, %v587
    %v589 = vand.u32 %v588, 4294901760
    %590 = vmatprep.subr.mxu0 %v589
    %v591 = vand.u32 %v101, 4294901760
    %v592 = vsub.f32 %v101, %v591
    %v593 = vand.u32 %v592, 4294901760
    %v594 = vsub.f32 %v592, %v593
    %v595 = vand.u32 %v594, 4294901760
    %596 = vmatpush2.msra.mxu0 %v595
    %v597 = vand.u32 %v100, 4294901760
    %v598 = vsub.f32 %v100, %v597
    %v599 = vand.u32 %v598, 4294901760
    %v600 = vsub.f32 %v598, %v599
    %v601 = vand.u32 %v600, 4294901760
    %602 = vmatprep.subr.mxu0 %v601
    %v603 = vand.u32 %v99, 4294901760
    %v604 = vsub.f32 %v99, %v603
    %v605 = vand.u32 %v604, 4294901760
    %v606 = vsub.f32 %v604, %v605
    %v607 = vand.u32 %v606, 4294901760
    %608 = vmatpush2.msra.mxu0 %v607
    %v609 = vand.u32 %v98, 4294901760
    %v610 = vsub.f32 %v98, %v609
    %v611 = vand.u32 %v610, 4294901760
    %v612 = vsub.f32 %v610, %v611
    %v613 = vand.u32 %v612, 4294901760
    %614 = vmatprep.subr.mxu0 %v613
    %v615 = vand.u32 %v97, 4294901760
    %v616 = vsub.f32 %v97, %v615
    %v617 = vand.u32 %v616, 4294901760
    %v618 = vsub.f32 %v616, %v617
    %v619 = vand.u32 %v618, 4294901760
    %620 = vmatpush2.msra.mxu0 %v619
    %v621 = vand.u32 %v96, 4294901760
    %v622 = vsub.f32 %v96, %v621
    %v623 = vand.u32 %v622, 4294901760
    %v624 = vsub.f32 %v622, %v623
    %v625 = vand.u32 %v624, 4294901760
    %626 = vmatprep.subr.mxu0 %v625
    %v627 = vand.u32 %v95, 4294901760
    %v628 = vsub.f32 %v95, %v627
    %v629 = vand.u32 %v628, 4294901760
    %v630 = vsub.f32 %v628, %v629
    %v631 = vand.u32 %v630, 4294901760
    %632 = vmatpush2.msra.mxu0 %v631
    %v633 = vand.u32 %v94, 4294901760
    %v634 = vsub.f32 %v94, %v633
    %v635 = vand.u32 %v634, 4294901760
    %v636 = vsub.f32 %v634, %v635
    %v637 = vand.u32 %v636, 4294901760
    %638 = vmatprep.subr.mxu0 %v637
    %v639 = vand.u32 %v93, 4294901760
    %v640 = vsub.f32 %v93, %v639
    %v641 = vand.u32 %v640, 4294901760
    %v642 = vsub.f32 %v640, %v641
    %v643 = vand.u32 %v642, 4294901760
    %644 = vmatpush2.msra.mxu0 %v643
    %v645 = vand.u32 %v92, 4294901760
    %v646 = vsub.f32 %v92, %v645
    %v647 = vand.u32 %v646, 4294901760
    %v648 = vsub.f32 %v646, %v647
    %v649 = vand.u32 %v648, 4294901760
    %650 = vmatprep.subr.mxu0 %v649
    %v651 = vand.u32 %v91, 4294901760
    %v652 = vsub.f32 %v91, %v651
    %v653 = vand.u32 %v652, 4294901760
    %v654 = vsub.f32 %v652, %v653
    %v655 = vand.u32 %v654, 4294901760
    %656 = vmatpush2.msra.mxu0 %v655
    %v657 = vand.u32 %v90, 4294901760
    %v658 = vsub.f32 %v90, %v657
    %v659 = vand.u32 %v658, 4294901760
    %v660 = vsub.f32 %v658, %v659
    %v661 = vand.u32 %v660, 4294901760
    %662 = vmatprep.subr.mxu0 %v661
    %v663 = vand.u32 %v89, 4294901760
    %v664 = vsub.f32 %v89, %v663
    %v665 = vand.u32 %v664, 4294901760
    %v666 = vsub.f32 %v664, %v665
    %v667 = vand.u32 %v666, 4294901760
    %668 = vmatpush2.msra.mxu0 %v667
    %v669 = vand.u32 %v88, 4294901760
    %v670 = vsub.f32 %v88, %v669
    %v671 = vand.u32 %v670, 4294901760
    %v672 = vsub.f32 %v670, %v671
    %v673 = vand.u32 %v672, 4294901760
    %674 = vmatprep.subr.mxu0 %v673
    %v675 = vand.u32 %v87, 4294901760
    %v676 = vsub.f32 %v87, %v675
    %v677 = vand.u32 %v676, 4294901760
    %v678 = vsub.f32 %v676, %v677
    %v679 = vand.u32 %v678, 4294901760
    %680 = vmatpush2.msra.mxu0 %v679
    %v681 = vand.u32 %v86, 4294901760
    %v682 = vsub.f32 %v86, %v681
    %v683 = vand.u32 %v682, 4294901760
    %v684 = vsub.f32 %v682, %v683
    %v685 = vand.u32 %v684, 4294901760
    %686 = vmatprep.subr.mxu0 %v685
    %v687 = vand.u32 %v85, 4294901760
    %v688 = vsub.f32 %v85, %v687
    %v689 = vand.u32 %v688, 4294901760
    %v690 = vsub.f32 %v688, %v689
    %v691 = vand.u32 %v690, 4294901760
    %692 = vmatpush2.msra.mxu0 %v691
    %v693 = vand.u32 %v84, 4294901760
    %v694 = vsub.f32 %v84, %v693
    %v695 = vand.u32 %v694, 4294901760
    %v696 = vsub.f32 %v694, %v695
    %v697 = vand.u32 %v696, 4294901760
    %698 = vmatprep.subr.mxu0 %v697
    %v699 = vand.u32 %v83, 4294901760
    %v700 = vsub.f32 %v83, %v699
    %v701 = vand.u32 %v700, 4294901760
    %v702 = vsub.f32 %v700, %v701
    %v703 = vand.u32 %v702, 4294901760
    %704 = vmatpush2.msra.mxu0 %v703
    %v705 = vand.u32 %v82, 4294901760
    %v706 = vsub.f32 %v82, %v705
    %v707 = vand.u32 %v706, 4294901760
    %v708 = vsub.f32 %v706, %v707
    %v709 = vand.u32 %v708, 4294901760
    %710 = vmatprep.subr.mxu0 %v709
    %v711 = vand.u32 %v81, 4294901760
    %v712 = vsub.f32 %v81, %v711
    %v713 = vand.u32 %v712, 4294901760
    %v714 = vsub.f32 %v712, %v713
    %v715 = vand.u32 %v714, 4294901760
    %716 = vmatpush2.msra.mxu0 %v715
    %v717 = vand.u32 %v80, 4294901760
    %v718 = vsub.f32 %v80, %v717
    %v719 = vand.u32 %v718, 4294901760
    %v720 = vsub.f32 %v718, %v719
    %v721 = vand.u32 %v720, 4294901760
    %722 = vmatprep.subr.mxu0 %v721
    %v723 = vand.u32 %v79, 4294901760
    %v724 = vsub.f32 %v79, %v723
    %v725 = vand.u32 %v724, 4294901760
    %v726 = vsub.f32 %v724, %v725
    %v727 = vand.u32 %v726, 4294901760
    %728 = vmatpush2.msra.mxu0 %v727
    %v729 = vand.u32 %v42, 4294901760
    %730 = vmatprep.mubr.f32.mxu0 %v729
    %v731 = vand.u32 %v41, 4294901760
    %732 = vmatmul.mubr.f32.gmra.mxu0 %v731
    %v733 = vpop.f32.mrf.mxu0
    %v734 = vadd.f32 %v341, %v733
    %v735 = vpop.f32.mrf.mxu0
    %v736 = vadd.f32 %v343, %v735
    %737 = vdwg.mxu0
    %v738 = vand.u32 %v78, 4294901760
    %v739 = vsub.f32 %v78, %v738
    %740 = vmatprep.subr.mxu0 %v739
    %v741 = vand.u32 %v77, 4294901760
    %v742 = vsub.f32 %v77, %v741
    %743 = vmatpush1.msra.mxu0 %v742
    %v744 = vand.u32 %v76, 4294901760
    %v745 = vsub.f32 %v76, %v744
    %746 = vmatprep.subr.mxu0 %v745
    %v747 = vand.u32 %v75, 4294901760
    %v748 = vsub.f32 %v75, %v747
    %749 = vmatpush1.msra.mxu0 %v748
    %v750 = vand.u32 %v74, 4294901760
    %v751 = vsub.f32 %v74, %v750
    %752 = vmatprep.subr.mxu0 %v751
    %v753 = vand.u32 %v73, 4294901760
    %v754 = vsub.f32 %v73, %v753
    %755 = vmatpush1.msra.mxu0 %v754
    %v756 = vand.u32 %v72, 4294901760
    %v757 = vsub.f32 %v72, %v756
    %758 = vmatprep.subr.mxu0 %v757
    %v759 = vand.u32 %v71, 4294901760
    %v760 = vsub.f32 %v71, %v759
    %761 = vmatpush1.msra.mxu0 %v760
    %v762 = vand.u32 %v70, 4294901760
    %v763 = vsub.f32 %v70, %v762
    %764 = vmatprep.subr.mxu0 %v763
    %v765 = vand.u32 %v69, 4294901760
    %v766 = vsub.f32 %v69, %v765
    %767 = vmatpush1.msra.mxu0 %v766
    %v768 = vand.u32 %v68, 4294901760
    %v769 = vsub.f32 %v68, %v768
    %770 = vmatprep.subr.mxu0 %v769
    %v771 = vand.u32 %v67, 4294901760
    %v772 = vsub.f32 %v67, %v771
    %773 = vmatpush1.msra.mxu0 %v772
    %v774 = vand.u32 %v66, 4294901760
    %v775 = vsub.f32 %v66, %v774
    %776 = vmatprep.subr.mxu0 %v775
    %v777 = vand.u32 %v65, 4294901760
    %v778 = vsub.f32 %v65, %v777
    %779 = vmatpush1.msra.mxu0 %v778
    %v780 = vand.u32 %v64, 4294901760
    %v781 = vsub.f32 %v64, %v780
    %782 = vmatprep.subr.mxu0 %v781
    %v783 = vand.u32 %v63, 4294901760
    %v784 = vsub.f32 %v63, %v783
    %785 = vmatpush1.msra.mxu0 %v784
    %v786 = vand.u32 %v62, 4294901760
    %v787 = vsub.f32 %v62, %v786
    %788 = vmatprep.subr.mxu0 %v787
    %v789 = vand.u32 %v61, 4294901760
    %v790 = vsub.f32 %v61, %v789
    %791 = vmatpush1.msra.mxu0 %v790
    %v792 = vand.u32 %v60, 4294901760
    %v793 = vsub.f32 %v60, %v792
    %794 = vmatprep.subr.mxu0 %v793
    %v795 = vand.u32 %v59, 4294901760
    %v796 = vsub.f32 %v59, %v795
    %797 = vmatpush1.msra.mxu0 %v796
    %v798 = vand.u32 %v58, 4294901760
    %v799 = vsub.f32 %v58, %v798
    %800 = vmatprep.subr.mxu0 %v799
    %v801 = vand.u32 %v57, 4294901760
    %v802 = vsub.f32 %v57, %v801
    %803 = vmatpush1.msra.mxu0 %v802
    %v804 = vand.u32 %v56, 4294901760
    %v805 = vsub.f32 %v56, %v804
    %806 = vmatprep.subr.mxu0 %v805
    %v807 = vand.u32 %v55, 4294901760
    %v808 = vsub.f32 %v55, %v807
    %809 = vmatpush1.msra.mxu0 %v808
    %v810 = vand.u32 %v54, 4294901760
    %v811 = vsub.f32 %v54, %v810
    %812 = vmatprep.subr.mxu0 %v811
    %v813 = vand.u32 %v53, 4294901760
    %v814 = vsub.f32 %v53, %v813
    %815 = vmatpush1.msra.mxu0 %v814
    %v816 = vand.u32 %v52, 4294901760
    %v817 = vsub.f32 %v52, %v816
    %818 = vmatprep.subr.mxu0 %v817
    %v819 = vand.u32 %v51, 4294901760
    %v820 = vsub.f32 %v51, %v819
    %821 = vmatpush1.msra.mxu0 %v820
    %v822 = vand.u32 %v50, 4294901760
    %v823 = vsub.f32 %v50, %v822
    %824 = vmatprep.subr.mxu0 %v823
    %v825 = vand.u32 %v49, 4294901760
    %v826 = vsub.f32 %v49, %v825
    %827 = vmatpush1.msra.mxu0 %v826
    %v828 = vand.u32 %v48, 4294901760
    %v829 = vsub.f32 %v48, %v828
    %830 = vmatprep.subr.mxu0 %v829
    %v831 = vand.u32 %v47, 4294901760
    %v832 = vsub.f32 %v47, %v831
    %833 = vmatpush1.msra.mxu0 %v832
    %v834 = vand.u32 %v110, 4294901760
    %v835 = vsub.f32 %v110, %v834
    %836 = vmatprep.subr.mxu0 %v835
    %v837 = vand.u32 %v109, 4294901760
    %v838 = vsub.f32 %v109, %v837
    %839 = vmatpush2.msra.mxu0 %v838
    %v840 = vand.u32 %v108, 4294901760
    %v841 = vsub.f32 %v108, %v840
    %842 = vmatprep.subr.mxu0 %v841
    %v843 = vand.u32 %v107, 4294901760
    %v844 = vsub.f32 %v107, %v843
    %845 = vmatpush2.msra.mxu0 %v844
    %v846 = vand.u32 %v106, 4294901760
    %v847 = vsub.f32 %v106, %v846
    %848 = vmatprep.subr.mxu0 %v847
    %v849 = vand.u32 %v105, 4294901760
    %v850 = vsub.f32 %v105, %v849
    %851 = vmatpush2.msra.mxu0 %v850
    %v852 = vand.u32 %v104, 4294901760
    %v853 = vsub.f32 %v104, %v852
    %854 = vmatprep.subr.mxu0 %v853
    %v855 = vand.u32 %v103, 4294901760
    %v856 = vsub.f32 %v103, %v855
    %857 = vmatpush2.msra.mxu0 %v856
    %v858 = vand.u32 %v102, 4294901760
    %v859 = vsub.f32 %v102, %v858
    %860 = vmatprep.subr.mxu0 %v859
    %v861 = vand.u32 %v101, 4294901760
    %v862 = vsub.f32 %v101, %v861
    %863 = vmatpush2.msra.mxu0 %v862
    %v864 = vand.u32 %v100, 4294901760
    %v865 = vsub.f32 %v100, %v864
    %866 = vmatprep.subr.mxu0 %v865
    %v867 = vand.u32 %v99, 4294901760
    %v868 = vsub.f32 %v99, %v867
    %869 = vmatpush2.msra.mxu0 %v868
    %v870 = vand.u32 %v98, 4294901760
    %v871 = vsub.f32 %v98, %v870
    %872 = vmatprep.subr.mxu0 %v871
    %v873 = vand.u32 %v97, 4294901760
    %v874 = vsub.f32 %v97, %v873
    %875 = vmatpush2.msra.mxu0 %v874
    %v876 = vand.u32 %v96, 4294901760
    %v877 = vsub.f32 %v96, %v876
    %878 = vmatprep.subr.mxu0 %v877
    %v879 = vand.u32 %v95, 4294901760
    %v880 = vsub.f32 %v95, %v879
    %881 = vmatpush2.msra.mxu0 %v880
    %v882 = vand.u32 %v94, 4294901760
    %v883 = vsub.f32 %v94, %v882
    %884 = vmatprep.subr.mxu0 %v883
    %v885 = vand.u32 %v93, 4294901760
    %v886 = vsub.f32 %v93, %v885
    %887 = vmatpush2.msra.mxu0 %v886
    %v888 = vand.u32 %v92, 4294901760
    %v889 = vsub.f32 %v92, %v888
    %890 = vmatprep.subr.mxu0 %v889
    %v891 = vand.u32 %v91, 4294901760
    %v892 = vsub.f32 %v91, %v891
    %893 = vmatpush2.msra.mxu0 %v892
    %v894 = vand.u32 %v90, 4294901760
    %v895 = vsub.f32 %v90, %v894
    %896 = vmatprep.subr.mxu0 %v895
    %v897 = vand.u32 %v89, 4294901760
    %v898 = vsub.f32 %v89, %v897
    %899 = vmatpush2.msra.mxu0 %v898
    %v900 = vand.u32 %v88, 4294901760
    %v901 = vsub.f32 %v88, %v900
    %902 = vmatprep.subr.mxu0 %v901
    %v903 = vand.u32 %v87, 4294901760
    %v904 = vsub.f32 %v87, %v903
    %905 = vmatpush2.msra.mxu0 %v904
    %v906 = vand.u32 %v86, 4294901760
    %v907 = vsub.f32 %v86, %v906
    %908 = vmatprep.subr.mxu0 %v907
    %v909 = vand.u32 %v85, 4294901760
    %v910 = vsub.f32 %v85, %v909
    %911 = vmatpush2.msra.mxu0 %v910
    %v912 = vand.u32 %v84, 4294901760
    %v913 = vsub.f32 %v84, %v912
    %914 = vmatprep.subr.mxu0 %v913
    %v915 = vand.u32 %v83, 4294901760
    %v916 = vsub.f32 %v83, %v915
    %917 = vmatpush2.msra.mxu0 %v916
    %v918 = vand.u32 %v82, 4294901760
    %v919 = vsub.f32 %v82, %v918
    %920 = vmatprep.subr.mxu0 %v919
    %v921 = vand.u32 %v81, 4294901760
    %v922 = vsub.f32 %v81, %v921
    %923 = vmatpush2.msra.mxu0 %v922
    %v924 = vand.u32 %v80, 4294901760
    %v925 = vsub.f32 %v80, %v924
    %926 = vmatprep.subr.mxu0 %v925
    %v927 = vand.u32 %v79, 4294901760
    %v928 = vsub.f32 %v79, %v927
    %929 = vmatpush2.msra.mxu0 %v928
    %v930 = vand.u32 %v42, 4294901760
    %v931 = vsub.f32 %v42, %v930
    %932 = vmatprep.mubr.f32.mxu0 %v931
    %v933 = vand.u32 %v41, 4294901760
    %v934 = vsub.f32 %v41, %v933
    %935 = vmatmul.mubr.f32.gmra.mxu0 %v934
    %v936 = vpop.f32.mrf.mxu0
    %v937 = vadd.f32 %v734, %v936
    %v938 = vpop.f32.mrf.mxu0
    %v939 = vadd.f32 %v736, %v938
    %940 = vdwg.mxu0
    %v941 = vand.u32 %v78, 4294901760
    %942 = vmatprep.subr.mxu0 %v941
    %v943 = vand.u32 %v77, 4294901760
    %944 = vmatpush1.msra.mxu0 %v943
    %v945 = vand.u32 %v76, 4294901760
    %946 = vmatprep.subr.mxu0 %v945
    %v947 = vand.u32 %v75, 4294901760
    %948 = vmatpush1.msra.mxu0 %v947
    %v949 = vand.u32 %v74, 4294901760
    %950 = vmatprep.subr.mxu0 %v949
    %v951 = vand.u32 %v73, 4294901760
    %952 = vmatpush1.msra.mxu0 %v951
    %v953 = vand.u32 %v72, 4294901760
    %954 = vmatprep.subr.mxu0 %v953
    %v955 = vand.u32 %v71, 4294901760
    %956 = vmatpush1.msra.mxu0 %v955
    %v957 = vand.u32 %v70, 4294901760
    %958 = vmatprep.subr.mxu0 %v957
    %v959 = vand.u32 %v69, 4294901760
    %960 = vmatpush1.msra.mxu0 %v959
    %v961 = vand.u32 %v68, 4294901760
    %962 = vmatprep.subr.mxu0 %v961
    %v963 = vand.u32 %v67, 4294901760
    %964 = vmatpush1.msra.mxu0 %v963
    %v965 = vand.u32 %v66, 4294901760
    %966 = vmatprep.subr.mxu0 %v965
    %v967 = vand.u32 %v65, 4294901760
    %968 = vmatpush1.msra.mxu0 %v967
    %v969 = vand.u32 %v64, 4294901760
    %970 = vmatprep.subr.mxu0 %v969
    %v971 = vand.u32 %v63, 4294901760
    %972 = vmatpush1.msra.mxu0 %v971
    %v973 = vand.u32 %v62, 4294901760
    %974 = vmatprep.subr.mxu0 %v973
    %v975 = vand.u32 %v61, 4294901760
    %976 = vmatpush1.msra.mxu0 %v975
    %v977 = vand.u32 %v60, 4294901760
    %978 = vmatprep.subr.mxu0 %v977
    %v979 = vand.u32 %v59, 4294901760
    %980 = vmatpush1.msra.mxu0 %v979
    %v981 = vand.u32 %v58, 4294901760
    %982 = vmatprep.subr.mxu0 %v981
    %v983 = vand.u32 %v57, 4294901760
    %984 = vmatpush1.msra.mxu0 %v983
    %v985 = vand.u32 %v56, 4294901760
    %986 = vmatprep.subr.mxu0 %v985
    %v987 = vand.u32 %v55, 4294901760
    %988 = vmatpush1.msra.mxu0 %v987
    %v989 = vand.u32 %v54, 4294901760
    %990 = vmatprep.subr.mxu0 %v989
    %v991 = vand.u32 %v53, 4294901760
    %992 = vmatpush1.msra.mxu0 %v991
    %v993 = vand.u32 %v52, 4294901760
    %994 = vmatprep.subr.mxu0 %v993
    %v995 = vand.u32 %v51, 4294901760
    %996 = vmatpush1.msra.mxu0 %v995
    %v997 = vand.u32 %v50, 4294901760
    %998 = vmatprep.subr.mxu0 %v997
    %v999 = vand.u32 %v49, 4294901760
    %1000 = vmatpush1.msra.mxu0 %v999
    %v1001 = vand.u32 %v48, 4294901760
    %1002 = vmatprep.subr.mxu0 %v1001
    %v1003 = vand.u32 %v47, 4294901760
    %1004 = vmatpush1.msra.mxu0 %v1003
    %v1005 = vand.u32 %v110, 4294901760
    %1006 = vmatprep.subr.mxu0 %v1005
    %v1007 = vand.u32 %v109, 4294901760
    %1008 = vmatpush2.msra.mxu0 %v1007
    %v1009 = vand.u32 %v108, 4294901760
    %1010 = vmatprep.subr.mxu0 %v1009
    %v1011 = vand.u32 %v107, 4294901760
    %1012 = vmatpush2.msra.mxu0 %v1011
    %v1013 = vand.u32 %v106, 4294901760
    %1014 = vmatprep.subr.mxu0 %v1013
    %v1015 = vand.u32 %v105, 4294901760
    %1016 = vmatpush2.msra.mxu0 %v1015
    %v1017 = vand.u32 %v104, 4294901760
    %1018 = vmatprep.subr.mxu0 %v1017
    %v1019 = vand.u32 %v103, 4294901760
    %1020 = vmatpush2.msra.mxu0 %v1019
    %v1021 = vand.u32 %v102, 4294901760
    %1022 = vmatprep.subr.mxu0 %v1021
    %v1023 = vand.u32 %v101, 4294901760
    %1024 = vmatpush2.msra.mxu0 %v1023
    %v1025 = vand.u32 %v100, 4294901760
    %1026 = vmatprep.subr.mxu0 %v1025
    %v1027 = vand.u32 %v99, 4294901760
    %1028 = vmatpush2.msra.mxu0 %v1027
    %v1029 = vand.u32 %v98, 4294901760
    %1030 = vmatprep.subr.mxu0 %v1029
    %v1031 = vand.u32 %v97, 4294901760
    %1032 = vmatpush2.msra.mxu0 %v1031
    %v1033 = vand.u32 %v96, 4294901760
    %1034 = vmatprep.subr.mxu0 %v1033
    %v1035 = vand.u32 %v95, 4294901760
    %1036 = vmatpush2.msra.mxu0 %v1035
    %v1037 = vand.u32 %v94, 4294901760
    %1038 = vmatprep.subr.mxu0 %v1037
    %v1039 = vand.u32 %v93, 4294901760
    %1040 = vmatpush2.msra.mxu0 %v1039
    %v1041 = vand.u32 %v92, 4294901760
    %1042 = vmatprep.subr.mxu0 %v1041
    %v1043 = vand.u32 %v91, 4294901760
    %1044 = vmatpush2.msra.mxu0 %v1043
    %v1045 = vand.u32 %v90, 4294901760
    %1046 = vmatprep.subr.mxu0 %v1045
    %v1047 = vand.u32 %v89, 4294901760
    %1048 = vmatpush2.msra.mxu0 %v1047
    %v1049 = vand.u32 %v88, 4294901760
    %1050 = vmatprep.subr.mxu0 %v1049
    %v1051 = vand.u32 %v87, 4294901760
    %1052 = vmatpush2.msra.mxu0 %v1051
    %v1053 = vand.u32 %v86, 4294901760
    %1054 = vmatprep.subr.mxu0 %v1053
    %v1055 = vand.u32 %v85, 4294901760
    %1056 = vmatpush2.msra.mxu0 %v1055
    %v1057 = vand.u32 %v84, 4294901760
    %1058 = vmatprep.subr.mxu0 %v1057
    %v1059 = vand.u32 %v83, 4294901760
    %1060 = vmatpush2.msra.mxu0 %v1059
    %v1061 = vand.u32 %v82, 4294901760
    %1062 = vmatprep.subr.mxu0 %v1061
    %v1063 = vand.u32 %v81, 4294901760
    %1064 = vmatpush2.msra.mxu0 %v1063
    %v1065 = vand.u32 %v80, 4294901760
    %1066 = vmatprep.subr.mxu0 %v1065
    %v1067 = vand.u32 %v79, 4294901760
    %1068 = vmatpush2.msra.mxu0 %v1067
    %v1069 = vand.u32 %v42, 4294901760
    %v1070 = vsub.f32 %v42, %v1069
    %v1071 = vand.u32 %v1070, 4294901760
    %1072 = vmatprep.mubr.f32.mxu0 %v1071
    %v1073 = vand.u32 %v41, 4294901760
    %v1074 = vsub.f32 %v41, %v1073
    %v1075 = vand.u32 %v1074, 4294901760
    %1076 = vmatmul.mubr.f32.gmra.mxu0 %v1075
    %v1077 = vpop.f32.mrf.mxu0
    %v1078 = vadd.f32 %v937, %v1077
    %v1079 = vpop.f32.mrf.mxu0
    %v1080 = vadd.f32 %v939, %v1079
    %1081 = vdwg.mxu0
    %v1082 = vand.u32 %v78, 4294901760
    %v1083 = vsub.f32 %v78, %v1082
    %v1084 = vand.u32 %v1083, 4294901760
    %1085 = vmatprep.subr.mxu0 %v1084
    %v1086 = vand.u32 %v77, 4294901760
    %v1087 = vsub.f32 %v77, %v1086
    %v1088 = vand.u32 %v1087, 4294901760
    %1089 = vmatpush1.msra.mxu0 %v1088
    %v1090 = vand.u32 %v76, 4294901760
    %v1091 = vsub.f32 %v76, %v1090
    %v1092 = vand.u32 %v1091, 4294901760
    %1093 = vmatprep.subr.mxu0 %v1092
    %v1094 = vand.u32 %v75, 4294901760
    %v1095 = vsub.f32 %v75, %v1094
    %v1096 = vand.u32 %v1095, 4294901760
    %1097 = vmatpush1.msra.mxu0 %v1096
    %v1098 = vand.u32 %v74, 4294901760
    %v1099 = vsub.f32 %v74, %v1098
    %v1100 = vand.u32 %v1099, 4294901760
    %1101 = vmatprep.subr.mxu0 %v1100
    %v1102 = vand.u32 %v73, 4294901760
    %v1103 = vsub.f32 %v73, %v1102
    %v1104 = vand.u32 %v1103, 4294901760
    %1105 = vmatpush1.msra.mxu0 %v1104
    %v1106 = vand.u32 %v72, 4294901760
    %v1107 = vsub.f32 %v72, %v1106
    %v1108 = vand.u32 %v1107, 4294901760
    %1109 = vmatprep.subr.mxu0 %v1108
    %v1110 = vand.u32 %v71, 4294901760
    %v1111 = vsub.f32 %v71, %v1110
    %v1112 = vand.u32 %v1111, 4294901760
    %1113 = vmatpush1.msra.mxu0 %v1112
    %v1114 = vand.u32 %v70, 4294901760
    %v1115 = vsub.f32 %v70, %v1114
    %v1116 = vand.u32 %v1115, 4294901760
    %1117 = vmatprep.subr.mxu0 %v1116
    %v1118 = vand.u32 %v69, 4294901760
    %v1119 = vsub.f32 %v69, %v1118
    %v1120 = vand.u32 %v1119, 4294901760
    %1121 = vmatpush1.msra.mxu0 %v1120
    %v1122 = vand.u32 %v68, 4294901760
    %v1123 = vsub.f32 %v68, %v1122
    %v1124 = vand.u32 %v1123, 4294901760
    %1125 = vmatprep.subr.mxu0 %v1124
    %v1126 = vand.u32 %v67, 4294901760
    %v1127 = vsub.f32 %v67, %v1126
    %v1128 = vand.u32 %v1127, 4294901760
    %1129 = vmatpush1.msra.mxu0 %v1128
    %v1130 = vand.u32 %v66, 4294901760
    %v1131 = vsub.f32 %v66, %v1130
    %v1132 = vand.u32 %v1131, 4294901760
    %1133 = vmatprep.subr.mxu0 %v1132
    %v1134 = vand.u32 %v65, 4294901760
    %v1135 = vsub.f32 %v65, %v1134
    %v1136 = vand.u32 %v1135, 4294901760
    %1137 = vmatpush1.msra.mxu0 %v1136
    %v1138 = vand.u32 %v64, 4294901760
    %v1139 = vsub.f32 %v64, %v1138
    %v1140 = vand.u32 %v1139, 4294901760
    %1141 = vmatprep.subr.mxu0 %v1140
    %v1142 = vand.u32 %v63, 4294901760
    %v1143 = vsub.f32 %v63, %v1142
    %v1144 = vand.u32 %v1143, 4294901760
    %1145 = vmatpush1.msra.mxu0 %v1144
    %v1146 = vand.u32 %v62, 4294901760
    %v1147 = vsub.f32 %v62, %v1146
    %v1148 = vand.u32 %v1147, 4294901760
    %1149 = vmatprep.subr.mxu0 %v1148
    %v1150 = vand.u32 %v61, 4294901760
    %v1151 = vsub.f32 %v61, %v1150
    %v1152 = vand.u32 %v1151, 4294901760
    %1153 = vmatpush1.msra.mxu0 %v1152
    %v1154 = vand.u32 %v60, 4294901760
    %v1155 = vsub.f32 %v60, %v1154
    %v1156 = vand.u32 %v1155, 4294901760
    %1157 = vmatprep.subr.mxu0 %v1156
    %v1158 = vand.u32 %v59, 4294901760
    %v1159 = vsub.f32 %v59, %v1158
    %v1160 = vand.u32 %v1159, 4294901760
    %1161 = vmatpush1.msra.mxu0 %v1160
    %v1162 = vand.u32 %v58, 4294901760
    %v1163 = vsub.f32 %v58, %v1162
    %v1164 = vand.u32 %v1163, 4294901760
    %1165 = vmatprep.subr.mxu0 %v1164
    %v1166 = vand.u32 %v57, 4294901760
    %v1167 = vsub.f32 %v57, %v1166
    %v1168 = vand.u32 %v1167, 4294901760
    %1169 = vmatpush1.msra.mxu0 %v1168
    %v1170 = vand.u32 %v56, 4294901760
    %v1171 = vsub.f32 %v56, %v1170
    %v1172 = vand.u32 %v1171, 4294901760
    %1173 = vmatprep.subr.mxu0 %v1172
    %v1174 = vand.u32 %v55, 4294901760
    %v1175 = vsub.f32 %v55, %v1174
    %v1176 = vand.u32 %v1175, 4294901760
    %1177 = vmatpush1.msra.mxu0 %v1176
    %v1178 = vand.u32 %v54, 4294901760
    %v1179 = vsub.f32 %v54, %v1178
    %v1180 = vand.u32 %v1179, 4294901760
    %1181 = vmatprep.subr.mxu0 %v1180
    %v1182 = vand.u32 %v53, 4294901760
    %v1183 = vsub.f32 %v53, %v1182
    %v1184 = vand.u32 %v1183, 4294901760
    %1185 = vmatpush1.msra.mxu0 %v1184
    %v1186 = vand.u32 %v52, 4294901760
    %v1187 = vsub.f32 %v52, %v1186
    %v1188 = vand.u32 %v1187, 4294901760
    %1189 = vmatprep.subr.mxu0 %v1188
    %v1190 = vand.u32 %v51, 4294901760
    %v1191 = vsub.f32 %v51, %v1190
    %v1192 = vand.u32 %v1191, 4294901760
    %1193 = vmatpush1.msra.mxu0 %v1192
    %v1194 = vand.u32 %v50, 4294901760
    %v1195 = vsub.f32 %v50, %v1194
    %v1196 = vand.u32 %v1195, 4294901760
    %1197 = vmatprep.subr.mxu0 %v1196
    %v1198 = vand.u32 %v49, 4294901760
    %v1199 = vsub.f32 %v49, %v1198
    %v1200 = vand.u32 %v1199, 4294901760
    %1201 = vmatpush1.msra.mxu0 %v1200
    %v1202 = vand.u32 %v48, 4294901760
    %v1203 = vsub.f32 %v48, %v1202
    %v1204 = vand.u32 %v1203, 4294901760
    %1205 = vmatprep.subr.mxu0 %v1204
    %v1206 = vand.u32 %v47, 4294901760
    %v1207 = vsub.f32 %v47, %v1206
    %v1208 = vand.u32 %v1207, 4294901760
    %1209 = vmatpush1.msra.mxu0 %v1208
    %v1210 = vand.u32 %v110, 4294901760
    %v1211 = vsub.f32 %v110, %v1210
    %v1212 = vand.u32 %v1211, 4294901760
    %1213 = vmatprep.subr.mxu0 %v1212
    %v1214 = vand.u32 %v109, 4294901760
    %v1215 = vsub.f32 %v109, %v1214
    %v1216 = vand.u32 %v1215, 4294901760
    %1217 = vmatpush2.msra.mxu0 %v1216
    %v1218 = vand.u32 %v108, 4294901760
    %v1219 = vsub.f32 %v108, %v1218
    %v1220 = vand.u32 %v1219, 4294901760
    %1221 = vmatprep.subr.mxu0 %v1220
    %v1222 = vand.u32 %v107, 4294901760
    %v1223 = vsub.f32 %v107, %v1222
    %v1224 = vand.u32 %v1223, 4294901760
    %1225 = vmatpush2.msra.mxu0 %v1224
    %v1226 = vand.u32 %v106, 4294901760
    %v1227 = vsub.f32 %v106, %v1226
    %v1228 = vand.u32 %v1227, 4294901760
    %1229 = vmatprep.subr.mxu0 %v1228
    %v1230 = vand.u32 %v105, 4294901760
    %v1231 = vsub.f32 %v105, %v1230
    %v1232 = vand.u32 %v1231, 4294901760
    %1233 = vmatpush2.msra.mxu0 %v1232
    %v1234 = vand.u32 %v104, 4294901760
    %v1235 = vsub.f32 %v104, %v1234
    %v1236 = vand.u32 %v1235, 4294901760
    %1237 = vmatprep.subr.mxu0 %v1236
    %v1238 = vand.u32 %v103, 4294901760
    %v1239 = vsub.f32 %v103, %v1238
    %v1240 = vand.u32 %v1239, 4294901760
    %1241 = vmatpush2.msra.mxu0 %v1240
    %v1242 = vand.u32 %v102, 4294901760
    %v1243 = vsub.f32 %v102, %v1242
    %v1244 = vand.u32 %v1243, 4294901760
    %1245 = vmatprep.subr.mxu0 %v1244
    %v1246 = vand.u32 %v101, 4294901760
    %v1247 = vsub.f32 %v101, %v1246
    %v1248 = vand.u32 %v1247, 4294901760
    %1249 = vmatpush2.msra.mxu0 %v1248
    %v1250 = vand.u32 %v100, 4294901760
    %v1251 = vsub.f32 %v100, %v1250
    %v1252 = vand.u32 %v1251, 4294901760
    %1253 = vmatprep.subr.mxu0 %v1252
    %v1254 = vand.u32 %v99, 4294901760
    %v1255 = vsub.f32 %v99, %v1254
    %v1256 = vand.u32 %v1255, 4294901760
    %1257 = vmatpush2.msra.mxu0 %v1256
    %v1258 = vand.u32 %v98, 4294901760
    %v1259 = vsub.f32 %v98, %v1258
    %v1260 = vand.u32 %v1259, 4294901760
    %1261 = vmatprep.subr.mxu0 %v1260
    %v1262 = vand.u32 %v97, 4294901760
    %v1263 = vsub.f32 %v97, %v1262
    %v1264 = vand.u32 %v1263, 4294901760
    %1265 = vmatpush2.msra.mxu0 %v1264
    %v1266 = vand.u32 %v96, 4294901760
    %v1267 = vsub.f32 %v96, %v1266
    %v1268 = vand.u32 %v1267, 4294901760
    %1269 = vmatprep.subr.mxu0 %v1268
    %v1270 = vand.u32 %v95, 4294901760
    %v1271 = vsub.f32 %v95, %v1270
    %v1272 = vand.u32 %v1271, 4294901760
    %1273 = vmatpush2.msra.mxu0 %v1272
    %v1274 = vand.u32 %v94, 4294901760
    %v1275 = vsub.f32 %v94, %v1274
    %v1276 = vand.u32 %v1275, 4294901760
    %1277 = vmatprep.subr.mxu0 %v1276
    %v1278 = vand.u32 %v93, 4294901760
    %v1279 = vsub.f32 %v93, %v1278
    %v1280 = vand.u32 %v1279, 4294901760
    %1281 = vmatpush2.msra.mxu0 %v1280
    %v1282 = vand.u32 %v92, 4294901760
    %v1283 = vsub.f32 %v92, %v1282
    %v1284 = vand.u32 %v1283, 4294901760
    %1285 = vmatprep.subr.mxu0 %v1284
    %v1286 = vand.u32 %v91, 4294901760
    %v1287 = vsub.f32 %v91, %v1286
    %v1288 = vand.u32 %v1287, 4294901760
    %1289 = vmatpush2.msra.mxu0 %v1288
    %v1290 = vand.u32 %v90, 4294901760
    %v1291 = vsub.f32 %v90, %v1290
    %v1292 = vand.u32 %v1291, 4294901760
    %1293 = vmatprep.subr.mxu0 %v1292
    %v1294 = vand.u32 %v89, 4294901760
    %v1295 = vsub.f32 %v89, %v1294
    %v1296 = vand.u32 %v1295, 4294901760
    %1297 = vmatpush2.msra.mxu0 %v1296
    %v1298 = vand.u32 %v88, 4294901760
    %v1299 = vsub.f32 %v88, %v1298
    %v1300 = vand.u32 %v1299, 4294901760
    %1301 = vmatprep.subr.mxu0 %v1300
    %v1302 = vand.u32 %v87, 4294901760
    %v1303 = vsub.f32 %v87, %v1302
    %v1304 = vand.u32 %v1303, 4294901760
    %1305 = vmatpush2.msra.mxu0 %v1304
    %v1306 = vand.u32 %v86, 4294901760
    %v1307 = vsub.f32 %v86, %v1306
    %v1308 = vand.u32 %v1307, 4294901760
    %1309 = vmatprep.subr.mxu0 %v1308
    %v1310 = vand.u32 %v85, 4294901760
    %v1311 = vsub.f32 %v85, %v1310
    %v1312 = vand.u32 %v1311, 4294901760
    %1313 = vmatpush2.msra.mxu0 %v1312
    %v1314 = vand.u32 %v84, 4294901760
    %v1315 = vsub.f32 %v84, %v1314
    %v1316 = vand.u32 %v1315, 4294901760
    %1317 = vmatprep.subr.mxu0 %v1316
    %v1318 = vand.u32 %v83, 4294901760
    %v1319 = vsub.f32 %v83, %v1318
    %v1320 = vand.u32 %v1319, 4294901760
    %1321 = vmatpush2.msra.mxu0 %v1320
    %v1322 = vand.u32 %v82, 4294901760
    %v1323 = vsub.f32 %v82, %v1322
    %v1324 = vand.u32 %v1323, 4294901760
    %1325 = vmatprep.subr.mxu0 %v1324
    %v1326 = vand.u32 %v81, 4294901760
    %v1327 = vsub.f32 %v81, %v1326
    %v1328 = vand.u32 %v1327, 4294901760
    %1329 = vmatpush2.msra.mxu0 %v1328
    %v1330 = vand.u32 %v80, 4294901760
    %v1331 = vsub.f32 %v80, %v1330
    %v1332 = vand.u32 %v1331, 4294901760
    %1333 = vmatprep.subr.mxu0 %v1332
    %v1334 = vand.u32 %v79, 4294901760
    %v1335 = vsub.f32 %v79, %v1334
    %v1336 = vand.u32 %v1335, 4294901760
    %1337 = vmatpush2.msra.mxu0 %v1336
    %v1338 = vand.u32 %v42, 4294901760
    %1339 = vmatprep.mubr.f32.mxu0 %v1338
    %v1340 = vand.u32 %v41, 4294901760
    %1341 = vmatmul.mubr.f32.gmra.mxu0 %v1340
    %v1342 = vpop.f32.mrf.mxu0
    %v1343 = vadd.f32 %v1078, %v1342
    %v1344 = vpop.f32.mrf.mxu0
    %v1345 = vadd.f32 %v1080, %v1344
    %1346 = vdwg.mxu0
    %v1347 = vand.u32 %v78, 4294901760
    %1348 = vmatprep.subr.mxu0 %v1347
    %v1349 = vand.u32 %v77, 4294901760
    %1350 = vmatpush1.msra.mxu0 %v1349
    %v1351 = vand.u32 %v76, 4294901760
    %1352 = vmatprep.subr.mxu0 %v1351
    %v1353 = vand.u32 %v75, 4294901760
    %1354 = vmatpush1.msra.mxu0 %v1353
    %v1355 = vand.u32 %v74, 4294901760
    %1356 = vmatprep.subr.mxu0 %v1355
    %v1357 = vand.u32 %v73, 4294901760
    %1358 = vmatpush1.msra.mxu0 %v1357
    %v1359 = vand.u32 %v72, 4294901760
    %1360 = vmatprep.subr.mxu0 %v1359
    %v1361 = vand.u32 %v71, 4294901760
    %1362 = vmatpush1.msra.mxu0 %v1361
    %v1363 = vand.u32 %v70, 4294901760
    %1364 = vmatprep.subr.mxu0 %v1363
    %v1365 = vand.u32 %v69, 4294901760
    %1366 = vmatpush1.msra.mxu0 %v1365
    %v1367 = vand.u32 %v68, 4294901760
    %1368 = vmatprep.subr.mxu0 %v1367
    %v1369 = vand.u32 %v67, 4294901760
    %1370 = vmatpush1.msra.mxu0 %v1369
    %v1371 = vand.u32 %v66, 4294901760
    %1372 = vmatprep.subr.mxu0 %v1371
    %v1373 = vand.u32 %v65, 4294901760
    %1374 = vmatpush1.msra.mxu0 %v1373
    %v1375 = vand.u32 %v64, 4294901760
    %1376 = vmatprep.subr.mxu0 %v1375
    %v1377 = vand.u32 %v63, 4294901760
    %1378 = vmatpush1.msra.mxu0 %v1377
    %v1379 = vand.u32 %v62, 4294901760
    %1380 = vmatprep.subr.mxu0 %v1379
    %v1381 = vand.u32 %v61, 4294901760
    %1382 = vmatpush1.msra.mxu0 %v1381
    %v1383 = vand.u32 %v60, 4294901760
    %1384 = vmatprep.subr.mxu0 %v1383
    %v1385 = vand.u32 %v59, 4294901760
    %1386 = vmatpush1.msra.mxu0 %v1385
    %v1387 = vand.u32 %v58, 4294901760
    %1388 = vmatprep.subr.mxu0 %v1387
    %v1389 = vand.u32 %v57, 4294901760
    %1390 = vmatpush1.msra.mxu0 %v1389
    %v1391 = vand.u32 %v56, 4294901760
    %1392 = vmatprep.subr.mxu0 %v1391
    %v1393 = vand.u32 %v55, 4294901760
    %1394 = vmatpush1.msra.mxu0 %v1393
    %v1395 = vand.u32 %v54, 4294901760
    %1396 = vmatprep.subr.mxu0 %v1395
    %v1397 = vand.u32 %v53, 4294901760
    %1398 = vmatpush1.msra.mxu0 %v1397
    %v1399 = vand.u32 %v52, 4294901760
    %1400 = vmatprep.subr.mxu0 %v1399
    %v1401 = vand.u32 %v51, 4294901760
    %1402 = vmatpush1.msra.mxu0 %v1401
    %v1403 = vand.u32 %v50, 4294901760
    %1404 = vmatprep.subr.mxu0 %v1403
    %v1405 = vand.u32 %v49, 4294901760
    %1406 = vmatpush1.msra.mxu0 %v1405
    %v1407 = vand.u32 %v48, 4294901760
    %1408 = vmatprep.subr.mxu0 %v1407
    %v1409 = vand.u32 %v47, 4294901760
    %1410 = vmatpush1.msra.mxu0 %v1409
    %v1411 = vand.u32 %v110, 4294901760
    %1412 = vmatprep.subr.mxu0 %v1411
    %v1413 = vand.u32 %v109, 4294901760
    %1414 = vmatpush2.msra.mxu0 %v1413
    %v1415 = vand.u32 %v108, 4294901760
    %1416 = vmatprep.subr.mxu0 %v1415
    %v1417 = vand.u32 %v107, 4294901760
    %1418 = vmatpush2.msra.mxu0 %v1417
    %v1419 = vand.u32 %v106, 4294901760
    %1420 = vmatprep.subr.mxu0 %v1419
    %v1421 = vand.u32 %v105, 4294901760
    %1422 = vmatpush2.msra.mxu0 %v1421
    %v1423 = vand.u32 %v104, 4294901760
    %1424 = vmatprep.subr.mxu0 %v1423
    %v1425 = vand.u32 %v103, 4294901760
    %1426 = vmatpush2.msra.mxu0 %v1425
    %v1427 = vand.u32 %v102, 4294901760
    %1428 = vmatprep.subr.mxu0 %v1427
    %v1429 = vand.u32 %v101, 4294901760
    %1430 = vmatpush2.msra.mxu0 %v1429
    %v1431 = vand.u32 %v100, 4294901760
    %1432 = vmatprep.subr.mxu0 %v1431
    %v1433 = vand.u32 %v99, 4294901760
    %1434 = vmatpush2.msra.mxu0 %v1433
    %v1435 = vand.u32 %v98, 4294901760
    %1436 = vmatprep.subr.mxu0 %v1435
    %v1437 = vand.u32 %v97, 4294901760
    %1438 = vmatpush2.msra.mxu0 %v1437
    %v1439 = vand.u32 %v96, 4294901760
    %1440 = vmatprep.subr.mxu0 %v1439
    %v1441 = vand.u32 %v95, 4294901760
    %1442 = vmatpush2.msra.mxu0 %v1441
    %v1443 = vand.u32 %v94, 4294901760
    %1444 = vmatprep.subr.mxu0 %v1443
    %v1445 = vand.u32 %v93, 4294901760
    %1446 = vmatpush2.msra.mxu0 %v1445
    %v1447 = vand.u32 %v92, 4294901760
    %1448 = vmatprep.subr.mxu0 %v1447
    %v1449 = vand.u32 %v91, 4294901760
    %1450 = vmatpush2.msra.mxu0 %v1449
    %v1451 = vand.u32 %v90, 4294901760
    %1452 = vmatprep.subr.mxu0 %v1451
    %v1453 = vand.u32 %v89, 4294901760
    %1454 = vmatpush2.msra.mxu0 %v1453
    %v1455 = vand.u32 %v88, 4294901760
    %1456 = vmatprep.subr.mxu0 %v1455
    %v1457 = vand.u32 %v87, 4294901760
    %1458 = vmatpush2.msra.mxu0 %v1457
    %v1459 = vand.u32 %v86, 4294901760
    %1460 = vmatprep.subr.mxu0 %v1459
    %v1461 = vand.u32 %v85, 4294901760
    %1462 = vmatpush2.msra.mxu0 %v1461
    %v1463 = vand.u32 %v84, 4294901760
    %1464 = vmatprep.subr.mxu0 %v1463
    %v1465 = vand.u32 %v83, 4294901760
    %1466 = vmatpush2.msra.mxu0 %v1465
    %v1467 = vand.u32 %v82, 4294901760
    %1468 = vmatprep.subr.mxu0 %v1467
    %v1469 = vand.u32 %v81, 4294901760
    %1470 = vmatpush2.msra.mxu0 %v1469
    %v1471 = vand.u32 %v80, 4294901760
    %1472 = vmatprep.subr.mxu0 %v1471
    %v1473 = vand.u32 %v79, 4294901760
    %1474 = vmatpush2.msra.mxu0 %v1473
    %v1475 = vand.u32 %v42, 4294901760
    %1476 = vmatprep.mubr.f32.mxu0 %v1475
    %v1477 = vand.u32 %v41, 4294901760
    %1478 = vmatmul.mubr.f32.gmra.mxu0 %v1477
    %v1479 = vpop.f32.mrf.mxu0
    %v1480 = vadd.f32 %v1343, %v1479
    %v1481 = vpop.f32.mrf.mxu0
    %v1482 = vadd.f32 %v1345, %v1481
    %1483 = vdwg.mxu0
    %v1484 = vand.u32 %v142, 4294901760
    %1485 = vmatprep.subr.mxu0 %v1484
    %v1486 = vand.u32 %v141, 4294901760
    %1487 = vmatpush1.msra.mxu0 %v1486
    %v1488 = vand.u32 %v140, 4294901760
    %1489 = vmatprep.subr.mxu0 %v1488
    %v1490 = vand.u32 %v139, 4294901760
    %1491 = vmatpush1.msra.mxu0 %v1490
    %v1492 = vand.u32 %v138, 4294901760
    %1493 = vmatprep.subr.mxu0 %v1492
    %v1494 = vand.u32 %v137, 4294901760
    %1495 = vmatpush1.msra.mxu0 %v1494
    %v1496 = vand.u32 %v136, 4294901760
    %1497 = vmatprep.subr.mxu0 %v1496
    %v1498 = vand.u32 %v135, 4294901760
    %1499 = vmatpush1.msra.mxu0 %v1498
    %v1500 = vand.u32 %v134, 4294901760
    %1501 = vmatprep.subr.mxu0 %v1500
    %v1502 = vand.u32 %v133, 4294901760
    %1503 = vmatpush1.msra.mxu0 %v1502
    %v1504 = vand.u32 %v132, 4294901760
    %1505 = vmatprep.subr.mxu0 %v1504
    %v1506 = vand.u32 %v131, 4294901760
    %1507 = vmatpush1.msra.mxu0 %v1506
    %v1508 = vand.u32 %v130, 4294901760
    %1509 = vmatprep.subr.mxu0 %v1508
    %v1510 = vand.u32 %v129, 4294901760
    %1511 = vmatpush1.msra.mxu0 %v1510
    %v1512 = vand.u32 %v128, 4294901760
    %1513 = vmatprep.subr.mxu0 %v1512
    %v1514 = vand.u32 %v127, 4294901760
    %1515 = vmatpush1.msra.mxu0 %v1514
    %v1516 = vand.u32 %v126, 4294901760
    %1517 = vmatprep.subr.mxu0 %v1516
    %v1518 = vand.u32 %v125, 4294901760
    %1519 = vmatpush1.msra.mxu0 %v1518
    %v1520 = vand.u32 %v124, 4294901760
    %1521 = vmatprep.subr.mxu0 %v1520
    %v1522 = vand.u32 %v123, 4294901760
    %1523 = vmatpush1.msra.mxu0 %v1522
    %v1524 = vand.u32 %v122, 4294901760
    %1525 = vmatprep.subr.mxu0 %v1524
    %v1526 = vand.u32 %v121, 4294901760
    %1527 = vmatpush1.msra.mxu0 %v1526
    %v1528 = vand.u32 %v120, 4294901760
    %1529 = vmatprep.subr.mxu0 %v1528
    %v1530 = vand.u32 %v119, 4294901760
    %1531 = vmatpush1.msra.mxu0 %v1530
    %v1532 = vand.u32 %v118, 4294901760
    %1533 = vmatprep.subr.mxu0 %v1532
    %v1534 = vand.u32 %v117, 4294901760
    %1535 = vmatpush1.msra.mxu0 %v1534
    %v1536 = vand.u32 %v116, 4294901760
    %1537 = vmatprep.subr.mxu0 %v1536
    %v1538 = vand.u32 %v115, 4294901760
    %1539 = vmatpush1.msra.mxu0 %v1538
    %v1540 = vand.u32 %v114, 4294901760
    %1541 = vmatprep.subr.mxu0 %v1540
    %v1542 = vand.u32 %v113, 4294901760
    %1543 = vmatpush1.msra.mxu0 %v1542
    %v1544 = vand.u32 %v112, 4294901760
    %1545 = vmatprep.subr.mxu0 %v1544
    %v1546 = vand.u32 %v111, 4294901760
    %1547 = vmatpush1.msra.mxu0 %v1546
    %v1548 = vand.u32 %v174, 4294901760
    %1549 = vmatprep.subr.mxu0 %v1548
    %v1550 = vand.u32 %v173, 4294901760
    %1551 = vmatpush2.msra.mxu0 %v1550
    %v1552 = vand.u32 %v172, 4294901760
    %1553 = vmatprep.subr.mxu0 %v1552
    %v1554 = vand.u32 %v171, 4294901760
    %1555 = vmatpush2.msra.mxu0 %v1554
    %v1556 = vand.u32 %v170, 4294901760
    %1557 = vmatprep.subr.mxu0 %v1556
    %v1558 = vand.u32 %v169, 4294901760
    %1559 = vmatpush2.msra.mxu0 %v1558
    %v1560 = vand.u32 %v168, 4294901760
    %1561 = vmatprep.subr.mxu0 %v1560
    %v1562 = vand.u32 %v167, 4294901760
    %1563 = vmatpush2.msra.mxu0 %v1562
    %v1564 = vand.u32 %v166, 4294901760
    %1565 = vmatprep.subr.mxu0 %v1564
    %v1566 = vand.u32 %v165, 4294901760
    %1567 = vmatpush2.msra.mxu0 %v1566
    %v1568 = vand.u32 %v164, 4294901760
    %1569 = vmatprep.subr.mxu0 %v1568
    %v1570 = vand.u32 %v163, 4294901760
    %1571 = vmatpush2.msra.mxu0 %v1570
    %v1572 = vand.u32 %v162, 4294901760
    %1573 = vmatprep.subr.mxu0 %v1572
    %v1574 = vand.u32 %v161, 4294901760
    %1575 = vmatpush2.msra.mxu0 %v1574
    %v1576 = vand.u32 %v160, 4294901760
    %1577 = vmatprep.subr.mxu0 %v1576
    %v1578 = vand.u32 %v159, 4294901760
    %1579 = vmatpush2.msra.mxu0 %v1578
    %v1580 = vand.u32 %v158, 4294901760
    %1581 = vmatprep.subr.mxu0 %v1580
    %v1582 = vand.u32 %v157, 4294901760
    %1583 = vmatpush2.msra.mxu0 %v1582
    %v1584 = vand.u32 %v156, 4294901760
    %1585 = vmatprep.subr.mxu0 %v1584
    %v1586 = vand.u32 %v155, 4294901760
    %1587 = vmatpush2.msra.mxu0 %v1586
    %v1588 = vand.u32 %v154, 4294901760
    %1589 = vmatprep.subr.mxu0 %v1588
    %v1590 = vand.u32 %v153, 4294901760
    %1591 = vmatpush2.msra.mxu0 %v1590
    %v1592 = vand.u32 %v152, 4294901760
    %1593 = vmatprep.subr.mxu0 %v1592
    %v1594 = vand.u32 %v151, 4294901760
    %1595 = vmatpush2.msra.mxu0 %v1594
    %v1596 = vand.u32 %v150, 4294901760
    %1597 = vmatprep.subr.mxu0 %v1596
    %v1598 = vand.u32 %v149, 4294901760
    %1599 = vmatpush2.msra.mxu0 %v1598
    %v1600 = vand.u32 %v148, 4294901760
    %1601 = vmatprep.subr.mxu0 %v1600
    %v1602 = vand.u32 %v147, 4294901760
    %1603 = vmatpush2.msra.mxu0 %v1602
    %v1604 = vand.u32 %v146, 4294901760
    %1605 = vmatprep.subr.mxu0 %v1604
    %v1606 = vand.u32 %v145, 4294901760
    %1607 = vmatpush2.msra.mxu0 %v1606
    %v1608 = vand.u32 %v144, 4294901760
    %1609 = vmatprep.subr.mxu0 %v1608
    %v1610 = vand.u32 %v143, 4294901760
    %1611 = vmatpush2.msra.mxu0 %v1610
    %v1612 = vand.u32 %v44, 4294901760
    %v1613 = vsub.f32 %v44, %v1612
    %v1614 = vand.u32 %v1613, 4294901760
    %v1615 = vsub.f32 %v1613, %v1614
    %v1616 = vand.u32 %v1615, 4294901760
    %1617 = vmatprep.mubr.f32.mxu0 %v1616
    %v1618 = vand.u32 %v43, 4294901760
    %v1619 = vsub.f32 %v43, %v1618
    %v1620 = vand.u32 %v1619, 4294901760
    %v1621 = vsub.f32 %v1619, %v1620
    %v1622 = vand.u32 %v1621, 4294901760
    %1623 = vmatmul.mubr.f32.gmra.mxu0 %v1622
    %v1624 = vpop.f32.mrf.mxu0
    %v1625 = vadd.f32 %v1480, %v1624
    %v1626 = vpop.f32.mrf.mxu0
    %v1627 = vadd.f32 %v1482, %v1626
    %1628 = vdwg.mxu0
    %v1629 = vand.u32 %v142, 4294901760
    %v1630 = vsub.f32 %v142, %v1629
    %v1631 = vand.u32 %v1630, 4294901760
    %v1632 = vsub.f32 %v1630, %v1631
    %v1633 = vand.u32 %v1632, 4294901760
    %1634 = vmatprep.subr.mxu0 %v1633
    %v1635 = vand.u32 %v141, 4294901760
    %v1636 = vsub.f32 %v141, %v1635
    %v1637 = vand.u32 %v1636, 4294901760
    %v1638 = vsub.f32 %v1636, %v1637
    %v1639 = vand.u32 %v1638, 4294901760
    %1640 = vmatpush1.msra.mxu0 %v1639
    %v1641 = vand.u32 %v140, 4294901760
    %v1642 = vsub.f32 %v140, %v1641
    %v1643 = vand.u32 %v1642, 4294901760
    %v1644 = vsub.f32 %v1642, %v1643
    %v1645 = vand.u32 %v1644, 4294901760
    %1646 = vmatprep.subr.mxu0 %v1645
    %v1647 = vand.u32 %v139, 4294901760
    %v1648 = vsub.f32 %v139, %v1647
    %v1649 = vand.u32 %v1648, 4294901760
    %v1650 = vsub.f32 %v1648, %v1649
    %v1651 = vand.u32 %v1650, 4294901760
    %1652 = vmatpush1.msra.mxu0 %v1651
    %v1653 = vand.u32 %v138, 4294901760
    %v1654 = vsub.f32 %v138, %v1653
    %v1655 = vand.u32 %v1654, 4294901760
    %v1656 = vsub.f32 %v1654, %v1655
    %v1657 = vand.u32 %v1656, 4294901760
    %1658 = vmatprep.subr.mxu0 %v1657
    %v1659 = vand.u32 %v137, 4294901760
    %v1660 = vsub.f32 %v137, %v1659
    %v1661 = vand.u32 %v1660, 4294901760
    %v1662 = vsub.f32 %v1660, %v1661
    %v1663 = vand.u32 %v1662, 4294901760
    %1664 = vmatpush1.msra.mxu0 %v1663
    %v1665 = vand.u32 %v136, 4294901760
    %v1666 = vsub.f32 %v136, %v1665
    %v1667 = vand.u32 %v1666, 4294901760
    %v1668 = vsub.f32 %v1666, %v1667
    %v1669 = vand.u32 %v1668, 4294901760
    %1670 = vmatprep.subr.mxu0 %v1669
    %v1671 = vand.u32 %v135, 4294901760
    %v1672 = vsub.f32 %v135, %v1671
    %v1673 = vand.u32 %v1672, 4294901760
    %v1674 = vsub.f32 %v1672, %v1673
    %v1675 = vand.u32 %v1674, 4294901760
    %1676 = vmatpush1.msra.mxu0 %v1675
    %v1677 = vand.u32 %v134, 4294901760
    %v1678 = vsub.f32 %v134, %v1677
    %v1679 = vand.u32 %v1678, 4294901760
    %v1680 = vsub.f32 %v1678, %v1679
    %v1681 = vand.u32 %v1680, 4294901760
    %1682 = vmatprep.subr.mxu0 %v1681
    %v1683 = vand.u32 %v133, 4294901760
    %v1684 = vsub.f32 %v133, %v1683
    %v1685 = vand.u32 %v1684, 4294901760
    %v1686 = vsub.f32 %v1684, %v1685
    %v1687 = vand.u32 %v1686, 4294901760
    %1688 = vmatpush1.msra.mxu0 %v1687
    %v1689 = vand.u32 %v132, 4294901760
    %v1690 = vsub.f32 %v132, %v1689
    %v1691 = vand.u32 %v1690, 4294901760
    %v1692 = vsub.f32 %v1690, %v1691
    %v1693 = vand.u32 %v1692, 4294901760
    %1694 = vmatprep.subr.mxu0 %v1693
    %v1695 = vand.u32 %v131, 4294901760
    %v1696 = vsub.f32 %v131, %v1695
    %v1697 = vand.u32 %v1696, 4294901760
    %v1698 = vsub.f32 %v1696, %v1697
    %v1699 = vand.u32 %v1698, 4294901760
    %1700 = vmatpush1.msra.mxu0 %v1699
    %v1701 = vand.u32 %v130, 4294901760
    %v1702 = vsub.f32 %v130, %v1701
    %v1703 = vand.u32 %v1702, 4294901760
    %v1704 = vsub.f32 %v1702, %v1703
    %v1705 = vand.u32 %v1704, 4294901760
    %1706 = vmatprep.subr.mxu0 %v1705
    %v1707 = vand.u32 %v129, 4294901760
    %v1708 = vsub.f32 %v129, %v1707
    %v1709 = vand.u32 %v1708, 4294901760
    %v1710 = vsub.f32 %v1708, %v1709
    %v1711 = vand.u32 %v1710, 4294901760
    %1712 = vmatpush1.msra.mxu0 %v1711
    %v1713 = vand.u32 %v128, 4294901760
    %v1714 = vsub.f32 %v128, %v1713
    %v1715 = vand.u32 %v1714, 4294901760
    %v1716 = vsub.f32 %v1714, %v1715
    %v1717 = vand.u32 %v1716, 4294901760
    %1718 = vmatprep.subr.mxu0 %v1717
    %v1719 = vand.u32 %v127, 4294901760
    %v1720 = vsub.f32 %v127, %v1719
    %v1721 = vand.u32 %v1720, 4294901760
    %v1722 = vsub.f32 %v1720, %v1721
    %v1723 = vand.u32 %v1722, 4294901760
    %1724 = vmatpush1.msra.mxu0 %v1723
    %v1725 = vand.u32 %v126, 4294901760
    %v1726 = vsub.f32 %v126, %v1725
    %v1727 = vand.u32 %v1726, 4294901760
    %v1728 = vsub.f32 %v1726, %v1727
    %v1729 = vand.u32 %v1728, 4294901760
    %1730 = vmatprep.subr.mxu0 %v1729
    %v1731 = vand.u32 %v125, 4294901760
    %v1732 = vsub.f32 %v125, %v1731
    %v1733 = vand.u32 %v1732, 4294901760
    %v1734 = vsub.f32 %v1732, %v1733
    %v1735 = vand.u32 %v1734, 4294901760
    %1736 = vmatpush1.msra.mxu0 %v1735
    %v1737 = vand.u32 %v124, 4294901760
    %v1738 = vsub.f32 %v124, %v1737
    %v1739 = vand.u32 %v1738, 4294901760
    %v1740 = vsub.f32 %v1738, %v1739
    %v1741 = vand.u32 %v1740, 4294901760
    %1742 = vmatprep.subr.mxu0 %v1741
    %v1743 = vand.u32 %v123, 4294901760
    %v1744 = vsub.f32 %v123, %v1743
    %v1745 = vand.u32 %v1744, 4294901760
    %v1746 = vsub.f32 %v1744, %v1745
    %v1747 = vand.u32 %v1746, 4294901760
    %1748 = vmatpush1.msra.mxu0 %v1747
    %v1749 = vand.u32 %v122, 4294901760
    %v1750 = vsub.f32 %v122, %v1749
    %v1751 = vand.u32 %v1750, 4294901760
    %v1752 = vsub.f32 %v1750, %v1751
    %v1753 = vand.u32 %v1752, 4294901760
    %1754 = vmatprep.subr.mxu0 %v1753
    %v1755 = vand.u32 %v121, 4294901760
    %v1756 = vsub.f32 %v121, %v1755
    %v1757 = vand.u32 %v1756, 4294901760
    %v1758 = vsub.f32 %v1756, %v1757
    %v1759 = vand.u32 %v1758, 4294901760
    %1760 = vmatpush1.msra.mxu0 %v1759
    %v1761 = vand.u32 %v120, 4294901760
    %v1762 = vsub.f32 %v120, %v1761
    %v1763 = vand.u32 %v1762, 4294901760
    %v1764 = vsub.f32 %v1762, %v1763
    %v1765 = vand.u32 %v1764, 4294901760
    %1766 = vmatprep.subr.mxu0 %v1765
    %v1767 = vand.u32 %v119, 4294901760
    %v1768 = vsub.f32 %v119, %v1767
    %v1769 = vand.u32 %v1768, 4294901760
    %v1770 = vsub.f32 %v1768, %v1769
    %v1771 = vand.u32 %v1770, 4294901760
    %1772 = vmatpush1.msra.mxu0 %v1771
    %v1773 = vand.u32 %v118, 4294901760
    %v1774 = vsub.f32 %v118, %v1773
    %v1775 = vand.u32 %v1774, 4294901760
    %v1776 = vsub.f32 %v1774, %v1775
    %v1777 = vand.u32 %v1776, 4294901760
    %1778 = vmatprep.subr.mxu0 %v1777
    %v1779 = vand.u32 %v117, 4294901760
    %v1780 = vsub.f32 %v117, %v1779
    %v1781 = vand.u32 %v1780, 4294901760
    %v1782 = vsub.f32 %v1780, %v1781
    %v1783 = vand.u32 %v1782, 4294901760
    %1784 = vmatpush1.msra.mxu0 %v1783
    %v1785 = vand.u32 %v116, 4294901760
    %v1786 = vsub.f32 %v116, %v1785
    %v1787 = vand.u32 %v1786, 4294901760
    %v1788 = vsub.f32 %v1786, %v1787
    %v1789 = vand.u32 %v1788, 4294901760
    %1790 = vmatprep.subr.mxu0 %v1789
    %v1791 = vand.u32 %v115, 4294901760
    %v1792 = vsub.f32 %v115, %v1791
    %v1793 = vand.u32 %v1792, 4294901760
    %v1794 = vsub.f32 %v1792, %v1793
    %v1795 = vand.u32 %v1794, 4294901760
    %1796 = vmatpush1.msra.mxu0 %v1795
    %v1797 = vand.u32 %v114, 4294901760
    %v1798 = vsub.f32 %v114, %v1797
    %v1799 = vand.u32 %v1798, 4294901760
    %v1800 = vsub.f32 %v1798, %v1799
    %v1801 = vand.u32 %v1800, 4294901760
    %1802 = vmatprep.subr.mxu0 %v1801
    %v1803 = vand.u32 %v113, 4294901760
    %v1804 = vsub.f32 %v113, %v1803
    %v1805 = vand.u32 %v1804, 4294901760
    %v1806 = vsub.f32 %v1804, %v1805
    %v1807 = vand.u32 %v1806, 4294901760
    %1808 = vmatpush1.msra.mxu0 %v1807
    %v1809 = vand.u32 %v112, 4294901760
    %v1810 = vsub.f32 %v112, %v1809
    %v1811 = vand.u32 %v1810, 4294901760
    %v1812 = vsub.f32 %v1810, %v1811
    %v1813 = vand.u32 %v1812, 4294901760
    %1814 = vmatprep.subr.mxu0 %v1813
    %v1815 = vand.u32 %v111, 4294901760
    %v1816 = vsub.f32 %v111, %v1815
    %v1817 = vand.u32 %v1816, 4294901760
    %v1818 = vsub.f32 %v1816, %v1817
    %v1819 = vand.u32 %v1818, 4294901760
    %1820 = vmatpush1.msra.mxu0 %v1819
    %v1821 = vand.u32 %v174, 4294901760
    %v1822 = vsub.f32 %v174, %v1821
    %v1823 = vand.u32 %v1822, 4294901760
    %v1824 = vsub.f32 %v1822, %v1823
    %v1825 = vand.u32 %v1824, 4294901760
    %1826 = vmatprep.subr.mxu0 %v1825
    %v1827 = vand.u32 %v173, 4294901760
    %v1828 = vsub.f32 %v173, %v1827
    %v1829 = vand.u32 %v1828, 4294901760
    %v1830 = vsub.f32 %v1828, %v1829
    %v1831 = vand.u32 %v1830, 4294901760
    %1832 = vmatpush2.msra.mxu0 %v1831
    %v1833 = vand.u32 %v172, 4294901760
    %v1834 = vsub.f32 %v172, %v1833
    %v1835 = vand.u32 %v1834, 4294901760
    %v1836 = vsub.f32 %v1834, %v1835
    %v1837 = vand.u32 %v1836, 4294901760
    %1838 = vmatprep.subr.mxu0 %v1837
    %v1839 = vand.u32 %v171, 4294901760
    %v1840 = vsub.f32 %v171, %v1839
    %v1841 = vand.u32 %v1840, 4294901760
    %v1842 = vsub.f32 %v1840, %v1841
    %v1843 = vand.u32 %v1842, 4294901760
    %1844 = vmatpush2.msra.mxu0 %v1843
    %v1845 = vand.u32 %v170, 4294901760
    %v1846 = vsub.f32 %v170, %v1845
    %v1847 = vand.u32 %v1846, 4294901760
    %v1848 = vsub.f32 %v1846, %v1847
    %v1849 = vand.u32 %v1848, 4294901760
    %1850 = vmatprep.subr.mxu0 %v1849
    %v1851 = vand.u32 %v169, 4294901760
    %v1852 = vsub.f32 %v169, %v1851
    %v1853 = vand.u32 %v1852, 4294901760
    %v1854 = vsub.f32 %v1852, %v1853
    %v1855 = vand.u32 %v1854, 4294901760
    %1856 = vmatpush2.msra.mxu0 %v1855
    %v1857 = vand.u32 %v168, 4294901760
    %v1858 = vsub.f32 %v168, %v1857
    %v1859 = vand.u32 %v1858, 4294901760
    %v1860 = vsub.f32 %v1858, %v1859
    %v1861 = vand.u32 %v1860, 4294901760
    %1862 = vmatprep.subr.mxu0 %v1861
    %v1863 = vand.u32 %v167, 4294901760
    %v1864 = vsub.f32 %v167, %v1863
    %v1865 = vand.u32 %v1864, 4294901760
    %v1866 = vsub.f32 %v1864, %v1865
    %v1867 = vand.u32 %v1866, 4294901760
    %1868 = vmatpush2.msra.mxu0 %v1867
    %v1869 = vand.u32 %v166, 4294901760
    %v1870 = vsub.f32 %v166, %v1869
    %v1871 = vand.u32 %v1870, 4294901760
    %v1872 = vsub.f32 %v1870, %v1871
    %v1873 = vand.u32 %v1872, 4294901760
    %1874 = vmatprep.subr.mxu0 %v1873
    %v1875 = vand.u32 %v165, 4294901760
    %v1876 = vsub.f32 %v165, %v1875
    %v1877 = vand.u32 %v1876, 4294901760
    %v1878 = vsub.f32 %v1876, %v1877
    %v1879 = vand.u32 %v1878, 4294901760
    %1880 = vmatpush2.msra.mxu0 %v1879
    %v1881 = vand.u32 %v164, 4294901760
    %v1882 = vsub.f32 %v164, %v1881
    %v1883 = vand.u32 %v1882, 4294901760
    %v1884 = vsub.f32 %v1882, %v1883
    %v1885 = vand.u32 %v1884, 4294901760
    %1886 = vmatprep.subr.mxu0 %v1885
    %v1887 = vand.u32 %v163, 4294901760
    %v1888 = vsub.f32 %v163, %v1887
    %v1889 = vand.u32 %v1888, 4294901760
    %v1890 = vsub.f32 %v1888, %v1889
    %v1891 = vand.u32 %v1890, 4294901760
    %1892 = vmatpush2.msra.mxu0 %v1891
    %v1893 = vand.u32 %v162, 4294901760
    %v1894 = vsub.f32 %v162, %v1893
    %v1895 = vand.u32 %v1894, 4294901760
    %v1896 = vsub.f32 %v1894, %v1895
    %v1897 = vand.u32 %v1896, 4294901760
    %1898 = vmatprep.subr.mxu0 %v1897
    %v1899 = vand.u32 %v161, 4294901760
    %v1900 = vsub.f32 %v161, %v1899
    %v1901 = vand.u32 %v1900, 4294901760
    %v1902 = vsub.f32 %v1900, %v1901
    %v1903 = vand.u32 %v1902, 4294901760
    %1904 = vmatpush2.msra.mxu0 %v1903
    %v1905 = vand.u32 %v160, 4294901760
    %v1906 = vsub.f32 %v160, %v1905
    %v1907 = vand.u32 %v1906, 4294901760
    %v1908 = vsub.f32 %v1906, %v1907
    %v1909 = vand.u32 %v1908, 4294901760
    %1910 = vmatprep.subr.mxu0 %v1909
    %v1911 = vand.u32 %v159, 4294901760
    %v1912 = vsub.f32 %v159, %v1911
    %v1913 = vand.u32 %v1912, 4294901760
    %v1914 = vsub.f32 %v1912, %v1913
    %v1915 = vand.u32 %v1914, 4294901760
    %1916 = vmatpush2.msra.mxu0 %v1915
    %v1917 = vand.u32 %v158, 4294901760
    %v1918 = vsub.f32 %v158, %v1917
    %v1919 = vand.u32 %v1918, 4294901760
    %v1920 = vsub.f32 %v1918, %v1919
    %v1921 = vand.u32 %v1920, 4294901760
    %1922 = vmatprep.subr.mxu0 %v1921
    %v1923 = vand.u32 %v157, 4294901760
    %v1924 = vsub.f32 %v157, %v1923
    %v1925 = vand.u32 %v1924, 4294901760
    %v1926 = vsub.f32 %v1924, %v1925
    %v1927 = vand.u32 %v1926, 4294901760
    %1928 = vmatpush2.msra.mxu0 %v1927
    %v1929 = vand.u32 %v156, 4294901760
    %v1930 = vsub.f32 %v156, %v1929
    %v1931 = vand.u32 %v1930, 4294901760
    %v1932 = vsub.f32 %v1930, %v1931
    %v1933 = vand.u32 %v1932, 4294901760
    %1934 = vmatprep.subr.mxu0 %v1933
    %v1935 = vand.u32 %v155, 4294901760
    %v1936 = vsub.f32 %v155, %v1935
    %v1937 = vand.u32 %v1936, 4294901760
    %v1938 = vsub.f32 %v1936, %v1937
    %v1939 = vand.u32 %v1938, 4294901760
    %1940 = vmatpush2.msra.mxu0 %v1939
    %v1941 = vand.u32 %v154, 4294901760
    %v1942 = vsub.f32 %v154, %v1941
    %v1943 = vand.u32 %v1942, 4294901760
    %v1944 = vsub.f32 %v1942, %v1943
    %v1945 = vand.u32 %v1944, 4294901760
    %1946 = vmatprep.subr.mxu0 %v1945
    %v1947 = vand.u32 %v153, 4294901760
    %v1948 = vsub.f32 %v153, %v1947
    %v1949 = vand.u32 %v1948, 4294901760
    %v1950 = vsub.f32 %v1948, %v1949
    %v1951 = vand.u32 %v1950, 4294901760
    %1952 = vmatpush2.msra.mxu0 %v1951
    %v1953 = vand.u32 %v152, 4294901760
    %v1954 = vsub.f32 %v152, %v1953
    %v1955 = vand.u32 %v1954, 4294901760
    %v1956 = vsub.f32 %v1954, %v1955
    %v1957 = vand.u32 %v1956, 4294901760
    %1958 = vmatprep.subr.mxu0 %v1957
    %v1959 = vand.u32 %v151, 4294901760
    %v1960 = vsub.f32 %v151, %v1959
    %v1961 = vand.u32 %v1960, 4294901760
    %v1962 = vsub.f32 %v1960, %v1961
    %v1963 = vand.u32 %v1962, 4294901760
    %1964 = vmatpush2.msra.mxu0 %v1963
    %v1965 = vand.u32 %v150, 4294901760
    %v1966 = vsub.f32 %v150, %v1965
    %v1967 = vand.u32 %v1966, 4294901760
    %v1968 = vsub.f32 %v1966, %v1967
    %v1969 = vand.u32 %v1968, 4294901760
    %1970 = vmatprep.subr.mxu0 %v1969
    %v1971 = vand.u32 %v149, 4294901760
    %v1972 = vsub.f32 %v149, %v1971
    %v1973 = vand.u32 %v1972, 4294901760
    %v1974 = vsub.f32 %v1972, %v1973
    %v1975 = vand.u32 %v1974, 4294901760
    %1976 = vmatpush2.msra.mxu0 %v1975
    %v1977 = vand.u32 %v148, 4294901760
    %v1978 = vsub.f32 %v148, %v1977
    %v1979 = vand.u32 %v1978, 4294901760
    %v1980 = vsub.f32 %v1978, %v1979
    %v1981 = vand.u32 %v1980, 4294901760
    %1982 = vmatprep.subr.mxu0 %v1981
    %v1983 = vand.u32 %v147, 4294901760
    %v1984 = vsub.f32 %v147, %v1983
    %v1985 = vand.u32 %v1984, 4294901760
    %v1986 = vsub.f32 %v1984, %v1985
    %v1987 = vand.u32 %v1986, 4294901760
    %1988 = vmatpush2.msra.mxu0 %v1987
    %v1989 = vand.u32 %v146, 4294901760
    %v1990 = vsub.f32 %v146, %v1989
    %v1991 = vand.u32 %v1990, 4294901760
    %v1992 = vsub.f32 %v1990, %v1991
    %v1993 = vand.u32 %v1992, 4294901760
    %1994 = vmatprep.subr.mxu0 %v1993
    %v1995 = vand.u32 %v145, 4294901760
    %v1996 = vsub.f32 %v145, %v1995
    %v1997 = vand.u32 %v1996, 4294901760
    %v1998 = vsub.f32 %v1996, %v1997
    %v1999 = vand.u32 %v1998, 4294901760
    %2000 = vmatpush2.msra.mxu0 %v1999
    %v2001 = vand.u32 %v144, 4294901760
    %v2002 = vsub.f32 %v144, %v2001
    %v2003 = vand.u32 %v2002, 4294901760
    %v2004 = vsub.f32 %v2002, %v2003
    %v2005 = vand.u32 %v2004, 4294901760
    %2006 = vmatprep.subr.mxu0 %v2005
    %v2007 = vand.u32 %v143, 4294901760
    %v2008 = vsub.f32 %v143, %v2007
    %v2009 = vand.u32 %v2008, 4294901760
    %v2010 = vsub.f32 %v2008, %v2009
    %v2011 = vand.u32 %v2010, 4294901760
    %2012 = vmatpush2.msra.mxu0 %v2011
    %v2013 = vand.u32 %v44, 4294901760
    %2014 = vmatprep.mubr.f32.mxu0 %v2013
    %v2015 = vand.u32 %v43, 4294901760
    %2016 = vmatmul.mubr.f32.gmra.mxu0 %v2015
    %v2017 = vpop.f32.mrf.mxu0
    %v2018 = vadd.f32 %v1625, %v2017
    %v2019 = vpop.f32.mrf.mxu0
    %v2020 = vadd.f32 %v1627, %v2019
    %2021 = vdwg.mxu0
    %v2022 = vand.u32 %v142, 4294901760
    %v2023 = vsub.f32 %v142, %v2022
    %2024 = vmatprep.subr.mxu0 %v2023
    %v2025 = vand.u32 %v141, 4294901760
    %v2026 = vsub.f32 %v141, %v2025
    %2027 = vmatpush1.msra.mxu0 %v2026
    %v2028 = vand.u32 %v140, 4294901760
    %v2029 = vsub.f32 %v140, %v2028
    %2030 = vmatprep.subr.mxu0 %v2029
    %v2031 = vand.u32 %v139, 4294901760
    %v2032 = vsub.f32 %v139, %v2031
    %2033 = vmatpush1.msra.mxu0 %v2032
    %v2034 = vand.u32 %v138, 4294901760
    %v2035 = vsub.f32 %v138, %v2034
    %2036 = vmatprep.subr.mxu0 %v2035
    %v2037 = vand.u32 %v137, 4294901760
    %v2038 = vsub.f32 %v137, %v2037
    %2039 = vmatpush1.msra.mxu0 %v2038
    %v2040 = vand.u32 %v136, 4294901760
    %v2041 = vsub.f32 %v136, %v2040
    %2042 = vmatprep.subr.mxu0 %v2041
    %v2043 = vand.u32 %v135, 4294901760
    %v2044 = vsub.f32 %v135, %v2043
    %2045 = vmatpush1.msra.mxu0 %v2044
    %v2046 = vand.u32 %v134, 4294901760
    %v2047 = vsub.f32 %v134, %v2046
    %2048 = vmatprep.subr.mxu0 %v2047
    %v2049 = vand.u32 %v133, 4294901760
    %v2050 = vsub.f32 %v133, %v2049
    %2051 = vmatpush1.msra.mxu0 %v2050
    %v2052 = vand.u32 %v132, 4294901760
    %v2053 = vsub.f32 %v132, %v2052
    %2054 = vmatprep.subr.mxu0 %v2053
    %v2055 = vand.u32 %v131, 4294901760
    %v2056 = vsub.f32 %v131, %v2055
    %2057 = vmatpush1.msra.mxu0 %v2056
    %v2058 = vand.u32 %v130, 4294901760
    %v2059 = vsub.f32 %v130, %v2058
    %2060 = vmatprep.subr.mxu0 %v2059
    %v2061 = vand.u32 %v129, 4294901760
    %v2062 = vsub.f32 %v129, %v2061
    %2063 = vmatpush1.msra.mxu0 %v2062
    %v2064 = vand.u32 %v128, 4294901760
    %v2065 = vsub.f32 %v128, %v2064
    %2066 = vmatprep.subr.mxu0 %v2065
    %v2067 = vand.u32 %v127, 4294901760
    %v2068 = vsub.f32 %v127, %v2067
    %2069 = vmatpush1.msra.mxu0 %v2068
    %v2070 = vand.u32 %v126, 4294901760
    %v2071 = vsub.f32 %v126, %v2070
    %2072 = vmatprep.subr.mxu0 %v2071
    %v2073 = vand.u32 %v125, 4294901760
    %v2074 = vsub.f32 %v125, %v2073
    %2075 = vmatpush1.msra.mxu0 %v2074
    %v2076 = vand.u32 %v124, 4294901760
    %v2077 = vsub.f32 %v124, %v2076
    %2078 = vmatprep.subr.mxu0 %v2077
    %v2079 = vand.u32 %v123, 4294901760
    %v2080 = vsub.f32 %v123, %v2079
    %2081 = vmatpush1.msra.mxu0 %v2080
    %v2082 = vand.u32 %v122, 4294901760
    %v2083 = vsub.f32 %v122, %v2082
    %2084 = vmatprep.subr.mxu0 %v2083
    %v2085 = vand.u32 %v121, 4294901760
    %v2086 = vsub.f32 %v121, %v2085
    %2087 = vmatpush1.msra.mxu0 %v2086
    %v2088 = vand.u32 %v120, 4294901760
    %v2089 = vsub.f32 %v120, %v2088
    %2090 = vmatprep.subr.mxu0 %v2089
    %v2091 = vand.u32 %v119, 4294901760
    %v2092 = vsub.f32 %v119, %v2091
    %2093 = vmatpush1.msra.mxu0 %v2092
    %v2094 = vand.u32 %v118, 4294901760
    %v2095 = vsub.f32 %v118, %v2094
    %2096 = vmatprep.subr.mxu0 %v2095
    %v2097 = vand.u32 %v117, 4294901760
    %v2098 = vsub.f32 %v117, %v2097
    %2099 = vmatpush1.msra.mxu0 %v2098
    %v2100 = vand.u32 %v116, 4294901760
    %v2101 = vsub.f32 %v116, %v2100
    %2102 = vmatprep.subr.mxu0 %v2101
    %v2103 = vand.u32 %v115, 4294901760
    %v2104 = vsub.f32 %v115, %v2103
    %2105 = vmatpush1.msra.mxu0 %v2104
    %v2106 = vand.u32 %v114, 4294901760
    %v2107 = vsub.f32 %v114, %v2106
    %2108 = vmatprep.subr.mxu0 %v2107
    %v2109 = vand.u32 %v113, 4294901760
    %v2110 = vsub.f32 %v113, %v2109
    %2111 = vmatpush1.msra.mxu0 %v2110
    %v2112 = vand.u32 %v112, 4294901760
    %v2113 = vsub.f32 %v112, %v2112
    %2114 = vmatprep.subr.mxu0 %v2113
    %v2115 = vand.u32 %v111, 4294901760
    %v2116 = vsub.f32 %v111, %v2115
    %2117 = vmatpush1.msra.mxu0 %v2116
    %v2118 = vand.u32 %v174, 4294901760
    %v2119 = vsub.f32 %v174, %v2118
    %2120 = vmatprep.subr.mxu0 %v2119
    %v2121 = vand.u32 %v173, 4294901760
    %v2122 = vsub.f32 %v173, %v2121
    %2123 = vmatpush2.msra.mxu0 %v2122
    %v2124 = vand.u32 %v172, 4294901760
    %v2125 = vsub.f32 %v172, %v2124
    %2126 = vmatprep.subr.mxu0 %v2125
    %v2127 = vand.u32 %v171, 4294901760
    %v2128 = vsub.f32 %v171, %v2127
    %2129 = vmatpush2.msra.mxu0 %v2128
    %v2130 = vand.u32 %v170, 4294901760
    %v2131 = vsub.f32 %v170, %v2130
    %2132 = vmatprep.subr.mxu0 %v2131
    %v2133 = vand.u32 %v169, 4294901760
    %v2134 = vsub.f32 %v169, %v2133
    %2135 = vmatpush2.msra.mxu0 %v2134
    %v2136 = vand.u32 %v168, 4294901760
    %v2137 = vsub.f32 %v168, %v2136
    %2138 = vmatprep.subr.mxu0 %v2137
    %v2139 = vand.u32 %v167, 4294901760
    %v2140 = vsub.f32 %v167, %v2139
    %2141 = vmatpush2.msra.mxu0 %v2140
    %v2142 = vand.u32 %v166, 4294901760
    %v2143 = vsub.f32 %v166, %v2142
    %2144 = vmatprep.subr.mxu0 %v2143
    %v2145 = vand.u32 %v165, 4294901760
    %v2146 = vsub.f32 %v165, %v2145
    %2147 = vmatpush2.msra.mxu0 %v2146
    %v2148 = vand.u32 %v164, 4294901760
    %v2149 = vsub.f32 %v164, %v2148
    %2150 = vmatprep.subr.mxu0 %v2149
    %v2151 = vand.u32 %v163, 4294901760
    %v2152 = vsub.f32 %v163, %v2151
    %2153 = vmatpush2.msra.mxu0 %v2152
    %v2154 = vand.u32 %v162, 4294901760
    %v2155 = vsub.f32 %v162, %v2154
    %2156 = vmatprep.subr.mxu0 %v2155
    %v2157 = vand.u32 %v161, 4294901760
    %v2158 = vsub.f32 %v161, %v2157
    %2159 = vmatpush2.msra.mxu0 %v2158
    %v2160 = vand.u32 %v160, 4294901760
    %v2161 = vsub.f32 %v160, %v2160
    %2162 = vmatprep.subr.mxu0 %v2161
    %v2163 = vand.u32 %v159, 4294901760
    %v2164 = vsub.f32 %v159, %v2163
    %2165 = vmatpush2.msra.mxu0 %v2164
    %v2166 = vand.u32 %v158, 4294901760
    %v2167 = vsub.f32 %v158, %v2166
    %2168 = vmatprep.subr.mxu0 %v2167
    %v2169 = vand.u32 %v157, 4294901760
    %v2170 = vsub.f32 %v157, %v2169
    %2171 = vmatpush2.msra.mxu0 %v2170
    %v2172 = vand.u32 %v156, 4294901760
    %v2173 = vsub.f32 %v156, %v2172
    %2174 = vmatprep.subr.mxu0 %v2173
    %v2175 = vand.u32 %v155, 4294901760
    %v2176 = vsub.f32 %v155, %v2175
    %2177 = vmatpush2.msra.mxu0 %v2176
    %v2178 = vand.u32 %v154, 4294901760
    %v2179 = vsub.f32 %v154, %v2178
    %2180 = vmatprep.subr.mxu0 %v2179
    %v2181 = vand.u32 %v153, 4294901760
    %v2182 = vsub.f32 %v153, %v2181
    %2183 = vmatpush2.msra.mxu0 %v2182
    %v2184 = vand.u32 %v152, 4294901760
    %v2185 = vsub.f32 %v152, %v2184
    %2186 = vmatprep.subr.mxu0 %v2185
    %v2187 = vand.u32 %v151, 4294901760
    %v2188 = vsub.f32 %v151, %v2187
    %2189 = vmatpush2.msra.mxu0 %v2188
    %v2190 = vand.u32 %v150, 4294901760
    %v2191 = vsub.f32 %v150, %v2190
    %2192 = vmatprep.subr.mxu0 %v2191
    %v2193 = vand.u32 %v149, 4294901760
    %v2194 = vsub.f32 %v149, %v2193
    %2195 = vmatpush2.msra.mxu0 %v2194
    %v2196 = vand.u32 %v148, 4294901760
    %v2197 = vsub.f32 %v148, %v2196
    %2198 = vmatprep.subr.mxu0 %v2197
    %v2199 = vand.u32 %v147, 4294901760
    %v2200 = vsub.f32 %v147, %v2199
    %2201 = vmatpush2.msra.mxu0 %v2200
    %v2202 = vand.u32 %v146, 4294901760
    %v2203 = vsub.f32 %v146, %v2202
    %2204 = vmatprep.subr.mxu0 %v2203
    %v2205 = vand.u32 %v145, 4294901760
    %v2206 = vsub.f32 %v145, %v2205
    %2207 = vmatpush2.msra.mxu0 %v2206
    %v2208 = vand.u32 %v144, 4294901760
    %v2209 = vsub.f32 %v144, %v2208
    %2210 = vmatprep.subr.mxu0 %v2209
    %v2211 = vand.u32 %v143, 4294901760
    %v2212 = vsub.f32 %v143, %v2211
    %2213 = vmatpush2.msra.mxu0 %v2212
    %v2214 = vand.u32 %v44, 4294901760
    %v2215 = vsub.f32 %v44, %v2214
    %2216 = vmatprep.mubr.f32.mxu0 %v2215
    %v2217 = vand.u32 %v43, 4294901760
    %v2218 = vsub.f32 %v43, %v2217
    %2219 = vmatmul.mubr.f32.gmra.mxu0 %v2218
    %v2220 = vpop.f32.mrf.mxu0
    %v2221 = vadd.f32 %v2018, %v2220
    %v2222 = vpop.f32.mrf.mxu0
    %v2223 = vadd.f32 %v2020, %v2222
    %2224 = vdwg.mxu0
    %v2225 = vand.u32 %v142, 4294901760
    %2226 = vmatprep.subr.mxu0 %v2225
    %v2227 = vand.u32 %v141, 4294901760
    %2228 = vmatpush1.msra.mxu0 %v2227
    %v2229 = vand.u32 %v140, 4294901760
    %2230 = vmatprep.subr.mxu0 %v2229
    %v2231 = vand.u32 %v139, 4294901760
    %2232 = vmatpush1.msra.mxu0 %v2231
    %v2233 = vand.u32 %v138, 4294901760
    %2234 = vmatprep.subr.mxu0 %v2233
    %v2235 = vand.u32 %v137, 4294901760
    %2236 = vmatpush1.msra.mxu0 %v2235
    %v2237 = vand.u32 %v136, 4294901760
    %2238 = vmatprep.subr.mxu0 %v2237
    %v2239 = vand.u32 %v135, 4294901760
    %2240 = vmatpush1.msra.mxu0 %v2239
    %v2241 = vand.u32 %v134, 4294901760
    %2242 = vmatprep.subr.mxu0 %v2241
    %v2243 = vand.u32 %v133, 4294901760
    %2244 = vmatpush1.msra.mxu0 %v2243
    %v2245 = vand.u32 %v132, 4294901760
    %2246 = vmatprep.subr.mxu0 %v2245
    %v2247 = vand.u32 %v131, 4294901760
    %2248 = vmatpush1.msra.mxu0 %v2247
    %v2249 = vand.u32 %v130, 4294901760
    %2250 = vmatprep.subr.mxu0 %v2249
    %v2251 = vand.u32 %v129, 4294901760
    %2252 = vmatpush1.msra.mxu0 %v2251
    %v2253 = vand.u32 %v128, 4294901760
    %2254 = vmatprep.subr.mxu0 %v2253
    %v2255 = vand.u32 %v127, 4294901760
    %2256 = vmatpush1.msra.mxu0 %v2255
    %v2257 = vand.u32 %v126, 4294901760
    %2258 = vmatprep.subr.mxu0 %v2257
    %v2259 = vand.u32 %v125, 4294901760
    %2260 = vmatpush1.msra.mxu0 %v2259
    %v2261 = vand.u32 %v124, 4294901760
    %2262 = vmatprep.subr.mxu0 %v2261
    %v2263 = vand.u32 %v123, 4294901760
    %2264 = vmatpush1.msra.mxu0 %v2263
    %v2265 = vand.u32 %v122, 4294901760
    %2266 = vmatprep.subr.mxu0 %v2265
    %v2267 = vand.u32 %v121, 4294901760
    %2268 = vmatpush1.msra.mxu0 %v2267
    %v2269 = vand.u32 %v120, 4294901760
    %2270 = vmatprep.subr.mxu0 %v2269
    %v2271 = vand.u32 %v119, 4294901760
    %2272 = vmatpush1.msra.mxu0 %v2271
    %v2273 = vand.u32 %v118, 4294901760
    %2274 = vmatprep.subr.mxu0 %v2273
    %v2275 = vand.u32 %v117, 4294901760
    %2276 = vmatpush1.msra.mxu0 %v2275
    %v2277 = vand.u32 %v116, 4294901760
    %2278 = vmatprep.subr.mxu0 %v2277
    %v2279 = vand.u32 %v115, 4294901760
    %2280 = vmatpush1.msra.mxu0 %v2279
    %v2281 = vand.u32 %v114, 4294901760
    %2282 = vmatprep.subr.mxu0 %v2281
    %v2283 = vand.u32 %v113, 4294901760
    %2284 = vmatpush1.msra.mxu0 %v2283
    %v2285 = vand.u32 %v112, 4294901760
    %2286 = vmatprep.subr.mxu0 %v2285
    %v2287 = vand.u32 %v111, 4294901760
    %2288 = vmatpush1.msra.mxu0 %v2287
    %v2289 = vand.u32 %v174, 4294901760
    %2290 = vmatprep.subr.mxu0 %v2289
    %v2291 = vand.u32 %v173, 4294901760
    %2292 = vmatpush2.msra.mxu0 %v2291
    %v2293 = vand.u32 %v172, 4294901760
    %2294 = vmatprep.subr.mxu0 %v2293
    %v2295 = vand.u32 %v171, 4294901760
    %2296 = vmatpush2.msra.mxu0 %v2295
    %v2297 = vand.u32 %v170, 4294901760
    %2298 = vmatprep.subr.mxu0 %v2297
    %v2299 = vand.u32 %v169, 4294901760
    %2300 = vmatpush2.msra.mxu0 %v2299
    %v2301 = vand.u32 %v168, 4294901760
    %2302 = vmatprep.subr.mxu0 %v2301
    %v2303 = vand.u32 %v167, 4294901760
    %2304 = vmatpush2.msra.mxu0 %v2303
    %v2305 = vand.u32 %v166, 4294901760
    %2306 = vmatprep.subr.mxu0 %v2305
    %v2307 = vand.u32 %v165, 4294901760
    %2308 = vmatpush2.msra.mxu0 %v2307
    %v2309 = vand.u32 %v164, 4294901760
    %2310 = vmatprep.subr.mxu0 %v2309
    %v2311 = vand.u32 %v163, 4294901760
    %2312 = vmatpush2.msra.mxu0 %v2311
    %v2313 = vand.u32 %v162, 4294901760
    %2314 = vmatprep.subr.mxu0 %v2313
    %v2315 = vand.u32 %v161, 4294901760
    %2316 = vmatpush2.msra.mxu0 %v2315
    %v2317 = vand.u32 %v160, 4294901760
    %2318 = vmatprep.subr.mxu0 %v2317
    %v2319 = vand.u32 %v159, 4294901760
    %2320 = vmatpush2.msra.mxu0 %v2319
    %v2321 = vand.u32 %v158, 4294901760
    %2322 = vmatprep.subr.mxu0 %v2321
    %v2323 = vand.u32 %v157, 4294901760
    %2324 = vmatpush2.msra.mxu0 %v2323
    %v2325 = vand.u32 %v156, 4294901760
    %2326 = vmatprep.subr.mxu0 %v2325
    %v2327 = vand.u32 %v155, 4294901760
    %2328 = vmatpush2.msra.mxu0 %v2327
    %v2329 = vand.u32 %v154, 4294901760
    %2330 = vmatprep.subr.mxu0 %v2329
    %v2331 = vand.u32 %v153, 4294901760
    %2332 = vmatpush2.msra.mxu0 %v2331
    %v2333 = vand.u32 %v152, 4294901760
    %2334 = vmatprep.subr.mxu0 %v2333
    %v2335 = vand.u32 %v151, 4294901760
    %2336 = vmatpush2.msra.mxu0 %v2335
    %v2337 = vand.u32 %v150, 4294901760
    %2338 = vmatprep.subr.mxu0 %v2337
    %v2339 = vand.u32 %v149, 4294901760
    %2340 = vmatpush2.msra.mxu0 %v2339
    %v2341 = vand.u32 %v148, 4294901760
    %2342 = vmatprep.subr.mxu0 %v2341
    %v2343 = vand.u32 %v147, 4294901760
    %2344 = vmatpush2.msra.mxu0 %v2343
    %v2345 = vand.u32 %v146, 4294901760
    %2346 = vmatprep.subr.mxu0 %v2345
    %v2347 = vand.u32 %v145, 4294901760
    %2348 = vmatpush2.msra.mxu0 %v2347
    %v2349 = vand.u32 %v144, 4294901760
    %2350 = vmatprep.subr.mxu0 %v2349
    %v2351 = vand.u32 %v143, 4294901760
    %2352 = vmatpush2.msra.mxu0 %v2351
    %v2353 = vand.u32 %v44, 4294901760
    %v2354 = vsub.f32 %v44, %v2353
    %v2355 = vand.u32 %v2354, 4294901760
    %2356 = vmatprep.mubr.f32.mxu0 %v2355
    %v2357 = vand.u32 %v43, 4294901760
    %v2358 = vsub.f32 %v43, %v2357
    %v2359 = vand.u32 %v2358, 4294901760
    %2360 = vmatmul.mubr.f32.gmra.mxu0 %v2359
    %v2361 = vpop.f32.mrf.mxu0
    %v2362 = vadd.f32 %v2221, %v2361
    %v2363 = vpop.f32.mrf.mxu0
    %v2364 = vadd.f32 %v2223, %v2363
    %2365 = vdwg.mxu0
    %v2366 = vand.u32 %v142, 4294901760
    %v2367 = vsub.f32 %v142, %v2366
    %v2368 = vand.u32 %v2367, 4294901760
    %2369 = vmatprep.subr.mxu0 %v2368
    %v2370 = vand.u32 %v141, 4294901760
    %v2371 = vsub.f32 %v141, %v2370
    %v2372 = vand.u32 %v2371, 4294901760
    %2373 = vmatpush1.msra.mxu0 %v2372
    %v2374 = vand.u32 %v140, 4294901760
    %v2375 = vsub.f32 %v140, %v2374
    %v2376 = vand.u32 %v2375, 4294901760
    %2377 = vmatprep.subr.mxu0 %v2376
    %v2378 = vand.u32 %v139, 4294901760
    %v2379 = vsub.f32 %v139, %v2378
    %v2380 = vand.u32 %v2379, 4294901760
    %2381 = vmatpush1.msra.mxu0 %v2380
    %v2382 = vand.u32 %v138, 4294901760
    %v2383 = vsub.f32 %v138, %v2382
    %v2384 = vand.u32 %v2383, 4294901760
    %2385 = vmatprep.subr.mxu0 %v2384
    %v2386 = vand.u32 %v137, 4294901760
    %v2387 = vsub.f32 %v137, %v2386
    %v2388 = vand.u32 %v2387, 4294901760
    %2389 = vmatpush1.msra.mxu0 %v2388
    %v2390 = vand.u32 %v136, 4294901760
    %v2391 = vsub.f32 %v136, %v2390
    %v2392 = vand.u32 %v2391, 4294901760
    %2393 = vmatprep.subr.mxu0 %v2392
    %v2394 = vand.u32 %v135, 4294901760
    %v2395 = vsub.f32 %v135, %v2394
    %v2396 = vand.u32 %v2395, 4294901760
    %2397 = vmatpush1.msra.mxu0 %v2396
    %v2398 = vand.u32 %v134, 4294901760
    %v2399 = vsub.f32 %v134, %v2398
    %v2400 = vand.u32 %v2399, 4294901760
    %2401 = vmatprep.subr.mxu0 %v2400
    %v2402 = vand.u32 %v133, 4294901760
    %v2403 = vsub.f32 %v133, %v2402
    %v2404 = vand.u32 %v2403, 4294901760
    %2405 = vmatpush1.msra.mxu0 %v2404
    %v2406 = vand.u32 %v132, 4294901760
    %v2407 = vsub.f32 %v132, %v2406
    %v2408 = vand.u32 %v2407, 4294901760
    %2409 = vmatprep.subr.mxu0 %v2408
    %v2410 = vand.u32 %v131, 4294901760
    %v2411 = vsub.f32 %v131, %v2410
    %v2412 = vand.u32 %v2411, 4294901760
    %2413 = vmatpush1.msra.mxu0 %v2412
    %v2414 = vand.u32 %v130, 4294901760
    %v2415 = vsub.f32 %v130, %v2414
    %v2416 = vand.u32 %v2415, 4294901760
    %2417 = vmatprep.subr.mxu0 %v2416
    %v2418 = vand.u32 %v129, 4294901760
    %v2419 = vsub.f32 %v129, %v2418
    %v2420 = vand.u32 %v2419, 4294901760
    %2421 = vmatpush1.msra.mxu0 %v2420
    %v2422 = vand.u32 %v128, 4294901760
    %v2423 = vsub.f32 %v128, %v2422
    %v2424 = vand.u32 %v2423, 4294901760
    %2425 = vmatprep.subr.mxu0 %v2424
    %v2426 = vand.u32 %v127, 4294901760
    %v2427 = vsub.f32 %v127, %v2426
    %v2428 = vand.u32 %v2427, 4294901760
    %2429 = vmatpush1.msra.mxu0 %v2428
    %v2430 = vand.u32 %v126, 4294901760
    %v2431 = vsub.f32 %v126, %v2430
    %v2432 = vand.u32 %v2431, 4294901760
    %2433 = vmatprep.subr.mxu0 %v2432
    %v2434 = vand.u32 %v125, 4294901760
    %v2435 = vsub.f32 %v125, %v2434
    %v2436 = vand.u32 %v2435, 4294901760
    %2437 = vmatpush1.msra.mxu0 %v2436
    %v2438 = vand.u32 %v124, 4294901760
    %v2439 = vsub.f32 %v124, %v2438
    %v2440 = vand.u32 %v2439, 4294901760
    %2441 = vmatprep.subr.mxu0 %v2440
    %v2442 = vand.u32 %v123, 4294901760
    %v2443 = vsub.f32 %v123, %v2442
    %v2444 = vand.u32 %v2443, 4294901760
    %2445 = vmatpush1.msra.mxu0 %v2444
    %v2446 = vand.u32 %v122, 4294901760
    %v2447 = vsub.f32 %v122, %v2446
    %v2448 = vand.u32 %v2447, 4294901760
    %2449 = vmatprep.subr.mxu0 %v2448
    %v2450 = vand.u32 %v121, 4294901760
    %v2451 = vsub.f32 %v121, %v2450
    %v2452 = vand.u32 %v2451, 4294901760
    %2453 = vmatpush1.msra.mxu0 %v2452
    %v2454 = vand.u32 %v120, 4294901760
    %v2455 = vsub.f32 %v120, %v2454
    %v2456 = vand.u32 %v2455, 4294901760
    %2457 = vmatprep.subr.mxu0 %v2456
    %v2458 = vand.u32 %v119, 4294901760
    %v2459 = vsub.f32 %v119, %v2458
    %v2460 = vand.u32 %v2459, 4294901760
    %2461 = vmatpush1.msra.mxu0 %v2460
    %v2462 = vand.u32 %v118, 4294901760
    %v2463 = vsub.f32 %v118, %v2462
    %v2464 = vand.u32 %v2463, 4294901760
    %2465 = vmatprep.subr.mxu0 %v2464
    %v2466 = vand.u32 %v117, 4294901760
    %v2467 = vsub.f32 %v117, %v2466
    %v2468 = vand.u32 %v2467, 4294901760
    %2469 = vmatpush1.msra.mxu0 %v2468
    %v2470 = vand.u32 %v116, 4294901760
    %v2471 = vsub.f32 %v116, %v2470
    %v2472 = vand.u32 %v2471, 4294901760
    %2473 = vmatprep.subr.mxu0 %v2472
    %v2474 = vand.u32 %v115, 4294901760
    %v2475 = vsub.f32 %v115, %v2474
    %v2476 = vand.u32 %v2475, 4294901760
    %2477 = vmatpush1.msra.mxu0 %v2476
    %v2478 = vand.u32 %v114, 4294901760
    %v2479 = vsub.f32 %v114, %v2478
    %v2480 = vand.u32 %v2479, 4294901760
    %2481 = vmatprep.subr.mxu0 %v2480
    %v2482 = vand.u32 %v113, 4294901760
    %v2483 = vsub.f32 %v113, %v2482
    %v2484 = vand.u32 %v2483, 4294901760
    %2485 = vmatpush1.msra.mxu0 %v2484
    %v2486 = vand.u32 %v112, 4294901760
    %v2487 = vsub.f32 %v112, %v2486
    %v2488 = vand.u32 %v2487, 4294901760
    %2489 = vmatprep.subr.mxu0 %v2488
    %v2490 = vand.u32 %v111, 4294901760
    %v2491 = vsub.f32 %v111, %v2490
    %v2492 = vand.u32 %v2491, 4294901760
    %2493 = vmatpush1.msra.mxu0 %v2492
    %v2494 = vand.u32 %v174, 4294901760
    %v2495 = vsub.f32 %v174, %v2494
    %v2496 = vand.u32 %v2495, 4294901760
    %2497 = vmatprep.subr.mxu0 %v2496
    %v2498 = vand.u32 %v173, 4294901760
    %v2499 = vsub.f32 %v173, %v2498
    %v2500 = vand.u32 %v2499, 4294901760
    %2501 = vmatpush2.msra.mxu0 %v2500
    %v2502 = vand.u32 %v172, 4294901760
    %v2503 = vsub.f32 %v172, %v2502
    %v2504 = vand.u32 %v2503, 4294901760
    %2505 = vmatprep.subr.mxu0 %v2504
    %v2506 = vand.u32 %v171, 4294901760
    %v2507 = vsub.f32 %v171, %v2506
    %v2508 = vand.u32 %v2507, 4294901760
    %2509 = vmatpush2.msra.mxu0 %v2508
    %v2510 = vand.u32 %v170, 4294901760
    %v2511 = vsub.f32 %v170, %v2510
    %v2512 = vand.u32 %v2511, 4294901760
    %2513 = vmatprep.subr.mxu0 %v2512
    %v2514 = vand.u32 %v169, 4294901760
    %v2515 = vsub.f32 %v169, %v2514
    %v2516 = vand.u32 %v2515, 4294901760
    %2517 = vmatpush2.msra.mxu0 %v2516
    %v2518 = vand.u32 %v168, 4294901760
    %v2519 = vsub.f32 %v168, %v2518
    %v2520 = vand.u32 %v2519, 4294901760
    %2521 = vmatprep.subr.mxu0 %v2520
    %v2522 = vand.u32 %v167, 4294901760
    %v2523 = vsub.f32 %v167, %v2522
    %v2524 = vand.u32 %v2523, 4294901760
    %2525 = vmatpush2.msra.mxu0 %v2524
    %v2526 = vand.u32 %v166, 4294901760
    %v2527 = vsub.f32 %v166, %v2526
    %v2528 = vand.u32 %v2527, 4294901760
    %2529 = vmatprep.subr.mxu0 %v2528
    %v2530 = vand.u32 %v165, 4294901760
    %v2531 = vsub.f32 %v165, %v2530
    %v2532 = vand.u32 %v2531, 4294901760
    %2533 = vmatpush2.msra.mxu0 %v2532
    %v2534 = vand.u32 %v164, 4294901760
    %v2535 = vsub.f32 %v164, %v2534
    %v2536 = vand.u32 %v2535, 4294901760
    %2537 = vmatprep.subr.mxu0 %v2536
    %v2538 = vand.u32 %v163, 4294901760
    %v2539 = vsub.f32 %v163, %v2538
    %v2540 = vand.u32 %v2539, 4294901760
    %2541 = vmatpush2.msra.mxu0 %v2540
    %v2542 = vand.u32 %v162, 4294901760
    %v2543 = vsub.f32 %v162, %v2542
    %v2544 = vand.u32 %v2543, 4294901760
    %2545 = vmatprep.subr.mxu0 %v2544
    %v2546 = vand.u32 %v161, 4294901760
    %v2547 = vsub.f32 %v161, %v2546
    %v2548 = vand.u32 %v2547, 4294901760
    %2549 = vmatpush2.msra.mxu0 %v2548
    %v2550 = vand.u32 %v160, 4294901760
    %v2551 = vsub.f32 %v160, %v2550
    %v2552 = vand.u32 %v2551, 4294901760
    %2553 = vmatprep.subr.mxu0 %v2552
    %v2554 = vand.u32 %v159, 4294901760
    %v2555 = vsub.f32 %v159, %v2554
    %v2556 = vand.u32 %v2555, 4294901760
    %2557 = vmatpush2.msra.mxu0 %v2556
    %v2558 = vand.u32 %v158, 4294901760
    %v2559 = vsub.f32 %v158, %v2558
    %v2560 = vand.u32 %v2559, 4294901760
    %2561 = vmatprep.subr.mxu0 %v2560
    %v2562 = vand.u32 %v157, 4294901760
    %v2563 = vsub.f32 %v157, %v2562
    %v2564 = vand.u32 %v2563, 4294901760
    %2565 = vmatpush2.msra.mxu0 %v2564
    %v2566 = vand.u32 %v156, 4294901760
    %v2567 = vsub.f32 %v156, %v2566
    %v2568 = vand.u32 %v2567, 4294901760
    %2569 = vmatprep.subr.mxu0 %v2568
    %v2570 = vand.u32 %v155, 4294901760
    %v2571 = vsub.f32 %v155, %v2570
    %v2572 = vand.u32 %v2571, 4294901760
    %2573 = vmatpush2.msra.mxu0 %v2572
    %v2574 = vand.u32 %v154, 4294901760
    %v2575 = vsub.f32 %v154, %v2574
    %v2576 = vand.u32 %v2575, 4294901760
    %2577 = vmatprep.subr.mxu0 %v2576
    %v2578 = vand.u32 %v153, 4294901760
    %v2579 = vsub.f32 %v153, %v2578
    %v2580 = vand.u32 %v2579, 4294901760
    %2581 = vmatpush2.msra.mxu0 %v2580
    %v2582 = vand.u32 %v152, 4294901760
    %v2583 = vsub.f32 %v152, %v2582
    %v2584 = vand.u32 %v2583, 4294901760
    %2585 = vmatprep.subr.mxu0 %v2584
    %v2586 = vand.u32 %v151, 4294901760
    %v2587 = vsub.f32 %v151, %v2586
    %v2588 = vand.u32 %v2587, 4294901760
    %2589 = vmatpush2.msra.mxu0 %v2588
    %v2590 = vand.u32 %v150, 4294901760
    %v2591 = vsub.f32 %v150, %v2590
    %v2592 = vand.u32 %v2591, 4294901760
    %2593 = vmatprep.subr.mxu0 %v2592
    %v2594 = vand.u32 %v149, 4294901760
    %v2595 = vsub.f32 %v149, %v2594
    %v2596 = vand.u32 %v2595, 4294901760
    %2597 = vmatpush2.msra.mxu0 %v2596
    %v2598 = vand.u32 %v148, 4294901760
    %v2599 = vsub.f32 %v148, %v2598
    %v2600 = vand.u32 %v2599, 4294901760
    %2601 = vmatprep.subr.mxu0 %v2600
    %v2602 = vand.u32 %v147, 4294901760
    %v2603 = vsub.f32 %v147, %v2602
    %v2604 = vand.u32 %v2603, 4294901760
    %2605 = vmatpush2.msra.mxu0 %v2604
    %v2606 = vand.u32 %v146, 4294901760
    %v2607 = vsub.f32 %v146, %v2606
    %v2608 = vand.u32 %v2607, 4294901760
    %2609 = vmatprep.subr.mxu0 %v2608
    %v2610 = vand.u32 %v145, 4294901760
    %v2611 = vsub.f32 %v145, %v2610
    %v2612 = vand.u32 %v2611, 4294901760
    %2613 = vmatpush2.msra.mxu0 %v2612
    %v2614 = vand.u32 %v144, 4294901760
    %v2615 = vsub.f32 %v144, %v2614
    %v2616 = vand.u32 %v2615, 4294901760
    %2617 = vmatprep.subr.mxu0 %v2616
    %v2618 = vand.u32 %v143, 4294901760
    %v2619 = vsub.f32 %v143, %v2618
    %v2620 = vand.u32 %v2619, 4294901760
    %2621 = vmatpush2.msra.mxu0 %v2620
    %v2622 = vand.u32 %v44, 4294901760
    %2623 = vmatprep.mubr.f32.mxu0 %v2622
    %v2624 = vand.u32 %v43, 4294901760
    %2625 = vmatmul.mubr.f32.gmra.mxu0 %v2624
    %v2626 = vpop.f32.mrf.mxu0
    %v2627 = vadd.f32 %v2362, %v2626
    %v2628 = vpop.f32.mrf.mxu0
    %v2629 = vadd.f32 %v2364, %v2628
    %2630 = vdwg.mxu0
    %v2631 = vand.u32 %v142, 4294901760
    %2632 = vmatprep.subr.mxu0 %v2631
    %v2633 = vand.u32 %v141, 4294901760
    %2634 = vmatpush1.msra.mxu0 %v2633
    %v2635 = vand.u32 %v140, 4294901760
    %2636 = vmatprep.subr.mxu0 %v2635
    %v2637 = vand.u32 %v139, 4294901760
    %2638 = vmatpush1.msra.mxu0 %v2637
    %v2639 = vand.u32 %v138, 4294901760
    %2640 = vmatprep.subr.mxu0 %v2639
    %v2641 = vand.u32 %v137, 4294901760
    %2642 = vmatpush1.msra.mxu0 %v2641
    %v2643 = vand.u32 %v136, 4294901760
    %2644 = vmatprep.subr.mxu0 %v2643
    %v2645 = vand.u32 %v135, 4294901760
    %2646 = vmatpush1.msra.mxu0 %v2645
    %v2647 = vand.u32 %v134, 4294901760
    %2648 = vmatprep.subr.mxu0 %v2647
    %v2649 = vand.u32 %v133, 4294901760
    %2650 = vmatpush1.msra.mxu0 %v2649
    %v2651 = vand.u32 %v132, 4294901760
    %2652 = vmatprep.subr.mxu0 %v2651
    %v2653 = vand.u32 %v131, 4294901760
    %2654 = vmatpush1.msra.mxu0 %v2653
    %v2655 = vand.u32 %v130, 4294901760
    %2656 = vmatprep.subr.mxu0 %v2655
    %v2657 = vand.u32 %v129, 4294901760
    %2658 = vmatpush1.msra.mxu0 %v2657
    %v2659 = vand.u32 %v128, 4294901760
    %2660 = vmatprep.subr.mxu0 %v2659
    %v2661 = vand.u32 %v127, 4294901760
    %2662 = vmatpush1.msra.mxu0 %v2661
    %v2663 = vand.u32 %v126, 4294901760
    %2664 = vmatprep.subr.mxu0 %v2663
    %v2665 = vand.u32 %v125, 4294901760
    %2666 = vmatpush1.msra.mxu0 %v2665
    %v2667 = vand.u32 %v124, 4294901760
    %2668 = vmatprep.subr.mxu0 %v2667
    %v2669 = vand.u32 %v123, 4294901760
    %2670 = vmatpush1.msra.mxu0 %v2669
    %v2671 = vand.u32 %v122, 4294901760
    %2672 = vmatprep.subr.mxu0 %v2671
    %v2673 = vand.u32 %v121, 4294901760
    %2674 = vmatpush1.msra.mxu0 %v2673
    %v2675 = vand.u32 %v120, 4294901760
    %2676 = vmatprep.subr.mxu0 %v2675
    %v2677 = vand.u32 %v119, 4294901760
    %2678 = vmatpush1.msra.mxu0 %v2677
    %v2679 = vand.u32 %v118, 4294901760
    %2680 = vmatprep.subr.mxu0 %v2679
    %v2681 = vand.u32 %v117, 4294901760
    %2682 = vmatpush1.msra.mxu0 %v2681
    %v2683 = vand.u32 %v116, 4294901760
    %2684 = vmatprep.subr.mxu0 %v2683
    %v2685 = vand.u32 %v115, 4294901760
    %2686 = vmatpush1.msra.mxu0 %v2685
    %v2687 = vand.u32 %v114, 4294901760
    %2688 = vmatprep.subr.mxu0 %v2687
    %v2689 = vand.u32 %v113, 4294901760
    %2690 = vmatpush1.msra.mxu0 %v2689
    %v2691 = vand.u32 %v112, 4294901760
    %2692 = vmatprep.subr.mxu0 %v2691
    %v2693 = vand.u32 %v111, 4294901760
    %2694 = vmatpush1.msra.mxu0 %v2693
    %v2695 = vand.u32 %v174, 4294901760
    %2696 = vmatprep.subr.mxu0 %v2695
    %v2697 = vand.u32 %v173, 4294901760
    %2698 = vmatpush2.msra.mxu0 %v2697
    %v2699 = vand.u32 %v172, 4294901760
    %2700 = vmatprep.subr.mxu0 %v2699
    %v2701 = vand.u32 %v171, 4294901760
    %2702 = vmatpush2.msra.mxu0 %v2701
    %v2703 = vand.u32 %v170, 4294901760
    %2704 = vmatprep.subr.mxu0 %v2703
    %v2705 = vand.u32 %v169, 4294901760
    %2706 = vmatpush2.msra.mxu0 %v2705
    %v2707 = vand.u32 %v168, 4294901760
    %2708 = vmatprep.subr.mxu0 %v2707
    %v2709 = vand.u32 %v167, 4294901760
    %2710 = vmatpush2.msra.mxu0 %v2709
    %v2711 = vand.u32 %v166, 4294901760
    %2712 = vmatprep.subr.mxu0 %v2711
    %v2713 = vand.u32 %v165, 4294901760
    %2714 = vmatpush2.msra.mxu0 %v2713
    %v2715 = vand.u32 %v164, 4294901760
    %2716 = vmatprep.subr.mxu0 %v2715
    %v2717 = vand.u32 %v163, 4294901760
    %2718 = vmatpush2.msra.mxu0 %v2717
    %v2719 = vand.u32 %v162, 4294901760
    %2720 = vmatprep.subr.mxu0 %v2719
    %v2721 = vand.u32 %v161, 4294901760
    %2722 = vmatpush2.msra.mxu0 %v2721
    %v2723 = vand.u32 %v160, 4294901760
    %2724 = vmatprep.subr.mxu0 %v2723
    %v2725 = vand.u32 %v159, 4294901760
    %2726 = vmatpush2.msra.mxu0 %v2725
    %v2727 = vand.u32 %v158, 4294901760
    %2728 = vmatprep.subr.mxu0 %v2727
    %v2729 = vand.u32 %v157, 4294901760
    %2730 = vmatpush2.msra.mxu0 %v2729
    %v2731 = vand.u32 %v156, 4294901760
    %2732 = vmatprep.subr.mxu0 %v2731
    %v2733 = vand.u32 %v155, 4294901760
    %2734 = vmatpush2.msra.mxu0 %v2733
    %v2735 = vand.u32 %v154, 4294901760
    %2736 = vmatprep.subr.mxu0 %v2735
    %v2737 = vand.u32 %v153, 4294901760
    %2738 = vmatpush2.msra.mxu0 %v2737
    %v2739 = vand.u32 %v152, 4294901760
    %2740 = vmatprep.subr.mxu0 %v2739
    %v2741 = vand.u32 %v151, 4294901760
    %2742 = vmatpush2.msra.mxu0 %v2741
    %v2743 = vand.u32 %v150, 4294901760
    %2744 = vmatprep.subr.mxu0 %v2743
    %v2745 = vand.u32 %v149, 4294901760
    %2746 = vmatpush2.msra.mxu0 %v2745
    %v2747 = vand.u32 %v148, 4294901760
    %2748 = vmatprep.subr.mxu0 %v2747
    %v2749 = vand.u32 %v147, 4294901760
    %2750 = vmatpush2.msra.mxu0 %v2749
    %v2751 = vand.u32 %v146, 4294901760
    %2752 = vmatprep.subr.mxu0 %v2751
    %v2753 = vand.u32 %v145, 4294901760
    %2754 = vmatpush2.msra.mxu0 %v2753
    %v2755 = vand.u32 %v144, 4294901760
    %2756 = vmatprep.subr.mxu0 %v2755
    %v2757 = vand.u32 %v143, 4294901760
    %2758 = vmatpush2.msra.mxu0 %v2757
    %v2759 = vand.u32 %v44, 4294901760
    %2760 = vmatprep.mubr.f32.mxu0 %v2759
    %v2761 = vand.u32 %v43, 4294901760
    %2762 = vmatmul.mubr.f32.gmra.mxu0 %v2761
    %v2763 = vpop.f32.mrf.mxu0
    %v2764 = vadd.f32 %v2627, %v2763
    %v2765 = vpop.f32.mrf.mxu0
    %v2766 = vadd.f32 %v2629, %v2765
    %2767 = vdwg.mxu0
    %2768 = vmatprep.subr.mxu0 0.0
    %2769 = vmatpush1.msra.mxu0 0.0
    %2770 = vmatprep.subr.mxu0 0.0
    %2771 = vmatpush1.msra.mxu0 0.0
    %2772 = vmatprep.subr.mxu0 0.0
    %2773 = vmatpush1.msra.mxu0 0.0
    %2774 = vmatprep.subr.mxu0 0.0
    %2775 = vmatpush1.msra.mxu0 0.0
    %2776 = vmatprep.subr.mxu0 0.0
    %2777 = vmatpush1.msra.mxu0 0.0
    %2778 = vmatprep.subr.mxu0 0.0
    %2779 = vmatpush1.msra.mxu0 0.0
    %2780 = vmatprep.subr.mxu0 0.0
    %2781 = vmatpush1.msra.mxu0 0.0
    %2782 = vmatprep.subr.mxu0 0.0
    %2783 = vmatpush1.msra.mxu0 0.0
    %v2784 = vand.u32 %v190, 4294901760
    %2785 = vmatprep.subr.mxu0 %v2784
    %v2786 = vand.u32 %v189, 4294901760
    %2787 = vmatpush1.msra.mxu0 %v2786
    %v2788 = vand.u32 %v188, 4294901760
    %2789 = vmatprep.subr.mxu0 %v2788
    %v2790 = vand.u32 %v187, 4294901760
    %2791 = vmatpush1.msra.mxu0 %v2790
    %v2792 = vand.u32 %v186, 4294901760
    %2793 = vmatprep.subr.mxu0 %v2792
    %v2794 = vand.u32 %v185, 4294901760
    %2795 = vmatpush1.msra.mxu0 %v2794
    %v2796 = vand.u32 %v184, 4294901760
    %2797 = vmatprep.subr.mxu0 %v2796
    %v2798 = vand.u32 %v183, 4294901760
    %2799 = vmatpush1.msra.mxu0 %v2798
    %v2800 = vand.u32 %v182, 4294901760
    %2801 = vmatprep.subr.mxu0 %v2800
    %v2802 = vand.u32 %v181, 4294901760
    %2803 = vmatpush1.msra.mxu0 %v2802
    %v2804 = vand.u32 %v180, 4294901760
    %2805 = vmatprep.subr.mxu0 %v2804
    %v2806 = vand.u32 %v179, 4294901760
    %2807 = vmatpush1.msra.mxu0 %v2806
    %v2808 = vand.u32 %v178, 4294901760
    %2809 = vmatprep.subr.mxu0 %v2808
    %v2810 = vand.u32 %v177, 4294901760
    %2811 = vmatpush1.msra.mxu0 %v2810
    %v2812 = vand.u32 %v176, 4294901760
    %2813 = vmatprep.subr.mxu0 %v2812
    %v2814 = vand.u32 %v175, 4294901760
    %2815 = vmatpush1.msra.mxu0 %v2814
    %2816 = vmatprep.subr.mxu0 0.0
    %2817 = vmatpush2.msra.mxu0 0.0
    %2818 = vmatprep.subr.mxu0 0.0
    %2819 = vmatpush2.msra.mxu0 0.0
    %2820 = vmatprep.subr.mxu0 0.0
    %2821 = vmatpush2.msra.mxu0 0.0
    %2822 = vmatprep.subr.mxu0 0.0
    %2823 = vmatpush2.msra.mxu0 0.0
    %2824 = vmatprep.subr.mxu0 0.0
    %2825 = vmatpush2.msra.mxu0 0.0
    %2826 = vmatprep.subr.mxu0 0.0
    %2827 = vmatpush2.msra.mxu0 0.0
    %2828 = vmatprep.subr.mxu0 0.0
    %2829 = vmatpush2.msra.mxu0 0.0
    %2830 = vmatprep.subr.mxu0 0.0
    %2831 = vmatpush2.msra.mxu0 0.0
    %2832 = vmatprep.subr.mxu0 0.0
    %2833 = vmatpush2.msra.mxu0 0.0
    %2834 = vmatprep.subr.mxu0 0.0
    %2835 = vmatpush2.msra.mxu0 0.0
    %2836 = vmatprep.subr.mxu0 0.0
    %2837 = vmatpush2.msra.mxu0 0.0
    %2838 = vmatprep.subr.mxu0 0.0
    %2839 = vmatpush2.msra.mxu0 0.0
    %2840 = vmatprep.subr.mxu0 0.0
    %2841 = vmatpush2.msra.mxu0 0.0
    %2842 = vmatprep.subr.mxu0 0.0
    %2843 = vmatpush2.msra.mxu0 0.0
    %2844 = vmatprep.subr.mxu0 0.0
    %2845 = vmatpush2.msra.mxu0 0.0
    %2846 = vmatprep.subr.mxu0 0.0
    %2847 = vmatpush2.msra.mxu0 0.0
    %2848 = vmatprep.mubr.f32.mxu0 0.0
    %v2849 = vand.u32 %v198, 4294901760
    %v2850 = vsub.f32 %v198, %v2849
    %v2851 = vand.u32 %v2850, 4294901760
    %v2852 = vsub.f32 %v2850, %v2851
    %v2853 = vand.u32 %v2852, 4294901760
    %2854 = vmatmul.mubr.f32.gmra.mxu0 %v2853
    %v2855 = vpop.f32.mrf.mxu0
    %v2856 = vadd.f32 %v2764, %v2855
    %v2857 = vpop.f32.mrf.mxu0
    %v2858 = vadd.f32 %v2766, %v2857
    %2859 = vdwg.mxu0
    %2860 = vmatprep.subr.mxu0 0.0
    %2861 = vmatpush1.msra.mxu0 0.0
    %2862 = vmatprep.subr.mxu0 0.0
    %2863 = vmatpush1.msra.mxu0 0.0
    %2864 = vmatprep.subr.mxu0 0.0
    %2865 = vmatpush1.msra.mxu0 0.0
    %2866 = vmatprep.subr.mxu0 0.0
    %2867 = vmatpush1.msra.mxu0 0.0
    %2868 = vmatprep.subr.mxu0 0.0
    %2869 = vmatpush1.msra.mxu0 0.0
    %2870 = vmatprep.subr.mxu0 0.0
    %2871 = vmatpush1.msra.mxu0 0.0
    %2872 = vmatprep.subr.mxu0 0.0
    %2873 = vmatpush1.msra.mxu0 0.0
    %2874 = vmatprep.subr.mxu0 0.0
    %2875 = vmatpush1.msra.mxu0 0.0
    %v2876 = vand.u32 %v190, 4294901760
    %v2877 = vsub.f32 %v190, %v2876
    %v2878 = vand.u32 %v2877, 4294901760
    %v2879 = vsub.f32 %v2877, %v2878
    %v2880 = vand.u32 %v2879, 4294901760
    %2881 = vmatprep.subr.mxu0 %v2880
    %v2882 = vand.u32 %v189, 4294901760
    %v2883 = vsub.f32 %v189, %v2882
    %v2884 = vand.u32 %v2883, 4294901760
    %v2885 = vsub.f32 %v2883, %v2884
    %v2886 = vand.u32 %v2885, 4294901760
    %2887 = vmatpush1.msra.mxu0 %v2886
    %v2888 = vand.u32 %v188, 4294901760
    %v2889 = vsub.f32 %v188, %v2888
    %v2890 = vand.u32 %v2889, 4294901760
    %v2891 = vsub.f32 %v2889, %v2890
    %v2892 = vand.u32 %v2891, 4294901760
    %2893 = vmatprep.subr.mxu0 %v2892
    %v2894 = vand.u32 %v187, 4294901760
    %v2895 = vsub.f32 %v187, %v2894
    %v2896 = vand.u32 %v2895, 4294901760
    %v2897 = vsub.f32 %v2895, %v2896
    %v2898 = vand.u32 %v2897, 4294901760
    %2899 = vmatpush1.msra.mxu0 %v2898
    %v2900 = vand.u32 %v186, 4294901760
    %v2901 = vsub.f32 %v186, %v2900
    %v2902 = vand.u32 %v2901, 4294901760
    %v2903 = vsub.f32 %v2901, %v2902
    %v2904 = vand.u32 %v2903, 4294901760
    %2905 = vmatprep.subr.mxu0 %v2904
    %v2906 = vand.u32 %v185, 4294901760
    %v2907 = vsub.f32 %v185, %v2906
    %v2908 = vand.u32 %v2907, 4294901760
    %v2909 = vsub.f32 %v2907, %v2908
    %v2910 = vand.u32 %v2909, 4294901760
    %2911 = vmatpush1.msra.mxu0 %v2910
    %v2912 = vand.u32 %v184, 4294901760
    %v2913 = vsub.f32 %v184, %v2912
    %v2914 = vand.u32 %v2913, 4294901760
    %v2915 = vsub.f32 %v2913, %v2914
    %v2916 = vand.u32 %v2915, 4294901760
    %2917 = vmatprep.subr.mxu0 %v2916
    %v2918 = vand.u32 %v183, 4294901760
    %v2919 = vsub.f32 %v183, %v2918
    %v2920 = vand.u32 %v2919, 4294901760
    %v2921 = vsub.f32 %v2919, %v2920
    %v2922 = vand.u32 %v2921, 4294901760
    %2923 = vmatpush1.msra.mxu0 %v2922
    %v2924 = vand.u32 %v182, 4294901760
    %v2925 = vsub.f32 %v182, %v2924
    %v2926 = vand.u32 %v2925, 4294901760
    %v2927 = vsub.f32 %v2925, %v2926
    %v2928 = vand.u32 %v2927, 4294901760
    %2929 = vmatprep.subr.mxu0 %v2928
    %v2930 = vand.u32 %v181, 4294901760
    %v2931 = vsub.f32 %v181, %v2930
    %v2932 = vand.u32 %v2931, 4294901760
    %v2933 = vsub.f32 %v2931, %v2932
    %v2934 = vand.u32 %v2933, 4294901760
    %2935 = vmatpush1.msra.mxu0 %v2934
    %v2936 = vand.u32 %v180, 4294901760
    %v2937 = vsub.f32 %v180, %v2936
    %v2938 = vand.u32 %v2937, 4294901760
    %v2939 = vsub.f32 %v2937, %v2938
    %v2940 = vand.u32 %v2939, 4294901760
    %2941 = vmatprep.subr.mxu0 %v2940
    %v2942 = vand.u32 %v179, 4294901760
    %v2943 = vsub.f32 %v179, %v2942
    %v2944 = vand.u32 %v2943, 4294901760
    %v2945 = vsub.f32 %v2943, %v2944
    %v2946 = vand.u32 %v2945, 4294901760
    %2947 = vmatpush1.msra.mxu0 %v2946
    %v2948 = vand.u32 %v178, 4294901760
    %v2949 = vsub.f32 %v178, %v2948
    %v2950 = vand.u32 %v2949, 4294901760
    %v2951 = vsub.f32 %v2949, %v2950
    %v2952 = vand.u32 %v2951, 4294901760
    %2953 = vmatprep.subr.mxu0 %v2952
    %v2954 = vand.u32 %v177, 4294901760
    %v2955 = vsub.f32 %v177, %v2954
    %v2956 = vand.u32 %v2955, 4294901760
    %v2957 = vsub.f32 %v2955, %v2956
    %v2958 = vand.u32 %v2957, 4294901760
    %2959 = vmatpush1.msra.mxu0 %v2958
    %v2960 = vand.u32 %v176, 4294901760
    %v2961 = vsub.f32 %v176, %v2960
    %v2962 = vand.u32 %v2961, 4294901760
    %v2963 = vsub.f32 %v2961, %v2962
    %v2964 = vand.u32 %v2963, 4294901760
    %2965 = vmatprep.subr.mxu0 %v2964
    %v2966 = vand.u32 %v175, 4294901760
    %v2967 = vsub.f32 %v175, %v2966
    %v2968 = vand.u32 %v2967, 4294901760
    %v2969 = vsub.f32 %v2967, %v2968
    %v2970 = vand.u32 %v2969, 4294901760
    %2971 = vmatpush1.msra.mxu0 %v2970
    %2972 = vmatprep.subr.mxu0 0.0
    %2973 = vmatpush2.msra.mxu0 0.0
    %2974 = vmatprep.subr.mxu0 0.0
    %2975 = vmatpush2.msra.mxu0 0.0
    %2976 = vmatprep.subr.mxu0 0.0
    %2977 = vmatpush2.msra.mxu0 0.0
    %2978 = vmatprep.subr.mxu0 0.0
    %2979 = vmatpush2.msra.mxu0 0.0
    %2980 = vmatprep.subr.mxu0 0.0
    %2981 = vmatpush2.msra.mxu0 0.0
    %2982 = vmatprep.subr.mxu0 0.0
    %2983 = vmatpush2.msra.mxu0 0.0
    %2984 = vmatprep.subr.mxu0 0.0
    %2985 = vmatpush2.msra.mxu0 0.0
    %2986 = vmatprep.subr.mxu0 0.0
    %2987 = vmatpush2.msra.mxu0 0.0
    %2988 = vmatprep.subr.mxu0 0.0
    %2989 = vmatpush2.msra.mxu0 0.0
    %2990 = vmatprep.subr.mxu0 0.0
    %2991 = vmatpush2.msra.mxu0 0.0
    %2992 = vmatprep.subr.mxu0 0.0
    %2993 = vmatpush2.msra.mxu0 0.0
    %2994 = vmatprep.subr.mxu0 0.0
    %2995 = vmatpush2.msra.mxu0 0.0
    %2996 = vmatprep.subr.mxu0 0.0
    %2997 = vmatpush2.msra.mxu0 0.0
    %2998 = vmatprep.subr.mxu0 0.0
    %2999 = vmatpush2.msra.mxu0 0.0
    %3000 = vmatprep.subr.mxu0 0.0
    %3001 = vmatpush2.msra.mxu0 0.0
    %3002 = vmatprep.subr.mxu0 0.0
    %3003 = vmatpush2.msra.mxu0 0.0
    %3004 = vmatprep.mubr.f32.mxu0 0.0
    %v3005 = vand.u32 %v198, 4294901760
    %3006 = vmatmul.mubr.f32.gmra.mxu0 %v3005
    %v3007 = vpop.f32.mrf.mxu0
    %v3008 = vadd.f32 %v2856, %v3007
    %v3009 = vpop.f32.mrf.mxu0
    %v3010 = vadd.f32 %v2858, %v3009
    %3011 = vdwg.mxu0
    %3012 = vmatprep.subr.mxu0 0.0
    %3013 = vmatpush1.msra.mxu0 0.0
    %3014 = vmatprep.subr.mxu0 0.0
    %3015 = vmatpush1.msra.mxu0 0.0
    %3016 = vmatprep.subr.mxu0 0.0
    %3017 = vmatpush1.msra.mxu0 0.0
    %3018 = vmatprep.subr.mxu0 0.0
    %3019 = vmatpush1.msra.mxu0 0.0
    %3020 = vmatprep.subr.mxu0 0.0
    %3021 = vmatpush1.msra.mxu0 0.0
    %3022 = vmatprep.subr.mxu0 0.0
    %3023 = vmatpush1.msra.mxu0 0.0
    %3024 = vmatprep.subr.mxu0 0.0
    %3025 = vmatpush1.msra.mxu0 0.0
    %3026 = vmatprep.subr.mxu0 0.0
    %3027 = vmatpush1.msra.mxu0 0.0
    %v3028 = vand.u32 %v190, 4294901760
    %v3029 = vsub.f32 %v190, %v3028
    %3030 = vmatprep.subr.mxu0 %v3029
    %v3031 = vand.u32 %v189, 4294901760
    %v3032 = vsub.f32 %v189, %v3031
    %3033 = vmatpush1.msra.mxu0 %v3032
    %v3034 = vand.u32 %v188, 4294901760
    %v3035 = vsub.f32 %v188, %v3034
    %3036 = vmatprep.subr.mxu0 %v3035
    %v3037 = vand.u32 %v187, 4294901760
    %v3038 = vsub.f32 %v187, %v3037
    %3039 = vmatpush1.msra.mxu0 %v3038
    %v3040 = vand.u32 %v186, 4294901760
    %v3041 = vsub.f32 %v186, %v3040
    %3042 = vmatprep.subr.mxu0 %v3041
    %v3043 = vand.u32 %v185, 4294901760
    %v3044 = vsub.f32 %v185, %v3043
    %3045 = vmatpush1.msra.mxu0 %v3044
    %v3046 = vand.u32 %v184, 4294901760
    %v3047 = vsub.f32 %v184, %v3046
    %3048 = vmatprep.subr.mxu0 %v3047
    %v3049 = vand.u32 %v183, 4294901760
    %v3050 = vsub.f32 %v183, %v3049
    %3051 = vmatpush1.msra.mxu0 %v3050
    %v3052 = vand.u32 %v182, 4294901760
    %v3053 = vsub.f32 %v182, %v3052
    %3054 = vmatprep.subr.mxu0 %v3053
    %v3055 = vand.u32 %v181, 4294901760
    %v3056 = vsub.f32 %v181, %v3055
    %3057 = vmatpush1.msra.mxu0 %v3056
    %v3058 = vand.u32 %v180, 4294901760
    %v3059 = vsub.f32 %v180, %v3058
    %3060 = vmatprep.subr.mxu0 %v3059
    %v3061 = vand.u32 %v179, 4294901760
    %v3062 = vsub.f32 %v179, %v3061
    %3063 = vmatpush1.msra.mxu0 %v3062
    %v3064 = vand.u32 %v178, 4294901760
    %v3065 = vsub.f32 %v178, %v3064
    %3066 = vmatprep.subr.mxu0 %v3065
    %v3067 = vand.u32 %v177, 4294901760
    %v3068 = vsub.f32 %v177, %v3067
    %3069 = vmatpush1.msra.mxu0 %v3068
    %v3070 = vand.u32 %v176, 4294901760
    %v3071 = vsub.f32 %v176, %v3070
    %3072 = vmatprep.subr.mxu0 %v3071
    %v3073 = vand.u32 %v175, 4294901760
    %v3074 = vsub.f32 %v175, %v3073
    %3075 = vmatpush1.msra.mxu0 %v3074
    %3076 = vmatprep.subr.mxu0 0.0
    %3077 = vmatpush2.msra.mxu0 0.0
    %3078 = vmatprep.subr.mxu0 0.0
    %3079 = vmatpush2.msra.mxu0 0.0
    %3080 = vmatprep.subr.mxu0 0.0
    %3081 = vmatpush2.msra.mxu0 0.0
    %3082 = vmatprep.subr.mxu0 0.0
    %3083 = vmatpush2.msra.mxu0 0.0
    %3084 = vmatprep.subr.mxu0 0.0
    %3085 = vmatpush2.msra.mxu0 0.0
    %3086 = vmatprep.subr.mxu0 0.0
    %3087 = vmatpush2.msra.mxu0 0.0
    %3088 = vmatprep.subr.mxu0 0.0
    %3089 = vmatpush2.msra.mxu0 0.0
    %3090 = vmatprep.subr.mxu0 0.0
    %3091 = vmatpush2.msra.mxu0 0.0
    %3092 = vmatprep.subr.mxu0 0.0
    %3093 = vmatpush2.msra.mxu0 0.0
    %3094 = vmatprep.subr.mxu0 0.0
    %3095 = vmatpush2.msra.mxu0 0.0
    %3096 = vmatprep.subr.mxu0 0.0
    %3097 = vmatpush2.msra.mxu0 0.0
    %3098 = vmatprep.subr.mxu0 0.0
    %3099 = vmatpush2.msra.mxu0 0.0
    %3100 = vmatprep.subr.mxu0 0.0
    %3101 = vmatpush2.msra.mxu0 0.0
    %3102 = vmatprep.subr.mxu0 0.0
    %3103 = vmatpush2.msra.mxu0 0.0
    %3104 = vmatprep.subr.mxu0 0.0
    %3105 = vmatpush2.msra.mxu0 0.0
    %3106 = vmatprep.subr.mxu0 0.0
    %3107 = vmatpush2.msra.mxu0 0.0
    %3108 = vmatprep.mubr.f32.mxu0 0.0
    %v3109 = vand.u32 %v198, 4294901760
    %v3110 = vsub.f32 %v198, %v3109
    %3111 = vmatmul.mubr.f32.gmra.mxu0 %v3110
    %v3112 = vpop.f32.mrf.mxu0
    %v3113 = vadd.f32 %v3008, %v3112
    %v3114 = vpop.f32.mrf.mxu0
    %v3115 = vadd.f32 %v3010, %v3114
    %3116 = vdwg.mxu0
    %3117 = vmatprep.subr.mxu0 0.0
    %3118 = vmatpush1.msra.mxu0 0.0
    %3119 = vmatprep.subr.mxu0 0.0
    %3120 = vmatpush1.msra.mxu0 0.0
    %3121 = vmatprep.subr.mxu0 0.0
    %3122 = vmatpush1.msra.mxu0 0.0
    %3123 = vmatprep.subr.mxu0 0.0
    %3124 = vmatpush1.msra.mxu0 0.0
    %3125 = vmatprep.subr.mxu0 0.0
    %3126 = vmatpush1.msra.mxu0 0.0
    %3127 = vmatprep.subr.mxu0 0.0
    %3128 = vmatpush1.msra.mxu0 0.0
    %3129 = vmatprep.subr.mxu0 0.0
    %3130 = vmatpush1.msra.mxu0 0.0
    %3131 = vmatprep.subr.mxu0 0.0
    %3132 = vmatpush1.msra.mxu0 0.0
    %v3133 = vand.u32 %v190, 4294901760
    %3134 = vmatprep.subr.mxu0 %v3133
    %v3135 = vand.u32 %v189, 4294901760
    %3136 = vmatpush1.msra.mxu0 %v3135
    %v3137 = vand.u32 %v188, 4294901760
    %3138 = vmatprep.subr.mxu0 %v3137
    %v3139 = vand.u32 %v187, 4294901760
    %3140 = vmatpush1.msra.mxu0 %v3139
    %v3141 = vand.u32 %v186, 4294901760
    %3142 = vmatprep.subr.mxu0 %v3141
    %v3143 = vand.u32 %v185, 4294901760
    %3144 = vmatpush1.msra.mxu0 %v3143
    %v3145 = vand.u32 %v184, 4294901760
    %3146 = vmatprep.subr.mxu0 %v3145
    %v3147 = vand.u32 %v183, 4294901760
    %3148 = vmatpush1.msra.mxu0 %v3147
    %v3149 = vand.u32 %v182, 4294901760
    %3150 = vmatprep.subr.mxu0 %v3149
    %v3151 = vand.u32 %v181, 4294901760
    %3152 = vmatpush1.msra.mxu0 %v3151
    %v3153 = vand.u32 %v180, 4294901760
    %3154 = vmatprep.subr.mxu0 %v3153
    %v3155 = vand.u32 %v179, 4294901760
    %3156 = vmatpush1.msra.mxu0 %v3155
    %v3157 = vand.u32 %v178, 4294901760
    %3158 = vmatprep.subr.mxu0 %v3157
    %v3159 = vand.u32 %v177, 4294901760
    %3160 = vmatpush1.msra.mxu0 %v3159
    %v3161 = vand.u32 %v176, 4294901760
    %3162 = vmatprep.subr.mxu0 %v3161
    %v3163 = vand.u32 %v175, 4294901760
    %3164 = vmatpush1.msra.mxu0 %v3163
    %3165 = vmatprep.subr.mxu0 0.0
    %3166 = vmatpush2.msra.mxu0 0.0
    %3167 = vmatprep.subr.mxu0 0.0
    %3168 = vmatpush2.msra.mxu0 0.0
    %3169 = vmatprep.subr.mxu0 0.0
    %3170 = vmatpush2.msra.mxu0 0.0
    %3171 = vmatprep.subr.mxu0 0.0
    %3172 = vmatpush2.msra.mxu0 0.0
    %3173 = vmatprep.subr.mxu0 0.0
    %3174 = vmatpush2.msra.mxu0 0.0
    %3175 = vmatprep.subr.mxu0 0.0
    %3176 = vmatpush2.msra.mxu0 0.0
    %3177 = vmatprep.subr.mxu0 0.0
    %3178 = vmatpush2.msra.mxu0 0.0
    %3179 = vmatprep.subr.mxu0 0.0
    %3180 = vmatpush2.msra.mxu0 0.0
    %3181 = vmatprep.subr.mxu0 0.0
    %3182 = vmatpush2.msra.mxu0 0.0
    %3183 = vmatprep.subr.mxu0 0.0
    %3184 = vmatpush2.msra.mxu0 0.0
    %3185 = vmatprep.subr.mxu0 0.0
    %3186 = vmatpush2.msra.mxu0 0.0
    %3187 = vmatprep.subr.mxu0 0.0
    %3188 = vmatpush2.msra.mxu0 0.0
    %3189 = vmatprep.subr.mxu0 0.0
    %3190 = vmatpush2.msra.mxu0 0.0
    %3191 = vmatprep.subr.mxu0 0.0
    %3192 = vmatpush2.msra.mxu0 0.0
    %3193 = vmatprep.subr.mxu0 0.0
    %3194 = vmatpush2.msra.mxu0 0.0
    %3195 = vmatprep.subr.mxu0 0.0
    %3196 = vmatpush2.msra.mxu0 0.0
    %3197 = vmatprep.mubr.f32.mxu0 0.0
    %v3198 = vand.u32 %v198, 4294901760
    %v3199 = vsub.f32 %v198, %v3198
    %v3200 = vand.u32 %v3199, 4294901760
    %3201 = vmatmul.mubr.f32.gmra.mxu0 %v3200
    %v3202 = vpop.f32.mrf.mxu0
    %v3203 = vadd.f32 %v3113, %v3202
    %v3204 = vpop.f32.mrf.mxu0
    %v3205 = vadd.f32 %v3115, %v3204
    %3206 = vdwg.mxu0
    %3207 = vmatprep.subr.mxu0 0.0
    %3208 = vmatpush1.msra.mxu0 0.0
    %3209 = vmatprep.subr.mxu0 0.0
    %3210 = vmatpush1.msra.mxu0 0.0
    %3211 = vmatprep.subr.mxu0 0.0
    %3212 = vmatpush1.msra.mxu0 0.0
    %3213 = vmatprep.subr.mxu0 0.0
    %3214 = vmatpush1.msra.mxu0 0.0
    %3215 = vmatprep.subr.mxu0 0.0
    %3216 = vmatpush1.msra.mxu0 0.0
    %3217 = vmatprep.subr.mxu0 0.0
    %3218 = vmatpush1.msra.mxu0 0.0
    %3219 = vmatprep.subr.mxu0 0.0
    %3220 = vmatpush1.msra.mxu0 0.0
    %3221 = vmatprep.subr.mxu0 0.0
    %3222 = vmatpush1.msra.mxu0 0.0
    %v3223 = vand.u32 %v190, 4294901760
    %v3224 = vsub.f32 %v190, %v3223
    %v3225 = vand.u32 %v3224, 4294901760
    %3226 = vmatprep.subr.mxu0 %v3225
    %v3227 = vand.u32 %v189, 4294901760
    %v3228 = vsub.f32 %v189, %v3227
    %v3229 = vand.u32 %v3228, 4294901760
    %3230 = vmatpush1.msra.mxu0 %v3229
    %v3231 = vand.u32 %v188, 4294901760
    %v3232 = vsub.f32 %v188, %v3231
    %v3233 = vand.u32 %v3232, 4294901760
    %3234 = vmatprep.subr.mxu0 %v3233
    %v3235 = vand.u32 %v187, 4294901760
    %v3236 = vsub.f32 %v187, %v3235
    %v3237 = vand.u32 %v3236, 4294901760
    %3238 = vmatpush1.msra.mxu0 %v3237
    %v3239 = vand.u32 %v186, 4294901760
    %v3240 = vsub.f32 %v186, %v3239
    %v3241 = vand.u32 %v3240, 4294901760
    %3242 = vmatprep.subr.mxu0 %v3241
    %v3243 = vand.u32 %v185, 4294901760
    %v3244 = vsub.f32 %v185, %v3243
    %v3245 = vand.u32 %v3244, 4294901760
    %3246 = vmatpush1.msra.mxu0 %v3245
    %v3247 = vand.u32 %v184, 4294901760
    %v3248 = vsub.f32 %v184, %v3247
    %v3249 = vand.u32 %v3248, 4294901760
    %3250 = vmatprep.subr.mxu0 %v3249
    %v3251 = vand.u32 %v183, 4294901760
    %v3252 = vsub.f32 %v183, %v3251
    %v3253 = vand.u32 %v3252, 4294901760
    %3254 = vmatpush1.msra.mxu0 %v3253
    %v3255 = vand.u32 %v182, 4294901760
    %v3256 = vsub.f32 %v182, %v3255
    %v3257 = vand.u32 %v3256, 4294901760
    %3258 = vmatprep.subr.mxu0 %v3257
    %v3259 = vand.u32 %v181, 4294901760
    %v3260 = vsub.f32 %v181, %v3259
    %v3261 = vand.u32 %v3260, 4294901760
    %3262 = vmatpush1.msra.mxu0 %v3261
    %v3263 = vand.u32 %v180, 4294901760
    %v3264 = vsub.f32 %v180, %v3263
    %v3265 = vand.u32 %v3264, 4294901760
    %3266 = vmatprep.subr.mxu0 %v3265
    %v3267 = vand.u32 %v179, 4294901760
    %v3268 = vsub.f32 %v179, %v3267
    %v3269 = vand.u32 %v3268, 4294901760
    %3270 = vmatpush1.msra.mxu0 %v3269
    %v3271 = vand.u32 %v178, 4294901760
    %v3272 = vsub.f32 %v178, %v3271
    %v3273 = vand.u32 %v3272, 4294901760
    %3274 = vmatprep.subr.mxu0 %v3273
    %v3275 = vand.u32 %v177, 4294901760
    %v3276 = vsub.f32 %v177, %v3275
    %v3277 = vand.u32 %v3276, 4294901760
    %3278 = vmatpush1.msra.mxu0 %v3277
    %v3279 = vand.u32 %v176, 4294901760
    %v3280 = vsub.f32 %v176, %v3279
    %v3281 = vand.u32 %v3280, 4294901760
    %3282 = vmatprep.subr.mxu0 %v3281
    %v3283 = vand.u32 %v175, 4294901760
    %v3284 = vsub.f32 %v175, %v3283
    %v3285 = vand.u32 %v3284, 4294901760
    %3286 = vmatpush1.msra.mxu0 %v3285
    %3287 = vmatprep.subr.mxu0 0.0
    %3288 = vmatpush2.msra.mxu0 0.0
    %3289 = vmatprep.subr.mxu0 0.0
    %3290 = vmatpush2.msra.mxu0 0.0
    %3291 = vmatprep.subr.mxu0 0.0
    %3292 = vmatpush2.msra.mxu0 0.0
    %3293 = vmatprep.subr.mxu0 0.0
    %3294 = vmatpush2.msra.mxu0 0.0
    %3295 = vmatprep.subr.mxu0 0.0
    %3296 = vmatpush2.msra.mxu0 0.0
    %3297 = vmatprep.subr.mxu0 0.0
    %3298 = vmatpush2.msra.mxu0 0.0
    %3299 = vmatprep.subr.mxu0 0.0
    %3300 = vmatpush2.msra.mxu0 0.0
    %3301 = vmatprep.subr.mxu0 0.0
    %3302 = vmatpush2.msra.mxu0 0.0
    %3303 = vmatprep.subr.mxu0 0.0
    %3304 = vmatpush2.msra.mxu0 0.0
    %3305 = vmatprep.subr.mxu0 0.0
    %3306 = vmatpush2.msra.mxu0 0.0
    %3307 = vmatprep.subr.mxu0 0.0
    %3308 = vmatpush2.msra.mxu0 0.0
    %3309 = vmatprep.subr.mxu0 0.0
    %3310 = vmatpush2.msra.mxu0 0.0
    %3311 = vmatprep.subr.mxu0 0.0
    %3312 = vmatpush2.msra.mxu0 0.0
    %3313 = vmatprep.subr.mxu0 0.0
    %3314 = vmatpush2.msra.mxu0 0.0
    %3315 = vmatprep.subr.mxu0 0.0
    %3316 = vmatpush2.msra.mxu0 0.0
    %3317 = vmatprep.subr.mxu0 0.0
    %3318 = vmatpush2.msra.mxu0 0.0
    %3319 = vmatprep.mubr.f32.mxu0 0.0
    %v3320 = vand.u32 %v198, 4294901760
    %3321 = vmatmul.mubr.f32.gmra.mxu0 %v3320
    %v3322 = vpop.f32.mrf.mxu0
    %v3323 = vadd.f32 %v3203, %v3322
    %v3324 = vpop.f32.mrf.mxu0
    %v3325 = vadd.f32 %v3205, %v3324
    %3326 = vdwg.mxu0
    %3327 = vmatprep.subr.mxu0 0.0
    %3328 = vmatpush1.msra.mxu0 0.0
    %3329 = vmatprep.subr.mxu0 0.0
    %3330 = vmatpush1.msra.mxu0 0.0
    %3331 = vmatprep.subr.mxu0 0.0
    %3332 = vmatpush1.msra.mxu0 0.0
    %3333 = vmatprep.subr.mxu0 0.0
    %3334 = vmatpush1.msra.mxu0 0.0
    %3335 = vmatprep.subr.mxu0 0.0
    %3336 = vmatpush1.msra.mxu0 0.0
    %3337 = vmatprep.subr.mxu0 0.0
    %3338 = vmatpush1.msra.mxu0 0.0
    %3339 = vmatprep.subr.mxu0 0.0
    %3340 = vmatpush1.msra.mxu0 0.0
    %3341 = vmatprep.subr.mxu0 0.0
    %3342 = vmatpush1.msra.mxu0 0.0
    %v3343 = vand.u32 %v190, 4294901760
    %3344 = vmatprep.subr.mxu0 %v3343
    %v3345 = vand.u32 %v189, 4294901760
    %3346 = vmatpush1.msra.mxu0 %v3345
    %v3347 = vand.u32 %v188, 4294901760
    %3348 = vmatprep.subr.mxu0 %v3347
    %v3349 = vand.u32 %v187, 4294901760
    %3350 = vmatpush1.msra.mxu0 %v3349
    %v3351 = vand.u32 %v186, 4294901760
    %3352 = vmatprep.subr.mxu0 %v3351
    %v3353 = vand.u32 %v185, 4294901760
    %3354 = vmatpush1.msra.mxu0 %v3353
    %v3355 = vand.u32 %v184, 4294901760
    %3356 = vmatprep.subr.mxu0 %v3355
    %v3357 = vand.u32 %v183, 4294901760
    %3358 = vmatpush1.msra.mxu0 %v3357
    %v3359 = vand.u32 %v182, 4294901760
    %3360 = vmatprep.subr.mxu0 %v3359
    %v3361 = vand.u32 %v181, 4294901760
    %3362 = vmatpush1.msra.mxu0 %v3361
    %v3363 = vand.u32 %v180, 4294901760
    %3364 = vmatprep.subr.mxu0 %v3363
    %v3365 = vand.u32 %v179, 4294901760
    %3366 = vmatpush1.msra.mxu0 %v3365
    %v3367 = vand.u32 %v178, 4294901760
    %3368 = vmatprep.subr.mxu0 %v3367
    %v3369 = vand.u32 %v177, 4294901760
    %3370 = vmatpush1.msra.mxu0 %v3369
    %v3371 = vand.u32 %v176, 4294901760
    %3372 = vmatprep.subr.mxu0 %v3371
    %v3373 = vand.u32 %v175, 4294901760
    %3374 = vmatpush1.msra.mxu0 %v3373
    %3375 = vmatprep.subr.mxu0 0.0
    %3376 = vmatpush2.msra.mxu0 0.0
    %3377 = vmatprep.subr.mxu0 0.0
    %3378 = vmatpush2.msra.mxu0 0.0
    %3379 = vmatprep.subr.mxu0 0.0
    %3380 = vmatpush2.msra.mxu0 0.0
    %3381 = vmatprep.subr.mxu0 0.0
    %3382 = vmatpush2.msra.mxu0 0.0
    %3383 = vmatprep.subr.mxu0 0.0
    %3384 = vmatpush2.msra.mxu0 0.0
    %3385 = vmatprep.subr.mxu0 0.0
    %3386 = vmatpush2.msra.mxu0 0.0
    %3387 = vmatprep.subr.mxu0 0.0
    %3388 = vmatpush2.msra.mxu0 0.0
    %3389 = vmatprep.subr.mxu0 0.0
    %3390 = vmatpush2.msra.mxu0 0.0
    %3391 = vmatprep.subr.mxu0 0.0
    %3392 = vmatpush2.msra.mxu0 0.0
    %3393 = vmatprep.subr.mxu0 0.0
    %3394 = vmatpush2.msra.mxu0 0.0
    %3395 = vmatprep.subr.mxu0 0.0
    %3396 = vmatpush2.msra.mxu0 0.0
    %3397 = vmatprep.subr.mxu0 0.0
    %3398 = vmatpush2.msra.mxu0 0.0
    %3399 = vmatprep.subr.mxu0 0.0
    %3400 = vmatpush2.msra.mxu0 0.0
    %3401 = vmatprep.subr.mxu0 0.0
    %3402 = vmatpush2.msra.mxu0 0.0
    %3403 = vmatprep.subr.mxu0 0.0
    %3404 = vmatpush2.msra.mxu0 0.0
    %3405 = vmatprep.subr.mxu0 0.0
    %3406 = vmatpush2.msra.mxu0 0.0
    %3407 = vmatprep.mubr.f32.mxu0 0.0
    %v3408 = vand.u32 %v198, 4294901760
    %3409 = vmatmul.mubr.f32.gmra.mxu0 %v3408
    %v3410 = vpop.f32.mrf.mxu0
    %v3411 = vadd.f32 %v3323, %v3410
    %v3412 = vpop.f32.mrf.mxu0
    %v3413 = vadd.f32 %v3325, %v3412
    %3414 = vdwg.mxu0
    %3415 = vst [vmem:[#allocation7] sm:$0xff] %v3411
    %3416 = vst [vmem:[#allocation7 + $0x8] sm:$0xff] %v3413
    %s3417 = scalar_lea.vmem [#allocation2], 1152
    %v3418 = vld [vmem:[%s3417] sm:$0xff]
    %v3419 = vld [vmem:[%s3417 + $0x8] sm:$0xff]
    %v3420 = vld [vmem:[%s3417 + $0x10] sm:$0xff]
    %v3421 = vld [vmem:[%s3417 + $0x18] sm:$0xff]
    %v3422 = vld [vmem:[%s3417 + $0x20] sm:$0xff]
    %v3423 = vld [vmem:[%s3417 + $0x28] sm:$0xff]
    %v3424 = vld [vmem:[%s3417 + $0x30] sm:$0xff]
    %v3425 = vld [vmem:[%s3417 + $0x38] sm:$0xff]
    %v3426 = vld [vmem:[%s3417 + $0x40] sm:$0xff]
    %v3427 = vld [vmem:[%s3417 + $0x48] sm:$0xff]
    %v3428 = vld [vmem:[%s3417 + $0x50] sm:$0xff]
    %v3429 = vld [vmem:[%s3417 + $0x58] sm:$0xff]
    %v3430 = vld [vmem:[%s3417 + $0x60] sm:$0xff]
    %v3431 = vld [vmem:[%s3417 + $0x68] sm:$0xff]
    %v3432 = vld [vmem:[%s3417 + $0x70] sm:$0xff]
    %v3433 = vld [vmem:[%s3417 + $0x78] sm:$0xff]
    %v3434 = vld [vmem:[%s3417 + $0x80] sm:$0xff]
    %v3435 = vld [vmem:[%s3417 + $0x88] sm:$0xff]
    %v3436 = vld [vmem:[%s3417 + $0x90] sm:$0xff]
    %v3437 = vld [vmem:[%s3417 + $0x98] sm:$0xff]
    %v3438 = vld [vmem:[%s3417 + $0xa0] sm:$0xff]
    %v3439 = vld [vmem:[%s3417 + $0xa8] sm:$0xff]
    %v3440 = vld [vmem:[%s3417 + $0xb0] sm:$0xff]
    %v3441 = vld [vmem:[%s3417 + $0xb8] sm:$0xff]
    %v3442 = vld [vmem:[%s3417 + $0xc0] sm:$0xff]
    %v3443 = vld [vmem:[%s3417 + $0xc8] sm:$0xff]
    %v3444 = vld [vmem:[%s3417 + $0xd0] sm:$0xff]
    %v3445 = vld [vmem:[%s3417 + $0xd8] sm:$0xff]
    %v3446 = vld [vmem:[%s3417 + $0xe0] sm:$0xff]
    %v3447 = vld [vmem:[%s3417 + $0xe8] sm:$0xff]
    %v3448 = vld [vmem:[%s3417 + $0xf0] sm:$0xff]
    %v3449 = vld [vmem:[%s3417 + $0xf8] sm:$0xff]
    %v3450 = vld [vmem:[%s3417 + $0x100] sm:$0xff]
    %v3451 = vld [vmem:[%s3417 + $0x108] sm:$0xff]
    %v3452 = vld [vmem:[%s3417 + $0x110] sm:$0xff]
    %v3453 = vld [vmem:[%s3417 + $0x118] sm:$0xff]
    %v3454 = vld [vmem:[%s3417 + $0x120] sm:$0xff]
    %v3455 = vld [vmem:[%s3417 + $0x128] sm:$0xff]
    %v3456 = vld [vmem:[%s3417 + $0x130] sm:$0xff]
    %v3457 = vld [vmem:[%s3417 + $0x138] sm:$0xff]
    %v3458 = vld [vmem:[%s3417 + $0x140] sm:$0xff]
    %v3459 = vld [vmem:[%s3417 + $0x148] sm:$0xff]
    %v3460 = vld [vmem:[%s3417 + $0x150] sm:$0xff]
    %v3461 = vld [vmem:[%s3417 + $0x158] sm:$0xff]
    %v3462 = vld [vmem:[%s3417 + $0x160] sm:$0xff]
    %v3463 = vld [vmem:[%s3417 + $0x168] sm:$0xff]
    %v3464 = vld [vmem:[%s3417 + $0x170] sm:$0xff]
    %v3465 = vld [vmem:[%s3417 + $0x178] sm:$0xff]
    %v3466 = vld [vmem:[%s3417 + $0x180] sm:$0xff]
    %v3467 = vld [vmem:[%s3417 + $0x188] sm:$0xff]
    %v3468 = vld [vmem:[%s3417 + $0x190] sm:$0xff]
    %v3469 = vld [vmem:[%s3417 + $0x198] sm:$0xff]
    %v3470 = vld [vmem:[%s3417 + $0x1a0] sm:$0xff]
    %v3471 = vld [vmem:[%s3417 + $0x1a8] sm:$0xff]
    %v3472 = vld [vmem:[%s3417 + $0x1b0] sm:$0xff]
    %v3473 = vld [vmem:[%s3417 + $0x1b8] sm:$0xff]
    %v3474 = vld [vmem:[%s3417 + $0x1c0] sm:$0xff]
    %v3475 = vld [vmem:[%s3417 + $0x1c8] sm:$0xff]
    %v3476 = vld [vmem:[%s3417 + $0x1d0] sm:$0xff]
    %v3477 = vld [vmem:[%s3417 + $0x1d8] sm:$0xff]
    %v3478 = vld [vmem:[%s3417 + $0x1e0] sm:$0xff]
    %v3479 = vld [vmem:[%s3417 + $0x1e8] sm:$0xff]
    %v3480 = vld [vmem:[%s3417 + $0x1f0] sm:$0xff]
    %v3481 = vld [vmem:[%s3417 + $0x1f8] sm:$0xff]
    %v3482 = vld [vmem:[%s3417 + $0x200] sm:$0xff]
    %v3483 = vld [vmem:[%s3417 + $0x208] sm:$0xff]
    %v3484 = vld [vmem:[%s3417 + $0x210] sm:$0xff]
    %v3485 = vld [vmem:[%s3417 + $0x218] sm:$0xff]
    %v3486 = vld [vmem:[%s3417 + $0x220] sm:$0xff]
    %v3487 = vld [vmem:[%s3417 + $0x228] sm:$0xff]
    %v3488 = vld [vmem:[%s3417 + $0x230] sm:$0xff]
    %v3489 = vld [vmem:[%s3417 + $0x238] sm:$0xff]
    %v3490 = vld [vmem:[%s3417 + $0x240] sm:$0xff]
    %v3491 = vld [vmem:[%s3417 + $0x248] sm:$0xff]
    %v3492 = vld [vmem:[%s3417 + $0x250] sm:$0xff]
    %v3493 = vld [vmem:[%s3417 + $0x258] sm:$0xff]
    %v3494 = vld [vmem:[%s3417 + $0x260] sm:$0xff]
    %v3495 = vld [vmem:[%s3417 + $0x268] sm:$0xff]
    %v3496 = vld [vmem:[%s3417 + $0x270] sm:$0xff]
    %v3497 = vld [vmem:[%s3417 + $0x278] sm:$0xff]
    %v3498 = vld [vmem:[%s3417 + $0x280] sm:$0xff]
    %v3499 = vld [vmem:[%s3417 + $0x288] sm:$0xff]
    %v3500 = vld [vmem:[%s3417 + $0x290] sm:$0xff]
    %v3501 = vld [vmem:[%s3417 + $0x298] sm:$0xff]
    %v3502 = vld [vmem:[%s3417 + $0x2a0] sm:$0xff]
    %v3503 = vld [vmem:[%s3417 + $0x2a8] sm:$0xff]
    %v3504 = vld [vmem:[%s3417 + $0x2b0] sm:$0xff]
    %v3505 = vld [vmem:[%s3417 + $0x2b8] sm:$0xff]
    %v3506 = vld [vmem:[%s3417 + $0x2c0] sm:$0xff]
    %v3507 = vld [vmem:[%s3417 + $0x2c8] sm:$0xff]
    %v3508 = vld [vmem:[%s3417 + $0x2d0] sm:$0xff]
    %v3509 = vld [vmem:[%s3417 + $0x2d8] sm:$0xff]
    %v3510 = vld [vmem:[%s3417 + $0x2e0] sm:$0xff]
    %v3511 = vld [vmem:[%s3417 + $0x2e8] sm:$0xff]
    %v3512 = vld [vmem:[%s3417 + $0x2f0] sm:$0xff]
    %v3513 = vld [vmem:[%s3417 + $0x2f8] sm:$0xff]
    %v3514 = vld [vmem:[%s3417 + $0x300] sm:$0xff]
    %v3515 = vld [vmem:[%s3417 + $0x308] sm:$0xff]
    %v3516 = vld [vmem:[%s3417 + $0x310] sm:$0xff]
    %v3517 = vld [vmem:[%s3417 + $0x318] sm:$0xff]
    %v3518 = vld [vmem:[%s3417 + $0x320] sm:$0xff]
    %v3519 = vld [vmem:[%s3417 + $0x328] sm:$0xff]
    %v3520 = vld [vmem:[%s3417 + $0x330] sm:$0xff]
    %v3521 = vld [vmem:[%s3417 + $0x338] sm:$0xff]
    %v3522 = vld [vmem:[%s3417 + $0x340] sm:$0xff]
    %v3523 = vld [vmem:[%s3417 + $0x348] sm:$0xff]
    %v3524 = vld [vmem:[%s3417 + $0x350] sm:$0xff]
    %v3525 = vld [vmem:[%s3417 + $0x358] sm:$0xff]
    %v3526 = vld [vmem:[%s3417 + $0x360] sm:$0xff]
    %v3527 = vld [vmem:[%s3417 + $0x368] sm:$0xff]
    %v3528 = vld [vmem:[%s3417 + $0x370] sm:$0xff]
    %v3529 = vld [vmem:[%s3417 + $0x378] sm:$0xff]
    %v3530 = vld [vmem:[%s3417 + $0x380] sm:$0xff]
    %v3531 = vld [vmem:[%s3417 + $0x388] sm:$0xff]
    %v3532 = vld [vmem:[%s3417 + $0x390] sm:$0xff]
    %v3533 = vld [vmem:[%s3417 + $0x398] sm:$0xff]
    %v3534 = vld [vmem:[%s3417 + $0x3a0] sm:$0xff]
    %v3535 = vld [vmem:[%s3417 + $0x3a8] sm:$0xff]
    %v3536 = vld [vmem:[%s3417 + $0x3b0] sm:$0xff]
    %v3537 = vld [vmem:[%s3417 + $0x3b8] sm:$0xff]
    %v3538 = vld [vmem:[%s3417 + $0x3c0] sm:$0xff]
    %v3539 = vld [vmem:[%s3417 + $0x3c8] sm:$0xff]
    %v3540 = vld [vmem:[%s3417 + $0x3d0] sm:$0xff]
    %v3541 = vld [vmem:[%s3417 + $0x3d8] sm:$0xff]
    %v3542 = vld [vmem:[%s3417 + $0x3e0] sm:$0xff]
    %v3543 = vld [vmem:[%s3417 + $0x3e8] sm:$0xff]
    %v3544 = vld [vmem:[%s3417 + $0x3f0] sm:$0xff]
    %v3545 = vld [vmem:[%s3417 + $0x3f8] sm:$0xff]
    %v3546 = vld [vmem:[%s3417 + $0x400] sm:$0xff]
    %v3547 = vld [vmem:[%s3417 + $0x408] sm:$0xff]
    %v3548 = vld [vmem:[%s3417 + $0x410] sm:$0xff]
    %v3549 = vld [vmem:[%s3417 + $0x418] sm:$0xff]
    %v3550 = vld [vmem:[%s3417 + $0x420] sm:$0xff]
    %v3551 = vld [vmem:[%s3417 + $0x428] sm:$0xff]
    %v3552 = vld [vmem:[%s3417 + $0x430] sm:$0xff]
    %v3553 = vld [vmem:[%s3417 + $0x438] sm:$0xff]
    %v3554 = vld [vmem:[%s3417 + $0x440] sm:$0xff]
    %v3555 = vld [vmem:[%s3417 + $0x448] sm:$0xff]
    %v3556 = vld [vmem:[%s3417 + $0x450] sm:$0xff]
    %v3557 = vld [vmem:[%s3417 + $0x458] sm:$0xff]
    %v3558 = vld [vmem:[%s3417 + $0x460] sm:$0xff]
    %v3559 = vld [vmem:[%s3417 + $0x468] sm:$0xff]
    %v3560 = vld [vmem:[%s3417 + $0x470] sm:$0xff]
    %v3561 = vld [vmem:[%s3417 + $0x478] sm:$0xff]
    %v3562 = vand.u32 %v3449, 4294901760
    %3563 = vmatprep.subr.mxu0 %v3562
    %v3564 = vand.u32 %v3448, 4294901760
    %3565 = vmatpush1.msra.mxu0 %v3564
    %v3566 = vand.u32 %v3447, 4294901760
    %3567 = vmatprep.subr.mxu0 %v3566
    %v3568 = vand.u32 %v3446, 4294901760
    %3569 = vmatpush1.msra.mxu0 %v3568
    %v3570 = vand.u32 %v3445, 4294901760
    %3571 = vmatprep.subr.mxu0 %v3570
    %v3572 = vand.u32 %v3444, 4294901760
    %3573 = vmatpush1.msra.mxu0 %v3572
    %v3574 = vand.u32 %v3443, 4294901760
    %3575 = vmatprep.subr.mxu0 %v3574
    %v3576 = vand.u32 %v3442, 4294901760
    %3577 = vmatpush1.msra.mxu0 %v3576
    %v3578 = vand.u32 %v3441, 4294901760
    %3579 = vmatprep.subr.mxu0 %v3578
    %v3580 = vand.u32 %v3440, 4294901760
    %3581 = vmatpush1.msra.mxu0 %v3580
    %v3582 = vand.u32 %v3439, 4294901760
    %3583 = vmatprep.subr.mxu0 %v3582
    %v3584 = vand.u32 %v3438, 4294901760
    %3585 = vmatpush1.msra.mxu0 %v3584
    %v3586 = vand.u32 %v3437, 4294901760
    %3587 = vmatprep.subr.mxu0 %v3586
    %v3588 = vand.u32 %v3436, 4294901760
    %3589 = vmatpush1.msra.mxu0 %v3588
    %v3590 = vand.u32 %v3435, 4294901760
    %3591 = vmatprep.subr.mxu0 %v3590
    %v3592 = vand.u32 %v3434, 4294901760
    %3593 = vmatpush1.msra.mxu0 %v3592
    %v3594 = vand.u32 %v3433, 4294901760
    %3595 = vmatprep.subr.mxu0 %v3594
    %v3596 = vand.u32 %v3432, 4294901760
    %3597 = vmatpush1.msra.mxu0 %v3596
    %v3598 = vand.u32 %v3431, 4294901760
    %3599 = vmatprep.subr.mxu0 %v3598
    %v3600 = vand.u32 %v3430, 4294901760
    %3601 = vmatpush1.msra.mxu0 %v3600
    %v3602 = vand.u32 %v3429, 4294901760
    %3603 = vmatprep.subr.mxu0 %v3602
    %v3604 = vand.u32 %v3428, 4294901760
    %3605 = vmatpush1.msra.mxu0 %v3604
    %v3606 = vand.u32 %v3427, 4294901760
    %3607 = vmatprep.subr.mxu0 %v3606
    %v3608 = vand.u32 %v3426, 4294901760
    %3609 = vmatpush1.msra.mxu0 %v3608
    %v3610 = vand.u32 %v3425, 4294901760
    %3611 = vmatprep.subr.mxu0 %v3610
    %v3612 = vand.u32 %v3424, 4294901760
    %3613 = vmatpush1.msra.mxu0 %v3612
    %v3614 = vand.u32 %v3423, 4294901760
    %3615 = vmatprep.subr.mxu0 %v3614
    %v3616 = vand.u32 %v3422, 4294901760
    %3617 = vmatpush1.msra.mxu0 %v3616
    %v3618 = vand.u32 %v3421, 4294901760
    %3619 = vmatprep.subr.mxu0 %v3618
    %v3620 = vand.u32 %v3420, 4294901760
    %3621 = vmatpush1.msra.mxu0 %v3620
    %v3622 = vand.u32 %v3419, 4294901760
    %3623 = vmatprep.subr.mxu0 %v3622
    %v3624 = vand.u32 %v3418, 4294901760
    %3625 = vmatpush1.msra.mxu0 %v3624
    %v3626 = vand.u32 %v3481, 4294901760
    %3627 = vmatprep.subr.mxu0 %v3626
    %v3628 = vand.u32 %v3480, 4294901760
    %3629 = vmatpush2.msra.mxu0 %v3628
    %v3630 = vand.u32 %v3479, 4294901760
    %3631 = vmatprep.subr.mxu0 %v3630
    %v3632 = vand.u32 %v3478, 4294901760
    %3633 = vmatpush2.msra.mxu0 %v3632
    %v3634 = vand.u32 %v3477, 4294901760
    %3635 = vmatprep.subr.mxu0 %v3634
    %v3636 = vand.u32 %v3476, 4294901760
    %3637 = vmatpush2.msra.mxu0 %v3636
    %v3638 = vand.u32 %v3475, 4294901760
    %3639 = vmatprep.subr.mxu0 %v3638
    %v3640 = vand.u32 %v3474, 4294901760
    %3641 = vmatpush2.msra.mxu0 %v3640
    %v3642 = vand.u32 %v3473, 4294901760
    %3643 = vmatprep.subr.mxu0 %v3642
    %v3644 = vand.u32 %v3472, 4294901760
    %3645 = vmatpush2.msra.mxu0 %v3644
    %v3646 = vand.u32 %v3471, 4294901760
    %3647 = vmatprep.subr.mxu0 %v3646
    %v3648 = vand.u32 %v3470, 4294901760
    %3649 = vmatpush2.msra.mxu0 %v3648
    %v3650 = vand.u32 %v3469, 4294901760
    %3651 = vmatprep.subr.mxu0 %v3650
    %v3652 = vand.u32 %v3468, 4294901760
    %3653 = vmatpush2.msra.mxu0 %v3652
    %v3654 = vand.u32 %v3467, 4294901760
    %3655 = vmatprep.subr.mxu0 %v3654
    %v3656 = vand.u32 %v3466, 4294901760
    %3657 = vmatpush2.msra.mxu0 %v3656
    %v3658 = vand.u32 %v3465, 4294901760
    %3659 = vmatprep.subr.mxu0 %v3658
    %v3660 = vand.u32 %v3464, 4294901760
    %3661 = vmatpush2.msra.mxu0 %v3660
    %v3662 = vand.u32 %v3463, 4294901760
    %3663 = vmatprep.subr.mxu0 %v3662
    %v3664 = vand.u32 %v3462, 4294901760
    %3665 = vmatpush2.msra.mxu0 %v3664
    %v3666 = vand.u32 %v3461, 4294901760
    %3667 = vmatprep.subr.mxu0 %v3666
    %v3668 = vand.u32 %v3460, 4294901760
    %3669 = vmatpush2.msra.mxu0 %v3668
    %v3670 = vand.u32 %v3459, 4294901760
    %3671 = vmatprep.subr.mxu0 %v3670
    %v3672 = vand.u32 %v3458, 4294901760
    %3673 = vmatpush2.msra.mxu0 %v3672
    %v3674 = vand.u32 %v3457, 4294901760
    %3675 = vmatprep.subr.mxu0 %v3674
    %v3676 = vand.u32 %v3456, 4294901760
    %3677 = vmatpush2.msra.mxu0 %v3676
    %v3678 = vand.u32 %v3455, 4294901760
    %3679 = vmatprep.subr.mxu0 %v3678
    %v3680 = vand.u32 %v3454, 4294901760
    %3681 = vmatpush2.msra.mxu0 %v3680
    %v3682 = vand.u32 %v3453, 4294901760
    %3683 = vmatprep.subr.mxu0 %v3682
    %v3684 = vand.u32 %v3452, 4294901760
    %3685 = vmatpush2.msra.mxu0 %v3684
    %v3686 = vand.u32 %v3451, 4294901760
    %3687 = vmatprep.subr.mxu0 %v3686
    %v3688 = vand.u32 %v3450, 4294901760
    %3689 = vmatpush2.msra.mxu0 %v3688
    %v3690 = vand.u32 %v42, 4294901760
    %v3691 = vsub.f32 %v42, %v3690
    %v3692 = vand.u32 %v3691, 4294901760
    %v3693 = vsub.f32 %v3691, %v3692
    %v3694 = vand.u32 %v3693, 4294901760
    %3695 = vmatprep.mubr.f32.mxu0 %v3694
    %v3696 = vand.u32 %v41, 4294901760
    %v3697 = vsub.f32 %v41, %v3696
    %v3698 = vand.u32 %v3697, 4294901760
    %v3699 = vsub.f32 %v3697, %v3698
    %v3700 = vand.u32 %v3699, 4294901760
    %3701 = vmatmul.mubr.f32.gmra.mxu0 %v3700
    %v3702 = vpop.f32.mrf.mxu0
    %v3703 = vadd.f32 %v194, %v3702
    %v3704 = vpop.f32.mrf.mxu0
    %v3705 = vadd.f32 %v194, %v3704
    %3706 = vdwg.mxu0
    %v3707 = vand.u32 %v3449, 4294901760
    %v3708 = vsub.f32 %v3449, %v3707
    %v3709 = vand.u32 %v3708, 4294901760
    %v3710 = vsub.f32 %v3708, %v3709
    %v3711 = vand.u32 %v3710, 4294901760
    %3712 = vmatprep.subr.mxu0 %v3711
    %v3713 = vand.u32 %v3448, 4294901760
    %v3714 = vsub.f32 %v3448, %v3713
    %v3715 = vand.u32 %v3714, 4294901760
    %v3716 = vsub.f32 %v3714, %v3715
    %v3717 = vand.u32 %v3716, 4294901760
    %3718 = vmatpush1.msra.mxu0 %v3717
    %v3719 = vand.u32 %v3447, 4294901760
    %v3720 = vsub.f32 %v3447, %v3719
    %v3721 = vand.u32 %v3720, 4294901760
    %v3722 = vsub.f32 %v3720, %v3721
    %v3723 = vand.u32 %v3722, 4294901760
    %3724 = vmatprep.subr.mxu0 %v3723
    %v3725 = vand.u32 %v3446, 4294901760
    %v3726 = vsub.f32 %v3446, %v3725
    %v3727 = vand.u32 %v3726, 4294901760
    %v3728 = vsub.f32 %v3726, %v3727
    %v3729 = vand.u32 %v3728, 4294901760
    %3730 = vmatpush1.msra.mxu0 %v3729
    %v3731 = vand.u32 %v3445, 4294901760
    %v3732 = vsub.f32 %v3445, %v3731
    %v3733 = vand.u32 %v3732, 4294901760
    %v3734 = vsub.f32 %v3732, %v3733
    %v3735 = vand.u32 %v3734, 4294901760
    %3736 = vmatprep.subr.mxu0 %v3735
    %v3737 = vand.u32 %v3444, 4294901760
    %v3738 = vsub.f32 %v3444, %v3737
    %v3739 = vand.u32 %v3738, 4294901760
    %v3740 = vsub.f32 %v3738, %v3739
    %v3741 = vand.u32 %v3740, 4294901760
    %3742 = vmatpush1.msra.mxu0 %v3741
    %v3743 = vand.u32 %v3443, 4294901760
    %v3744 = vsub.f32 %v3443, %v3743
    %v3745 = vand.u32 %v3744, 4294901760
    %v3746 = vsub.f32 %v3744, %v3745
    %v3747 = vand.u32 %v3746, 4294901760
    %3748 = vmatprep.subr.mxu0 %v3747
    %v3749 = vand.u32 %v3442, 4294901760
    %v3750 = vsub.f32 %v3442, %v3749
    %v3751 = vand.u32 %v3750, 4294901760
    %v3752 = vsub.f32 %v3750, %v3751
    %v3753 = vand.u32 %v3752, 4294901760
    %3754 = vmatpush1.msra.mxu0 %v3753
    %v3755 = vand.u32 %v3441, 4294901760
    %v3756 = vsub.f32 %v3441, %v3755
    %v3757 = vand.u32 %v3756, 4294901760
    %v3758 = vsub.f32 %v3756, %v3757
    %v3759 = vand.u32 %v3758, 4294901760
    %3760 = vmatprep.subr.mxu0 %v3759
    %v3761 = vand.u32 %v3440, 4294901760
    %v3762 = vsub.f32 %v3440, %v3761
    %v3763 = vand.u32 %v3762, 4294901760
    %v3764 = vsub.f32 %v3762, %v3763
    %v3765 = vand.u32 %v3764, 4294901760
    %3766 = vmatpush1.msra.mxu0 %v3765
    %v3767 = vand.u32 %v3439, 4294901760
    %v3768 = vsub.f32 %v3439, %v3767
    %v3769 = vand.u32 %v3768, 4294901760
    %v3770 = vsub.f32 %v3768, %v3769
    %v3771 = vand.u32 %v3770, 4294901760
    %3772 = vmatprep.subr.mxu0 %v3771
    %v3773 = vand.u32 %v3438, 4294901760
    %v3774 = vsub.f32 %v3438, %v3773
    %v3775 = vand.u32 %v3774, 4294901760
    %v3776 = vsub.f32 %v3774, %v3775
    %v3777 = vand.u32 %v3776, 4294901760
    %3778 = vmatpush1.msra.mxu0 %v3777
    %v3779 = vand.u32 %v3437, 4294901760
    %v3780 = vsub.f32 %v3437, %v3779
    %v3781 = vand.u32 %v3780, 4294901760
    %v3782 = vsub.f32 %v3780, %v3781
    %v3783 = vand.u32 %v3782, 4294901760
    %3784 = vmatprep.subr.mxu0 %v3783
    %v3785 = vand.u32 %v3436, 4294901760
    %v3786 = vsub.f32 %v3436, %v3785
    %v3787 = vand.u32 %v3786, 4294901760
    %v3788 = vsub.f32 %v3786, %v3787
    %v3789 = vand.u32 %v3788, 4294901760
    %3790 = vmatpush1.msra.mxu0 %v3789
    %v3791 = vand.u32 %v3435, 4294901760
    %v3792 = vsub.f32 %v3435, %v3791
    %v3793 = vand.u32 %v3792, 4294901760
    %v3794 = vsub.f32 %v3792, %v3793
    %v3795 = vand.u32 %v3794, 4294901760
    %3796 = vmatprep.subr.mxu0 %v3795
    %v3797 = vand.u32 %v3434, 4294901760
    %v3798 = vsub.f32 %v3434, %v3797
    %v3799 = vand.u32 %v3798, 4294901760
    %v3800 = vsub.f32 %v3798, %v3799
    %v3801 = vand.u32 %v3800, 4294901760
    %3802 = vmatpush1.msra.mxu0 %v3801
    %v3803 = vand.u32 %v3433, 4294901760
    %v3804 = vsub.f32 %v3433, %v3803
    %v3805 = vand.u32 %v3804, 4294901760
    %v3806 = vsub.f32 %v3804, %v3805
    %v3807 = vand.u32 %v3806, 4294901760
    %3808 = vmatprep.subr.mxu0 %v3807
    %v3809 = vand.u32 %v3432, 4294901760
    %v3810 = vsub.f32 %v3432, %v3809
    %v3811 = vand.u32 %v3810, 4294901760
    %v3812 = vsub.f32 %v3810, %v3811
    %v3813 = vand.u32 %v3812, 4294901760
    %3814 = vmatpush1.msra.mxu0 %v3813
    %v3815 = vand.u32 %v3431, 4294901760
    %v3816 = vsub.f32 %v3431, %v3815
    %v3817 = vand.u32 %v3816, 4294901760
    %v3818 = vsub.f32 %v3816, %v3817
    %v3819 = vand.u32 %v3818, 4294901760
    %3820 = vmatprep.subr.mxu0 %v3819
    %v3821 = vand.u32 %v3430, 4294901760
    %v3822 = vsub.f32 %v3430, %v3821
    %v3823 = vand.u32 %v3822, 4294901760
    %v3824 = vsub.f32 %v3822, %v3823
    %v3825 = vand.u32 %v3824, 4294901760
    %3826 = vmatpush1.msra.mxu0 %v3825
    %v3827 = vand.u32 %v3429, 4294901760
    %v3828 = vsub.f32 %v3429, %v3827
    %v3829 = vand.u32 %v3828, 4294901760
    %v3830 = vsub.f32 %v3828, %v3829
    %v3831 = vand.u32 %v3830, 4294901760
    %3832 = vmatprep.subr.mxu0 %v3831
    %v3833 = vand.u32 %v3428, 4294901760
    %v3834 = vsub.f32 %v3428, %v3833
    %v3835 = vand.u32 %v3834, 4294901760
    %v3836 = vsub.f32 %v3834, %v3835
    %v3837 = vand.u32 %v3836, 4294901760
    %3838 = vmatpush1.msra.mxu0 %v3837
    %v3839 = vand.u32 %v3427, 4294901760
    %v3840 = vsub.f32 %v3427, %v3839
    %v3841 = vand.u32 %v3840, 4294901760
    %v3842 = vsub.f32 %v3840, %v3841
    %v3843 = vand.u32 %v3842, 4294901760
    %3844 = vmatprep.subr.mxu0 %v3843
    %v3845 = vand.u32 %v3426, 4294901760
    %v3846 = vsub.f32 %v3426, %v3845
    %v3847 = vand.u32 %v3846, 4294901760
    %v3848 = vsub.f32 %v3846, %v3847
    %v3849 = vand.u32 %v3848, 4294901760
    %3850 = vmatpush1.msra.mxu0 %v3849
    %v3851 = vand.u32 %v3425, 4294901760
    %v3852 = vsub.f32 %v3425, %v3851
    %v3853 = vand.u32 %v3852, 4294901760
    %v3854 = vsub.f32 %v3852, %v3853
    %v3855 = vand.u32 %v3854, 4294901760
    %3856 = vmatprep.subr.mxu0 %v3855
    %v3857 = vand.u32 %v3424, 4294901760
    %v3858 = vsub.f32 %v3424, %v3857
    %v3859 = vand.u32 %v3858, 4294901760
    %v3860 = vsub.f32 %v3858, %v3859
    %v3861 = vand.u32 %v3860, 4294901760
    %3862 = vmatpush1.msra.mxu0 %v3861
    %v3863 = vand.u32 %v3423, 4294901760
    %v3864 = vsub.f32 %v3423, %v3863
    %v3865 = vand.u32 %v3864, 4294901760
    %v3866 = vsub.f32 %v3864, %v3865
    %v3867 = vand.u32 %v3866, 4294901760
    %3868 = vmatprep.subr.mxu0 %v3867
    %v3869 = vand.u32 %v3422, 4294901760
    %v3870 = vsub.f32 %v3422, %v3869
    %v3871 = vand.u32 %v3870, 4294901760
    %v3872 = vsub.f32 %v3870, %v3871
    %v3873 = vand.u32 %v3872, 4294901760
    %3874 = vmatpush1.msra.mxu0 %v3873
    %v3875 = vand.u32 %v3421, 4294901760
    %v3876 = vsub.f32 %v3421, %v3875
    %v3877 = vand.u32 %v3876, 4294901760
    %v3878 = vsub.f32 %v3876, %v3877
    %v3879 = vand.u32 %v3878, 4294901760
    %3880 = vmatprep.subr.mxu0 %v3879
    %v3881 = vand.u32 %v3420, 4294901760
    %v3882 = vsub.f32 %v3420, %v3881
    %v3883 = vand.u32 %v3882, 4294901760
    %v3884 = vsub.f32 %v3882, %v3883
    %v3885 = vand.u32 %v3884, 4294901760
    %3886 = vmatpush1.msra.mxu0 %v3885
    %v3887 = vand.u32 %v3419, 4294901760
    %v3888 = vsub.f32 %v3419, %v3887
    %v3889 = vand.u32 %v3888, 4294901760
    %v3890 = vsub.f32 %v3888, %v3889
    %v3891 = vand.u32 %v3890, 4294901760
    %3892 = vmatprep.subr.mxu0 %v3891
    %v3893 = vand.u32 %v3418, 4294901760
    %v3894 = vsub.f32 %v3418, %v3893
    %v3895 = vand.u32 %v3894, 4294901760
    %v3896 = vsub.f32 %v3894, %v3895
    %v3897 = vand.u32 %v3896, 4294901760
    %3898 = vmatpush1.msra.mxu0 %v3897
    %v3899 = vand.u32 %v3481, 4294901760
    %v3900 = vsub.f32 %v3481, %v3899
    %v3901 = vand.u32 %v3900, 4294901760
    %v3902 = vsub.f32 %v3900, %v3901
    %v3903 = vand.u32 %v3902, 4294901760
    %3904 = vmatprep.subr.mxu0 %v3903
    %v3905 = vand.u32 %v3480, 4294901760
    %v3906 = vsub.f32 %v3480, %v3905
    %v3907 = vand.u32 %v3906, 4294901760
    %v3908 = vsub.f32 %v3906, %v3907
    %v3909 = vand.u32 %v3908, 4294901760
    %3910 = vmatpush2.msra.mxu0 %v3909
    %v3911 = vand.u32 %v3479, 4294901760
    %v3912 = vsub.f32 %v3479, %v3911
    %v3913 = vand.u32 %v3912, 4294901760
    %v3914 = vsub.f32 %v3912, %v3913
    %v3915 = vand.u32 %v3914, 4294901760
    %3916 = vmatprep.subr.mxu0 %v3915
    %v3917 = vand.u32 %v3478, 4294901760
    %v3918 = vsub.f32 %v3478, %v3917
    %v3919 = vand.u32 %v3918, 4294901760
    %v3920 = vsub.f32 %v3918, %v3919
    %v3921 = vand.u32 %v3920, 4294901760
    %3922 = vmatpush2.msra.mxu0 %v3921
    %v3923 = vand.u32 %v3477, 4294901760
    %v3924 = vsub.f32 %v3477, %v3923
    %v3925 = vand.u32 %v3924, 4294901760
    %v3926 = vsub.f32 %v3924, %v3925
    %v3927 = vand.u32 %v3926, 4294901760
    %3928 = vmatprep.subr.mxu0 %v3927
    %v3929 = vand.u32 %v3476, 4294901760
    %v3930 = vsub.f32 %v3476, %v3929
    %v3931 = vand.u32 %v3930, 4294901760
    %v3932 = vsub.f32 %v3930, %v3931
    %v3933 = vand.u32 %v3932, 4294901760
    %3934 = vmatpush2.msra.mxu0 %v3933
    %v3935 = vand.u32 %v3475, 4294901760
    %v3936 = vsub.f32 %v3475, %v3935
    %v3937 = vand.u32 %v3936, 4294901760
    %v3938 = vsub.f32 %v3936, %v3937
    %v3939 = vand.u32 %v3938, 4294901760
    %3940 = vmatprep.subr.mxu0 %v3939
    %v3941 = vand.u32 %v3474, 4294901760
    %v3942 = vsub.f32 %v3474, %v3941
    %v3943 = vand.u32 %v3942, 4294901760
    %v3944 = vsub.f32 %v3942, %v3943
    %v3945 = vand.u32 %v3944, 4294901760
    %3946 = vmatpush2.msra.mxu0 %v3945
    %v3947 = vand.u32 %v3473, 4294901760
    %v3948 = vsub.f32 %v3473, %v3947
    %v3949 = vand.u32 %v3948, 4294901760
    %v3950 = vsub.f32 %v3948, %v3949
    %v3951 = vand.u32 %v3950, 4294901760
    %3952 = vmatprep.subr.mxu0 %v3951
    %v3953 = vand.u32 %v3472, 4294901760
    %v3954 = vsub.f32 %v3472, %v3953
    %v3955 = vand.u32 %v3954, 4294901760
    %v3956 = vsub.f32 %v3954, %v3955
    %v3957 = vand.u32 %v3956, 4294901760
    %3958 = vmatpush2.msra.mxu0 %v3957
    %v3959 = vand.u32 %v3471, 4294901760
    %v3960 = vsub.f32 %v3471, %v3959
    %v3961 = vand.u32 %v3960, 4294901760
    %v3962 = vsub.f32 %v3960, %v3961
    %v3963 = vand.u32 %v3962, 4294901760
    %3964 = vmatprep.subr.mxu0 %v3963
    %v3965 = vand.u32 %v3470, 4294901760
    %v3966 = vsub.f32 %v3470, %v3965
    %v3967 = vand.u32 %v3966, 4294901760
    %v3968 = vsub.f32 %v3966, %v3967
    %v3969 = vand.u32 %v3968, 4294901760
    %3970 = vmatpush2.msra.mxu0 %v3969
    %v3971 = vand.u32 %v3469, 4294901760
    %v3972 = vsub.f32 %v3469, %v3971
    %v3973 = vand.u32 %v3972, 4294901760
    %v3974 = vsub.f32 %v3972, %v3973
    %v3975 = vand.u32 %v3974, 4294901760
    %3976 = vmatprep.subr.mxu0 %v3975
    %v3977 = vand.u32 %v3468, 4294901760
    %v3978 = vsub.f32 %v3468, %v3977
    %v3979 = vand.u32 %v3978, 4294901760
    %v3980 = vsub.f32 %v3978, %v3979
    %v3981 = vand.u32 %v3980, 4294901760
    %3982 = vmatpush2.msra.mxu0 %v3981
    %v3983 = vand.u32 %v3467, 4294901760
    %v3984 = vsub.f32 %v3467, %v3983
    %v3985 = vand.u32 %v3984, 4294901760
    %v3986 = vsub.f32 %v3984, %v3985
    %v3987 = vand.u32 %v3986, 4294901760
    %3988 = vmatprep.subr.mxu0 %v3987
    %v3989 = vand.u32 %v3466, 4294901760
    %v3990 = vsub.f32 %v3466, %v3989
    %v3991 = vand.u32 %v3990, 4294901760
    %v3992 = vsub.f32 %v3990, %v3991
    %v3993 = vand.u32 %v3992, 4294901760
    %3994 = vmatpush2.msra.mxu0 %v3993
    %v3995 = vand.u32 %v3465, 4294901760
    %v3996 = vsub.f32 %v3465, %v3995
    %v3997 = vand.u32 %v3996, 4294901760
    %v3998 = vsub.f32 %v3996, %v3997
    %v3999 = vand.u32 %v3998, 4294901760
    %4000 = vmatprep.subr.mxu0 %v3999
    %v4001 = vand.u32 %v3464, 4294901760
    %v4002 = vsub.f32 %v3464, %v4001
    %v4003 = vand.u32 %v4002, 4294901760
    %v4004 = vsub.f32 %v4002, %v4003
    %v4005 = vand.u32 %v4004, 4294901760
    %4006 = vmatpush2.msra.mxu0 %v4005
    %v4007 = vand.u32 %v3463, 4294901760
    %v4008 = vsub.f32 %v3463, %v4007
    %v4009 = vand.u32 %v4008, 4294901760
    %v4010 = vsub.f32 %v4008, %v4009
    %v4011 = vand.u32 %v4010, 4294901760
    %4012 = vmatprep.subr.mxu0 %v4011
    %v4013 = vand.u32 %v3462, 4294901760
    %v4014 = vsub.f32 %v3462, %v4013
    %v4015 = vand.u32 %v4014, 4294901760
    %v4016 = vsub.f32 %v4014, %v4015
    %v4017 = vand.u32 %v4016, 4294901760
    %4018 = vmatpush2.msra.mxu0 %v4017
    %v4019 = vand.u32 %v3461, 4294901760
    %v4020 = vsub.f32 %v3461, %v4019
    %v4021 = vand.u32 %v4020, 4294901760
    %v4022 = vsub.f32 %v4020, %v4021
    %v4023 = vand.u32 %v4022, 4294901760
    %4024 = vmatprep.subr.mxu0 %v4023
    %v4025 = vand.u32 %v3460, 4294901760
    %v4026 = vsub.f32 %v3460, %v4025
    %v4027 = vand.u32 %v4026, 4294901760
    %v4028 = vsub.f32 %v4026, %v4027
    %v4029 = vand.u32 %v4028, 4294901760
    %4030 = vmatpush2.msra.mxu0 %v4029
    %v4031 = vand.u32 %v3459, 4294901760
    %v4032 = vsub.f32 %v3459, %v4031
    %v4033 = vand.u32 %v4032, 4294901760
    %v4034 = vsub.f32 %v4032, %v4033
    %v4035 = vand.u32 %v4034, 4294901760
    %4036 = vmatprep.subr.mxu0 %v4035
    %v4037 = vand.u32 %v3458, 4294901760
    %v4038 = vsub.f32 %v3458, %v4037
    %v4039 = vand.u32 %v4038, 4294901760
    %v4040 = vsub.f32 %v4038, %v4039
    %v4041 = vand.u32 %v4040, 4294901760
    %4042 = vmatpush2.msra.mxu0 %v4041
    %v4043 = vand.u32 %v3457, 4294901760
    %v4044 = vsub.f32 %v3457, %v4043
    %v4045 = vand.u32 %v4044, 4294901760
    %v4046 = vsub.f32 %v4044, %v4045
    %v4047 = vand.u32 %v4046, 4294901760
    %4048 = vmatprep.subr.mxu0 %v4047
    %v4049 = vand.u32 %v3456, 4294901760
    %v4050 = vsub.f32 %v3456, %v4049
    %v4051 = vand.u32 %v4050, 4294901760
    %v4052 = vsub.f32 %v4050, %v4051
    %v4053 = vand.u32 %v4052, 4294901760
    %4054 = vmatpush2.msra.mxu0 %v4053
    %v4055 = vand.u32 %v3455, 4294901760
    %v4056 = vsub.f32 %v3455, %v4055
    %v4057 = vand.u32 %v4056, 4294901760
    %v4058 = vsub.f32 %v4056, %v4057
    %v4059 = vand.u32 %v4058, 4294901760
    %4060 = vmatprep.subr.mxu0 %v4059
    %v4061 = vand.u32 %v3454, 4294901760
    %v4062 = vsub.f32 %v3454, %v4061
    %v4063 = vand.u32 %v4062, 4294901760
    %v4064 = vsub.f32 %v4062, %v4063
    %v4065 = vand.u32 %v4064, 4294901760
    %4066 = vmatpush2.msra.mxu0 %v4065
    %v4067 = vand.u32 %v3453, 4294901760
    %v4068 = vsub.f32 %v3453, %v4067
    %v4069 = vand.u32 %v4068, 4294901760
    %v4070 = vsub.f32 %v4068, %v4069
    %v4071 = vand.u32 %v4070, 4294901760
    %4072 = vmatprep.subr.mxu0 %v4071
    %v4073 = vand.u32 %v3452, 4294901760
    %v4074 = vsub.f32 %v3452, %v4073
    %v4075 = vand.u32 %v4074, 4294901760
    %v4076 = vsub.f32 %v4074, %v4075
    %v4077 = vand.u32 %v4076, 4294901760
    %4078 = vmatpush2.msra.mxu0 %v4077
    %v4079 = vand.u32 %v3451, 4294901760
    %v4080 = vsub.f32 %v3451, %v4079
    %v4081 = vand.u32 %v4080, 4294901760
    %v4082 = vsub.f32 %v4080, %v4081
    %v4083 = vand.u32 %v4082, 4294901760
    %4084 = vmatprep.subr.mxu0 %v4083
    %v4085 = vand.u32 %v3450, 4294901760
    %v4086 = vsub.f32 %v3450, %v4085
    %v4087 = vand.u32 %v4086, 4294901760
    %v4088 = vsub.f32 %v4086, %v4087
    %v4089 = vand.u32 %v4088, 4294901760
    %4090 = vmatpush2.msra.mxu0 %v4089
    %v4091 = vand.u32 %v42, 4294901760
    %4092 = vmatprep.mubr.f32.mxu0 %v4091
    %v4093 = vand.u32 %v41, 4294901760
    %4094 = vmatmul.mubr.f32.gmra.mxu0 %v4093
    %v4095 = vpop.f32.mrf.mxu0
    %v4096 = vadd.f32 %v3703, %v4095
    %v4097 = vpop.f32.mrf.mxu0
    %v4098 = vadd.f32 %v3705, %v4097
    %4099 = vdwg.mxu0
    %v4100 = vand.u32 %v3449, 4294901760
    %v4101 = vsub.f32 %v3449, %v4100
    %4102 = vmatprep.subr.mxu0 %v4101
    %v4103 = vand.u32 %v3448, 4294901760
    %v4104 = vsub.f32 %v3448, %v4103
    %4105 = vmatpush1.msra.mxu0 %v4104
    %v4106 = vand.u32 %v3447, 4294901760
    %v4107 = vsub.f32 %v3447, %v4106
    %4108 = vmatprep.subr.mxu0 %v4107
    %v4109 = vand.u32 %v3446, 4294901760
    %v4110 = vsub.f32 %v3446, %v4109
    %4111 = vmatpush1.msra.mxu0 %v4110
    %v4112 = vand.u32 %v3445, 4294901760
    %v4113 = vsub.f32 %v3445, %v4112
    %4114 = vmatprep.subr.mxu0 %v4113
    %v4115 = vand.u32 %v3444, 4294901760
    %v4116 = vsub.f32 %v3444, %v4115
    %4117 = vmatpush1.msra.mxu0 %v4116
    %v4118 = vand.u32 %v3443, 4294901760
    %v4119 = vsub.f32 %v3443, %v4118
    %4120 = vmatprep.subr.mxu0 %v4119
    %v4121 = vand.u32 %v3442, 4294901760
    %v4122 = vsub.f32 %v3442, %v4121
    %4123 = vmatpush1.msra.mxu0 %v4122
    %v4124 = vand.u32 %v3441, 4294901760
    %v4125 = vsub.f32 %v3441, %v4124
    %4126 = vmatprep.subr.mxu0 %v4125
    %v4127 = vand.u32 %v3440, 4294901760
    %v4128 = vsub.f32 %v3440, %v4127
    %4129 = vmatpush1.msra.mxu0 %v4128
    %v4130 = vand.u32 %v3439, 4294901760
    %v4131 = vsub.f32 %v3439, %v4130
    %4132 = vmatprep.subr.mxu0 %v4131
    %v4133 = vand.u32 %v3438, 4294901760
    %v4134 = vsub.f32 %v3438, %v4133
    %4135 = vmatpush1.msra.mxu0 %v4134
    %v4136 = vand.u32 %v3437, 4294901760
    %v4137 = vsub.f32 %v3437, %v4136
    %4138 = vmatprep.subr.mxu0 %v4137
    %v4139 = vand.u32 %v3436, 4294901760
    %v4140 = vsub.f32 %v3436, %v4139
    %4141 = vmatpush1.msra.mxu0 %v4140
    %v4142 = vand.u32 %v3435, 4294901760
    %v4143 = vsub.f32 %v3435, %v4142
    %4144 = vmatprep.subr.mxu0 %v4143
    %v4145 = vand.u32 %v3434, 4294901760
    %v4146 = vsub.f32 %v3434, %v4145
    %4147 = vmatpush1.msra.mxu0 %v4146
    %v4148 = vand.u32 %v3433, 4294901760
    %v4149 = vsub.f32 %v3433, %v4148
    %4150 = vmatprep.subr.mxu0 %v4149
    %v4151 = vand.u32 %v3432, 4294901760
    %v4152 = vsub.f32 %v3432, %v4151
    %4153 = vmatpush1.msra.mxu0 %v4152
    %v4154 = vand.u32 %v3431, 4294901760
    %v4155 = vsub.f32 %v3431, %v4154
    %4156 = vmatprep.subr.mxu0 %v4155
    %v4157 = vand.u32 %v3430, 4294901760
    %v4158 = vsub.f32 %v3430, %v4157
    %4159 = vmatpush1.msra.mxu0 %v4158
    %v4160 = vand.u32 %v3429, 4294901760
    %v4161 = vsub.f32 %v3429, %v4160
    %4162 = vmatprep.subr.mxu0 %v4161
    %v4163 = vand.u32 %v3428, 4294901760
    %v4164 = vsub.f32 %v3428, %v4163
    %4165 = vmatpush1.msra.mxu0 %v4164
    %v4166 = vand.u32 %v3427, 4294901760
    %v4167 = vsub.f32 %v3427, %v4166
    %4168 = vmatprep.subr.mxu0 %v4167
    %v4169 = vand.u32 %v3426, 4294901760
    %v4170 = vsub.f32 %v3426, %v4169
    %4171 = vmatpush1.msra.mxu0 %v4170
    %v4172 = vand.u32 %v3425, 4294901760
    %v4173 = vsub.f32 %v3425, %v4172
    %4174 = vmatprep.subr.mxu0 %v4173
    %v4175 = vand.u32 %v3424, 4294901760
    %v4176 = vsub.f32 %v3424, %v4175
    %4177 = vmatpush1.msra.mxu0 %v4176
    %v4178 = vand.u32 %v3423, 4294901760
    %v4179 = vsub.f32 %v3423, %v4178
    %4180 = vmatprep.subr.mxu0 %v4179
    %v4181 = vand.u32 %v3422, 4294901760
    %v4182 = vsub.f32 %v3422, %v4181
    %4183 = vmatpush1.msra.mxu0 %v4182
    %v4184 = vand.u32 %v3421, 4294901760
    %v4185 = vsub.f32 %v3421, %v4184
    %4186 = vmatprep.subr.mxu0 %v4185
    %v4187 = vand.u32 %v3420, 4294901760
    %v4188 = vsub.f32 %v3420, %v4187
    %4189 = vmatpush1.msra.mxu0 %v4188
    %v4190 = vand.u32 %v3419, 4294901760
    %v4191 = vsub.f32 %v3419, %v4190
    %4192 = vmatprep.subr.mxu0 %v4191
    %v4193 = vand.u32 %v3418, 4294901760
    %v4194 = vsub.f32 %v3418, %v4193
    %4195 = vmatpush1.msra.mxu0 %v4194
    %v4196 = vand.u32 %v3481, 4294901760
    %v4197 = vsub.f32 %v3481, %v4196
    %4198 = vmatprep.subr.mxu0 %v4197
    %v4199 = vand.u32 %v3480, 4294901760
    %v4200 = vsub.f32 %v3480, %v4199
    %4201 = vmatpush2.msra.mxu0 %v4200
    %v4202 = vand.u32 %v3479, 4294901760
    %v4203 = vsub.f32 %v3479, %v4202
    %4204 = vmatprep.subr.mxu0 %v4203
    %v4205 = vand.u32 %v3478, 4294901760
    %v4206 = vsub.f32 %v3478, %v4205
    %4207 = vmatpush2.msra.mxu0 %v4206
    %v4208 = vand.u32 %v3477, 4294901760
    %v4209 = vsub.f32 %v3477, %v4208
    %4210 = vmatprep.subr.mxu0 %v4209
    %v4211 = vand.u32 %v3476, 4294901760
    %v4212 = vsub.f32 %v3476, %v4211
    %4213 = vmatpush2.msra.mxu0 %v4212
    %v4214 = vand.u32 %v3475, 4294901760
    %v4215 = vsub.f32 %v3475, %v4214
    %4216 = vmatprep.subr.mxu0 %v4215
    %v4217 = vand.u32 %v3474, 4294901760
    %v4218 = vsub.f32 %v3474, %v4217
    %4219 = vmatpush2.msra.mxu0 %v4218
    %v4220 = vand.u32 %v3473, 4294901760
    %v4221 = vsub.f32 %v3473, %v4220
    %4222 = vmatprep.subr.mxu0 %v4221
    %v4223 = vand.u32 %v3472, 4294901760
    %v4224 = vsub.f32 %v3472, %v4223
    %4225 = vmatpush2.msra.mxu0 %v4224
    %v4226 = vand.u32 %v3471, 4294901760
    %v4227 = vsub.f32 %v3471, %v4226
    %4228 = vmatprep.subr.mxu0 %v4227
    %v4229 = vand.u32 %v3470, 4294901760
    %v4230 = vsub.f32 %v3470, %v4229
    %4231 = vmatpush2.msra.mxu0 %v4230
    %v4232 = vand.u32 %v3469, 4294901760
    %v4233 = vsub.f32 %v3469, %v4232
    %4234 = vmatprep.subr.mxu0 %v4233
    %v4235 = vand.u32 %v3468, 4294901760
    %v4236 = vsub.f32 %v3468, %v4235
    %4237 = vmatpush2.msra.mxu0 %v4236
    %v4238 = vand.u32 %v3467, 4294901760
    %v4239 = vsub.f32 %v3467, %v4238
    %4240 = vmatprep.subr.mxu0 %v4239
    %v4241 = vand.u32 %v3466, 4294901760
    %v4242 = vsub.f32 %v3466, %v4241
    %4243 = vmatpush2.msra.mxu0 %v4242
    %v4244 = vand.u32 %v3465, 4294901760
    %v4245 = vsub.f32 %v3465, %v4244
    %4246 = vmatprep.subr.mxu0 %v4245
    %v4247 = vand.u32 %v3464, 4294901760
    %v4248 = vsub.f32 %v3464, %v4247
    %4249 = vmatpush2.msra.mxu0 %v4248
    %v4250 = vand.u32 %v3463, 4294901760
    %v4251 = vsub.f32 %v3463, %v4250
    %4252 = vmatprep.subr.mxu0 %v4251
    %v4253 = vand.u32 %v3462, 4294901760
    %v4254 = vsub.f32 %v3462, %v4253
    %4255 = vmatpush2.msra.mxu0 %v4254
    %v4256 = vand.u32 %v3461, 4294901760
    %v4257 = vsub.f32 %v3461, %v4256
    %4258 = vmatprep.subr.mxu0 %v4257
    %v4259 = vand.u32 %v3460, 4294901760
    %v4260 = vsub.f32 %v3460, %v4259
    %4261 = vmatpush2.msra.mxu0 %v4260
    %v4262 = vand.u32 %v3459, 4294901760
    %v4263 = vsub.f32 %v3459, %v4262
    %4264 = vmatprep.subr.mxu0 %v4263
    %v4265 = vand.u32 %v3458, 4294901760
    %v4266 = vsub.f32 %v3458, %v4265
    %4267 = vmatpush2.msra.mxu0 %v4266
    %v4268 = vand.u32 %v3457, 4294901760
    %v4269 = vsub.f32 %v3457, %v4268
    %4270 = vmatprep.subr.mxu0 %v4269
    %v4271 = vand.u32 %v3456, 4294901760
    %v4272 = vsub.f32 %v3456, %v4271
    %4273 = vmatpush2.msra.mxu0 %v4272
    %v4274 = vand.u32 %v3455, 4294901760
    %v4275 = vsub.f32 %v3455, %v4274
    %4276 = vmatprep.subr.mxu0 %v4275
    %v4277 = vand.u32 %v3454, 4294901760
    %v4278 = vsub.f32 %v3454, %v4277
    %4279 = vmatpush2.msra.mxu0 %v4278
    %v4280 = vand.u32 %v3453, 4294901760
    %v4281 = vsub.f32 %v3453, %v4280
    %4282 = vmatprep.subr.mxu0 %v4281
    %v4283 = vand.u32 %v3452, 4294901760
    %v4284 = vsub.f32 %v3452, %v4283
    %4285 = vmatpush2.msra.mxu0 %v4284
    %v4286 = vand.u32 %v3451, 4294901760
    %v4287 = vsub.f32 %v3451, %v4286
    %4288 = vmatprep.subr.mxu0 %v4287
    %v4289 = vand.u32 %v3450, 4294901760
    %v4290 = vsub.f32 %v3450, %v4289
    %4291 = vmatpush2.msra.mxu0 %v4290
    %v4292 = vand.u32 %v42, 4294901760
    %v4293 = vsub.f32 %v42, %v4292
    %4294 = vmatprep.mubr.f32.mxu0 %v4293
    %v4295 = vand.u32 %v41, 4294901760
    %v4296 = vsub.f32 %v41, %v4295
    %4297 = vmatmul.mubr.f32.gmra.mxu0 %v4296
    %v4298 = vpop.f32.mrf.mxu0
    %v4299 = vadd.f32 %v4096, %v4298
    %v4300 = vpop.f32.mrf.mxu0
    %v4301 = vadd.f32 %v4098, %v4300
    %4302 = vdwg.mxu0
    %v4303 = vand.u32 %v3449, 4294901760
    %4304 = vmatprep.subr.mxu0 %v4303
    %v4305 = vand.u32 %v3448, 4294901760
    %4306 = vmatpush1.msra.mxu0 %v4305
    %v4307 = vand.u32 %v3447, 4294901760
    %4308 = vmatprep.subr.mxu0 %v4307
    %v4309 = vand.u32 %v3446, 4294901760
    %4310 = vmatpush1.msra.mxu0 %v4309
    %v4311 = vand.u32 %v3445, 4294901760
    %4312 = vmatprep.subr.mxu0 %v4311
    %v4313 = vand.u32 %v3444, 4294901760
    %4314 = vmatpush1.msra.mxu0 %v4313
    %v4315 = vand.u32 %v3443, 4294901760
    %4316 = vmatprep.subr.mxu0 %v4315
    %v4317 = vand.u32 %v3442, 4294901760
    %4318 = vmatpush1.msra.mxu0 %v4317
    %v4319 = vand.u32 %v3441, 4294901760
    %4320 = vmatprep.subr.mxu0 %v4319
    %v4321 = vand.u32 %v3440, 4294901760
    %4322 = vmatpush1.msra.mxu0 %v4321
    %v4323 = vand.u32 %v3439, 4294901760
    %4324 = vmatprep.subr.mxu0 %v4323
    %v4325 = vand.u32 %v3438, 4294901760
    %4326 = vmatpush1.msra.mxu0 %v4325
    %v4327 = vand.u32 %v3437, 4294901760
    %4328 = vmatprep.subr.mxu0 %v4327
    %v4329 = vand.u32 %v3436, 4294901760
    %4330 = vmatpush1.msra.mxu0 %v4329
    %v4331 = vand.u32 %v3435, 4294901760
    %4332 = vmatprep.subr.mxu0 %v4331
    %v4333 = vand.u32 %v3434, 4294901760
    %4334 = vmatpush1.msra.mxu0 %v4333
    %v4335 = vand.u32 %v3433, 4294901760
    %4336 = vmatprep.subr.mxu0 %v4335
    %v4337 = vand.u32 %v3432, 4294901760
    %4338 = vmatpush1.msra.mxu0 %v4337
    %v4339 = vand.u32 %v3431, 4294901760
    %4340 = vmatprep.subr.mxu0 %v4339
    %v4341 = vand.u32 %v3430, 4294901760
    %4342 = vmatpush1.msra.mxu0 %v4341
    %v4343 = vand.u32 %v3429, 4294901760
    %4344 = vmatprep.subr.mxu0 %v4343
    %v4345 = vand.u32 %v3428, 4294901760
    %4346 = vmatpush1.msra.mxu0 %v4345
    %v4347 = vand.u32 %v3427, 4294901760
    %4348 = vmatprep.subr.mxu0 %v4347
    %v4349 = vand.u32 %v3426, 4294901760
    %4350 = vmatpush1.msra.mxu0 %v4349
    %v4351 = vand.u32 %v3425, 4294901760
    %4352 = vmatprep.subr.mxu0 %v4351
    %v4353 = vand.u32 %v3424, 4294901760
    %4354 = vmatpush1.msra.mxu0 %v4353
    %v4355 = vand.u32 %v3423, 4294901760
    %4356 = vmatprep.subr.mxu0 %v4355
    %v4357 = vand.u32 %v3422, 4294901760
    %4358 = vmatpush1.msra.mxu0 %v4357
    %v4359 = vand.u32 %v3421, 4294901760
    %4360 = vmatprep.subr.mxu0 %v4359
    %v4361 = vand.u32 %v3420, 4294901760
    %4362 = vmatpush1.msra.mxu0 %v4361
    %v4363 = vand.u32 %v3419, 4294901760
    %4364 = vmatprep.subr.mxu0 %v4363
    %v4365 = vand.u32 %v3418, 4294901760
    %4366 = vmatpush1.msra.mxu0 %v4365
    %v4367 = vand.u32 %v3481, 4294901760
    %4368 = vmatprep.subr.mxu0 %v4367
    %v4369 = vand.u32 %v3480, 4294901760
    %4370 = vmatpush2.msra.mxu0 %v4369
    %v4371 = vand.u32 %v3479, 4294901760
    %4372 = vmatprep.subr.mxu0 %v4371
    %v4373 = vand.u32 %v3478, 4294901760
    %4374 = vmatpush2.msra.mxu0 %v4373
    %v4375 = vand.u32 %v3477, 4294901760
    %4376 = vmatprep.subr.mxu0 %v4375
    %v4377 = vand.u32 %v3476, 4294901760
    %4378 = vmatpush2.msra.mxu0 %v4377
    %v4379 = vand.u32 %v3475, 4294901760
    %4380 = vmatprep.subr.mxu0 %v4379
    %v4381 = vand.u32 %v3474, 4294901760
    %4382 = vmatpush2.msra.mxu0 %v4381
    %v4383 = vand.u32 %v3473, 4294901760
    %4384 = vmatprep.subr.mxu0 %v4383
    %v4385 = vand.u32 %v3472, 4294901760
    %4386 = vmatpush2.msra.mxu0 %v4385
    %v4387 = vand.u32 %v3471, 4294901760
    %4388 = vmatprep.subr.mxu0 %v4387
    %v4389 = vand.u32 %v3470, 4294901760
    %4390 = vmatpush2.msra.mxu0 %v4389
    %v4391 = vand.u32 %v3469, 4294901760
    %4392 = vmatprep.subr.mxu0 %v4391
    %v4393 = vand.u32 %v3468, 4294901760
    %4394 = vmatpush2.msra.mxu0 %v4393
    %v4395 = vand.u32 %v3467, 4294901760
    %4396 = vmatprep.subr.mxu0 %v4395
    %v4397 = vand.u32 %v3466, 4294901760
    %4398 = vmatpush2.msra.mxu0 %v4397
    %v4399 = vand.u32 %v3465, 4294901760
    %4400 = vmatprep.subr.mxu0 %v4399
    %v4401 = vand.u32 %v3464, 4294901760
    %4402 = vmatpush2.msra.mxu0 %v4401
    %v4403 = vand.u32 %v3463, 4294901760
    %4404 = vmatprep.subr.mxu0 %v4403
    %v4405 = vand.u32 %v3462, 4294901760
    %4406 = vmatpush2.msra.mxu0 %v4405
    %v4407 = vand.u32 %v3461, 4294901760
    %4408 = vmatprep.subr.mxu0 %v4407
    %v4409 = vand.u32 %v3460, 4294901760
    %4410 = vmatpush2.msra.mxu0 %v4409
    %v4411 = vand.u32 %v3459, 4294901760
    %4412 = vmatprep.subr.mxu0 %v4411
    %v4413 = vand.u32 %v3458, 4294901760
    %4414 = vmatpush2.msra.mxu0 %v4413
    %v4415 = vand.u32 %v3457, 4294901760
    %4416 = vmatprep.subr.mxu0 %v4415
    %v4417 = vand.u32 %v3456, 4294901760
    %4418 = vmatpush2.msra.mxu0 %v4417
    %v4419 = vand.u32 %v3455, 4294901760
    %4420 = vmatprep.subr.mxu0 %v4419
    %v4421 = vand.u32 %v3454, 4294901760
    %4422 = vmatpush2.msra.mxu0 %v4421
    %v4423 = vand.u32 %v3453, 4294901760
    %4424 = vmatprep.subr.mxu0 %v4423
    %v4425 = vand.u32 %v3452, 4294901760
    %4426 = vmatpush2.msra.mxu0 %v4425
    %v4427 = vand.u32 %v3451, 4294901760
    %4428 = vmatprep.subr.mxu0 %v4427
    %v4429 = vand.u32 %v3450, 4294901760
    %4430 = vmatpush2.msra.mxu0 %v4429
    %v4431 = vand.u32 %v42, 4294901760
    %v4432 = vsub.f32 %v42, %v4431
    %v4433 = vand.u32 %v4432, 4294901760
    %4434 = vmatprep.mubr.f32.mxu0 %v4433
    %v4435 = vand.u32 %v41, 4294901760
    %v4436 = vsub.f32 %v41, %v4435
    %v4437 = vand.u32 %v4436, 4294901760
    %4438 = vmatmul.mubr.f32.gmra.mxu0 %v4437
    %v4439 = vpop.f32.mrf.mxu0
    %v4440 = vadd.f32 %v4299, %v4439
    %v4441 = vpop.f32.mrf.mxu0
    %v4442 = vadd.f32 %v4301, %v4441
    %4443 = vdwg.mxu0
    %v4444 = vand.u32 %v3449, 4294901760
    %v4445 = vsub.f32 %v3449, %v4444
    %v4446 = vand.u32 %v4445, 4294901760
    %4447 = vmatprep.subr.mxu0 %v4446
    %v4448 = vand.u32 %v3448, 4294901760
    %v4449 = vsub.f32 %v3448, %v4448
    %v4450 = vand.u32 %v4449, 4294901760
    %4451 = vmatpush1.msra.mxu0 %v4450
    %v4452 = vand.u32 %v3447, 4294901760
    %v4453 = vsub.f32 %v3447, %v4452
    %v4454 = vand.u32 %v4453, 4294901760
    %4455 = vmatprep.subr.mxu0 %v4454
    %v4456 = vand.u32 %v3446, 4294901760
    %v4457 = vsub.f32 %v3446, %v4456
    %v4458 = vand.u32 %v4457, 4294901760
    %4459 = vmatpush1.msra.mxu0 %v4458
    %v4460 = vand.u32 %v3445, 4294901760
    %v4461 = vsub.f32 %v3445, %v4460
    %v4462 = vand.u32 %v4461, 4294901760
    %4463 = vmatprep.subr.mxu0 %v4462
    %v4464 = vand.u32 %v3444, 4294901760
    %v4465 = vsub.f32 %v3444, %v4464
    %v4466 = vand.u32 %v4465, 4294901760
    %4467 = vmatpush1.msra.mxu0 %v4466
    %v4468 = vand.u32 %v3443, 4294901760
    %v4469 = vsub.f32 %v3443, %v4468
    %v4470 = vand.u32 %v4469, 4294901760
    %4471 = vmatprep.subr.mxu0 %v4470
    %v4472 = vand.u32 %v3442, 4294901760
    %v4473 = vsub.f32 %v3442, %v4472
    %v4474 = vand.u32 %v4473, 4294901760
    %4475 = vmatpush1.msra.mxu0 %v4474
    %v4476 = vand.u32 %v3441, 4294901760
    %v4477 = vsub.f32 %v3441, %v4476
    %v4478 = vand.u32 %v4477, 4294901760
    %4479 = vmatprep.subr.mxu0 %v4478
    %v4480 = vand.u32 %v3440, 4294901760
    %v4481 = vsub.f32 %v3440, %v4480
    %v4482 = vand.u32 %v4481, 4294901760
    %4483 = vmatpush1.msra.mxu0 %v4482
    %v4484 = vand.u32 %v3439, 4294901760
    %v4485 = vsub.f32 %v3439, %v4484
    %v4486 = vand.u32 %v4485, 4294901760
    %4487 = vmatprep.subr.mxu0 %v4486
    %v4488 = vand.u32 %v3438, 4294901760
    %v4489 = vsub.f32 %v3438, %v4488
    %v4490 = vand.u32 %v4489, 4294901760
    %4491 = vmatpush1.msra.mxu0 %v4490
    %v4492 = vand.u32 %v3437, 4294901760
    %v4493 = vsub.f32 %v3437, %v4492
    %v4494 = vand.u32 %v4493, 4294901760
    %4495 = vmatprep.subr.mxu0 %v4494
    %v4496 = vand.u32 %v3436, 4294901760
    %v4497 = vsub.f32 %v3436, %v4496
    %v4498 = vand.u32 %v4497, 4294901760
    %4499 = vmatpush1.msra.mxu0 %v4498
    %v4500 = vand.u32 %v3435, 4294901760
    %v4501 = vsub.f32 %v3435, %v4500
    %v4502 = vand.u32 %v4501, 4294901760
    %4503 = vmatprep.subr.mxu0 %v4502
    %v4504 = vand.u32 %v3434, 4294901760
    %v4505 = vsub.f32 %v3434, %v4504
    %v4506 = vand.u32 %v4505, 4294901760
    %4507 = vmatpush1.msra.mxu0 %v4506
    %v4508 = vand.u32 %v3433, 4294901760
    %v4509 = vsub.f32 %v3433, %v4508
    %v4510 = vand.u32 %v4509, 4294901760
    %4511 = vmatprep.subr.mxu0 %v4510
    %v4512 = vand.u32 %v3432, 4294901760
    %v4513 = vsub.f32 %v3432, %v4512
    %v4514 = vand.u32 %v4513, 4294901760
    %4515 = vmatpush1.msra.mxu0 %v4514
    %v4516 = vand.u32 %v3431, 4294901760
    %v4517 = vsub.f32 %v3431, %v4516
    %v4518 = vand.u32 %v4517, 4294901760
    %4519 = vmatprep.subr.mxu0 %v4518
    %v4520 = vand.u32 %v3430, 4294901760
    %v4521 = vsub.f32 %v3430, %v4520
    %v4522 = vand.u32 %v4521, 4294901760
    %4523 = vmatpush1.msra.mxu0 %v4522
    %v4524 = vand.u32 %v3429, 4294901760
    %v4525 = vsub.f32 %v3429, %v4524
    %v4526 = vand.u32 %v4525, 4294901760
    %4527 = vmatprep.subr.mxu0 %v4526
    %v4528 = vand.u32 %v3428, 4294901760
    %v4529 = vsub.f32 %v3428, %v4528
    %v4530 = vand.u32 %v4529, 4294901760
    %4531 = vmatpush1.msra.mxu0 %v4530
    %v4532 = vand.u32 %v3427, 4294901760
    %v4533 = vsub.f32 %v3427, %v4532
    %v4534 = vand.u32 %v4533, 4294901760
    %4535 = vmatprep.subr.mxu0 %v4534
    %v4536 = vand.u32 %v3426, 4294901760
    %v4537 = vsub.f32 %v3426, %v4536
    %v4538 = vand.u32 %v4537, 4294901760
    %4539 = vmatpush1.msra.mxu0 %v4538
    %v4540 = vand.u32 %v3425, 4294901760
    %v4541 = vsub.f32 %v3425, %v4540
    %v4542 = vand.u32 %v4541, 4294901760
    %4543 = vmatprep.subr.mxu0 %v4542
    %v4544 = vand.u32 %v3424, 4294901760
    %v4545 = vsub.f32 %v3424, %v4544
    %v4546 = vand.u32 %v4545, 4294901760
    %4547 = vmatpush1.msra.mxu0 %v4546
    %v4548 = vand.u32 %v3423, 4294901760
    %v4549 = vsub.f32 %v3423, %v4548
    %v4550 = vand.u32 %v4549, 4294901760
    %4551 = vmatprep.subr.mxu0 %v4550
    %v4552 = vand.u32 %v3422, 4294901760
    %v4553 = vsub.f32 %v3422, %v4552
    %v4554 = vand.u32 %v4553, 4294901760
    %4555 = vmatpush1.msra.mxu0 %v4554
    %v4556 = vand.u32 %v3421, 4294901760
    %v4557 = vsub.f32 %v3421, %v4556
    %v4558 = vand.u32 %v4557, 4294901760
    %4559 = vmatprep.subr.mxu0 %v4558
    %v4560 = vand.u32 %v3420, 4294901760
    %v4561 = vsub.f32 %v3420, %v4560
    %v4562 = vand.u32 %v4561, 4294901760
    %4563 = vmatpush1.msra.mxu0 %v4562
    %v4564 = vand.u32 %v3419, 4294901760
    %v4565 = vsub.f32 %v3419, %v4564
    %v4566 = vand.u32 %v4565, 4294901760
    %4567 = vmatprep.subr.mxu0 %v4566
    %v4568 = vand.u32 %v3418, 4294901760
    %v4569 = vsub.f32 %v3418, %v4568
    %v4570 = vand.u32 %v4569, 4294901760
    %4571 = vmatpush1.msra.mxu0 %v4570
    %v4572 = vand.u32 %v3481, 4294901760
    %v4573 = vsub.f32 %v3481, %v4572
    %v4574 = vand.u32 %v4573, 4294901760
    %4575 = vmatprep.subr.mxu0 %v4574
    %v4576 = vand.u32 %v3480, 4294901760
    %v4577 = vsub.f32 %v3480, %v4576
    %v4578 = vand.u32 %v4577, 4294901760
    %4579 = vmatpush2.msra.mxu0 %v4578
    %v4580 = vand.u32 %v3479, 4294901760
    %v4581 = vsub.f32 %v3479, %v4580
    %v4582 = vand.u32 %v4581, 4294901760
    %4583 = vmatprep.subr.mxu0 %v4582
    %v4584 = vand.u32 %v3478, 4294901760
    %v4585 = vsub.f32 %v3478, %v4584
    %v4586 = vand.u32 %v4585, 4294901760
    %4587 = vmatpush2.msra.mxu0 %v4586
    %v4588 = vand.u32 %v3477, 4294901760
    %v4589 = vsub.f32 %v3477, %v4588
    %v4590 = vand.u32 %v4589, 4294901760
    %4591 = vmatprep.subr.mxu0 %v4590
    %v4592 = vand.u32 %v3476, 4294901760
    %v4593 = vsub.f32 %v3476, %v4592
    %v4594 = vand.u32 %v4593, 4294901760
    %4595 = vmatpush2.msra.mxu0 %v4594
    %v4596 = vand.u32 %v3475, 4294901760
    %v4597 = vsub.f32 %v3475, %v4596
    %v4598 = vand.u32 %v4597, 4294901760
    %4599 = vmatprep.subr.mxu0 %v4598
    %v4600 = vand.u32 %v3474, 4294901760
    %v4601 = vsub.f32 %v3474, %v4600
    %v4602 = vand.u32 %v4601, 4294901760
    %4603 = vmatpush2.msra.mxu0 %v4602
    %v4604 = vand.u32 %v3473, 4294901760
    %v4605 = vsub.f32 %v3473, %v4604
    %v4606 = vand.u32 %v4605, 4294901760
    %4607 = vmatprep.subr.mxu0 %v4606
    %v4608 = vand.u32 %v3472, 4294901760
    %v4609 = vsub.f32 %v3472, %v4608
    %v4610 = vand.u32 %v4609, 4294901760
    %4611 = vmatpush2.msra.mxu0 %v4610
    %v4612 = vand.u32 %v3471, 4294901760
    %v4613 = vsub.f32 %v3471, %v4612
    %v4614 = vand.u32 %v4613, 4294901760
    %4615 = vmatprep.subr.mxu0 %v4614
    %v4616 = vand.u32 %v3470, 4294901760
    %v4617 = vsub.f32 %v3470, %v4616
    %v4618 = vand.u32 %v4617, 4294901760
    %4619 = vmatpush2.msra.mxu0 %v4618
    %v4620 = vand.u32 %v3469, 4294901760
    %v4621 = vsub.f32 %v3469, %v4620
    %v4622 = vand.u32 %v4621, 4294901760
    %4623 = vmatprep.subr.mxu0 %v4622
    %v4624 = vand.u32 %v3468, 4294901760
    %v4625 = vsub.f32 %v3468, %v4624
    %v4626 = vand.u32 %v4625, 4294901760
    %4627 = vmatpush2.msra.mxu0 %v4626
    %v4628 = vand.u32 %v3467, 4294901760
    %v4629 = vsub.f32 %v3467, %v4628
    %v4630 = vand.u32 %v4629, 4294901760
    %4631 = vmatprep.subr.mxu0 %v4630
    %v4632 = vand.u32 %v3466, 4294901760
    %v4633 = vsub.f32 %v3466, %v4632
    %v4634 = vand.u32 %v4633, 4294901760
    %4635 = vmatpush2.msra.mxu0 %v4634
    %v4636 = vand.u32 %v3465, 4294901760
    %v4637 = vsub.f32 %v3465, %v4636
    %v4638 = vand.u32 %v4637, 4294901760
    %4639 = vmatprep.subr.mxu0 %v4638
    %v4640 = vand.u32 %v3464, 4294901760
    %v4641 = vsub.f32 %v3464, %v4640
    %v4642 = vand.u32 %v4641, 4294901760
    %4643 = vmatpush2.msra.mxu0 %v4642
    %v4644 = vand.u32 %v3463, 4294901760
    %v4645 = vsub.f32 %v3463, %v4644
    %v4646 = vand.u32 %v4645, 4294901760
    %4647 = vmatprep.subr.mxu0 %v4646
    %v4648 = vand.u32 %v3462, 4294901760
    %v4649 = vsub.f32 %v3462, %v4648
    %v4650 = vand.u32 %v4649, 4294901760
    %4651 = vmatpush2.msra.mxu0 %v4650
    %v4652 = vand.u32 %v3461, 4294901760
    %v4653 = vsub.f32 %v3461, %v4652
    %v4654 = vand.u32 %v4653, 4294901760
    %4655 = vmatprep.subr.mxu0 %v4654
    %v4656 = vand.u32 %v3460, 4294901760
    %v4657 = vsub.f32 %v3460, %v4656
    %v4658 = vand.u32 %v4657, 4294901760
    %4659 = vmatpush2.msra.mxu0 %v4658
    %v4660 = vand.u32 %v3459, 4294901760
    %v4661 = vsub.f32 %v3459, %v4660
    %v4662 = vand.u32 %v4661, 4294901760
    %4663 = vmatprep.subr.mxu0 %v4662
    %v4664 = vand.u32 %v3458, 4294901760
    %v4665 = vsub.f32 %v3458, %v4664
    %v4666 = vand.u32 %v4665, 4294901760
    %4667 = vmatpush2.msra.mxu0 %v4666
    %v4668 = vand.u32 %v3457, 4294901760
    %v4669 = vsub.f32 %v3457, %v4668
    %v4670 = vand.u32 %v4669, 4294901760
    %4671 = vmatprep.subr.mxu0 %v4670
    %v4672 = vand.u32 %v3456, 4294901760
    %v4673 = vsub.f32 %v3456, %v4672
    %v4674 = vand.u32 %v4673, 4294901760
    %4675 = vmatpush2.msra.mxu0 %v4674
    %v4676 = vand.u32 %v3455, 4294901760
    %v4677 = vsub.f32 %v3455, %v4676
    %v4678 = vand.u32 %v4677, 4294901760
    %4679 = vmatprep.subr.mxu0 %v4678
    %v4680 = vand.u32 %v3454, 4294901760
    %v4681 = vsub.f32 %v3454, %v4680
    %v4682 = vand.u32 %v4681, 4294901760
    %4683 = vmatpush2.msra.mxu0 %v4682
    %v4684 = vand.u32 %v3453, 4294901760
    %v4685 = vsub.f32 %v3453, %v4684
    %v4686 = vand.u32 %v4685, 4294901760
    %4687 = vmatprep.subr.mxu0 %v4686
    %v4688 = vand.u32 %v3452, 4294901760
    %v4689 = vsub.f32 %v3452, %v4688
    %v4690 = vand.u32 %v4689, 4294901760
    %4691 = vmatpush2.msra.mxu0 %v4690
    %v4692 = vand.u32 %v3451, 4294901760
    %v4693 = vsub.f32 %v3451, %v4692
    %v4694 = vand.u32 %v4693, 4294901760
    %4695 = vmatprep.subr.mxu0 %v4694
    %v4696 = vand.u32 %v3450, 4294901760
    %v4697 = vsub.f32 %v3450, %v4696
    %v4698 = vand.u32 %v4697, 4294901760
    %4699 = vmatpush2.msra.mxu0 %v4698
    %v4700 = vand.u32 %v42, 4294901760
    %4701 = vmatprep.mubr.f32.mxu0 %v4700
    %v4702 = vand.u32 %v41, 4294901760
    %4703 = vmatmul.mubr.f32.gmra.mxu0 %v4702
    %v4704 = vpop.f32.mrf.mxu0
    %v4705 = vadd.f32 %v4440, %v4704
    %v4706 = vpop.f32.mrf.mxu0
    %v4707 = vadd.f32 %v4442, %v4706
    %4708 = vdwg.mxu0
    %v4709 = vand.u32 %v3449, 4294901760
    %4710 = vmatprep.subr.mxu0 %v4709
    %v4711 = vand.u32 %v3448, 4294901760
    %4712 = vmatpush1.msra.mxu0 %v4711
    %v4713 = vand.u32 %v3447, 4294901760
    %4714 = vmatprep.subr.mxu0 %v4713
    %v4715 = vand.u32 %v3446, 4294901760
    %4716 = vmatpush1.msra.mxu0 %v4715
    %v4717 = vand.u32 %v3445, 4294901760
    %4718 = vmatprep.subr.mxu0 %v4717
    %v4719 = vand.u32 %v3444, 4294901760
    %4720 = vmatpush1.msra.mxu0 %v4719
    %v4721 = vand.u32 %v3443, 4294901760
    %4722 = vmatprep.subr.mxu0 %v4721
    %v4723 = vand.u32 %v3442, 4294901760
    %4724 = vmatpush1.msra.mxu0 %v4723
    %v4725 = vand.u32 %v3441, 4294901760
    %4726 = vmatprep.subr.mxu0 %v4725
    %v4727 = vand.u32 %v3440, 4294901760
    %4728 = vmatpush1.msra.mxu0 %v4727
    %v4729 = vand.u32 %v3439, 4294901760
    %4730 = vmatprep.subr.mxu0 %v4729
    %v4731 = vand.u32 %v3438, 4294901760
    %4732 = vmatpush1.msra.mxu0 %v4731
    %v4733 = vand.u32 %v3437, 4294901760
    %4734 = vmatprep.subr.mxu0 %v4733
    %v4735 = vand.u32 %v3436, 4294901760
    %4736 = vmatpush1.msra.mxu0 %v4735
    %v4737 = vand.u32 %v3435, 4294901760
    %4738 = vmatprep.subr.mxu0 %v4737
    %v4739 = vand.u32 %v3434, 4294901760
    %4740 = vmatpush1.msra.mxu0 %v4739
    %v4741 = vand.u32 %v3433, 4294901760
    %4742 = vmatprep.subr.mxu0 %v4741
    %v4743 = vand.u32 %v3432, 4294901760
    %4744 = vmatpush1.msra.mxu0 %v4743
    %v4745 = vand.u32 %v3431, 4294901760
    %4746 = vmatprep.subr.mxu0 %v4745
    %v4747 = vand.u32 %v3430, 4294901760
    %4748 = vmatpush1.msra.mxu0 %v4747
    %v4749 = vand.u32 %v3429, 4294901760
    %4750 = vmatprep.subr.mxu0 %v4749
    %v4751 = vand.u32 %v3428, 4294901760
    %4752 = vmatpush1.msra.mxu0 %v4751
    %v4753 = vand.u32 %v3427, 4294901760
    %4754 = vmatprep.subr.mxu0 %v4753
    %v4755 = vand.u32 %v3426, 4294901760
    %4756 = vmatpush1.msra.mxu0 %v4755
    %v4757 = vand.u32 %v3425, 4294901760
    %4758 = vmatprep.subr.mxu0 %v4757
    %v4759 = vand.u32 %v3424, 4294901760
    %4760 = vmatpush1.msra.mxu0 %v4759
    %v4761 = vand.u32 %v3423, 4294901760
    %4762 = vmatprep.subr.mxu0 %v4761
    %v4763 = vand.u32 %v3422, 4294901760
    %4764 = vmatpush1.msra.mxu0 %v4763
    %v4765 = vand.u32 %v3421, 4294901760
    %4766 = vmatprep.subr.mxu0 %v4765
    %v4767 = vand.u32 %v3420, 4294901760
    %4768 = vmatpush1.msra.mxu0 %v4767
    %v4769 = vand.u32 %v3419, 4294901760
    %4770 = vmatprep.subr.mxu0 %v4769
    %v4771 = vand.u32 %v3418, 4294901760
    %4772 = vmatpush1.msra.mxu0 %v4771
    %v4773 = vand.u32 %v3481, 4294901760
    %4774 = vmatprep.subr.mxu0 %v4773
    %v4775 = vand.u32 %v3480, 4294901760
    %4776 = vmatpush2.msra.mxu0 %v4775
    %v4777 = vand.u32 %v3479, 4294901760
    %4778 = vmatprep.subr.mxu0 %v4777
    %v4779 = vand.u32 %v3478, 4294901760
    %4780 = vmatpush2.msra.mxu0 %v4779
    %v4781 = vand.u32 %v3477, 4294901760
    %4782 = vmatprep.subr.mxu0 %v4781
    %v4783 = vand.u32 %v3476, 4294901760
    %4784 = vmatpush2.msra.mxu0 %v4783
    %v4785 = vand.u32 %v3475, 4294901760
    %4786 = vmatprep.subr.mxu0 %v4785
    %v4787 = vand.u32 %v3474, 4294901760
    %4788 = vmatpush2.msra.mxu0 %v4787
    %v4789 = vand.u32 %v3473, 4294901760
    %4790 = vmatprep.subr.mxu0 %v4789
    %v4791 = vand.u32 %v3472, 4294901760
    %4792 = vmatpush2.msra.mxu0 %v4791
    %v4793 = vand.u32 %v3471, 4294901760
    %4794 = vmatprep.subr.mxu0 %v4793
    %v4795 = vand.u32 %v3470, 4294901760
    %4796 = vmatpush2.msra.mxu0 %v4795
    %v4797 = vand.u32 %v3469, 4294901760
    %4798 = vmatprep.subr.mxu0 %v4797
    %v4799 = vand.u32 %v3468, 4294901760
    %4800 = vmatpush2.msra.mxu0 %v4799
    %v4801 = vand.u32 %v3467, 4294901760
    %4802 = vmatprep.subr.mxu0 %v4801
    %v4803 = vand.u32 %v3466, 4294901760
    %4804 = vmatpush2.msra.mxu0 %v4803
    %v4805 = vand.u32 %v3465, 4294901760
    %4806 = vmatprep.subr.mxu0 %v4805
    %v4807 = vand.u32 %v3464, 4294901760
    %4808 = vmatpush2.msra.mxu0 %v4807
    %v4809 = vand.u32 %v3463, 4294901760
    %4810 = vmatprep.subr.mxu0 %v4809
    %v4811 = vand.u32 %v3462, 4294901760
    %4812 = vmatpush2.msra.mxu0 %v4811
    %v4813 = vand.u32 %v3461, 4294901760
    %4814 = vmatprep.subr.mxu0 %v4813
    %v4815 = vand.u32 %v3460, 4294901760
    %4816 = vmatpush2.msra.mxu0 %v4815
    %v4817 = vand.u32 %v3459, 4294901760
    %4818 = vmatprep.subr.mxu0 %v4817
    %v4819 = vand.u32 %v3458, 4294901760
    %4820 = vmatpush2.msra.mxu0 %v4819
    %v4821 = vand.u32 %v3457, 4294901760
    %4822 = vmatprep.subr.mxu0 %v4821
    %v4823 = vand.u32 %v3456, 4294901760
    %4824 = vmatpush2.msra.mxu0 %v4823
    %v4825 = vand.u32 %v3455, 4294901760
    %4826 = vmatprep.subr.mxu0 %v4825
    %v4827 = vand.u32 %v3454, 4294901760
    %4828 = vmatpush2.msra.mxu0 %v4827
    %v4829 = vand.u32 %v3453, 4294901760
    %4830 = vmatprep.subr.mxu0 %v4829
    %v4831 = vand.u32 %v3452, 4294901760
    %4832 = vmatpush2.msra.mxu0 %v4831
    %v4833 = vand.u32 %v3451, 4294901760
    %4834 = vmatprep.subr.mxu0 %v4833
    %v4835 = vand.u32 %v3450, 4294901760
    %4836 = vmatpush2.msra.mxu0 %v4835
    %v4837 = vand.u32 %v42, 4294901760
    %4838 = vmatprep.mubr.f32.mxu0 %v4837
    %v4839 = vand.u32 %v41, 4294901760
    %4840 = vmatmul.mubr.f32.gmra.mxu0 %v4839
    %v4841 = vpop.f32.mrf.mxu0
    %v4842 = vadd.f32 %v4705, %v4841
    %v4843 = vpop.f32.mrf.mxu0
    %v4844 = vadd.f32 %v4707, %v4843
    %4845 = vdwg.mxu0
    %v4846 = vand.u32 %v3513, 4294901760
    %4847 = vmatprep.subr.mxu0 %v4846
    %v4848 = vand.u32 %v3512, 4294901760
    %4849 = vmatpush1.msra.mxu0 %v4848
    %v4850 = vand.u32 %v3511, 4294901760
    %4851 = vmatprep.subr.mxu0 %v4850
    %v4852 = vand.u32 %v3510, 4294901760
    %4853 = vmatpush1.msra.mxu0 %v4852
    %v4854 = vand.u32 %v3509, 4294901760
    %4855 = vmatprep.subr.mxu0 %v4854
    %v4856 = vand.u32 %v3508, 4294901760
    %4857 = vmatpush1.msra.mxu0 %v4856
    %v4858 = vand.u32 %v3507, 4294901760
    %4859 = vmatprep.subr.mxu0 %v4858
    %v4860 = vand.u32 %v3506, 4294901760
    %4861 = vmatpush1.msra.mxu0 %v4860
    %v4862 = vand.u32 %v3505, 4294901760
    %4863 = vmatprep.subr.mxu0 %v4862
    %v4864 = vand.u32 %v3504, 4294901760
    %4865 = vmatpush1.msra.mxu0 %v4864
    %v4866 = vand.u32 %v3503, 4294901760
    %4867 = vmatprep.subr.mxu0 %v4866
    %v4868 = vand.u32 %v3502, 4294901760
    %4869 = vmatpush1.msra.mxu0 %v4868
    %v4870 = vand.u32 %v3501, 4294901760
    %4871 = vmatprep.subr.mxu0 %v4870
    %v4872 = vand.u32 %v3500, 4294901760
    %4873 = vmatpush1.msra.mxu0 %v4872
    %v4874 = vand.u32 %v3499, 4294901760
    %4875 = vmatprep.subr.mxu0 %v4874
    %v4876 = vand.u32 %v3498, 4294901760
    %4877 = vmatpush1.msra.mxu0 %v4876
    %v4878 = vand.u32 %v3497, 4294901760
    %4879 = vmatprep.subr.mxu0 %v4878
    %v4880 = vand.u32 %v3496, 4294901760
    %4881 = vmatpush1.msra.mxu0 %v4880
    %v4882 = vand.u32 %v3495, 4294901760
    %4883 = vmatprep.subr.mxu0 %v4882
    %v4884 = vand.u32 %v3494, 4294901760
    %4885 = vmatpush1.msra.mxu0 %v4884
    %v4886 = vand.u32 %v3493, 4294901760
    %4887 = vmatprep.subr.mxu0 %v4886
    %v4888 = vand.u32 %v3492, 4294901760
    %4889 = vmatpush1.msra.mxu0 %v4888
    %v4890 = vand.u32 %v3491, 4294901760
    %4891 = vmatprep.subr.mxu0 %v4890
    %v4892 = vand.u32 %v3490, 4294901760
    %4893 = vmatpush1.msra.mxu0 %v4892
    %v4894 = vand.u32 %v3489, 4294901760
    %4895 = vmatprep.subr.mxu0 %v4894
    %v4896 = vand.u32 %v3488, 4294901760
    %4897 = vmatpush1.msra.mxu0 %v4896
    %v4898 = vand.u32 %v3487, 4294901760
    %4899 = vmatprep.subr.mxu0 %v4898
    %v4900 = vand.u32 %v3486, 4294901760
    %4901 = vmatpush1.msra.mxu0 %v4900
    %v4902 = vand.u32 %v3485, 4294901760
    %4903 = vmatprep.subr.mxu0 %v4902
    %v4904 = vand.u32 %v3484, 4294901760
    %4905 = vmatpush1.msra.mxu0 %v4904
    %v4906 = vand.u32 %v3483, 4294901760
    %4907 = vmatprep.subr.mxu0 %v4906
    %v4908 = vand.u32 %v3482, 4294901760
    %4909 = vmatpush1.msra.mxu0 %v4908
    %v4910 = vand.u32 %v3545, 4294901760
    %4911 = vmatprep.subr.mxu0 %v4910
    %v4912 = vand.u32 %v3544, 4294901760
    %4913 = vmatpush2.msra.mxu0 %v4912
    %v4914 = vand.u32 %v3543, 4294901760
    %4915 = vmatprep.subr.mxu0 %v4914
    %v4916 = vand.u32 %v3542, 4294901760
    %4917 = vmatpush2.msra.mxu0 %v4916
    %v4918 = vand.u32 %v3541, 4294901760
    %4919 = vmatprep.subr.mxu0 %v4918
    %v4920 = vand.u32 %v3540, 4294901760
    %4921 = vmatpush2.msra.mxu0 %v4920
    %v4922 = vand.u32 %v3539, 4294901760
    %4923 = vmatprep.subr.mxu0 %v4922
    %v4924 = vand.u32 %v3538, 4294901760
    %4925 = vmatpush2.msra.mxu0 %v4924
    %v4926 = vand.u32 %v3537, 4294901760
    %4927 = vmatprep.subr.mxu0 %v4926
    %v4928 = vand.u32 %v3536, 4294901760
    %4929 = vmatpush2.msra.mxu0 %v4928
    %v4930 = vand.u32 %v3535, 4294901760
    %4931 = vmatprep.subr.mxu0 %v4930
    %v4932 = vand.u32 %v3534, 4294901760
    %4933 = vmatpush2.msra.mxu0 %v4932
    %v4934 = vand.u32 %v3533, 4294901760
    %4935 = vmatprep.subr.mxu0 %v4934
    %v4936 = vand.u32 %v3532, 4294901760
    %4937 = vmatpush2.msra.mxu0 %v4936
    %v4938 = vand.u32 %v3531, 4294901760
    %4939 = vmatprep.subr.mxu0 %v4938
    %v4940 = vand.u32 %v3530, 4294901760
    %4941 = vmatpush2.msra.mxu0 %v4940
    %v4942 = vand.u32 %v3529, 4294901760
    %4943 = vmatprep.subr.mxu0 %v4942
    %v4944 = vand.u32 %v3528, 4294901760
    %4945 = vmatpush2.msra.mxu0 %v4944
    %v4946 = vand.u32 %v3527, 4294901760
    %4947 = vmatprep.subr.mxu0 %v4946
    %v4948 = vand.u32 %v3526, 4294901760
    %4949 = vmatpush2.msra.mxu0 %v4948
    %v4950 = vand.u32 %v3525, 4294901760
    %4951 = vmatprep.subr.mxu0 %v4950
    %v4952 = vand.u32 %v3524, 4294901760
    %4953 = vmatpush2.msra.mxu0 %v4952
    %v4954 = vand.u32 %v3523, 4294901760
    %4955 = vmatprep.subr.mxu0 %v4954
    %v4956 = vand.u32 %v3522, 4294901760
    %4957 = vmatpush2.msra.mxu0 %v4956
    %v4958 = vand.u32 %v3521, 4294901760
    %4959 = vmatprep.subr.mxu0 %v4958
    %v4960 = vand.u32 %v3520, 4294901760
    %4961 = vmatpush2.msra.mxu0 %v4960
    %v4962 = vand.u32 %v3519, 4294901760
    %4963 = vmatprep.subr.mxu0 %v4962
    %v4964 = vand.u32 %v3518, 4294901760
    %4965 = vmatpush2.msra.mxu0 %v4964
    %v4966 = vand.u32 %v3517, 4294901760
    %4967 = vmatprep.subr.mxu0 %v4966
    %v4968 = vand.u32 %v3516, 4294901760
    %4969 = vmatpush2.msra.mxu0 %v4968
    %v4970 = vand.u32 %v3515, 4294901760
    %4971 = vmatprep.subr.mxu0 %v4970
    %v4972 = vand.u32 %v3514, 4294901760
    %4973 = vmatpush2.msra.mxu0 %v4972
    %v4974 = vand.u32 %v44, 4294901760
    %v4975 = vsub.f32 %v44, %v4974
    %v4976 = vand.u32 %v4975, 4294901760
    %v4977 = vsub.f32 %v4975, %v4976
    %v4978 = vand.u32 %v4977, 4294901760
    %4979 = vmatprep.mubr.f32.mxu0 %v4978
    %v4980 = vand.u32 %v43, 4294901760
    %v4981 = vsub.f32 %v43, %v4980
    %v4982 = vand.u32 %v4981, 4294901760
    %v4983 = vsub.f32 %v4981, %v4982
    %v4984 = vand.u32 %v4983, 4294901760
    %4985 = vmatmul.mubr.f32.gmra.mxu0 %v4984
    %v4986 = vpop.f32.mrf.mxu0
    %v4987 = vadd.f32 %v4842, %v4986
    %v4988 = vpop.f32.mrf.mxu0
    %v4989 = vadd.f32 %v4844, %v4988
    %4990 = vdwg.mxu0
    %v4991 = vand.u32 %v3513, 4294901760
    %v4992 = vsub.f32 %v3513, %v4991
    %v4993 = vand.u32 %v4992, 4294901760
    %v4994 = vsub.f32 %v4992, %v4993
    %v4995 = vand.u32 %v4994, 4294901760
    %4996 = vmatprep.subr.mxu0 %v4995
    %v4997 = vand.u32 %v3512, 4294901760
    %v4998 = vsub.f32 %v3512, %v4997
    %v4999 = vand.u32 %v4998, 4294901760
    %v5000 = vsub.f32 %v4998, %v4999
    %v5001 = vand.u32 %v5000, 4294901760
    %5002 = vmatpush1.msra.mxu0 %v5001
    %v5003 = vand.u32 %v3511, 4294901760
    %v5004 = vsub.f32 %v3511, %v5003
    %v5005 = vand.u32 %v5004, 4294901760
    %v5006 = vsub.f32 %v5004, %v5005
    %v5007 = vand.u32 %v5006, 4294901760
    %5008 = vmatprep.subr.mxu0 %v5007
    %v5009 = vand.u32 %v3510, 4294901760
    %v5010 = vsub.f32 %v3510, %v5009
    %v5011 = vand.u32 %v5010, 4294901760
    %v5012 = vsub.f32 %v5010, %v5011
    %v5013 = vand.u32 %v5012, 4294901760
    %5014 = vmatpush1.msra.mxu0 %v5013
    %v5015 = vand.u32 %v3509, 4294901760
    %v5016 = vsub.f32 %v3509, %v5015
    %v5017 = vand.u32 %v5016, 4294901760
    %v5018 = vsub.f32 %v5016, %v5017
    %v5019 = vand.u32 %v5018, 4294901760
    %5020 = vmatprep.subr.mxu0 %v5019
    %v5021 = vand.u32 %v3508, 4294901760
    %v5022 = vsub.f32 %v3508, %v5021
    %v5023 = vand.u32 %v5022, 4294901760
    %v5024 = vsub.f32 %v5022, %v5023
    %v5025 = vand.u32 %v5024, 4294901760
    %5026 = vmatpush1.msra.mxu0 %v5025
    %v5027 = vand.u32 %v3507, 4294901760
    %v5028 = vsub.f32 %v3507, %v5027
    %v5029 = vand.u32 %v5028, 4294901760
    %v5030 = vsub.f32 %v5028, %v5029
    %v5031 = vand.u32 %v5030, 4294901760
    %5032 = vmatprep.subr.mxu0 %v5031
    %v5033 = vand.u32 %v3506, 4294901760
    %v5034 = vsub.f32 %v3506, %v5033
    %v5035 = vand.u32 %v5034, 4294901760
    %v5036 = vsub.f32 %v5034, %v5035
    %v5037 = vand.u32 %v5036, 4294901760
    %5038 = vmatpush1.msra.mxu0 %v5037
    %v5039 = vand.u32 %v3505, 4294901760
    %v5040 = vsub.f32 %v3505, %v5039
    %v5041 = vand.u32 %v5040, 4294901760
    %v5042 = vsub.f32 %v5040, %v5041
    %v5043 = vand.u32 %v5042, 4294901760
    %5044 = vmatprep.subr.mxu0 %v5043
    %v5045 = vand.u32 %v3504, 4294901760
    %v5046 = vsub.f32 %v3504, %v5045
    %v5047 = vand.u32 %v5046, 4294901760
    %v5048 = vsub.f32 %v5046, %v5047
    %v5049 = vand.u32 %v5048, 4294901760
    %5050 = vmatpush1.msra.mxu0 %v5049
    %v5051 = vand.u32 %v3503, 4294901760
    %v5052 = vsub.f32 %v3503, %v5051
    %v5053 = vand.u32 %v5052, 4294901760
    %v5054 = vsub.f32 %v5052, %v5053
    %v5055 = vand.u32 %v5054, 4294901760
    %5056 = vmatprep.subr.mxu0 %v5055
    %v5057 = vand.u32 %v3502, 4294901760
    %v5058 = vsub.f32 %v3502, %v5057
    %v5059 = vand.u32 %v5058, 4294901760
    %v5060 = vsub.f32 %v5058, %v5059
    %v5061 = vand.u32 %v5060, 4294901760
    %5062 = vmatpush1.msra.mxu0 %v5061
    %v5063 = vand.u32 %v3501, 4294901760
    %v5064 = vsub.f32 %v3501, %v5063
    %v5065 = vand.u32 %v5064, 4294901760
    %v5066 = vsub.f32 %v5064, %v5065
    %v5067 = vand.u32 %v5066, 4294901760
    %5068 = vmatprep.subr.mxu0 %v5067
    %v5069 = vand.u32 %v3500, 4294901760
    %v5070 = vsub.f32 %v3500, %v5069
    %v5071 = vand.u32 %v5070, 4294901760
    %v5072 = vsub.f32 %v5070, %v5071
    %v5073 = vand.u32 %v5072, 4294901760
    %5074 = vmatpush1.msra.mxu0 %v5073
    %v5075 = vand.u32 %v3499, 4294901760
    %v5076 = vsub.f32 %v3499, %v5075
    %v5077 = vand.u32 %v5076, 4294901760
    %v5078 = vsub.f32 %v5076, %v5077
    %v5079 = vand.u32 %v5078, 4294901760
    %5080 = vmatprep.subr.mxu0 %v5079
    %v5081 = vand.u32 %v3498, 4294901760
    %v5082 = vsub.f32 %v3498, %v5081
    %v5083 = vand.u32 %v5082, 4294901760
    %v5084 = vsub.f32 %v5082, %v5083
    %v5085 = vand.u32 %v5084, 4294901760
    %5086 = vmatpush1.msra.mxu0 %v5085
    %v5087 = vand.u32 %v3497, 4294901760
    %v5088 = vsub.f32 %v3497, %v5087
    %v5089 = vand.u32 %v5088, 4294901760
    %v5090 = vsub.f32 %v5088, %v5089
    %v5091 = vand.u32 %v5090, 4294901760
    %5092 = vmatprep.subr.mxu0 %v5091
    %v5093 = vand.u32 %v3496, 4294901760
    %v5094 = vsub.f32 %v3496, %v5093
    %v5095 = vand.u32 %v5094, 4294901760
    %v5096 = vsub.f32 %v5094, %v5095
    %v5097 = vand.u32 %v5096, 4294901760
    %5098 = vmatpush1.msra.mxu0 %v5097
    %v5099 = vand.u32 %v3495, 4294901760
    %v5100 = vsub.f32 %v3495, %v5099
    %v5101 = vand.u32 %v5100, 4294901760
    %v5102 = vsub.f32 %v5100, %v5101
    %v5103 = vand.u32 %v5102, 4294901760
    %5104 = vmatprep.subr.mxu0 %v5103
    %v5105 = vand.u32 %v3494, 4294901760
    %v5106 = vsub.f32 %v3494, %v5105
    %v5107 = vand.u32 %v5106, 4294901760
    %v5108 = vsub.f32 %v5106, %v5107
    %v5109 = vand.u32 %v5108, 4294901760
    %5110 = vmatpush1.msra.mxu0 %v5109
    %v5111 = vand.u32 %v3493, 4294901760
    %v5112 = vsub.f32 %v3493, %v5111
    %v5113 = vand.u32 %v5112, 4294901760
    %v5114 = vsub.f32 %v5112, %v5113
    %v5115 = vand.u32 %v5114, 4294901760
    %5116 = vmatprep.subr.mxu0 %v5115
    %v5117 = vand.u32 %v3492, 4294901760
    %v5118 = vsub.f32 %v3492, %v5117
    %v5119 = vand.u32 %v5118, 4294901760
    %v5120 = vsub.f32 %v5118, %v5119
    %v5121 = vand.u32 %v5120, 4294901760
    %5122 = vmatpush1.msra.mxu0 %v5121
    %v5123 = vand.u32 %v3491, 4294901760
    %v5124 = vsub.f32 %v3491, %v5123
    %v5125 = vand.u32 %v5124, 4294901760
    %v5126 = vsub.f32 %v5124, %v5125
    %v5127 = vand.u32 %v5126, 4294901760
    %5128 = vmatprep.subr.mxu0 %v5127
    %v5129 = vand.u32 %v3490, 4294901760
    %v5130 = vsub.f32 %v3490, %v5129
    %v5131 = vand.u32 %v5130, 4294901760
    %v5132 = vsub.f32 %v5130, %v5131
    %v5133 = vand.u32 %v5132, 4294901760
    %5134 = vmatpush1.msra.mxu0 %v5133
    %v5135 = vand.u32 %v3489, 4294901760
    %v5136 = vsub.f32 %v3489, %v5135
    %v5137 = vand.u32 %v5136, 4294901760
    %v5138 = vsub.f32 %v5136, %v5137
    %v5139 = vand.u32 %v5138, 4294901760
    %5140 = vmatprep.subr.mxu0 %v5139
    %v5141 = vand.u32 %v3488, 4294901760
    %v5142 = vsub.f32 %v3488, %v5141
    %v5143 = vand.u32 %v5142, 4294901760
    %v5144 = vsub.f32 %v5142, %v5143
    %v5145 = vand.u32 %v5144, 4294901760
    %5146 = vmatpush1.msra.mxu0 %v5145
    %v5147 = vand.u32 %v3487, 4294901760
    %v5148 = vsub.f32 %v3487, %v5147
    %v5149 = vand.u32 %v5148, 4294901760
    %v5150 = vsub.f32 %v5148, %v5149
    %v5151 = vand.u32 %v5150, 4294901760
    %5152 = vmatprep.subr.mxu0 %v5151
    %v5153 = vand.u32 %v3486, 4294901760
    %v5154 = vsub.f32 %v3486, %v5153
    %v5155 = vand.u32 %v5154, 4294901760
    %v5156 = vsub.f32 %v5154, %v5155
    %v5157 = vand.u32 %v5156, 4294901760
    %5158 = vmatpush1.msra.mxu0 %v5157
    %v5159 = vand.u32 %v3485, 4294901760
    %v5160 = vsub.f32 %v3485, %v5159
    %v5161 = vand.u32 %v5160, 4294901760
    %v5162 = vsub.f32 %v5160, %v5161
    %v5163 = vand.u32 %v5162, 4294901760
    %5164 = vmatprep.subr.mxu0 %v5163
    %v5165 = vand.u32 %v3484, 4294901760
    %v5166 = vsub.f32 %v3484, %v5165
    %v5167 = vand.u32 %v5166, 4294901760
    %v5168 = vsub.f32 %v5166, %v5167
    %v5169 = vand.u32 %v5168, 4294901760
    %5170 = vmatpush1.msra.mxu0 %v5169
    %v5171 = vand.u32 %v3483, 4294901760
    %v5172 = vsub.f32 %v3483, %v5171
    %v5173 = vand.u32 %v5172, 4294901760
    %v5174 = vsub.f32 %v5172, %v5173
    %v5175 = vand.u32 %v5174, 4294901760
    %5176 = vmatprep.subr.mxu0 %v5175
    %v5177 = vand.u32 %v3482, 4294901760
    %v5178 = vsub.f32 %v3482, %v5177
    %v5179 = vand.u32 %v5178, 4294901760
    %v5180 = vsub.f32 %v5178, %v5179
    %v5181 = vand.u32 %v5180, 4294901760
    %5182 = vmatpush1.msra.mxu0 %v5181
    %v5183 = vand.u32 %v3545, 4294901760
    %v5184 = vsub.f32 %v3545, %v5183
    %v5185 = vand.u32 %v5184, 4294901760
    %v5186 = vsub.f32 %v5184, %v5185
    %v5187 = vand.u32 %v5186, 4294901760
    %5188 = vmatprep.subr.mxu0 %v5187
    %v5189 = vand.u32 %v3544, 4294901760
    %v5190 = vsub.f32 %v3544, %v5189
    %v5191 = vand.u32 %v5190, 4294901760
    %v5192 = vsub.f32 %v5190, %v5191
    %v5193 = vand.u32 %v5192, 4294901760
    %5194 = vmatpush2.msra.mxu0 %v5193
    %v5195 = vand.u32 %v3543, 4294901760
    %v5196 = vsub.f32 %v3543, %v5195
    %v5197 = vand.u32 %v5196, 4294901760
    %v5198 = vsub.f32 %v5196, %v5197
    %v5199 = vand.u32 %v5198, 4294901760
    %5200 = vmatprep.subr.mxu0 %v5199
    %v5201 = vand.u32 %v3542, 4294901760
    %v5202 = vsub.f32 %v3542, %v5201
    %v5203 = vand.u32 %v5202, 4294901760
    %v5204 = vsub.f32 %v5202, %v5203
    %v5205 = vand.u32 %v5204, 4294901760
    %5206 = vmatpush2.msra.mxu0 %v5205
    %v5207 = vand.u32 %v3541, 4294901760
    %v5208 = vsub.f32 %v3541, %v5207
    %v5209 = vand.u32 %v5208, 4294901760
    %v5210 = vsub.f32 %v5208, %v5209
    %v5211 = vand.u32 %v5210, 4294901760
    %5212 = vmatprep.subr.mxu0 %v5211
    %v5213 = vand.u32 %v3540, 4294901760
    %v5214 = vsub.f32 %v3540, %v5213
    %v5215 = vand.u32 %v5214, 4294901760
    %v5216 = vsub.f32 %v5214, %v5215
    %v5217 = vand.u32 %v5216, 4294901760
    %5218 = vmatpush2.msra.mxu0 %v5217
    %v5219 = vand.u32 %v3539, 4294901760
    %v5220 = vsub.f32 %v3539, %v5219
    %v5221 = vand.u32 %v5220, 4294901760
    %v5222 = vsub.f32 %v5220, %v5221
    %v5223 = vand.u32 %v5222, 4294901760
    %5224 = vmatprep.subr.mxu0 %v5223
    %v5225 = vand.u32 %v3538, 4294901760
    %v5226 = vsub.f32 %v3538, %v5225
    %v5227 = vand.u32 %v5226, 4294901760
    %v5228 = vsub.f32 %v5226, %v5227
    %v5229 = vand.u32 %v5228, 4294901760
    %5230 = vmatpush2.msra.mxu0 %v5229
    %v5231 = vand.u32 %v3537, 4294901760
    %v5232 = vsub.f32 %v3537, %v5231
    %v5233 = vand.u32 %v5232, 4294901760
    %v5234 = vsub.f32 %v5232, %v5233
    %v5235 = vand.u32 %v5234, 4294901760
    %5236 = vmatprep.subr.mxu0 %v5235
    %v5237 = vand.u32 %v3536, 4294901760
    %v5238 = vsub.f32 %v3536, %v5237
    %v5239 = vand.u32 %v5238, 4294901760
    %v5240 = vsub.f32 %v5238, %v5239
    %v5241 = vand.u32 %v5240, 4294901760
    %5242 = vmatpush2.msra.mxu0 %v5241
    %v5243 = vand.u32 %v3535, 4294901760
    %v5244 = vsub.f32 %v3535, %v5243
    %v5245 = vand.u32 %v5244, 4294901760
    %v5246 = vsub.f32 %v5244, %v5245
    %v5247 = vand.u32 %v5246, 4294901760
    %5248 = vmatprep.subr.mxu0 %v5247
    %v5249 = vand.u32 %v3534, 4294901760
    %v5250 = vsub.f32 %v3534, %v5249
    %v5251 = vand.u32 %v5250, 4294901760
    %v5252 = vsub.f32 %v5250, %v5251
    %v5253 = vand.u32 %v5252, 4294901760
    %5254 = vmatpush2.msra.mxu0 %v5253
    %v5255 = vand.u32 %v3533, 4294901760
    %v5256 = vsub.f32 %v3533, %v5255
    %v5257 = vand.u32 %v5256, 4294901760
    %v5258 = vsub.f32 %v5256, %v5257
    %v5259 = vand.u32 %v5258, 4294901760
    %5260 = vmatprep.subr.mxu0 %v5259
    %v5261 = vand.u32 %v3532, 4294901760
    %v5262 = vsub.f32 %v3532, %v5261
    %v5263 = vand.u32 %v5262, 4294901760
    %v5264 = vsub.f32 %v5262, %v5263
    %v5265 = vand.u32 %v5264, 4294901760
    %5266 = vmatpush2.msra.mxu0 %v5265
    %v5267 = vand.u32 %v3531, 4294901760
    %v5268 = vsub.f32 %v3531, %v5267
    %v5269 = vand.u32 %v5268, 4294901760
    %v5270 = vsub.f32 %v5268, %v5269
    %v5271 = vand.u32 %v5270, 4294901760
    %5272 = vmatprep.subr.mxu0 %v5271
    %v5273 = vand.u32 %v3530, 4294901760
    %v5274 = vsub.f32 %v3530, %v5273
    %v5275 = vand.u32 %v5274, 4294901760
    %v5276 = vsub.f32 %v5274, %v5275
    %v5277 = vand.u32 %v5276, 4294901760
    %5278 = vmatpush2.msra.mxu0 %v5277
    %v5279 = vand.u32 %v3529, 4294901760
    %v5280 = vsub.f32 %v3529, %v5279
    %v5281 = vand.u32 %v5280, 4294901760
    %v5282 = vsub.f32 %v5280, %v5281
    %v5283 = vand.u32 %v5282, 4294901760
    %5284 = vmatprep.subr.mxu0 %v5283
    %v5285 = vand.u32 %v3528, 4294901760
    %v5286 = vsub.f32 %v3528, %v5285
    %v5287 = vand.u32 %v5286, 4294901760
    %v5288 = vsub.f32 %v5286, %v5287
    %v5289 = vand.u32 %v5288, 4294901760
    %5290 = vmatpush2.msra.mxu0 %v5289
    %v5291 = vand.u32 %v3527, 4294901760
    %v5292 = vsub.f32 %v3527, %v5291
    %v5293 = vand.u32 %v5292, 4294901760
    %v5294 = vsub.f32 %v5292, %v5293
    %v5295 = vand.u32 %v5294, 4294901760
    %5296 = vmatprep.subr.mxu0 %v5295
    %v5297 = vand.u32 %v3526, 4294901760
    %v5298 = vsub.f32 %v3526, %v5297
    %v5299 = vand.u32 %v5298, 4294901760
    %v5300 = vsub.f32 %v5298, %v5299
    %v5301 = vand.u32 %v5300, 4294901760
    %5302 = vmatpush2.msra.mxu0 %v5301
    %v5303 = vand.u32 %v3525, 4294901760
    %v5304 = vsub.f32 %v3525, %v5303
    %v5305 = vand.u32 %v5304, 4294901760
    %v5306 = vsub.f32 %v5304, %v5305
    %v5307 = vand.u32 %v5306, 4294901760
    %5308 = vmatprep.subr.mxu0 %v5307
    %v5309 = vand.u32 %v3524, 4294901760
    %v5310 = vsub.f32 %v3524, %v5309
    %v5311 = vand.u32 %v5310, 4294901760
    %v5312 = vsub.f32 %v5310, %v5311
    %v5313 = vand.u32 %v5312, 4294901760
    %5314 = vmatpush2.msra.mxu0 %v5313
    %v5315 = vand.u32 %v3523, 4294901760
    %v5316 = vsub.f32 %v3523, %v5315
    %v5317 = vand.u32 %v5316, 4294901760
    %v5318 = vsub.f32 %v5316, %v5317
    %v5319 = vand.u32 %v5318, 4294901760
    %5320 = vmatprep.subr.mxu0 %v5319
    %v5321 = vand.u32 %v3522, 4294901760
    %v5322 = vsub.f32 %v3522, %v5321
    %v5323 = vand.u32 %v5322, 4294901760
    %v5324 = vsub.f32 %v5322, %v5323
    %v5325 = vand.u32 %v5324, 4294901760
    %5326 = vmatpush2.msra.mxu0 %v5325
    %v5327 = vand.u32 %v3521, 4294901760
    %v5328 = vsub.f32 %v3521, %v5327
    %v5329 = vand.u32 %v5328, 4294901760
    %v5330 = vsub.f32 %v5328, %v5329
    %v5331 = vand.u32 %v5330, 4294901760
    %5332 = vmatprep.subr.mxu0 %v5331
    %v5333 = vand.u32 %v3520, 4294901760
    %v5334 = vsub.f32 %v3520, %v5333
    %v5335 = vand.u32 %v5334, 4294901760
    %v5336 = vsub.f32 %v5334, %v5335
    %v5337 = vand.u32 %v5336, 4294901760
    %5338 = vmatpush2.msra.mxu0 %v5337
    %v5339 = vand.u32 %v3519, 4294901760
    %v5340 = vsub.f32 %v3519, %v5339
    %v5341 = vand.u32 %v5340, 4294901760
    %v5342 = vsub.f32 %v5340, %v5341
    %v5343 = vand.u32 %v5342, 4294901760
    %5344 = vmatprep.subr.mxu0 %v5343
    %v5345 = vand.u32 %v3518, 4294901760
    %v5346 = vsub.f32 %v3518, %v5345
    %v5347 = vand.u32 %v5346, 4294901760
    %v5348 = vsub.f32 %v5346, %v5347
    %v5349 = vand.u32 %v5348, 4294901760
    %5350 = vmatpush2.msra.mxu0 %v5349
    %v5351 = vand.u32 %v3517, 4294901760
    %v5352 = vsub.f32 %v3517, %v5351
    %v5353 = vand.u32 %v5352, 4294901760
    %v5354 = vsub.f32 %v5352, %v5353
    %v5355 = vand.u32 %v5354, 4294901760
    %5356 = vmatprep.subr.mxu0 %v5355
    %v5357 = vand.u32 %v3516, 4294901760
    %v5358 = vsub.f32 %v3516, %v5357
    %v5359 = vand.u32 %v5358, 4294901760
    %v5360 = vsub.f32 %v5358, %v5359
    %v5361 = vand.u32 %v5360, 4294901760
    %5362 = vmatpush2.msra.mxu0 %v5361
    %v5363 = vand.u32 %v3515, 4294901760
    %v5364 = vsub.f32 %v3515, %v5363
    %v5365 = vand.u32 %v5364, 4294901760
    %v5366 = vsub.f32 %v5364, %v5365
    %v5367 = vand.u32 %v5366, 4294901760
    %5368 = vmatprep.subr.mxu0 %v5367
    %v5369 = vand.u32 %v3514, 4294901760
    %v5370 = vsub.f32 %v3514, %v5369
    %v5371 = vand.u32 %v5370, 4294901760
    %v5372 = vsub.f32 %v5370, %v5371
    %v5373 = vand.u32 %v5372, 4294901760
    %5374 = vmatpush2.msra.mxu0 %v5373
    %v5375 = vand.u32 %v44, 4294901760
    %5376 = vmatprep.mubr.f32.mxu0 %v5375
    %v5377 = vand.u32 %v43, 4294901760
    %5378 = vmatmul.mubr.f32.gmra.mxu0 %v5377
    %v5379 = vpop.f32.mrf.mxu0
    %v5380 = vadd.f32 %v4987, %v5379
    %v5381 = vpop.f32.mrf.mxu0
    %v5382 = vadd.f32 %v4989, %v5381
    %5383 = vdwg.mxu0
    %v5384 = vand.u32 %v3513, 4294901760
    %v5385 = vsub.f32 %v3513, %v5384
    %5386 = vmatprep.subr.mxu0 %v5385
    %v5387 = vand.u32 %v3512, 4294901760
    %v5388 = vsub.f32 %v3512, %v5387
    %5389 = vmatpush1.msra.mxu0 %v5388
    %v5390 = vand.u32 %v3511, 4294901760
    %v5391 = vsub.f32 %v3511, %v5390
    %5392 = vmatprep.subr.mxu0 %v5391
    %v5393 = vand.u32 %v3510, 4294901760
    %v5394 = vsub.f32 %v3510, %v5393
    %5395 = vmatpush1.msra.mxu0 %v5394
    %v5396 = vand.u32 %v3509, 4294901760
    %v5397 = vsub.f32 %v3509, %v5396
    %5398 = vmatprep.subr.mxu0 %v5397
    %v5399 = vand.u32 %v3508, 4294901760
    %v5400 = vsub.f32 %v3508, %v5399
    %5401 = vmatpush1.msra.mxu0 %v5400
    %v5402 = vand.u32 %v3507, 4294901760
    %v5403 = vsub.f32 %v3507, %v5402
    %5404 = vmatprep.subr.mxu0 %v5403
    %v5405 = vand.u32 %v3506, 4294901760
    %v5406 = vsub.f32 %v3506, %v5405
    %5407 = vmatpush1.msra.mxu0 %v5406
    %v5408 = vand.u32 %v3505, 4294901760
    %v5409 = vsub.f32 %v3505, %v5408
    %5410 = vmatprep.subr.mxu0 %v5409
    %v5411 = vand.u32 %v3504, 4294901760
    %v5412 = vsub.f32 %v3504, %v5411
    %5413 = vmatpush1.msra.mxu0 %v5412
    %v5414 = vand.u32 %v3503, 4294901760
    %v5415 = vsub.f32 %v3503, %v5414
    %5416 = vmatprep.subr.mxu0 %v5415
    %v5417 = vand.u32 %v3502, 4294901760
    %v5418 = vsub.f32 %v3502, %v5417
    %5419 = vmatpush1.msra.mxu0 %v5418
    %v5420 = vand.u32 %v3501, 4294901760
    %v5421 = vsub.f32 %v3501, %v5420
    %5422 = vmatprep.subr.mxu0 %v5421
    %v5423 = vand.u32 %v3500, 4294901760
    %v5424 = vsub.f32 %v3500, %v5423
    %5425 = vmatpush1.msra.mxu0 %v5424
    %v5426 = vand.u32 %v3499, 4294901760
    %v5427 = vsub.f32 %v3499, %v5426
    %5428 = vmatprep.subr.mxu0 %v5427
    %v5429 = vand.u32 %v3498, 4294901760
    %v5430 = vsub.f32 %v3498, %v5429
    %5431 = vmatpush1.msra.mxu0 %v5430
    %v5432 = vand.u32 %v3497, 4294901760
    %v5433 = vsub.f32 %v3497, %v5432
    %5434 = vmatprep.subr.mxu0 %v5433
    %v5435 = vand.u32 %v3496, 4294901760
    %v5436 = vsub.f32 %v3496, %v5435
    %5437 = vmatpush1.msra.mxu0 %v5436
    %v5438 = vand.u32 %v3495, 4294901760
    %v5439 = vsub.f32 %v3495, %v5438
    %5440 = vmatprep.subr.mxu0 %v5439
    %v5441 = vand.u32 %v3494, 4294901760
    %v5442 = vsub.f32 %v3494, %v5441
    %5443 = vmatpush1.msra.mxu0 %v5442
    %v5444 = vand.u32 %v3493, 4294901760
    %v5445 = vsub.f32 %v3493, %v5444
    %5446 = vmatprep.subr.mxu0 %v5445
    %v5447 = vand.u32 %v3492, 4294901760
    %v5448 = vsub.f32 %v3492, %v5447
    %5449 = vmatpush1.msra.mxu0 %v5448
    %v5450 = vand.u32 %v3491, 4294901760
    %v5451 = vsub.f32 %v3491, %v5450
    %5452 = vmatprep.subr.mxu0 %v5451
    %v5453 = vand.u32 %v3490, 4294901760
    %v5454 = vsub.f32 %v3490, %v5453
    %5455 = vmatpush1.msra.mxu0 %v5454
    %v5456 = vand.u32 %v3489, 4294901760
    %v5457 = vsub.f32 %v3489, %v5456
    %5458 = vmatprep.subr.mxu0 %v5457
    %v5459 = vand.u32 %v3488, 4294901760
    %v5460 = vsub.f32 %v3488, %v5459
    %5461 = vmatpush1.msra.mxu0 %v5460
    %v5462 = vand.u32 %v3487, 4294901760
    %v5463 = vsub.f32 %v3487, %v5462
    %5464 = vmatprep.subr.mxu0 %v5463
    %v5465 = vand.u32 %v3486, 4294901760
    %v5466 = vsub.f32 %v3486, %v5465
    %5467 = vmatpush1.msra.mxu0 %v5466
    %v5468 = vand.u32 %v3485, 4294901760
    %v5469 = vsub.f32 %v3485, %v5468
    %5470 = vmatprep.subr.mxu0 %v5469
    %v5471 = vand.u32 %v3484, 4294901760
    %v5472 = vsub.f32 %v3484, %v5471
    %5473 = vmatpush1.msra.mxu0 %v5472
    %v5474 = vand.u32 %v3483, 4294901760
    %v5475 = vsub.f32 %v3483, %v5474
    %5476 = vmatprep.subr.mxu0 %v5475
    %v5477 = vand.u32 %v3482, 4294901760
    %v5478 = vsub.f32 %v3482, %v5477
    %5479 = vmatpush1.msra.mxu0 %v5478
    %v5480 = vand.u32 %v3545, 4294901760
    %v5481 = vsub.f32 %v3545, %v5480
    %5482 = vmatprep.subr.mxu0 %v5481
    %v5483 = vand.u32 %v3544, 4294901760
    %v5484 = vsub.f32 %v3544, %v5483
    %5485 = vmatpush2.msra.mxu0 %v5484
    %v5486 = vand.u32 %v3543, 4294901760
    %v5487 = vsub.f32 %v3543, %v5486
    %5488 = vmatprep.subr.mxu0 %v5487
    %v5489 = vand.u32 %v3542, 4294901760
    %v5490 = vsub.f32 %v3542, %v5489
    %5491 = vmatpush2.msra.mxu0 %v5490
    %v5492 = vand.u32 %v3541, 4294901760
    %v5493 = vsub.f32 %v3541, %v5492
    %5494 = vmatprep.subr.mxu0 %v5493
    %v5495 = vand.u32 %v3540, 4294901760
    %v5496 = vsub.f32 %v3540, %v5495
    %5497 = vmatpush2.msra.mxu0 %v5496
    %v5498 = vand.u32 %v3539, 4294901760
    %v5499 = vsub.f32 %v3539, %v5498
    %5500 = vmatprep.subr.mxu0 %v5499
    %v5501 = vand.u32 %v3538, 4294901760
    %v5502 = vsub.f32 %v3538, %v5501
    %5503 = vmatpush2.msra.mxu0 %v5502
    %v5504 = vand.u32 %v3537, 4294901760
    %v5505 = vsub.f32 %v3537, %v5504
    %5506 = vmatprep.subr.mxu0 %v5505
    %v5507 = vand.u32 %v3536, 4294901760
    %v5508 = vsub.f32 %v3536, %v5507
    %5509 = vmatpush2.msra.mxu0 %v5508
    %v5510 = vand.u32 %v3535, 4294901760
    %v5511 = vsub.f32 %v3535, %v5510
    %5512 = vmatprep.subr.mxu0 %v5511
    %v5513 = vand.u32 %v3534, 4294901760
    %v5514 = vsub.f32 %v3534, %v5513
    %5515 = vmatpush2.msra.mxu0 %v5514
    %v5516 = vand.u32 %v3533, 4294901760
    %v5517 = vsub.f32 %v3533, %v5516
    %5518 = vmatprep.subr.mxu0 %v5517
    %v5519 = vand.u32 %v3532, 4294901760
    %v5520 = vsub.f32 %v3532, %v5519
    %5521 = vmatpush2.msra.mxu0 %v5520
    %v5522 = vand.u32 %v3531, 4294901760
    %v5523 = vsub.f32 %v3531, %v5522
    %5524 = vmatprep.subr.mxu0 %v5523
    %v5525 = vand.u32 %v3530, 4294901760
    %v5526 = vsub.f32 %v3530, %v5525
    %5527 = vmatpush2.msra.mxu0 %v5526
    %v5528 = vand.u32 %v3529, 4294901760
    %v5529 = vsub.f32 %v3529, %v5528
    %5530 = vmatprep.subr.mxu0 %v5529
    %v5531 = vand.u32 %v3528, 4294901760
    %v5532 = vsub.f32 %v3528, %v5531
    %5533 = vmatpush2.msra.mxu0 %v5532
    %v5534 = vand.u32 %v3527, 4294901760
    %v5535 = vsub.f32 %v3527, %v5534
    %5536 = vmatprep.subr.mxu0 %v5535
    %v5537 = vand.u32 %v3526, 4294901760
    %v5538 = vsub.f32 %v3526, %v5537
    %5539 = vmatpush2.msra.mxu0 %v5538
    %v5540 = vand.u32 %v3525, 4294901760
    %v5541 = vsub.f32 %v3525, %v5540
    %5542 = vmatprep.subr.mxu0 %v5541
    %v5543 = vand.u32 %v3524, 4294901760
    %v5544 = vsub.f32 %v3524, %v5543
    %5545 = vmatpush2.msra.mxu0 %v5544
    %v5546 = vand.u32 %v3523, 4294901760
    %v5547 = vsub.f32 %v3523, %v5546
    %5548 = vmatprep.subr.mxu0 %v5547
    %v5549 = vand.u32 %v3522, 4294901760
    %v5550 = vsub.f32 %v3522, %v5549
    %5551 = vmatpush2.msra.mxu0 %v5550
    %v5552 = vand.u32 %v3521, 4294901760
    %v5553 = vsub.f32 %v3521, %v5552
    %5554 = vmatprep.subr.mxu0 %v5553
    %v5555 = vand.u32 %v3520, 4294901760
    %v5556 = vsub.f32 %v3520, %v5555
    %5557 = vmatpush2.msra.mxu0 %v5556
    %v5558 = vand.u32 %v3519, 4294901760
    %v5559 = vsub.f32 %v3519, %v5558
    %5560 = vmatprep.subr.mxu0 %v5559
    %v5561 = vand.u32 %v3518, 4294901760
    %v5562 = vsub.f32 %v3518, %v5561
    %5563 = vmatpush2.msra.mxu0 %v5562
    %v5564 = vand.u32 %v3517, 4294901760
    %v5565 = vsub.f32 %v3517, %v5564
    %5566 = vmatprep.subr.mxu0 %v5565
    %v5567 = vand.u32 %v3516, 4294901760
    %v5568 = vsub.f32 %v3516, %v5567
    %5569 = vmatpush2.msra.mxu0 %v5568
    %v5570 = vand.u32 %v3515, 4294901760
    %v5571 = vsub.f32 %v3515, %v5570
    %5572 = vmatprep.subr.mxu0 %v5571
    %v5573 = vand.u32 %v3514, 4294901760
    %v5574 = vsub.f32 %v3514, %v5573
    %5575 = vmatpush2.msra.mxu0 %v5574
    %v5576 = vand.u32 %v44, 4294901760
    %v5577 = vsub.f32 %v44, %v5576
    %5578 = vmatprep.mubr.f32.mxu0 %v5577
    %v5579 = vand.u32 %v43, 4294901760
    %v5580 = vsub.f32 %v43, %v5579
    %5581 = vmatmul.mubr.f32.gmra.mxu0 %v5580
    %v5582 = vpop.f32.mrf.mxu0
    %v5583 = vadd.f32 %v5380, %v5582
    %v5584 = vpop.f32.mrf.mxu0
    %v5585 = vadd.f32 %v5382, %v5584
    %5586 = vdwg.mxu0
    %v5587 = vand.u32 %v3513, 4294901760
    %5588 = vmatprep.subr.mxu0 %v5587
    %v5589 = vand.u32 %v3512, 4294901760
    %5590 = vmatpush1.msra.mxu0 %v5589
    %v5591 = vand.u32 %v3511, 4294901760
    %5592 = vmatprep.subr.mxu0 %v5591
    %v5593 = vand.u32 %v3510, 4294901760
    %5594 = vmatpush1.msra.mxu0 %v5593
    %v5595 = vand.u32 %v3509, 4294901760
    %5596 = vmatprep.subr.mxu0 %v5595
    %v5597 = vand.u32 %v3508, 4294901760
    %5598 = vmatpush1.msra.mxu0 %v5597
    %v5599 = vand.u32 %v3507, 4294901760
    %5600 = vmatprep.subr.mxu0 %v5599
    %v5601 = vand.u32 %v3506, 4294901760
    %5602 = vmatpush1.msra.mxu0 %v5601
    %v5603 = vand.u32 %v3505, 4294901760
    %5604 = vmatprep.subr.mxu0 %v5603
    %v5605 = vand.u32 %v3504, 4294901760
    %5606 = vmatpush1.msra.mxu0 %v5605
    %v5607 = vand.u32 %v3503, 4294901760
    %5608 = vmatprep.subr.mxu0 %v5607
    %v5609 = vand.u32 %v3502, 4294901760
    %5610 = vmatpush1.msra.mxu0 %v5609
    %v5611 = vand.u32 %v3501, 4294901760
    %5612 = vmatprep.subr.mxu0 %v5611
    %v5613 = vand.u32 %v3500, 4294901760
    %5614 = vmatpush1.msra.mxu0 %v5613
    %v5615 = vand.u32 %v3499, 4294901760
    %5616 = vmatprep.subr.mxu0 %v5615
    %v5617 = vand.u32 %v3498, 4294901760
    %5618 = vmatpush1.msra.mxu0 %v5617
    %v5619 = vand.u32 %v3497, 4294901760
    %5620 = vmatprep.subr.mxu0 %v5619
    %v5621 = vand.u32 %v3496, 4294901760
    %5622 = vmatpush1.msra.mxu0 %v5621
    %v5623 = vand.u32 %v3495, 4294901760
    %5624 = vmatprep.subr.mxu0 %v5623
    %v5625 = vand.u32 %v3494, 4294901760
    %5626 = vmatpush1.msra.mxu0 %v5625
    %v5627 = vand.u32 %v3493, 4294901760
    %5628 = vmatprep.subr.mxu0 %v5627
    %v5629 = vand.u32 %v3492, 4294901760
    %5630 = vmatpush1.msra.mxu0 %v5629
    %v5631 = vand.u32 %v3491, 4294901760
    %5632 = vmatprep.subr.mxu0 %v5631
    %v5633 = vand.u32 %v3490, 4294901760
    %5634 = vmatpush1.msra.mxu0 %v5633
    %v5635 = vand.u32 %v3489, 4294901760
    %5636 = vmatprep.subr.mxu0 %v5635
    %v5637 = vand.u32 %v3488, 4294901760
    %5638 = vmatpush1.msra.mxu0 %v5637
    %v5639 = vand.u32 %v3487, 4294901760
    %5640 = vmatprep.subr.mxu0 %v5639
    %v5641 = vand.u32 %v3486, 4294901760
    %5642 = vmatpush1.msra.mxu0 %v5641
    %v5643 = vand.u32 %v3485, 4294901760
    %5644 = vmatprep.subr.mxu0 %v5643
    %v5645 = vand.u32 %v3484, 4294901760
    %5646 = vmatpush1.msra.mxu0 %v5645
    %v5647 = vand.u32 %v3483, 4294901760
    %5648 = vmatprep.subr.mxu0 %v5647
    %v5649 = vand.u32 %v3482, 4294901760
    %5650 = vmatpush1.msra.mxu0 %v5649
    %v5651 = vand.u32 %v3545, 4294901760
    %5652 = vmatprep.subr.mxu0 %v5651
    %v5653 = vand.u32 %v3544, 4294901760
    %5654 = vmatpush2.msra.mxu0 %v5653
    %v5655 = vand.u32 %v3543, 4294901760
    %5656 = vmatprep.subr.mxu0 %v5655
    %v5657 = vand.u32 %v3542, 4294901760
    %5658 = vmatpush2.msra.mxu0 %v5657
    %v5659 = vand.u32 %v3541, 4294901760
    %5660 = vmatprep.subr.mxu0 %v5659
    %v5661 = vand.u32 %v3540, 4294901760
    %5662 = vmatpush2.msra.mxu0 %v5661
    %v5663 = vand.u32 %v3539, 4294901760
    %5664 = vmatprep.subr.mxu0 %v5663
    %v5665 = vand.u32 %v3538, 4294901760
    %5666 = vmatpush2.msra.mxu0 %v5665
    %v5667 = vand.u32 %v3537, 4294901760
    %5668 = vmatprep.subr.mxu0 %v5667
    %v5669 = vand.u32 %v3536, 4294901760
    %5670 = vmatpush2.msra.mxu0 %v5669
    %v5671 = vand.u32 %v3535, 4294901760
    %5672 = vmatprep.subr.mxu0 %v5671
    %v5673 = vand.u32 %v3534, 4294901760
    %5674 = vmatpush2.msra.mxu0 %v5673
    %v5675 = vand.u32 %v3533, 4294901760
    %5676 = vmatprep.subr.mxu0 %v5675
    %v5677 = vand.u32 %v3532, 4294901760
    %5678 = vmatpush2.msra.mxu0 %v5677
    %v5679 = vand.u32 %v3531, 4294901760
    %5680 = vmatprep.subr.mxu0 %v5679
    %v5681 = vand.u32 %v3530, 4294901760
    %5682 = vmatpush2.msra.mxu0 %v5681
    %v5683 = vand.u32 %v3529, 4294901760
    %5684 = vmatprep.subr.mxu0 %v5683
    %v5685 = vand.u32 %v3528, 4294901760
    %5686 = vmatpush2.msra.mxu0 %v5685
    %v5687 = vand.u32 %v3527, 4294901760
    %5688 = vmatprep.subr.mxu0 %v5687
    %v5689 = vand.u32 %v3526, 4294901760
    %5690 = vmatpush2.msra.mxu0 %v5689
    %v5691 = vand.u32 %v3525, 4294901760
    %5692 = vmatprep.subr.mxu0 %v5691
    %v5693 = vand.u32 %v3524, 4294901760
    %5694 = vmatpush2.msra.mxu0 %v5693
    %v5695 = vand.u32 %v3523, 4294901760
    %5696 = vmatprep.subr.mxu0 %v5695
    %v5697 = vand.u32 %v3522, 4294901760
    %5698 = vmatpush2.msra.mxu0 %v5697
    %v5699 = vand.u32 %v3521, 4294901760
    %5700 = vmatprep.subr.mxu0 %v5699
    %v5701 = vand.u32 %v3520, 4294901760
    %5702 = vmatpush2.msra.mxu0 %v5701
    %v5703 = vand.u32 %v3519, 4294901760
    %5704 = vmatprep.subr.mxu0 %v5703
    %v5705 = vand.u32 %v3518, 4294901760
    %5706 = vmatpush2.msra.mxu0 %v5705
    %v5707 = vand.u32 %v3517, 4294901760
    %5708 = vmatprep.subr.mxu0 %v5707
    %v5709 = vand.u32 %v3516, 4294901760
    %5710 = vmatpush2.msra.mxu0 %v5709
    %v5711 = vand.u32 %v3515, 4294901760
    %5712 = vmatprep.subr.mxu0 %v5711
    %v5713 = vand.u32 %v3514, 4294901760
    %5714 = vmatpush2.msra.mxu0 %v5713
    %v5715 = vand.u32 %v44, 4294901760
    %v5716 = vsub.f32 %v44, %v5715
    %v5717 = vand.u32 %v5716, 4294901760
    %5718 = vmatprep.mubr.f32.mxu0 %v5717
    %v5719 = vand.u32 %v43, 4294901760
    %v5720 = vsub.f32 %v43, %v5719
    %v5721 = vand.u32 %v5720, 4294901760
    %5722 = vmatmul.mubr.f32.gmra.mxu0 %v5721
    %v5723 = vpop.f32.mrf.mxu0
    %v5724 = vadd.f32 %v5583, %v5723
    %v5725 = vpop.f32.mrf.mxu0
    %v5726 = vadd.f32 %v5585, %v5725
    %5727 = vdwg.mxu0
    %v5728 = vand.u32 %v3513, 4294901760
    %v5729 = vsub.f32 %v3513, %v5728
    %v5730 = vand.u32 %v5729, 4294901760
    %5731 = vmatprep.subr.mxu0 %v5730
    %v5732 = vand.u32 %v3512, 4294901760
    %v5733 = vsub.f32 %v3512, %v5732
    %v5734 = vand.u32 %v5733, 4294901760
    %5735 = vmatpush1.msra.mxu0 %v5734
    %v5736 = vand.u32 %v3511, 4294901760
    %v5737 = vsub.f32 %v3511, %v5736
    %v5738 = vand.u32 %v5737, 4294901760
    %5739 = vmatprep.subr.mxu0 %v5738
    %v5740 = vand.u32 %v3510, 4294901760
    %v5741 = vsub.f32 %v3510, %v5740
    %v5742 = vand.u32 %v5741, 4294901760
    %5743 = vmatpush1.msra.mxu0 %v5742
    %v5744 = vand.u32 %v3509, 4294901760
    %v5745 = vsub.f32 %v3509, %v5744
    %v5746 = vand.u32 %v5745, 4294901760
    %5747 = vmatprep.subr.mxu0 %v5746
    %v5748 = vand.u32 %v3508, 4294901760
    %v5749 = vsub.f32 %v3508, %v5748
    %v5750 = vand.u32 %v5749, 4294901760
    %5751 = vmatpush1.msra.mxu0 %v5750
    %v5752 = vand.u32 %v3507, 4294901760
    %v5753 = vsub.f32 %v3507, %v5752
    %v5754 = vand.u32 %v5753, 4294901760
    %5755 = vmatprep.subr.mxu0 %v5754
    %v5756 = vand.u32 %v3506, 4294901760
    %v5757 = vsub.f32 %v3506, %v5756
    %v5758 = vand.u32 %v5757, 4294901760
    %5759 = vmatpush1.msra.mxu0 %v5758
    %v5760 = vand.u32 %v3505, 4294901760
    %v5761 = vsub.f32 %v3505, %v5760
    %v5762 = vand.u32 %v5761, 4294901760
    %5763 = vmatprep.subr.mxu0 %v5762
    %v5764 = vand.u32 %v3504, 4294901760
    %v5765 = vsub.f32 %v3504, %v5764
    %v5766 = vand.u32 %v5765, 4294901760
    %5767 = vmatpush1.msra.mxu0 %v5766
    %v5768 = vand.u32 %v3503, 4294901760
    %v5769 = vsub.f32 %v3503, %v5768
    %v5770 = vand.u32 %v5769, 4294901760
    %5771 = vmatprep.subr.mxu0 %v5770
    %v5772 = vand.u32 %v3502, 4294901760
    %v5773 = vsub.f32 %v3502, %v5772
    %v5774 = vand.u32 %v5773, 4294901760
    %5775 = vmatpush1.msra.mxu0 %v5774
    %v5776 = vand.u32 %v3501, 4294901760
    %v5777 = vsub.f32 %v3501, %v5776
    %v5778 = vand.u32 %v5777, 4294901760
    %5779 = vmatprep.subr.mxu0 %v5778
    %v5780 = vand.u32 %v3500, 4294901760
    %v5781 = vsub.f32 %v3500, %v5780
    %v5782 = vand.u32 %v5781, 4294901760
    %5783 = vmatpush1.msra.mxu0 %v5782
    %v5784 = vand.u32 %v3499, 4294901760
    %v5785 = vsub.f32 %v3499, %v5784
    %v5786 = vand.u32 %v5785, 4294901760
    %5787 = vmatprep.subr.mxu0 %v5786
    %v5788 = vand.u32 %v3498, 4294901760
    %v5789 = vsub.f32 %v3498, %v5788
    %v5790 = vand.u32 %v5789, 4294901760
    %5791 = vmatpush1.msra.mxu0 %v5790
    %v5792 = vand.u32 %v3497, 4294901760
    %v5793 = vsub.f32 %v3497, %v5792
    %v5794 = vand.u32 %v5793, 4294901760
    %5795 = vmatprep.subr.mxu0 %v5794
    %v5796 = vand.u32 %v3496, 4294901760
    %v5797 = vsub.f32 %v3496, %v5796
    %v5798 = vand.u32 %v5797, 4294901760
    %5799 = vmatpush1.msra.mxu0 %v5798
    %v5800 = vand.u32 %v3495, 4294901760
    %v5801 = vsub.f32 %v3495, %v5800
    %v5802 = vand.u32 %v5801, 4294901760
    %5803 = vmatprep.subr.mxu0 %v5802
    %v5804 = vand.u32 %v3494, 4294901760
    %v5805 = vsub.f32 %v3494, %v5804
    %v5806 = vand.u32 %v5805, 4294901760
    %5807 = vmatpush1.msra.mxu0 %v5806
    %v5808 = vand.u32 %v3493, 4294901760
    %v5809 = vsub.f32 %v3493, %v5808
    %v5810 = vand.u32 %v5809, 4294901760
    %5811 = vmatprep.subr.mxu0 %v5810
    %v5812 = vand.u32 %v3492, 4294901760
    %v5813 = vsub.f32 %v3492, %v5812
    %v5814 = vand.u32 %v5813, 4294901760
    %5815 = vmatpush1.msra.mxu0 %v5814
    %v5816 = vand.u32 %v3491, 4294901760
    %v5817 = vsub.f32 %v3491, %v5816
    %v5818 = vand.u32 %v5817, 4294901760
    %5819 = vmatprep.subr.mxu0 %v5818
    %v5820 = vand.u32 %v3490, 4294901760
    %v5821 = vsub.f32 %v3490, %v5820
    %v5822 = vand.u32 %v5821, 4294901760
    %5823 = vmatpush1.msra.mxu0 %v5822
    %v5824 = vand.u32 %v3489, 4294901760
    %v5825 = vsub.f32 %v3489, %v5824
    %v5826 = vand.u32 %v5825, 4294901760
    %5827 = vmatprep.subr.mxu0 %v5826
    %v5828 = vand.u32 %v3488, 4294901760
    %v5829 = vsub.f32 %v3488, %v5828
    %v5830 = vand.u32 %v5829, 4294901760
    %5831 = vmatpush1.msra.mxu0 %v5830
    %v5832 = vand.u32 %v3487, 4294901760
    %v5833 = vsub.f32 %v3487, %v5832
    %v5834 = vand.u32 %v5833, 4294901760
    %5835 = vmatprep.subr.mxu0 %v5834
    %v5836 = vand.u32 %v3486, 4294901760
    %v5837 = vsub.f32 %v3486, %v5836
    %v5838 = vand.u32 %v5837, 4294901760
    %5839 = vmatpush1.msra.mxu0 %v5838
    %v5840 = vand.u32 %v3485, 4294901760
    %v5841 = vsub.f32 %v3485, %v5840
    %v5842 = vand.u32 %v5841, 4294901760
    %5843 = vmatprep.subr.mxu0 %v5842
    %v5844 = vand.u32 %v3484, 4294901760
    %v5845 = vsub.f32 %v3484, %v5844
    %v5846 = vand.u32 %v5845, 4294901760
    %5847 = vmatpush1.msra.mxu0 %v5846
    %v5848 = vand.u32 %v3483, 4294901760
    %v5849 = vsub.f32 %v3483, %v5848
    %v5850 = vand.u32 %v5849, 4294901760
    %5851 = vmatprep.subr.mxu0 %v5850
    %v5852 = vand.u32 %v3482, 4294901760
    %v5853 = vsub.f32 %v3482, %v5852
    %v5854 = vand.u32 %v5853, 4294901760
    %5855 = vmatpush1.msra.mxu0 %v5854
    %v5856 = vand.u32 %v3545, 4294901760
    %v5857 = vsub.f32 %v3545, %v5856
    %v5858 = vand.u32 %v5857, 4294901760
    %5859 = vmatprep.subr.mxu0 %v5858
    %v5860 = vand.u32 %v3544, 4294901760
    %v5861 = vsub.f32 %v3544, %v5860
    %v5862 = vand.u32 %v5861, 4294901760
    %5863 = vmatpush2.msra.mxu0 %v5862
    %v5864 = vand.u32 %v3543, 4294901760
    %v5865 = vsub.f32 %v3543, %v5864
    %v5866 = vand.u32 %v5865, 4294901760
    %5867 = vmatprep.subr.mxu0 %v5866
    %v5868 = vand.u32 %v3542, 4294901760
    %v5869 = vsub.f32 %v3542, %v5868
    %v5870 = vand.u32 %v5869, 4294901760
    %5871 = vmatpush2.msra.mxu0 %v5870
    %v5872 = vand.u32 %v3541, 4294901760
    %v5873 = vsub.f32 %v3541, %v5872
    %v5874 = vand.u32 %v5873, 4294901760
    %5875 = vmatprep.subr.mxu0 %v5874
    %v5876 = vand.u32 %v3540, 4294901760
    %v5877 = vsub.f32 %v3540, %v5876
    %v5878 = vand.u32 %v5877, 4294901760
    %5879 = vmatpush2.msra.mxu0 %v5878
    %v5880 = vand.u32 %v3539, 4294901760
    %v5881 = vsub.f32 %v3539, %v5880
    %v5882 = vand.u32 %v5881, 4294901760
    %5883 = vmatprep.subr.mxu0 %v5882
    %v5884 = vand.u32 %v3538, 4294901760
    %v5885 = vsub.f32 %v3538, %v5884
    %v5886 = vand.u32 %v5885, 4294901760
    %5887 = vmatpush2.msra.mxu0 %v5886
    %v5888 = vand.u32 %v3537, 4294901760
    %v5889 = vsub.f32 %v3537, %v5888
    %v5890 = vand.u32 %v5889, 4294901760
    %5891 = vmatprep.subr.mxu0 %v5890
    %v5892 = vand.u32 %v3536, 4294901760
    %v5893 = vsub.f32 %v3536, %v5892
    %v5894 = vand.u32 %v5893, 4294901760
    %5895 = vmatpush2.msra.mxu0 %v5894
    %v5896 = vand.u32 %v3535, 4294901760
    %v5897 = vsub.f32 %v3535, %v5896
    %v5898 = vand.u32 %v5897, 4294901760
    %5899 = vmatprep.subr.mxu0 %v5898
    %v5900 = vand.u32 %v3534, 4294901760
    %v5901 = vsub.f32 %v3534, %v5900
    %v5902 = vand.u32 %v5901, 4294901760
    %5903 = vmatpush2.msra.mxu0 %v5902
    %v5904 = vand.u32 %v3533, 4294901760
    %v5905 = vsub.f32 %v3533, %v5904
    %v5906 = vand.u32 %v5905, 4294901760
    %5907 = vmatprep.subr.mxu0 %v5906
    %v5908 = vand.u32 %v3532, 4294901760
    %v5909 = vsub.f32 %v3532, %v5908
    %v5910 = vand.u32 %v5909, 4294901760
    %5911 = vmatpush2.msra.mxu0 %v5910
    %v5912 = vand.u32 %v3531, 4294901760
    %v5913 = vsub.f32 %v3531, %v5912
    %v5914 = vand.u32 %v5913, 4294901760
    %5915 = vmatprep.subr.mxu0 %v5914
    %v5916 = vand.u32 %v3530, 4294901760
    %v5917 = vsub.f32 %v3530, %v5916
    %v5918 = vand.u32 %v5917, 4294901760
    %5919 = vmatpush2.msra.mxu0 %v5918
    %v5920 = vand.u32 %v3529, 4294901760
    %v5921 = vsub.f32 %v3529, %v5920
    %v5922 = vand.u32 %v5921, 4294901760
    %5923 = vmatprep.subr.mxu0 %v5922
    %v5924 = vand.u32 %v3528, 4294901760
    %v5925 = vsub.f32 %v3528, %v5924
    %v5926 = vand.u32 %v5925, 4294901760
    %5927 = vmatpush2.msra.mxu0 %v5926
    %v5928 = vand.u32 %v3527, 4294901760
    %v5929 = vsub.f32 %v3527, %v5928
    %v5930 = vand.u32 %v5929, 4294901760
    %5931 = vmatprep.subr.mxu0 %v5930
    %v5932 = vand.u32 %v3526, 4294901760
    %v5933 = vsub.f32 %v3526, %v5932
    %v5934 = vand.u32 %v5933, 4294901760
    %5935 = vmatpush2.msra.mxu0 %v5934
    %v5936 = vand.u32 %v3525, 4294901760
    %v5937 = vsub.f32 %v3525, %v5936
    %v5938 = vand.u32 %v5937, 4294901760
    %5939 = vmatprep.subr.mxu0 %v5938
    %v5940 = vand.u32 %v3524, 4294901760
    %v5941 = vsub.f32 %v3524, %v5940
    %v5942 = vand.u32 %v5941, 4294901760
    %5943 = vmatpush2.msra.mxu0 %v5942
    %v5944 = vand.u32 %v3523, 4294901760
    %v5945 = vsub.f32 %v3523, %v5944
    %v5946 = vand.u32 %v5945, 4294901760
    %5947 = vmatprep.subr.mxu0 %v5946
    %v5948 = vand.u32 %v3522, 4294901760
    %v5949 = vsub.f32 %v3522, %v5948
    %v5950 = vand.u32 %v5949, 4294901760
    %5951 = vmatpush2.msra.mxu0 %v5950
    %v5952 = vand.u32 %v3521, 4294901760
    %v5953 = vsub.f32 %v3521, %v5952
    %v5954 = vand.u32 %v5953, 4294901760
    %5955 = vmatprep.subr.mxu0 %v5954
    %v5956 = vand.u32 %v3520, 4294901760
    %v5957 = vsub.f32 %v3520, %v5956
    %v5958 = vand.u32 %v5957, 4294901760
    %5959 = vmatpush2.msra.mxu0 %v5958
    %v5960 = vand.u32 %v3519, 4294901760
    %v5961 = vsub.f32 %v3519, %v5960
    %v5962 = vand.u32 %v5961, 4294901760
    %5963 = vmatprep.subr.mxu0 %v5962
    %v5964 = vand.u32 %v3518, 4294901760
    %v5965 = vsub.f32 %v3518, %v5964
    %v5966 = vand.u32 %v5965, 4294901760
    %5967 = vmatpush2.msra.mxu0 %v5966
    %v5968 = vand.u32 %v3517, 4294901760
    %v5969 = vsub.f32 %v3517, %v5968
    %v5970 = vand.u32 %v5969, 4294901760
    %5971 = vmatprep.subr.mxu0 %v5970
    %v5972 = vand.u32 %v3516, 4294901760
    %v5973 = vsub.f32 %v3516, %v5972
    %v5974 = vand.u32 %v5973, 4294901760
    %5975 = vmatpush2.msra.mxu0 %v5974
    %v5976 = vand.u32 %v3515, 4294901760
    %v5977 = vsub.f32 %v3515, %v5976
    %v5978 = vand.u32 %v5977, 4294901760
    %5979 = vmatprep.subr.mxu0 %v5978
    %v5980 = vand.u32 %v3514, 4294901760
    %v5981 = vsub.f32 %v3514, %v5980
    %v5982 = vand.u32 %v5981, 4294901760
    %5983 = vmatpush2.msra.mxu0 %v5982
    %v5984 = vand.u32 %v44, 4294901760
    %5985 = vmatprep.mubr.f32.mxu0 %v5984
    %v5986 = vand.u32 %v43, 4294901760
    %5987 = vmatmul.mubr.f32.gmra.mxu0 %v5986
    %v5988 = vpop.f32.mrf.mxu0
    %v5989 = vadd.f32 %v5724, %v5988
    %v5990 = vpop.f32.mrf.mxu0
    %v5991 = vadd.f32 %v5726, %v5990
    %5992 = vdwg.mxu0
    %v5993 = vand.u32 %v3513, 4294901760
    %5994 = vmatprep.subr.mxu0 %v5993
    %v5995 = vand.u32 %v3512, 4294901760
    %5996 = vmatpush1.msra.mxu0 %v5995
    %v5997 = vand.u32 %v3511, 4294901760
    %5998 = vmatprep.subr.mxu0 %v5997
    %v5999 = vand.u32 %v3510, 4294901760
    %6000 = vmatpush1.msra.mxu0 %v5999
    %v6001 = vand.u32 %v3509, 4294901760
    %6002 = vmatprep.subr.mxu0 %v6001
    %v6003 = vand.u32 %v3508, 4294901760
    %6004 = vmatpush1.msra.mxu0 %v6003
    %v6005 = vand.u32 %v3507, 4294901760
    %6006 = vmatprep.subr.mxu0 %v6005
    %v6007 = vand.u32 %v3506, 4294901760
    %6008 = vmatpush1.msra.mxu0 %v6007
    %v6009 = vand.u32 %v3505, 4294901760
    %6010 = vmatprep.subr.mxu0 %v6009
    %v6011 = vand.u32 %v3504, 4294901760
    %6012 = vmatpush1.msra.mxu0 %v6011
    %v6013 = vand.u32 %v3503, 4294901760
    %6014 = vmatprep.subr.mxu0 %v6013
    %v6015 = vand.u32 %v3502, 4294901760
    %6016 = vmatpush1.msra.mxu0 %v6015
    %v6017 = vand.u32 %v3501, 4294901760
    %6018 = vmatprep.subr.mxu0 %v6017
    %v6019 = vand.u32 %v3500, 4294901760
    %6020 = vmatpush1.msra.mxu0 %v6019
    %v6021 = vand.u32 %v3499, 4294901760
    %6022 = vmatprep.subr.mxu0 %v6021
    %v6023 = vand.u32 %v3498, 4294901760
    %6024 = vmatpush1.msra.mxu0 %v6023
    %v6025 = vand.u32 %v3497, 4294901760
    %6026 = vmatprep.subr.mxu0 %v6025
    %v6027 = vand.u32 %v3496, 4294901760
    %6028 = vmatpush1.msra.mxu0 %v6027
    %v6029 = vand.u32 %v3495, 4294901760
    %6030 = vmatprep.subr.mxu0 %v6029
    %v6031 = vand.u32 %v3494, 4294901760
    %6032 = vmatpush1.msra.mxu0 %v6031
    %v6033 = vand.u32 %v3493, 4294901760
    %6034 = vmatprep.subr.mxu0 %v6033
    %v6035 = vand.u32 %v3492, 4294901760
    %6036 = vmatpush1.msra.mxu0 %v6035
    %v6037 = vand.u32 %v3491, 4294901760
    %6038 = vmatprep.subr.mxu0 %v6037
    %v6039 = vand.u32 %v3490, 4294901760
    %6040 = vmatpush1.msra.mxu0 %v6039
    %v6041 = vand.u32 %v3489, 4294901760
    %6042 = vmatprep.subr.mxu0 %v6041
    %v6043 = vand.u32 %v3488, 4294901760
    %6044 = vmatpush1.msra.mxu0 %v6043
    %v6045 = vand.u32 %v3487, 4294901760
    %6046 = vmatprep.subr.mxu0 %v6045
    %v6047 = vand.u32 %v3486, 4294901760
    %6048 = vmatpush1.msra.mxu0 %v6047
    %v6049 = vand.u32 %v3485, 4294901760
    %6050 = vmatprep.subr.mxu0 %v6049
    %v6051 = vand.u32 %v3484, 4294901760
    %6052 = vmatpush1.msra.mxu0 %v6051
    %v6053 = vand.u32 %v3483, 4294901760
    %6054 = vmatprep.subr.mxu0 %v6053
    %v6055 = vand.u32 %v3482, 4294901760
    %6056 = vmatpush1.msra.mxu0 %v6055
    %v6057 = vand.u32 %v3545, 4294901760
    %6058 = vmatprep.subr.mxu0 %v6057
    %v6059 = vand.u32 %v3544, 4294901760
    %6060 = vmatpush2.msra.mxu0 %v6059
    %v6061 = vand.u32 %v3543, 4294901760
    %6062 = vmatprep.subr.mxu0 %v6061
    %v6063 = vand.u32 %v3542, 4294901760
    %6064 = vmatpush2.msra.mxu0 %v6063
    %v6065 = vand.u32 %v3541, 4294901760
    %6066 = vmatprep.subr.mxu0 %v6065
    %v6067 = vand.u32 %v3540, 4294901760
    %6068 = vmatpush2.msra.mxu0 %v6067
    %v6069 = vand.u32 %v3539, 4294901760
    %6070 = vmatprep.subr.mxu0 %v6069
    %v6071 = vand.u32 %v3538, 4294901760
    %6072 = vmatpush2.msra.mxu0 %v6071
    %v6073 = vand.u32 %v3537, 4294901760
    %6074 = vmatprep.subr.mxu0 %v6073
    %v6075 = vand.u32 %v3536, 4294901760
    %6076 = vmatpush2.msra.mxu0 %v6075
    %v6077 = vand.u32 %v3535, 4294901760
    %6078 = vmatprep.subr.mxu0 %v6077
    %v6079 = vand.u32 %v3534, 4294901760
    %6080 = vmatpush2.msra.mxu0 %v6079
    %v6081 = vand.u32 %v3533, 4294901760
    %6082 = vmatprep.subr.mxu0 %v6081
    %v6083 = vand.u32 %v3532, 4294901760
    %6084 = vmatpush2.msra.mxu0 %v6083
    %v6085 = vand.u32 %v3531, 4294901760
    %6086 = vmatprep.subr.mxu0 %v6085
    %v6087 = vand.u32 %v3530, 4294901760
    %6088 = vmatpush2.msra.mxu0 %v6087
    %v6089 = vand.u32 %v3529, 4294901760
    %6090 = vmatprep.subr.mxu0 %v6089
    %v6091 = vand.u32 %v3528, 4294901760
    %6092 = vmatpush2.msra.mxu0 %v6091
    %v6093 = vand.u32 %v3527, 4294901760
    %6094 = vmatprep.subr.mxu0 %v6093
    %v6095 = vand.u32 %v3526, 4294901760
    %6096 = vmatpush2.msra.mxu0 %v6095
    %v6097 = vand.u32 %v3525, 4294901760
    %6098 = vmatprep.subr.mxu0 %v6097
    %v6099 = vand.u32 %v3524, 4294901760
    %6100 = vmatpush2.msra.mxu0 %v6099
    %v6101 = vand.u32 %v3523, 4294901760
    %6102 = vmatprep.subr.mxu0 %v6101
    %v6103 = vand.u32 %v3522, 4294901760
    %6104 = vmatpush2.msra.mxu0 %v6103
    %v6105 = vand.u32 %v3521, 4294901760
    %6106 = vmatprep.subr.mxu0 %v6105
    %v6107 = vand.u32 %v3520, 4294901760
    %6108 = vmatpush2.msra.mxu0 %v6107
    %v6109 = vand.u32 %v3519, 4294901760
    %6110 = vmatprep.subr.mxu0 %v6109
    %v6111 = vand.u32 %v3518, 4294901760
    %6112 = vmatpush2.msra.mxu0 %v6111
    %v6113 = vand.u32 %v3517, 4294901760
    %6114 = vmatprep.subr.mxu0 %v6113
    %v6115 = vand.u32 %v3516, 4294901760
    %6116 = vmatpush2.msra.mxu0 %v6115
    %v6117 = vand.u32 %v3515, 4294901760
    %6118 = vmatprep.subr.mxu0 %v6117
    %v6119 = vand.u32 %v3514, 4294901760
    %6120 = vmatpush2.msra.mxu0 %v6119
    %v6121 = vand.u32 %v44, 4294901760
    %6122 = vmatprep.mubr.f32.mxu0 %v6121
    %v6123 = vand.u32 %v43, 4294901760
    %6124 = vmatmul.mubr.f32.gmra.mxu0 %v6123
    %v6125 = vpop.f32.mrf.mxu0
    %v6126 = vadd.f32 %v5989, %v6125
    %v6127 = vpop.f32.mrf.mxu0
    %v6128 = vadd.f32 %v5991, %v6127
    %6129 = vdwg.mxu0
    %6130 = vmatprep.subr.mxu0 0.0
    %6131 = vmatpush1.msra.mxu0 0.0
    %6132 = vmatprep.subr.mxu0 0.0
    %6133 = vmatpush1.msra.mxu0 0.0
    %6134 = vmatprep.subr.mxu0 0.0
    %6135 = vmatpush1.msra.mxu0 0.0
    %6136 = vmatprep.subr.mxu0 0.0
    %6137 = vmatpush1.msra.mxu0 0.0
    %6138 = vmatprep.subr.mxu0 0.0
    %6139 = vmatpush1.msra.mxu0 0.0
    %6140 = vmatprep.subr.mxu0 0.0
    %6141 = vmatpush1.msra.mxu0 0.0
    %6142 = vmatprep.subr.mxu0 0.0
    %6143 = vmatpush1.msra.mxu0 0.0
    %6144 = vmatprep.subr.mxu0 0.0
    %6145 = vmatpush1.msra.mxu0 0.0
    %v6146 = vand.u32 %v3561, 4294901760
    %6147 = vmatprep.subr.mxu0 %v6146
    %v6148 = vand.u32 %v3560, 4294901760
    %6149 = vmatpush1.msra.mxu0 %v6148
    %v6150 = vand.u32 %v3559, 4294901760
    %6151 = vmatprep.subr.mxu0 %v6150
    %v6152 = vand.u32 %v3558, 4294901760
    %6153 = vmatpush1.msra.mxu0 %v6152
    %v6154 = vand.u32 %v3557, 4294901760
    %6155 = vmatprep.subr.mxu0 %v6154
    %v6156 = vand.u32 %v3556, 4294901760
    %6157 = vmatpush1.msra.mxu0 %v6156
    %v6158 = vand.u32 %v3555, 4294901760
    %6159 = vmatprep.subr.mxu0 %v6158
    %v6160 = vand.u32 %v3554, 4294901760
    %6161 = vmatpush1.msra.mxu0 %v6160
    %v6162 = vand.u32 %v3553, 4294901760
    %6163 = vmatprep.subr.mxu0 %v6162
    %v6164 = vand.u32 %v3552, 4294901760
    %6165 = vmatpush1.msra.mxu0 %v6164
    %v6166 = vand.u32 %v3551, 4294901760
    %6167 = vmatprep.subr.mxu0 %v6166
    %v6168 = vand.u32 %v3550, 4294901760
    %6169 = vmatpush1.msra.mxu0 %v6168
    %v6170 = vand.u32 %v3549, 4294901760
    %6171 = vmatprep.subr.mxu0 %v6170
    %v6172 = vand.u32 %v3548, 4294901760
    %6173 = vmatpush1.msra.mxu0 %v6172
    %v6174 = vand.u32 %v3547, 4294901760
    %6175 = vmatprep.subr.mxu0 %v6174
    %v6176 = vand.u32 %v3546, 4294901760
    %6177 = vmatpush1.msra.mxu0 %v6176
    %6178 = vmatprep.subr.mxu0 0.0
    %6179 = vmatpush2.msra.mxu0 0.0
    %6180 = vmatprep.subr.mxu0 0.0
    %6181 = vmatpush2.msra.mxu0 0.0
    %6182 = vmatprep.subr.mxu0 0.0
    %6183 = vmatpush2.msra.mxu0 0.0
    %6184 = vmatprep.subr.mxu0 0.0
    %6185 = vmatpush2.msra.mxu0 0.0
    %6186 = vmatprep.subr.mxu0 0.0
    %6187 = vmatpush2.msra.mxu0 0.0
    %6188 = vmatprep.subr.mxu0 0.0
    %6189 = vmatpush2.msra.mxu0 0.0
    %6190 = vmatprep.subr.mxu0 0.0
    %6191 = vmatpush2.msra.mxu0 0.0
    %6192 = vmatprep.subr.mxu0 0.0
    %6193 = vmatpush2.msra.mxu0 0.0
    %6194 = vmatprep.subr.mxu0 0.0
    %6195 = vmatpush2.msra.mxu0 0.0
    %6196 = vmatprep.subr.mxu0 0.0
    %6197 = vmatpush2.msra.mxu0 0.0
    %6198 = vmatprep.subr.mxu0 0.0
    %6199 = vmatpush2.msra.mxu0 0.0
    %6200 = vmatprep.subr.mxu0 0.0
    %6201 = vmatpush2.msra.mxu0 0.0
    %6202 = vmatprep.subr.mxu0 0.0
    %6203 = vmatpush2.msra.mxu0 0.0
    %6204 = vmatprep.subr.mxu0 0.0
    %6205 = vmatpush2.msra.mxu0 0.0
    %6206 = vmatprep.subr.mxu0 0.0
    %6207 = vmatpush2.msra.mxu0 0.0
    %6208 = vmatprep.subr.mxu0 0.0
    %6209 = vmatpush2.msra.mxu0 0.0
    %6210 = vmatprep.mubr.f32.mxu0 0.0
    %v6211 = vand.u32 %v198, 4294901760
    %v6212 = vsub.f32 %v198, %v6211
    %v6213 = vand.u32 %v6212, 4294901760
    %v6214 = vsub.f32 %v6212, %v6213
    %v6215 = vand.u32 %v6214, 4294901760
    %6216 = vmatmul.mubr.f32.gmra.mxu0 %v6215
    %v6217 = vpop.f32.mrf.mxu0
    %v6218 = vadd.f32 %v6126, %v6217
    %v6219 = vpop.f32.mrf.mxu0
    %v6220 = vadd.f32 %v6128, %v6219
    %6221 = vdwg.mxu0
    %6222 = vmatprep.subr.mxu0 0.0
    %6223 = vmatpush1.msra.mxu0 0.0
    %6224 = vmatprep.subr.mxu0 0.0
    %6225 = vmatpush1.msra.mxu0 0.0
    %6226 = vmatprep.subr.mxu0 0.0
    %6227 = vmatpush1.msra.mxu0 0.0
    %6228 = vmatprep.subr.mxu0 0.0
    %6229 = vmatpush1.msra.mxu0 0.0
    %6230 = vmatprep.subr.mxu0 0.0
    %6231 = vmatpush1.msra.mxu0 0.0
    %6232 = vmatprep.subr.mxu0 0.0
    %6233 = vmatpush1.msra.mxu0 0.0
    %6234 = vmatprep.subr.mxu0 0.0
    %6235 = vmatpush1.msra.mxu0 0.0
    %6236 = vmatprep.subr.mxu0 0.0
    %6237 = vmatpush1.msra.mxu0 0.0
    %v6238 = vand.u32 %v3561, 4294901760
    %v6239 = vsub.f32 %v3561, %v6238
    %v6240 = vand.u32 %v6239, 4294901760
    %v6241 = vsub.f32 %v6239, %v6240
    %v6242 = vand.u32 %v6241, 4294901760
    %6243 = vmatprep.subr.mxu0 %v6242
    %v6244 = vand.u32 %v3560, 4294901760
    %v6245 = vsub.f32 %v3560, %v6244
    %v6246 = vand.u32 %v6245, 4294901760
    %v6247 = vsub.f32 %v6245, %v6246
    %v6248 = vand.u32 %v6247, 4294901760
    %6249 = vmatpush1.msra.mxu0 %v6248
    %v6250 = vand.u32 %v3559, 4294901760
    %v6251 = vsub.f32 %v3559, %v6250
    %v6252 = vand.u32 %v6251, 4294901760
    %v6253 = vsub.f32 %v6251, %v6252
    %v6254 = vand.u32 %v6253, 4294901760
    %6255 = vmatprep.subr.mxu0 %v6254
    %v6256 = vand.u32 %v3558, 4294901760
    %v6257 = vsub.f32 %v3558, %v6256
    %v6258 = vand.u32 %v6257, 4294901760
    %v6259 = vsub.f32 %v6257, %v6258
    %v6260 = vand.u32 %v6259, 4294901760
    %6261 = vmatpush1.msra.mxu0 %v6260
    %v6262 = vand.u32 %v3557, 4294901760
    %v6263 = vsub.f32 %v3557, %v6262
    %v6264 = vand.u32 %v6263, 4294901760
    %v6265 = vsub.f32 %v6263, %v6264
    %v6266 = vand.u32 %v6265, 4294901760
    %6267 = vmatprep.subr.mxu0 %v6266
    %v6268 = vand.u32 %v3556, 4294901760
    %v6269 = vsub.f32 %v3556, %v6268
    %v6270 = vand.u32 %v6269, 4294901760
    %v6271 = vsub.f32 %v6269, %v6270
    %v6272 = vand.u32 %v6271, 4294901760
    %6273 = vmatpush1.msra.mxu0 %v6272
    %v6274 = vand.u32 %v3555, 4294901760
    %v6275 = vsub.f32 %v3555, %v6274
    %v6276 = vand.u32 %v6275, 4294901760
    %v6277 = vsub.f32 %v6275, %v6276
    %v6278 = vand.u32 %v6277, 4294901760
    %6279 = vmatprep.subr.mxu0 %v6278
    %v6280 = vand.u32 %v3554, 4294901760
    %v6281 = vsub.f32 %v3554, %v6280
    %v6282 = vand.u32 %v6281, 4294901760
    %v6283 = vsub.f32 %v6281, %v6282
    %v6284 = vand.u32 %v6283, 4294901760
    %6285 = vmatpush1.msra.mxu0 %v6284
    %v6286 = vand.u32 %v3553, 4294901760
    %v6287 = vsub.f32 %v3553, %v6286
    %v6288 = vand.u32 %v6287, 4294901760
    %v6289 = vsub.f32 %v6287, %v6288
    %v6290 = vand.u32 %v6289, 4294901760
    %6291 = vmatprep.subr.mxu0 %v6290
    %v6292 = vand.u32 %v3552, 4294901760
    %v6293 = vsub.f32 %v3552, %v6292
    %v6294 = vand.u32 %v6293, 4294901760
    %v6295 = vsub.f32 %v6293, %v6294
    %v6296 = vand.u32 %v6295, 4294901760
    %6297 = vmatpush1.msra.mxu0 %v6296
    %v6298 = vand.u32 %v3551, 4294901760
    %v6299 = vsub.f32 %v3551, %v6298
    %v6300 = vand.u32 %v6299, 4294901760
    %v6301 = vsub.f32 %v6299, %v6300
    %v6302 = vand.u32 %v6301, 4294901760
    %6303 = vmatprep.subr.mxu0 %v6302
    %v6304 = vand.u32 %v3550, 4294901760
    %v6305 = vsub.f32 %v3550, %v6304
    %v6306 = vand.u32 %v6305, 4294901760
    %v6307 = vsub.f32 %v6305, %v6306
    %v6308 = vand.u32 %v6307, 4294901760
    %6309 = vmatpush1.msra.mxu0 %v6308
    %v6310 = vand.u32 %v3549, 4294901760
    %v6311 = vsub.f32 %v3549, %v6310
    %v6312 = vand.u32 %v6311, 4294901760
    %v6313 = vsub.f32 %v6311, %v6312
    %v6314 = vand.u32 %v6313, 4294901760
    %6315 = vmatprep.subr.mxu0 %v6314
    %v6316 = vand.u32 %v3548, 4294901760
    %v6317 = vsub.f32 %v3548, %v6316
    %v6318 = vand.u32 %v6317, 4294901760
    %v6319 = vsub.f32 %v6317, %v6318
    %v6320 = vand.u32 %v6319, 4294901760
    %6321 = vmatpush1.msra.mxu0 %v6320
    %v6322 = vand.u32 %v3547, 4294901760
    %v6323 = vsub.f32 %v3547, %v6322
    %v6324 = vand.u32 %v6323, 4294901760
    %v6325 = vsub.f32 %v6323, %v6324
    %v6326 = vand.u32 %v6325, 4294901760
    %6327 = vmatprep.subr.mxu0 %v6326
    %v6328 = vand.u32 %v3546, 4294901760
    %v6329 = vsub.f32 %v3546, %v6328
    %v6330 = vand.u32 %v6329, 4294901760
    %v6331 = vsub.f32 %v6329, %v6330
    %v6332 = vand.u32 %v6331, 4294901760
    %6333 = vmatpush1.msra.mxu0 %v6332
    %6334 = vmatprep.subr.mxu0 0.0
    %6335 = vmatpush2.msra.mxu0 0.0
    %6336 = vmatprep.subr.mxu0 0.0
    %6337 = vmatpush2.msra.mxu0 0.0
    %6338 = vmatprep.subr.mxu0 0.0
    %6339 = vmatpush2.msra.mxu0 0.0
    %6340 = vmatprep.subr.mxu0 0.0
    %6341 = vmatpush2.msra.mxu0 0.0
    %6342 = vmatprep.subr.mxu0 0.0
    %6343 = vmatpush2.msra.mxu0 0.0
    %6344 = vmatprep.subr.mxu0 0.0
    %6345 = vmatpush2.msra.mxu0 0.0
    %6346 = vmatprep.subr.mxu0 0.0
    %6347 = vmatpush2.msra.mxu0 0.0
    %6348 = vmatprep.subr.mxu0 0.0
    %6349 = vmatpush2.msra.mxu0 0.0
    %6350 = vmatprep.subr.mxu0 0.0
    %6351 = vmatpush2.msra.mxu0 0.0
    %6352 = vmatprep.subr.mxu0 0.0
    %6353 = vmatpush2.msra.mxu0 0.0
    %6354 = vmatprep.subr.mxu0 0.0
    %6355 = vmatpush2.msra.mxu0 0.0
    %6356 = vmatprep.subr.mxu0 0.0
    %6357 = vmatpush2.msra.mxu0 0.0
    %6358 = vmatprep.subr.mxu0 0.0
    %6359 = vmatpush2.msra.mxu0 0.0
    %6360 = vmatprep.subr.mxu0 0.0
    %6361 = vmatpush2.msra.mxu0 0.0
    %6362 = vmatprep.subr.mxu0 0.0
    %6363 = vmatpush2.msra.mxu0 0.0
    %6364 = vmatprep.subr.mxu0 0.0
    %6365 = vmatpush2.msra.mxu0 0.0
    %6366 = vmatprep.mubr.f32.mxu0 0.0
    %v6367 = vand.u32 %v198, 4294901760
    %6368 = vmatmul.mubr.f32.gmra.mxu0 %v6367
    %v6369 = vpop.f32.mrf.mxu0
    %v6370 = vadd.f32 %v6218, %v6369
    %v6371 = vpop.f32.mrf.mxu0
    %v6372 = vadd.f32 %v6220, %v6371
    %6373 = vdwg.mxu0
    %6374 = vmatprep.subr.mxu0 0.0
    %6375 = vmatpush1.msra.mxu0 0.0
    %6376 = vmatprep.subr.mxu0 0.0
    %6377 = vmatpush1.msra.mxu0 0.0
    %6378 = vmatprep.subr.mxu0 0.0
    %6379 = vmatpush1.msra.mxu0 0.0
    %6380 = vmatprep.subr.mxu0 0.0
    %6381 = vmatpush1.msra.mxu0 0.0
    %6382 = vmatprep.subr.mxu0 0.0
    %6383 = vmatpush1.msra.mxu0 0.0
    %6384 = vmatprep.subr.mxu0 0.0
    %6385 = vmatpush1.msra.mxu0 0.0
    %6386 = vmatprep.subr.mxu0 0.0
    %6387 = vmatpush1.msra.mxu0 0.0
    %6388 = vmatprep.subr.mxu0 0.0
    %6389 = vmatpush1.msra.mxu0 0.0
    %v6390 = vand.u32 %v3561, 4294901760
    %v6391 = vsub.f32 %v3561, %v6390
    %6392 = vmatprep.subr.mxu0 %v6391
    %v6393 = vand.u32 %v3560, 4294901760
    %v6394 = vsub.f32 %v3560, %v6393
    %6395 = vmatpush1.msra.mxu0 %v6394
    %v6396 = vand.u32 %v3559, 4294901760
    %v6397 = vsub.f32 %v3559, %v6396
    %6398 = vmatprep.subr.mxu0 %v6397
    %v6399 = vand.u32 %v3558, 4294901760
    %v6400 = vsub.f32 %v3558, %v6399
    %6401 = vmatpush1.msra.mxu0 %v6400
    %v6402 = vand.u32 %v3557, 4294901760
    %v6403 = vsub.f32 %v3557, %v6402
    %6404 = vmatprep.subr.mxu0 %v6403
    %v6405 = vand.u32 %v3556, 4294901760
    %v6406 = vsub.f32 %v3556, %v6405
    %6407 = vmatpush1.msra.mxu0 %v6406
    %v6408 = vand.u32 %v3555, 4294901760
    %v6409 = vsub.f32 %v3555, %v6408
    %6410 = vmatprep.subr.mxu0 %v6409
    %v6411 = vand.u32 %v3554, 4294901760
    %v6412 = vsub.f32 %v3554, %v6411
    %6413 = vmatpush1.msra.mxu0 %v6412
    %v6414 = vand.u32 %v3553, 4294901760
    %v6415 = vsub.f32 %v3553, %v6414
    %6416 = vmatprep.subr.mxu0 %v6415
    %v6417 = vand.u32 %v3552, 4294901760
    %v6418 = vsub.f32 %v3552, %v6417
    %6419 = vmatpush1.msra.mxu0 %v6418
    %v6420 = vand.u32 %v3551, 4294901760
    %v6421 = vsub.f32 %v3551, %v6420
    %6422 = vmatprep.subr.mxu0 %v6421
    %v6423 = vand.u32 %v3550, 4294901760
    %v6424 = vsub.f32 %v3550, %v6423
    %6425 = vmatpush1.msra.mxu0 %v6424
    %v6426 = vand.u32 %v3549, 4294901760
    %v6427 = vsub.f32 %v3549, %v6426
    %6428 = vmatprep.subr.mxu0 %v6427
    %v6429 = vand.u32 %v3548, 4294901760
    %v6430 = vsub.f32 %v3548, %v6429
    %6431 = vmatpush1.msra.mxu0 %v6430
    %v6432 = vand.u32 %v3547, 4294901760
    %v6433 = vsub.f32 %v3547, %v6432
    %6434 = vmatprep.subr.mxu0 %v6433
    %v6435 = vand.u32 %v3546, 4294901760
    %v6436 = vsub.f32 %v3546, %v6435
    %6437 = vmatpush1.msra.mxu0 %v6436
    %6438 = vmatprep.subr.mxu0 0.0
    %6439 = vmatpush2.msra.mxu0 0.0
    %6440 = vmatprep.subr.mxu0 0.0
    %6441 = vmatpush2.msra.mxu0 0.0
    %6442 = vmatprep.subr.mxu0 0.0
    %6443 = vmatpush2.msra.mxu0 0.0
    %6444 = vmatprep.subr.mxu0 0.0
    %6445 = vmatpush2.msra.mxu0 0.0
    %6446 = vmatprep.subr.mxu0 0.0
    %6447 = vmatpush2.msra.mxu0 0.0
    %6448 = vmatprep.subr.mxu0 0.0
    %6449 = vmatpush2.msra.mxu0 0.0
    %6450 = vmatprep.subr.mxu0 0.0
    %6451 = vmatpush2.msra.mxu0 0.0
    %6452 = vmatprep.subr.mxu0 0.0
    %6453 = vmatpush2.msra.mxu0 0.0
    %6454 = vmatprep.subr.mxu0 0.0
    %6455 = vmatpush2.msra.mxu0 0.0
    %6456 = vmatprep.subr.mxu0 0.0
    %6457 = vmatpush2.msra.mxu0 0.0
    %6458 = vmatprep.subr.mxu0 0.0
    %6459 = vmatpush2.msra.mxu0 0.0
    %6460 = vmatprep.subr.mxu0 0.0
    %6461 = vmatpush2.msra.mxu0 0.0
    %6462 = vmatprep.subr.mxu0 0.0
    %6463 = vmatpush2.msra.mxu0 0.0
    %6464 = vmatprep.subr.mxu0 0.0
    %6465 = vmatpush2.msra.mxu0 0.0
    %6466 = vmatprep.subr.mxu0 0.0
    %6467 = vmatpush2.msra.mxu0 0.0
    %6468 = vmatprep.subr.mxu0 0.0
    %6469 = vmatpush2.msra.mxu0 0.0
    %6470 = vmatprep.mubr.f32.mxu0 0.0
    %v6471 = vand.u32 %v198, 4294901760
    %v6472 = vsub.f32 %v198, %v6471
    %6473 = vmatmul.mubr.f32.gmra.mxu0 %v6472
    %v6474 = vpop.f32.mrf.mxu0
    %v6475 = vadd.f32 %v6370, %v6474
    %v6476 = vpop.f32.mrf.mxu0
    %v6477 = vadd.f32 %v6372, %v6476
    %6478 = vdwg.mxu0
    %6479 = vmatprep.subr.mxu0 0.0
    %6480 = vmatpush1.msra.mxu0 0.0
    %6481 = vmatprep.subr.mxu0 0.0
    %6482 = vmatpush1.msra.mxu0 0.0
    %6483 = vmatprep.subr.mxu0 0.0
    %6484 = vmatpush1.msra.mxu0 0.0
    %6485 = vmatprep.subr.mxu0 0.0
    %6486 = vmatpush1.msra.mxu0 0.0
    %6487 = vmatprep.subr.mxu0 0.0
    %6488 = vmatpush1.msra.mxu0 0.0
    %6489 = vmatprep.subr.mxu0 0.0
    %6490 = vmatpush1.msra.mxu0 0.0
    %6491 = vmatprep.subr.mxu0 0.0
    %6492 = vmatpush1.msra.mxu0 0.0
    %6493 = vmatprep.subr.mxu0 0.0
    %6494 = vmatpush1.msra.mxu0 0.0
    %v6495 = vand.u32 %v3561, 4294901760
    %6496 = vmatprep.subr.mxu0 %v6495
    %v6497 = vand.u32 %v3560, 4294901760
    %6498 = vmatpush1.msra.mxu0 %v6497
    %v6499 = vand.u32 %v3559, 4294901760
    %6500 = vmatprep.subr.mxu0 %v6499
    %v6501 = vand.u32 %v3558, 4294901760
    %6502 = vmatpush1.msra.mxu0 %v6501
    %v6503 = vand.u32 %v3557, 4294901760
    %6504 = vmatprep.subr.mxu0 %v6503
    %v6505 = vand.u32 %v3556, 4294901760
    %6506 = vmatpush1.msra.mxu0 %v6505
    %v6507 = vand.u32 %v3555, 4294901760
    %6508 = vmatprep.subr.mxu0 %v6507
    %v6509 = vand.u32 %v3554, 4294901760
    %6510 = vmatpush1.msra.mxu0 %v6509
    %v6511 = vand.u32 %v3553, 4294901760
    %6512 = vmatprep.subr.mxu0 %v6511
    %v6513 = vand.u32 %v3552, 4294901760
    %6514 = vmatpush1.msra.mxu0 %v6513
    %v6515 = vand.u32 %v3551, 4294901760
    %6516 = vmatprep.subr.mxu0 %v6515
    %v6517 = vand.u32 %v3550, 4294901760
    %6518 = vmatpush1.msra.mxu0 %v6517
    %v6519 = vand.u32 %v3549, 4294901760
    %6520 = vmatprep.subr.mxu0 %v6519
    %v6521 = vand.u32 %v3548, 4294901760
    %6522 = vmatpush1.msra.mxu0 %v6521
    %v6523 = vand.u32 %v3547, 4294901760
    %6524 = vmatprep.subr.mxu0 %v6523
    %v6525 = vand.u32 %v3546, 4294901760
    %6526 = vmatpush1.msra.mxu0 %v6525
    %6527 = vmatprep.subr.mxu0 0.0
    %6528 = vmatpush2.msra.mxu0 0.0
    %6529 = vmatprep.subr.mxu0 0.0
    %6530 = vmatpush2.msra.mxu0 0.0
    %6531 = vmatprep.subr.mxu0 0.0
    %6532 = vmatpush2.msra.mxu0 0.0
    %6533 = vmatprep.subr.mxu0 0.0
    %6534 = vmatpush2.msra.mxu0 0.0
    %6535 = vmatprep.subr.mxu0 0.0
    %6536 = vmatpush2.msra.mxu0 0.0
    %6537 = vmatprep.subr.mxu0 0.0
    %6538 = vmatpush2.msra.mxu0 0.0
    %6539 = vmatprep.subr.mxu0 0.0
    %6540 = vmatpush2.msra.mxu0 0.0
    %6541 = vmatprep.subr.mxu0 0.0
    %6542 = vmatpush2.msra.mxu0 0.0
    %6543 = vmatprep.subr.mxu0 0.0
    %6544 = vmatpush2.msra.mxu0 0.0
    %6545 = vmatprep.subr.mxu0 0.0
    %6546 = vmatpush2.msra.mxu0 0.0
    %6547 = vmatprep.subr.mxu0 0.0
    %6548 = vmatpush2.msra.mxu0 0.0
    %6549 = vmatprep.subr.mxu0 0.0
    %6550 = vmatpush2.msra.mxu0 0.0
    %6551 = vmatprep.subr.mxu0 0.0
    %6552 = vmatpush2.msra.mxu0 0.0
    %6553 = vmatprep.subr.mxu0 0.0
    %6554 = vmatpush2.msra.mxu0 0.0
    %6555 = vmatprep.subr.mxu0 0.0
    %6556 = vmatpush2.msra.mxu0 0.0
    %6557 = vmatprep.subr.mxu0 0.0
    %6558 = vmatpush2.msra.mxu0 0.0
    %6559 = vmatprep.mubr.f32.mxu0 0.0
    %v6560 = vand.u32 %v198, 4294901760
    %v6561 = vsub.f32 %v198, %v6560
    %v6562 = vand.u32 %v6561, 4294901760
    %6563 = vmatmul.mubr.f32.gmra.mxu0 %v6562
    %v6564 = vpop.f32.mrf.mxu0
    %v6565 = vadd.f32 %v6475, %v6564
    %v6566 = vpop.f32.mrf.mxu0
    %v6567 = vadd.f32 %v6477, %v6566
    %6568 = vdwg.mxu0
    %6569 = vmatprep.subr.mxu0 0.0
    %6570 = vmatpush1.msra.mxu0 0.0
    %6571 = vmatprep.subr.mxu0 0.0
    %6572 = vmatpush1.msra.mxu0 0.0
    %6573 = vmatprep.subr.mxu0 0.0
    %6574 = vmatpush1.msra.mxu0 0.0
    %6575 = vmatprep.subr.mxu0 0.0
    %6576 = vmatpush1.msra.mxu0 0.0
    %6577 = vmatprep.subr.mxu0 0.0
    %6578 = vmatpush1.msra.mxu0 0.0
    %6579 = vmatprep.subr.mxu0 0.0
    %6580 = vmatpush1.msra.mxu0 0.0
    %6581 = vmatprep.subr.mxu0 0.0
    %6582 = vmatpush1.msra.mxu0 0.0
    %6583 = vmatprep.subr.mxu0 0.0
    %6584 = vmatpush1.msra.mxu0 0.0
    %v6585 = vand.u32 %v3561, 4294901760
    %v6586 = vsub.f32 %v3561, %v6585
    %v6587 = vand.u32 %v6586, 4294901760
    %6588 = vmatprep.subr.mxu0 %v6587
    %v6589 = vand.u32 %v3560, 4294901760
    %v6590 = vsub.f32 %v3560, %v6589
    %v6591 = vand.u32 %v6590, 4294901760
    %6592 = vmatpush1.msra.mxu0 %v6591
    %v6593 = vand.u32 %v3559, 4294901760
    %v6594 = vsub.f32 %v3559, %v6593
    %v6595 = vand.u32 %v6594, 4294901760
    %6596 = vmatprep.subr.mxu0 %v6595
    %v6597 = vand.u32 %v3558, 4294901760
    %v6598 = vsub.f32 %v3558, %v6597
    %v6599 = vand.u32 %v6598, 4294901760
    %6600 = vmatpush1.msra.mxu0 %v6599
    %v6601 = vand.u32 %v3557, 4294901760
    %v6602 = vsub.f32 %v3557, %v6601
    %v6603 = vand.u32 %v6602, 4294901760
    %6604 = vmatprep.subr.mxu0 %v6603
    %v6605 = vand.u32 %v3556, 4294901760
    %v6606 = vsub.f32 %v3556, %v6605
    %v6607 = vand.u32 %v6606, 4294901760
    %6608 = vmatpush1.msra.mxu0 %v6607
    %v6609 = vand.u32 %v3555, 4294901760
    %v6610 = vsub.f32 %v3555, %v6609
    %v6611 = vand.u32 %v6610, 4294901760
    %6612 = vmatprep.subr.mxu0 %v6611
    %v6613 = vand.u32 %v3554, 4294901760
    %v6614 = vsub.f32 %v3554, %v6613
    %v6615 = vand.u32 %v6614, 4294901760
    %6616 = vmatpush1.msra.mxu0 %v6615
    %v6617 = vand.u32 %v3553, 4294901760
    %v6618 = vsub.f32 %v3553, %v6617
    %v6619 = vand.u32 %v6618, 4294901760
    %6620 = vmatprep.subr.mxu0 %v6619
    %v6621 = vand.u32 %v3552, 4294901760
    %v6622 = vsub.f32 %v3552, %v6621
    %v6623 = vand.u32 %v6622, 4294901760
    %6624 = vmatpush1.msra.mxu0 %v6623
    %v6625 = vand.u32 %v3551, 4294901760
    %v6626 = vsub.f32 %v3551, %v6625
    %v6627 = vand.u32 %v6626, 4294901760
    %6628 = vmatprep.subr.mxu0 %v6627
    %v6629 = vand.u32 %v3550, 4294901760
    %v6630 = vsub.f32 %v3550, %v6629
    %v6631 = vand.u32 %v6630, 4294901760
    %6632 = vmatpush1.msra.mxu0 %v6631
    %v6633 = vand.u32 %v3549, 4294901760
    %v6634 = vsub.f32 %v3549, %v6633
    %v6635 = vand.u32 %v6634, 4294901760
    %6636 = vmatprep.subr.mxu0 %v6635
    %v6637 = vand.u32 %v3548, 4294901760
    %v6638 = vsub.f32 %v3548, %v6637
    %v6639 = vand.u32 %v6638, 4294901760
    %6640 = vmatpush1.msra.mxu0 %v6639
    %v6641 = vand.u32 %v3547, 4294901760
    %v6642 = vsub.f32 %v3547, %v6641
    %v6643 = vand.u32 %v6642, 4294901760
    %6644 = vmatprep.subr.mxu0 %v6643
    %v6645 = vand.u32 %v3546, 4294901760
    %v6646 = vsub.f32 %v3546, %v6645
    %v6647 = vand.u32 %v6646, 4294901760
    %6648 = vmatpush1.msra.mxu0 %v6647
    %6649 = vmatprep.subr.mxu0 0.0
    %6650 = vmatpush2.msra.mxu0 0.0
    %6651 = vmatprep.subr.mxu0 0.0
    %6652 = vmatpush2.msra.mxu0 0.0
    %6653 = vmatprep.subr.mxu0 0.0
    %6654 = vmatpush2.msra.mxu0 0.0
    %6655 = vmatprep.subr.mxu0 0.0
    %6656 = vmatpush2.msra.mxu0 0.0
    %6657 = vmatprep.subr.mxu0 0.0
    %6658 = vmatpush2.msra.mxu0 0.0
    %6659 = vmatprep.subr.mxu0 0.0
    %6660 = vmatpush2.msra.mxu0 0.0
    %6661 = vmatprep.subr.mxu0 0.0
    %6662 = vmatpush2.msra.mxu0 0.0
    %6663 = vmatprep.subr.mxu0 0.0
    %6664 = vmatpush2.msra.mxu0 0.0
    %6665 = vmatprep.subr.mxu0 0.0
    %6666 = vmatpush2.msra.mxu0 0.0
    %6667 = vmatprep.subr.mxu0 0.0
    %6668 = vmatpush2.msra.mxu0 0.0
    %6669 = vmatprep.subr.mxu0 0.0
    %6670 = vmatpush2.msra.mxu0 0.0
    %6671 = vmatprep.subr.mxu0 0.0
    %6672 = vmatpush2.msra.mxu0 0.0
    %6673 = vmatprep.subr.mxu0 0.0
    %6674 = vmatpush2.msra.mxu0 0.0
    %6675 = vmatprep.subr.mxu0 0.0
    %6676 = vmatpush2.msra.mxu0 0.0
    %6677 = vmatprep.subr.mxu0 0.0
    %6678 = vmatpush2.msra.mxu0 0.0
    %6679 = vmatprep.subr.mxu0 0.0
    %6680 = vmatpush2.msra.mxu0 0.0
    %6681 = vmatprep.mubr.f32.mxu0 0.0
    %v6682 = vand.u32 %v198, 4294901760
    %6683 = vmatmul.mubr.f32.gmra.mxu0 %v6682
    %v6684 = vpop.f32.mrf.mxu0
    %v6685 = vadd.f32 %v6565, %v6684
    %v6686 = vpop.f32.mrf.mxu0
    %v6687 = vadd.f32 %v6567, %v6686
    %6688 = vdwg.mxu0
    %6689 = vmatprep.subr.mxu0 0.0
    %6690 = vmatpush1.msra.mxu0 0.0
    %6691 = vmatprep.subr.mxu0 0.0
    %6692 = vmatpush1.msra.mxu0 0.0
    %6693 = vmatprep.subr.mxu0 0.0
    %6694 = vmatpush1.msra.mxu0 0.0
    %6695 = vmatprep.subr.mxu0 0.0
    %6696 = vmatpush1.msra.mxu0 0.0
    %6697 = vmatprep.subr.mxu0 0.0
    %6698 = vmatpush1.msra.mxu0 0.0
    %6699 = vmatprep.subr.mxu0 0.0
    %6700 = vmatpush1.msra.mxu0 0.0
    %6701 = vmatprep.subr.mxu0 0.0
    %6702 = vmatpush1.msra.mxu0 0.0
    %6703 = vmatprep.subr.mxu0 0.0
    %6704 = vmatpush1.msra.mxu0 0.0
    %v6705 = vand.u32 %v3561, 4294901760
    %6706 = vmatprep.subr.mxu0 %v6705
    %v6707 = vand.u32 %v3560, 4294901760
    %6708 = vmatpush1.msra.mxu0 %v6707
    %v6709 = vand.u32 %v3559, 4294901760
    %6710 = vmatprep.subr.mxu0 %v6709
    %v6711 = vand.u32 %v3558, 4294901760
    %6712 = vmatpush1.msra.mxu0 %v6711
    %v6713 = vand.u32 %v3557, 4294901760
    %6714 = vmatprep.subr.mxu0 %v6713
    %v6715 = vand.u32 %v3556, 4294901760
    %6716 = vmatpush1.msra.mxu0 %v6715
    %v6717 = vand.u32 %v3555, 4294901760
    %6718 = vmatprep.subr.mxu0 %v6717
    %v6719 = vand.u32 %v3554, 4294901760
    %6720 = vmatpush1.msra.mxu0 %v6719
    %v6721 = vand.u32 %v3553, 4294901760
    %6722 = vmatprep.subr.mxu0 %v6721
    %v6723 = vand.u32 %v3552, 4294901760
    %6724 = vmatpush1.msra.mxu0 %v6723
    %v6725 = vand.u32 %v3551, 4294901760
    %6726 = vmatprep.subr.mxu0 %v6725
    %v6727 = vand.u32 %v3550, 4294901760
    %6728 = vmatpush1.msra.mxu0 %v6727
    %v6729 = vand.u32 %v3549, 4294901760
    %6730 = vmatprep.subr.mxu0 %v6729
    %v6731 = vand.u32 %v3548, 4294901760
    %6732 = vmatpush1.msra.mxu0 %v6731
    %v6733 = vand.u32 %v3547, 4294901760
    %6734 = vmatprep.subr.mxu0 %v6733
    %v6735 = vand.u32 %v3546, 4294901760
    %6736 = vmatpush1.msra.mxu0 %v6735
    %6737 = vmatprep.subr.mxu0 0.0
    %6738 = vmatpush2.msra.mxu0 0.0
    %6739 = vmatprep.subr.mxu0 0.0
    %6740 = vmatpush2.msra.mxu0 0.0
    %6741 = vmatprep.subr.mxu0 0.0
    %6742 = vmatpush2.msra.mxu0 0.0
    %6743 = vmatprep.subr.mxu0 0.0
    %6744 = vmatpush2.msra.mxu0 0.0
    %6745 = vmatprep.subr.mxu0 0.0
    %6746 = vmatpush2.msra.mxu0 0.0
    %6747 = vmatprep.subr.mxu0 0.0
    %6748 = vmatpush2.msra.mxu0 0.0
    %6749 = vmatprep.subr.mxu0 0.0
    %6750 = vmatpush2.msra.mxu0 0.0
    %6751 = vmatprep.subr.mxu0 0.0
    %6752 = vmatpush2.msra.mxu0 0.0
    %6753 = vmatprep.subr.mxu0 0.0
    %6754 = vmatpush2.msra.mxu0 0.0
    %6755 = vmatprep.subr.mxu0 0.0
    %6756 = vmatpush2.msra.mxu0 0.0
    %6757 = vmatprep.subr.mxu0 0.0
    %6758 = vmatpush2.msra.mxu0 0.0
    %6759 = vmatprep.subr.mxu0 0.0
    %6760 = vmatpush2.msra.mxu0 0.0
    %6761 = vmatprep.subr.mxu0 0.0
    %6762 = vmatpush2.msra.mxu0 0.0
    %6763 = vmatprep.subr.mxu0 0.0
    %6764 = vmatpush2.msra.mxu0 0.0
    %6765 = vmatprep.subr.mxu0 0.0
    %6766 = vmatpush2.msra.mxu0 0.0
    %6767 = vmatprep.subr.mxu0 0.0
    %6768 = vmatpush2.msra.mxu0 0.0
    %6769 = vmatprep.mubr.f32.mxu0 0.0
    %v6770 = vand.u32 %v198, 4294901760
    %6771 = vmatmul.mubr.f32.gmra.mxu0 %v6770
    %v6772 = vpop.f32.mrf.mxu0
    %v6773 = vadd.f32 %v6685, %v6772
    %v6774 = vpop.f32.mrf.mxu0
    %v6775 = vadd.f32 %v6687, %v6774
    %6776 = vdwg.mxu0
    %s6777 = scalar_lea.vmem [#allocation7], 16
    %6778 = vst [vmem:[%s6777] sm:$0xff] %v6773
    %6779 = vst [vmem:[%s6777 + $0x8] sm:$0xff] %v6775
    // Predicated region
    $region22: #{tpu_custom_call.1} parent=1 // pred_check
      _
    $region23: #{tpu_custom_call.1} parent=1 // pred_check_branch
      %6781 = sbr.rel (0) target = $region25
    $region24: #{tpu_custom_call.1} parent=1 // pred_region
      %s6783 = ssub.s32 512, 512
      %6784 = vsyncadd [#allocation4], %s6783
      %s6785 = sshll.u32 [#allocation7], 4
      %s6786 = int_to_ptr.vmem [resolvable:$true] %s6785
      %6791 = dma.vmem_to_hbm [thread:$0]  %s6786, 512, %s3, [#allocation4], 256, 256, 16
    $region25: #{tpu_custom_call.1} parent=1 // pred_fallthru
      _
    // Predicated region
    $region26: #{tpu_custom_call.1} parent=1 // pred_check
      _
    $region27: #{tpu_custom_call.1} parent=1 // pred_check_branch
      %6793 = sbr.rel (0) target = $region29
    $region28: #{tpu_custom_call.1} parent=1 // pred_region
      %6794 = dma.done [#allocation4], 512
    $region29: #{tpu_custom_call.1} parent=1 // pred_fallthru
      _
    %6795 = vsyncpa [#allocation3], 1
    %6796 = vsyncpa [#allocation6], 1
    %6797 = vsyncpa [#allocation4], 1

</llo_original>
